<compile_context>
chip_gen: v7x
topology: tpu7x:2x2x1
jax: 0.10.0
libtpu: 0.0.40
codegen_flags: <defaults>
</compile_context>

<pallas_src>
import functools

import numpy as np

import jax
import jax.numpy as jnp
from jax import lax
from jax.experimental import pallas as pl
from jax.experimental.pallas import tpu as pltpu


# Canvas geometry (fixed by Linear(384, A): input spatial must be 16x12).
_HP, _WP = 18, 14                 # padded layer-1 grid
_CANVAS = _HP * _WP               # 252 positions per batch element
_EXT = 64                         # zero extension so every tap slice is in-bounds

# Conv tap offsets on the flattened canvas (q = h*14 + w).
_OFF1 = tuple(dh * _WP + dw for dh in range(3) for dw in range(3))          # 3x3, s1
_OFF2 = tuple(dh * _WP + dw for dh in range(4) for dw in range(4))          # 4x4, s1 on canvas
_OFF3 = tuple(2 * dh * _WP + 2 * dw for dh in range(3) for dw in range(3))  # 3x3 on s2-subgrid


# -----------------------------------------------------------------------------
# Fused kernel: conv1+BN+ReLU, conv2+BN+ReLU, conv3+BN+ReLU, FC head + softmax.
# -----------------------------------------------------------------------------
def _policy_fused_kernel(x_ref, w1_ref, w2_ref, w3_ref, bn_ref, mask_ref,
                         selr_ref, wh_ref, bh_ref, out_ref, buf_a, buf_b,
                         *, batch, eps=1e-5):
    f32 = jnp.float32
    L = mask_ref.shape[1]               # batch * 252 (valid canvas width)
    E = x_ref.shape[1] - L              # zero-extension columns (64)
    C = 16                              # conv output channels

    def conv(src_ref, w_ref, offsets):
        # out[co, Q] = sum_{tap} W_tap[co, ci] * src[ci, Q + off_tap]
        acc = None
        for kk, off in enumerate(offsets):
            w_kk = w_ref[kk * C:(kk + 1) * C, :]              # (Cout, Cin)
            tap = src_ref[:, off:off + L]                     # (Cin, L)
            t = jnp.dot(w_kk, tap, preferred_element_type=f32)
            acc = t if acc is None else acc + t
        return acc                                            # (Cout, L)

    def bn_relu(o, valid_row, count, gamma_col, beta_col):
        # Batch-statistic BN over the masked (valid) canvas positions.
        inv_n = 1.0 / float(count)
        mean = jnp.sum(o * valid_row, axis=1, keepdims=True) * inv_n     # (C,1)
        cm = (o - mean) * valid_row
        var = jnp.sum(cm * cm, axis=1, keepdims=True) * inv_n            # biased
        scale = gamma_col * lax.rsqrt(var + eps)
        shift = beta_col - mean * scale
        return jnp.maximum(o * scale + shift, 0.0)

    bn = bn_ref[...]                      # (16, 6) = [g1 b1 g2 b2 g3 b3]
    v1 = mask_ref[0:1, :]                 # valid layer-1 outputs
    m2 = mask_ref[1:2, :]                 # layer-2 padded-input canvas mask
    v2 = mask_ref[2:3, :]                 # valid layer-2 outputs (even-even grid)
    v3 = mask_ref[3:4, :]                 # valid layer-3 outputs

    # ---- layer 1: 3x3 / s1 / p1 (padding ring already baked into the input canvas)
    o1 = conv(x_ref, w1_ref, _OFF1)
    r1 = bn_relu(o1, v1, batch * 192, bn[:, 0:1], bn[:, 1:2])

    # ---- layer 2 input canvas: shift the valid 16x12 block to offset (1,1)
    #      (= +15 flat columns) and re-apply the zero padding ring via the mask.
    p2 = jnp.concatenate([jnp.zeros((C, 15), f32), r1[:, :L - 15]], axis=1) * m2
    buf_a[:, :L] = p2
    buf_a[:, L:] = jnp.zeros((C, E), f32)
    o2 = conv(buf_a, w2_ref, _OFF2)        # stride-2 outputs live at even-even positions
    r2 = bn_relu(o2, v2, batch * 48, bn[:, 2:3], bn[:, 3:4])

    # ---- layer 3: 3x3 / s1 / p0 on the stride-2 subsampled grid -> dilation-2 taps.
    buf_b[:, :L] = r2
    buf_b[:, L:] = jnp.zeros((C, E), f32)
    o3 = conv(buf_b, w3_ref, _OFF3)
    r3 = bn_relu(o3, v3, batch * 24, bn[:, 4:5], bn[:, 5:6])

    # ---- head: gather the 24 valid spatial positions per batch with one MXU
    #      matmul, restack to the torch NCHW-flatten order, single FC matmul
    #      (1/temperature folded into wh/bh), exact softmax over actions.
    f = jnp.dot(r3, selr_ref[...], preferred_element_type=f32)       # (16, 24*B)
    fstack = jnp.concatenate(
        [f[:, j * batch:(j + 1) * batch] for j in range(24)], axis=0)  # (384, B)
    logits_t = jnp.dot(wh_ref[...], fstack, preferred_element_type=f32) + bh_ref[...]
    m = jnp.max(logits_t, axis=0, keepdims=True)
    e = jnp.exp(logits_t - m)
    probs_t = e / jnp.sum(e, axis=0, keepdims=True)                   # (A, B)
    out_ref[...] = jnp.transpose(probs_t)                             # (B, A)


# -----------------------------------------------------------------------------
# Constant builders / parameter packing (runs once, outside the hot path).
# -----------------------------------------------------------------------------
def _canvas_masks(batch):
    h = np.arange(_HP)[:, None]
    w = np.arange(_WP)[None, :]
    v1 = (h <= 15) & (w <= 11)                                     # layer-1 valid
    m2 = (h >= 1) & (h <= 16) & (w >= 1) & (w <= 12)               # layer-2 input (pad ring = 0)
    v2 = (h % 2 == 0) & (h <= 14) & (w % 2 == 0) & (w <= 10)       # layer-2 valid
    v3 = (h % 2 == 0) & (h <= 10) & (w % 2 == 0) & (w <= 6)        # layer-3 valid
    m = np.stack([a.reshape(-1) for a in (v1, m2, v2, v3)], 0).astype(np.float32)
    return jnp.asarray(np.tile(m, (1, batch)))                     # (4, 252*B)


def _head_gather(batch):
    # SelR[b*252 + 28*h3 + 2*w3, j*B + b] = 1, j = h3*4 + w3  (layer-3 output positions)
    sel = np.zeros((_CANVAS * batch, 24 * batch), np.float32)
    for b in range(batch):
        for h3 in range(6):
            for w3 in range(4):
                j = h3 * 4 + w3
                sel[b * _CANVAS + 28 * h3 + 2 * w3, j * batch + b] = 1.0
    return jnp.asarray(sel)


def _pack_operands(params, batch, temperature):
    def conv_w(w):                       # torch (Cout, Cin, KH, KW) -> (KH*KW*Cout, Cin)
        co, ci, kh, kw = w.shape
        return jnp.transpose(w, (2, 3, 0, 1)).reshape(kh * kw * co, ci)

    bnp = jnp.stack([params["g1"], params["b1"], params["g2"], params["b2"],
                     params["g3"], params["b3"]], axis=1)                  # (16, 6)
    wf = params["wf"]                                                       # (A, 384)
    a = wf.shape[0]
    inv_t = 1.0 / float(temperature)
    # wh[a, j*16 + c] = wf[a, c*24 + j] / T   (flatten permutation folded into the weight)
    wh = jnp.transpose(wf.reshape(a, 16, 24), (0, 2, 1)).reshape(a, 384) * inv_t
    bh = (params["bf"] * inv_t).reshape(a, 1)
    # NOTE: conv biases cancel exactly under batch-statistic BN, so they are not passed.
    return (conv_w(params["w1"]), conv_w(params["w2"]), conv_w(params["w3"]),
            bnp, _canvas_masks(batch), _head_gather(batch), wh, bh)


def make_policy_forward(params, *, batch, temperature=1.0):
    packed = _pack_operands(params, batch, temperature)
    num_actions = params["wf"].shape[0]
    c_in = params["w1"].shape[1]
    L = _CANVAS * batch

    kernel = functools.partial(_policy_fused_kernel, batch=batch)
    operand_shapes = ((c_in, L + _EXT),) + tuple(a.shape for a in packed)

    flops = 2 * L * (9 * 16 * c_in + 16 * 16 * 16 + 9 * 16 * 16 + 16 * 24 * batch) \
        + 2 * num_actions * 384 * batch
    bytes_accessed = 4 * (sum(int(np.prod(s)) for s in operand_shapes)
                          + batch * num_actions)

    def full_spec(shape):
        n = len(shape)
        return pl.BlockSpec(shape, lambda i: (0,) * n)

    call = pl.pallas_call(
        kernel,
        out_shape=jax.ShapeDtypeStruct((batch, num_actions), jnp.float32),
        grid=(1,),
        in_specs=[full_spec(s) for s in operand_shapes],
        out_specs=full_spec((batch, num_actions)),
        scratch_shapes=[pltpu.VMEM((16, L + _EXT), jnp.float32),
                        pltpu.VMEM((16, L + _EXT), jnp.float32)],
        compiler_params=pltpu.CompilerParams(dimension_semantics=("arbitrary",)),
        cost_estimate=pl.CostEstimate(flops=flops, transcendentals=64,
                                      bytes_accessed=bytes_accessed),
    )

    @jax.jit
    def forward(x_nchw):
        b, c, h, w = x_nchw.shape
        assert (b, c, h, w) == (batch, c_in, 16, 12), \
            "Linear(384, A) requires a 16x12 spatial input"
        # One-time light layout prep of the tiny input (a few XLA ops on ~6 KB);
        # everything else is fused inside the single pallas_call.
        xt = jnp.transpose(x_nchw.astype(jnp.float32), (1, 0, 2, 3))     # (C, B, H, W)
        xp = jnp.pad(xt, ((0, 0), (0, 0), (1, 1), (1, 1)))               # (C, B, 18, 14)
        canvas = jnp.pad(xp.reshape(c, b * _CANVAS), ((0, 0), (0, _EXT)))
        return call(canvas, *packed)

    return forward


# -----------------------------------------------------------------------------
# Parameter init (PyTorch-default-like) and a pure-JAX reference for validation.
# -----------------------------------------------------------------------------
def init_params(key, input_channels, num_actions):
    ks = jax.random.split(key, 8)

    def u(k, shape, fan_in):
        bound = 1.0 / np.sqrt(fan_in)
        return jax.random.uniform(k, shape, jnp.float32, -bound, bound)

    p = {
        "w1": u(ks[0], (16, input_channels, 3, 3), input_channels * 9),
        "cb1": u(ks[1], (16,), input_channels * 9),
        "w2": u(ks[2], (16, 16, 4, 4), 16 * 16),
        "cb2": u(ks[3], (16,), 16 * 16),
        "w3": u(ks[4], (16, 16, 3, 3), 16 * 9),
        "cb3": u(ks[5], (16,), 16 * 9),
        "wf": u(ks[6], (num_actions, 384), 384),
        "bf": u(ks[7], (num_actions,), 384),
    }
    for i in (1, 2, 3):
        p[f"g{i}"] = jnp.ones((16,), jnp.float32)    # BatchNorm2d defaults
        p[f"b{i}"] = jnp.zeros((16,), jnp.float32)
    return p


def reference_forward(x, params, temperature=1.0):
    hp = lax.Precision.HIGHEST

    def conv(a, w, b, stride, pad):
        y = lax.conv_general_dilated(a, w, (stride, stride), ((pad, pad), (pad, pad)),
                                     dimension_numbers=("NCHW", "OIHW", "NCHW"),
                                     precision=hp)
        return y + b.reshape(1, -1, 1, 1)

    def bn_relu(y, g, b):
        mean = jnp.mean(y, axis=(0, 2, 3), keepdims=True)
        var = jnp.mean(jnp.square(y - mean), axis=(0, 2, 3), keepdims=True)
        yh = (y - mean) * lax.rsqrt(var + 1e-5)
        return jnp.maximum(yh * g.reshape(1, -1, 1, 1) + b.reshape(1, -1, 1, 1), 0.0)

    a = bn_relu(conv(x, params["w1"], params["cb1"], 1, 1), params["g1"], params["b1"])
    a = bn_relu(conv(a, params["w2"], params["cb2"], 2, 1), params["g2"], params["b2"])
    a = bn_relu(conv(a, params["w3"], params["cb3"], 1, 0), params["g3"], params["b3"])
    flat = a.reshape(a.shape[0], -1)
    logits = jnp.dot(flat, params["wf"].T, precision=hp) + params["bf"]
    return jax.nn.softmax(logits / temperature, axis=-1)


# -----------------------------------------------------------------------------
if __name__ == "__main__":
    # Spatial size chosen so the flattened feature size is exactly 384 (required
    # by Linear(384, A)): 16x12 -> conv1 16x12 -> conv2 8x6 -> conv3 6x4, 16*24=384.
    B, C_IN, H, W = 2, 4, 16, 12
    NUM_ACTIONS = 8

    key = jax.random.PRNGKey(0)
    kx, kp = jax.random.split(key)
    x = jax.random.normal(kx, (B, C_IN, H, W), dtype=jnp.float32)   # NCHW like torch
    params = init_params(kp, C_IN, NUM_ACTIONS)

    forward = make_policy_forward(params, batch=B, temperature=1.0)
    probs = jax.block_until_ready(forward(x))

    assert probs.shape == (B, NUM_ACTIONS)
    assert bool(jnp.all(jnp.isfinite(probs)))
    assert bool(jnp.allclose(jnp.sum(probs, axis=-1), 1.0, atol=1e-5))

    ref = reference_forward(x, params, temperature=1.0)
    assert bool(jnp.allclose(probs, ref, atol=1e-3, rtol=1e-3)), (probs, ref)

    print("KERNEL_OK")
</pallas_src>

<mosaic_0001>
module attributes {stable_mosaic.version = 11 : i64} {
  func.func @_policy_fused_kernel(%arg0: i32, %arg1: memref<4x568xf32, #tpu.memory_space<vmem>>, %arg2: memref<144x4xf32, #tpu.memory_space<vmem>>, %arg3: memref<256x16xf32, #tpu.memory_space<vmem>>, %arg4: memref<144x16xf32, #tpu.memory_space<vmem>>, %arg5: memref<16x6xf32, #tpu.memory_space<vmem>>, %arg6: memref<4x504xf32, #tpu.memory_space<vmem>>, %arg7: memref<504x48xf32, #tpu.memory_space<vmem>>, %arg8: memref<8x384xf32, #tpu.memory_space<vmem>>, %arg9: memref<8x1xf32, #tpu.memory_space<vmem>>, %arg10: memref<2x8xf32, #tpu.memory_space<vmem>>, %arg11: memref<16x568xf32, #tpu.memory_space<vmem>>, %arg12: memref<16x568xf32, #tpu.memory_space<vmem>>) attributes {dimension_semantics = [#tpu.dimension_semantics<arbitrary>], iteration_bounds = array<i64: 1>, scalar_prefetch = 0 : i64, scratch_operands = 2 : i64, tpu.core_type = #tpu.core_type<tc>, window_params = [{pipeline_mode = #tpu.pipeline_mode<synchronous>, transform_indices = @transform_0, window_bounds = array<i64: 4, 568>}, {pipeline_mode = #tpu.pipeline_mode<synchronous>, transform_indices = @transform_1, window_bounds = array<i64: 144, 4>}, {pipeline_mode = #tpu.pipeline_mode<synchronous>, transform_indices = @transform_2, window_bounds = array<i64: 256, 16>}, {pipeline_mode = #tpu.pipeline_mode<synchronous>, transform_indices = @transform_3, window_bounds = array<i64: 144, 16>}, {pipeline_mode = #tpu.pipeline_mode<synchronous>, transform_indices = @transform_4, window_bounds = array<i64: 16, 6>}, {pipeline_mode = #tpu.pipeline_mode<synchronous>, transform_indices = @transform_5, window_bounds = array<i64: 4, 504>}, {pipeline_mode = #tpu.pipeline_mode<synchronous>, transform_indices = @transform_6, window_bounds = array<i64: 504, 48>}, {pipeline_mode = #tpu.pipeline_mode<synchronous>, transform_indices = @transform_7, window_bounds = array<i64: 8, 384>}, {pipeline_mode = #tpu.pipeline_mode<synchronous>, transform_indices = @transform_8, window_bounds = array<i64: 8, 1>}, {pipeline_mode = #tpu.pipeline_mode<synchronous>, transform_indices = @transform_9, window_bounds = array<i64: 2, 8>}]} {
    %c0 = arith.constant 0 : index
    %c0_0 = arith.constant 0 : index
    %0 = vector.load %arg5[%c0, %c0_0] : memref<16x6xf32, #tpu.memory_space<vmem>>, vector<16x6xf32>
    %c0_1 = arith.constant 0 : index
    %c0_2 = arith.constant 0 : index
    %1 = vector.load %arg6[%c0_1, %c0_2] : memref<4x504xf32, #tpu.memory_space<vmem>>, vector<1x504xf32>
    %c1 = arith.constant 1 : index
    %c0_3 = arith.constant 0 : index
    %2 = vector.load %arg6[%c1, %c0_3] : memref<4x504xf32, #tpu.memory_space<vmem>>, vector<1x504xf32>
    %c2 = arith.constant 2 : index
    %c0_4 = arith.constant 0 : index
    %3 = vector.load %arg6[%c2, %c0_4] : memref<4x504xf32, #tpu.memory_space<vmem>>, vector<1x504xf32>
    %c3 = arith.constant 3 : index
    %c0_5 = arith.constant 0 : index
    %4 = vector.load %arg6[%c3, %c0_5] : memref<4x504xf32, #tpu.memory_space<vmem>>, vector<1x504xf32>
    %c0_6 = arith.constant 0 : index
    %c0_7 = arith.constant 0 : index
    %5 = vector.load %arg2[%c0_6, %c0_7] : memref<144x4xf32, #tpu.memory_space<vmem>>, vector<16x4xf32>
    %c0_8 = arith.constant 0 : index
    %c0_9 = arith.constant 0 : index
    %6 = vector.load %arg1[%c0_8, %c0_9] : memref<4x568xf32, #tpu.memory_space<vmem>>, vector<4x504xf32>
    %cst = arith.constant dense<0.000000e+00> : vector<16x504xf32>
    %7 = tpu.matmul %5, %6, %cst {dimension_numbers = #tpu.dot_dimension_numbers<[1], [0], [0], [1], [0, 0, 1, 1], [], []>} : vector<16x4xf32>, vector<4x504xf32>, vector<16x504xf32> -> vector<16x504xf32>
    %c16 = arith.constant 16 : index
    %c0_10 = arith.constant 0 : index
    %8 = vector.load %arg2[%c16, %c0_10] : memref<144x4xf32, #tpu.memory_space<vmem>>, vector<16x4xf32>
    %c0_11 = arith.constant 0 : index
    %c1_12 = arith.constant 1 : index
    %9 = vector.load %arg1[%c0_11, %c1_12] : memref<4x568xf32, #tpu.memory_space<vmem>>, vector<4x504xf32>
    %cst_13 = arith.constant dense<0.000000e+00> : vector<16x504xf32>
    %10 = tpu.matmul %8, %9, %cst_13 {dimension_numbers = #tpu.dot_dimension_numbers<[1], [0], [0], [1], [0, 0, 1, 1], [], []>} : vector<16x4xf32>, vector<4x504xf32>, vector<16x504xf32> -> vector<16x504xf32>
    %11 = arith.addf %7, %10 : vector<16x504xf32>
    %c32 = arith.constant 32 : index
    %c0_14 = arith.constant 0 : index
    %12 = vector.load %arg2[%c32, %c0_14] : memref<144x4xf32, #tpu.memory_space<vmem>>, vector<16x4xf32>
    %c0_15 = arith.constant 0 : index
    %c2_16 = arith.constant 2 : index
    %13 = vector.load %arg1[%c0_15, %c2_16] : memref<4x568xf32, #tpu.memory_space<vmem>>, vector<4x504xf32>
    %cst_17 = arith.constant dense<0.000000e+00> : vector<16x504xf32>
    %14 = tpu.matmul %12, %13, %cst_17 {dimension_numbers = #tpu.dot_dimension_numbers<[1], [0], [0], [1], [0, 0, 1, 1], [], []>} : vector<16x4xf32>, vector<4x504xf32>, vector<16x504xf32> -> vector<16x504xf32>
    %15 = arith.addf %11, %14 : vector<16x504xf32>
    %c48 = arith.constant 48 : index
    %c0_18 = arith.constant 0 : index
    %16 = vector.load %arg2[%c48, %c0_18] : memref<144x4xf32, #tpu.memory_space<vmem>>, vector<16x4xf32>
    %c0_19 = arith.constant 0 : index
    %c14 = arith.constant 14 : index
    %17 = vector.load %arg1[%c0_19, %c14] : memref<4x568xf32, #tpu.memory_space<vmem>>, vector<4x504xf32>
    %cst_20 = arith.constant dense<0.000000e+00> : vector<16x504xf32>
    %18 = tpu.matmul %16, %17, %cst_20 {dimension_numbers = #tpu.dot_dimension_numbers<[1], [0], [0], [1], [0, 0, 1, 1], [], []>} : vector<16x4xf32>, vector<4x504xf32>, vector<16x504xf32> -> vector<16x504xf32>
    %19 = arith.addf %15, %18 : vector<16x504xf32>
    %c64 = arith.constant 64 : index
    %c0_21 = arith.constant 0 : index
    %20 = vector.load %arg2[%c64, %c0_21] : memref<144x4xf32, #tpu.memory_space<vmem>>, vector<16x4xf32>
    %c0_22 = arith.constant 0 : index
    %c15 = arith.constant 15 : index
    %21 = vector.load %arg1[%c0_22, %c15] : memref<4x568xf32, #tpu.memory_space<vmem>>, vector<4x504xf32>
    %cst_23 = arith.constant dense<0.000000e+00> : vector<16x504xf32>
    %22 = tpu.matmul %20, %21, %cst_23 {dimension_numbers = #tpu.dot_dimension_numbers<[1], [0], [0], [1], [0, 0, 1, 1], [], []>} : vector<16x4xf32>, vector<4x504xf32>, vector<16x504xf32> -> vector<16x504xf32>
    %23 = arith.addf %19, %22 : vector<16x504xf32>
    %c80 = arith.constant 80 : index
    %c0_24 = arith.constant 0 : index
    %24 = vector.load %arg2[%c80, %c0_24] : memref<144x4xf32, #tpu.memory_space<vmem>>, vector<16x4xf32>
    %c0_25 = arith.constant 0 : index
    %c16_26 = arith.constant 16 : index
    %25 = vector.load %arg1[%c0_25, %c16_26] : memref<4x568xf32, #tpu.memory_space<vmem>>, vector<4x504xf32>
    %cst_27 = arith.constant dense<0.000000e+00> : vector<16x504xf32>
    %26 = tpu.matmul %24, %25, %cst_27 {dimension_numbers = #tpu.dot_dimension_numbers<[1], [0], [0], [1], [0, 0, 1, 1], [], []>} : vector<16x4xf32>, vector<4x504xf32>, vector<16x504xf32> -> vector<16x504xf32>
    %27 = arith.addf %23, %26 : vector<16x504xf32>
    %c96 = arith.constant 96 : index
    %c0_28 = arith.constant 0 : index
    %28 = vector.load %arg2[%c96, %c0_28] : memref<144x4xf32, #tpu.memory_space<vmem>>, vector<16x4xf32>
    %c0_29 = arith.constant 0 : index
    %c28 = arith.constant 28 : index
    %29 = vector.load %arg1[%c0_29, %c28] : memref<4x568xf32, #tpu.memory_space<vmem>>, vector<4x504xf32>
    %cst_30 = arith.constant dense<0.000000e+00> : vector<16x504xf32>
    %30 = tpu.matmul %28, %29, %cst_30 {dimension_numbers = #tpu.dot_dimension_numbers<[1], [0], [0], [1], [0, 0, 1, 1], [], []>} : vector<16x4xf32>, vector<4x504xf32>, vector<16x504xf32> -> vector<16x504xf32>
    %31 = arith.addf %27, %30 : vector<16x504xf32>
    %c112 = arith.constant 112 : index
    %c0_31 = arith.constant 0 : index
    %32 = vector.load %arg2[%c112, %c0_31] : memref<144x4xf32, #tpu.memory_space<vmem>>, vector<16x4xf32>
    %c0_32 = arith.constant 0 : index
    %c29 = arith.constant 29 : index
    %33 = vector.load %arg1[%c0_32, %c29] : memref<4x568xf32, #tpu.memory_space<vmem>>, vector<4x504xf32>
    %cst_33 = arith.constant dense<0.000000e+00> : vector<16x504xf32>
    %34 = tpu.matmul %32, %33, %cst_33 {dimension_numbers = #tpu.dot_dimension_numbers<[1], [0], [0], [1], [0, 0, 1, 1], [], []>} : vector<16x4xf32>, vector<4x504xf32>, vector<16x504xf32> -> vector<16x504xf32>
    %35 = arith.addf %31, %34 : vector<16x504xf32>
    %c128 = arith.constant 128 : index
    %c0_34 = arith.constant 0 : index
    %36 = vector.load %arg2[%c128, %c0_34] : memref<144x4xf32, #tpu.memory_space<vmem>>, vector<16x4xf32>
    %c0_35 = arith.constant 0 : index
    %c30 = arith.constant 30 : index
    %37 = vector.load %arg1[%c0_35, %c30] : memref<4x568xf32, #tpu.memory_space<vmem>>, vector<4x504xf32>
    %cst_36 = arith.constant dense<0.000000e+00> : vector<16x504xf32>
    %38 = tpu.matmul %36, %37, %cst_36 {dimension_numbers = #tpu.dot_dimension_numbers<[1], [0], [0], [1], [0, 0, 1, 1], [], []>} : vector<16x4xf32>, vector<4x504xf32>, vector<16x504xf32> -> vector<16x504xf32>
    %39 = arith.addf %35, %38 : vector<16x504xf32>
    %40 = vector.extract_strided_slice %0 {offsets = [0, 0], sizes = [16, 1], strides = [1, 1]} : vector<16x6xf32> to vector<16x1xf32>
    %41 = vector.extract_strided_slice %0 {offsets = [0, 1], sizes = [16, 1], strides = [1, 1]} : vector<16x6xf32> to vector<16x1xf32>
    %42 = vector.broadcast %1 : vector<1x504xf32> to vector<16x504xf32>
    %43 = arith.mulf %39, %42 : vector<16x504xf32>
    %cst_37 = arith.constant dense<0.000000e+00> : vector<16xf32>
    %44 = vector.multi_reduction <add>, %43, %cst_37 [1] : vector<16x504xf32> to vector<16xf32>
    %45 = vector.shape_cast %44 : vector<16xf32> to vector<16x1xf32>
    %cst_38 = arith.constant 0.00260416674 : f32
    %46 = vector.broadcast %cst_38 : f32 to vector<16x1xf32>
    %47 = arith.mulf %45, %46 : vector<16x1xf32>
    %48 = vector.broadcast %47 : vector<16x1xf32> to vector<16x504xf32>
    %49 = arith.subf %39, %48 : vector<16x504xf32>
    %50 = vector.broadcast %1 : vector<1x504xf32> to vector<16x504xf32>
    %51 = arith.mulf %49, %50 : vector<16x504xf32>
    %52 = arith.mulf %51, %51 : vector<16x504xf32>
    %cst_39 = arith.constant dense<0.000000e+00> : vector<16xf32>
    %53 = vector.multi_reduction <add>, %52, %cst_39 [1] : vector<16x504xf32> to vector<16xf32>
    %54 = vector.shape_cast %53 : vector<16xf32> to vector<16x1xf32>
    %cst_40 = arith.constant 0.00260416674 : f32
    %55 = vector.broadcast %cst_40 : f32 to vector<16x1xf32>
    %56 = arith.mulf %54, %55 : vector<16x1xf32>
    %cst_41 = arith.constant 9.99999974E-6 : f32
    %57 = vector.broadcast %cst_41 : f32 to vector<16x1xf32>
    %58 = arith.addf %56, %57 : vector<16x1xf32>
    %59 = math.rsqrt %58 : vector<16x1xf32>
    %60 = arith.mulf %40, %59 : vector<16x1xf32>
    %61 = arith.mulf %47, %60 : vector<16x1xf32>
    %62 = arith.subf %41, %61 : vector<16x1xf32>
    %63 = vector.broadcast %60 : vector<16x1xf32> to vector<16x504xf32>
    %64 = arith.mulf %39, %63 : vector<16x504xf32>
    %65 = vector.broadcast %62 : vector<16x1xf32> to vector<16x504xf32>
    %66 = arith.addf %64, %65 : vector<16x504xf32>
    %cst_42 = arith.constant 0.000000e+00 : f32
    %67 = vector.broadcast %cst_42 : f32 to vector<16x504xf32>
    %68 = arith.maximumf %66, %67 : vector<16x504xf32>
    %cst_43 = arith.constant 0.000000e+00 : f32
    %69 = vector.broadcast %cst_43 : f32 to vector<16x15xf32>
    %70 = vector.extract_strided_slice %68 {offsets = [0, 0], sizes = [16, 489], strides = [1, 1]} : vector<16x504xf32> to vector<16x489xf32>
    %71 = tpu.concatenate %69, %70 in 1 : vector<16x15xf32>, vector<16x489xf32> -> vector<16x504xf32>
    %72 = vector.broadcast %2 : vector<1x504xf32> to vector<16x504xf32>
    %73 = arith.mulf %71, %72 : vector<16x504xf32>
    %c0_44 = arith.constant 0 : index
    %c0_45 = arith.constant 0 : index
    %74 = vector.load %arg11[%c0_44, %c0_45] : memref<16x568xf32, #tpu.memory_space<vmem>>, vector<16x504xf32>
    tpu.vector_store %arg11[%c0_44, %c0_45], %73 {strides = array<i32>} : memref<16x568xf32, #tpu.memory_space<vmem>>, vector<16x504xf32>,
    %cst_46 = arith.constant 0.000000e+00 : f32
    %75 = vector.broadcast %cst_46 : f32 to vector<16x64xf32>
    %c0_47 = arith.constant 0 : index
    %c504 = arith.constant 504 : index
    %76 = vector.load %arg11[%c0_47, %c504] : memref<16x568xf32, #tpu.memory_space<vmem>>, vector<16x64xf32>
    tpu.vector_store %arg11[%c0_47, %c504], %75 {strides = array<i32>} : memref<16x568xf32, #tpu.memory_space<vmem>>, vector<16x64xf32>,
    %c0_48 = arith.constant 0 : index
    %c0_49 = arith.constant 0 : index
    %77 = vector.load %arg3[%c0_48, %c0_49] : memref<256x16xf32, #tpu.memory_space<vmem>>, vector<16x16xf32>
    %c0_50 = arith.constant 0 : index
    %c0_51 = arith.constant 0 : index
    %78 = vector.load %arg11[%c0_50, %c0_51] : memref<16x568xf32, #tpu.memory_space<vmem>>, vector<16x504xf32>
    %cst_52 = arith.constant dense<0.000000e+00> : vector<16x504xf32>
    %79 = tpu.matmul %77, %78, %cst_52 {dimension_numbers = #tpu.dot_dimension_numbers<[1], [0], [0], [1], [0, 0, 1, 1], [], []>} : vector<16x16xf32>, vector<16x504xf32>, vector<16x504xf32> -> vector<16x504xf32>
    %c16_53 = arith.constant 16 : index
    %c0_54 = arith.constant 0 : index
    %80 = vector.load %arg3[%c16_53, %c0_54] : memref<256x16xf32, #tpu.memory_space<vmem>>, vector<16x16xf32>
    %c0_55 = arith.constant 0 : index
    %c1_56 = arith.constant 1 : index
    %81 = vector.load %arg11[%c0_55, %c1_56] : memref<16x568xf32, #tpu.memory_space<vmem>>, vector<16x504xf32>
    %cst_57 = arith.constant dense<0.000000e+00> : vector<16x504xf32>
    %82 = tpu.matmul %80, %81, %cst_57 {dimension_numbers = #tpu.dot_dimension_numbers<[1], [0], [0], [1], [0, 0, 1, 1], [], []>} : vector<16x16xf32>, vector<16x504xf32>, vector<16x504xf32> -> vector<16x504xf32>
    %83 = arith.addf %79, %82 : vector<16x504xf32>
    %c32_58 = arith.constant 32 : index
    %c0_59 = arith.constant 0 : index
    %84 = vector.load %arg3[%c32_58, %c0_59] : memref<256x16xf32, #tpu.memory_space<vmem>>, vector<16x16xf32>
    %c0_60 = arith.constant 0 : index
    %c2_61 = arith.constant 2 : index
    %85 = vector.load %arg11[%c0_60, %c2_61] : memref<16x568xf32, #tpu.memory_space<vmem>>, vector<16x504xf32>
    %cst_62 = arith.constant dense<0.000000e+00> : vector<16x504xf32>
    %86 = tpu.matmul %84, %85, %cst_62 {dimension_numbers = #tpu.dot_dimension_numbers<[1], [0], [0], [1], [0, 0, 1, 1], [], []>} : vector<16x16xf32>, vector<16x504xf32>, vector<16x504xf32> -> vector<16x504xf32>
    %87 = arith.addf %83, %86 : vector<16x504xf32>
    %c48_63 = arith.constant 48 : index
    %c0_64 = arith.constant 0 : index
    %88 = vector.load %arg3[%c48_63, %c0_64] : memref<256x16xf32, #tpu.memory_space<vmem>>, vector<16x16xf32>
    %c0_65 = arith.constant 0 : index
    %c3_66 = arith.constant 3 : index
    %89 = vector.load %arg11[%c0_65, %c3_66] : memref<16x568xf32, #tpu.memory_space<vmem>>, vector<16x504xf32>
    %cst_67 = arith.constant dense<0.000000e+00> : vector<16x504xf32>
    %90 = tpu.matmul %88, %89, %cst_67 {dimension_numbers = #tpu.dot_dimension_numbers<[1], [0], [0], [1], [0, 0, 1, 1], [], []>} : vector<16x16xf32>, vector<16x504xf32>, vector<16x504xf32> -> vector<16x504xf32>
    %91 = arith.addf %87, %90 : vector<16x504xf32>
    %c64_68 = arith.constant 64 : index
    %c0_69 = arith.constant 0 : index
    %92 = vector.load %arg3[%c64_68, %c0_69] : memref<256x16xf32, #tpu.memory_space<vmem>>, vector<16x16xf32>
    %c0_70 = arith.constant 0 : index
    %c14_71 = arith.constant 14 : index
    %93 = vector.load %arg11[%c0_70, %c14_71] : memref<16x568xf32, #tpu.memory_space<vmem>>, vector<16x504xf32>
    %cst_72 = arith.constant dense<0.000000e+00> : vector<16x504xf32>
    %94 = tpu.matmul %92, %93, %cst_72 {dimension_numbers = #tpu.dot_dimension_numbers<[1], [0], [0], [1], [0, 0, 1, 1], [], []>} : vector<16x16xf32>, vector<16x504xf32>, vector<16x504xf32> -> vector<16x504xf32>
    %95 = arith.addf %91, %94 : vector<16x504xf32>
    %c80_73 = arith.constant 80 : index
    %c0_74 = arith.constant 0 : index
    %96 = vector.load %arg3[%c80_73, %c0_74] : memref<256x16xf32, #tpu.memory_space<vmem>>, vector<16x16xf32>
    %c0_75 = arith.constant 0 : index
    %c15_76 = arith.constant 15 : index
    %97 = vector.load %arg11[%c0_75, %c15_76] : memref<16x568xf32, #tpu.memory_space<vmem>>, vector<16x504xf32>
    %cst_77 = arith.constant dense<0.000000e+00> : vector<16x504xf32>
    %98 = tpu.matmul %96, %97, %cst_77 {dimension_numbers = #tpu.dot_dimension_numbers<[1], [0], [0], [1], [0, 0, 1, 1], [], []>} : vector<16x16xf32>, vector<16x504xf32>, vector<16x504xf32> -> vector<16x504xf32>
    %99 = arith.addf %95, %98 : vector<16x504xf32>
    %c96_78 = arith.constant 96 : index
    %c0_79 = arith.constant 0 : index
    %100 = vector.load %arg3[%c96_78, %c0_79] : memref<256x16xf32, #tpu.memory_space<vmem>>, vector<16x16xf32>
    %c0_80 = arith.constant 0 : index
    %c16_81 = arith.constant 16 : index
    %101 = vector.load %arg11[%c0_80, %c16_81] : memref<16x568xf32, #tpu.memory_space<vmem>>, vector<16x504xf32>
    %cst_82 = arith.constant dense<0.000000e+00> : vector<16x504xf32>
    %102 = tpu.matmul %100, %101, %cst_82 {dimension_numbers = #tpu.dot_dimension_numbers<[1], [0], [0], [1], [0, 0, 1, 1], [], []>} : vector<16x16xf32>, vector<16x504xf32>, vector<16x504xf32> -> vector<16x504xf32>
    %103 = arith.addf %99, %102 : vector<16x504xf32>
    %c112_83 = arith.constant 112 : index
    %c0_84 = arith.constant 0 : index
    %104 = vector.load %arg3[%c112_83, %c0_84] : memref<256x16xf32, #tpu.memory_space<vmem>>, vector<16x16xf32>
    %c0_85 = arith.constant 0 : index
    %c17 = arith.constant 17 : index
    %105 = vector.load %arg11[%c0_85, %c17] : memref<16x568xf32, #tpu.memory_space<vmem>>, vector<16x504xf32>
    %cst_86 = arith.constant dense<0.000000e+00> : vector<16x504xf32>
    %106 = tpu.matmul %104, %105, %cst_86 {dimension_numbers = #tpu.dot_dimension_numbers<[1], [0], [0], [1], [0, 0, 1, 1], [], []>} : vector<16x16xf32>, vector<16x504xf32>, vector<16x504xf32> -> vector<16x504xf32>
    %107 = arith.addf %103, %106 : vector<16x504xf32>
    %c128_87 = arith.constant 128 : index
    %c0_88 = arith.constant 0 : index
    %108 = vector.load %arg3[%c128_87, %c0_88] : memref<256x16xf32, #tpu.memory_space<vmem>>, vector<16x16xf32>
    %c0_89 = arith.constant 0 : index
    %c28_90 = arith.constant 28 : index
    %109 = vector.load %arg11[%c0_89, %c28_90] : memref<16x568xf32, #tpu.memory_space<vmem>>, vector<16x504xf32>
    %cst_91 = arith.constant dense<0.000000e+00> : vector<16x504xf32>
    %110 = tpu.matmul %108, %109, %cst_91 {dimension_numbers = #tpu.dot_dimension_numbers<[1], [0], [0], [1], [0, 0, 1, 1], [], []>} : vector<16x16xf32>, vector<16x504xf32>, vector<16x504xf32> -> vector<16x504xf32>
    %111 = arith.addf %107, %110 : vector<16x504xf32>
    %c144 = arith.constant 144 : index
    %c0_92 = arith.constant 0 : index
    %112 = vector.load %arg3[%c144, %c0_92] : memref<256x16xf32, #tpu.memory_space<vmem>>, vector<16x16xf32>
    %c0_93 = arith.constant 0 : index
    %c29_94 = arith.constant 29 : index
    %113 = vector.load %arg11[%c0_93, %c29_94] : memref<16x568xf32, #tpu.memory_space<vmem>>, vector<16x504xf32>
    %cst_95 = arith.constant dense<0.000000e+00> : vector<16x504xf32>
    %114 = tpu.matmul %112, %113, %cst_95 {dimension_numbers = #tpu.dot_dimension_numbers<[1], [0], [0], [1], [0, 0, 1, 1], [], []>} : vector<16x16xf32>, vector<16x504xf32>, vector<16x504xf32> -> vector<16x504xf32>
    %115 = arith.addf %111, %114 : vector<16x504xf32>
    %c160 = arith.constant 160 : index
    %c0_96 = arith.constant 0 : index
    %116 = vector.load %arg3[%c160, %c0_96] : memref<256x16xf32, #tpu.memory_space<vmem>>, vector<16x16xf32>
    %c0_97 = arith.constant 0 : index
    %c30_98 = arith.constant 30 : index
    %117 = vector.load %arg11[%c0_97, %c30_98] : memref<16x568xf32, #tpu.memory_space<vmem>>, vector<16x504xf32>
    %cst_99 = arith.constant dense<0.000000e+00> : vector<16x504xf32>
    %118 = tpu.matmul %116, %117, %cst_99 {dimension_numbers = #tpu.dot_dimension_numbers<[1], [0], [0], [1], [0, 0, 1, 1], [], []>} : vector<16x16xf32>, vector<16x504xf32>, vector<16x504xf32> -> vector<16x504xf32>
    %119 = arith.addf %115, %118 : vector<16x504xf32>
    %c176 = arith.constant 176 : index
    %c0_100 = arith.constant 0 : index
    %120 = vector.load %arg3[%c176, %c0_100] : memref<256x16xf32, #tpu.memory_space<vmem>>, vector<16x16xf32>
    %c0_101 = arith.constant 0 : index
    %c31 = arith.constant 31 : index
    %121 = vector.load %arg11[%c0_101, %c31] : memref<16x568xf32, #tpu.memory_space<vmem>>, vector<16x504xf32>
    %cst_102 = arith.constant dense<0.000000e+00> : vector<16x504xf32>
    %122 = tpu.matmul %120, %121, %cst_102 {dimension_numbers = #tpu.dot_dimension_numbers<[1], [0], [0], [1], [0, 0, 1, 1], [], []>} : vector<16x16xf32>, vector<16x504xf32>, vector<16x504xf32> -> vector<16x504xf32>
    %123 = arith.addf %119, %122 : vector<16x504xf32>
    %c192 = arith.constant 192 : index
    %c0_103 = arith.constant 0 : index
    %124 = vector.load %arg3[%c192, %c0_103] : memref<256x16xf32, #tpu.memory_space<vmem>>, vector<16x16xf32>
    %c0_104 = arith.constant 0 : index
    %c42 = arith.constant 42 : index
    %125 = vector.load %arg11[%c0_104, %c42] : memref<16x568xf32, #tpu.memory_space<vmem>>, vector<16x504xf32>
    %cst_105 = arith.constant dense<0.000000e+00> : vector<16x504xf32>
    %126 = tpu.matmul %124, %125, %cst_105 {dimension_numbers = #tpu.dot_dimension_numbers<[1], [0], [0], [1], [0, 0, 1, 1], [], []>} : vector<16x16xf32>, vector<16x504xf32>, vector<16x504xf32> -> vector<16x504xf32>
    %127 = arith.addf %123, %126 : vector<16x504xf32>
    %c208 = arith.constant 208 : index
    %c0_106 = arith.constant 0 : index
    %128 = vector.load %arg3[%c208, %c0_106] : memref<256x16xf32, #tpu.memory_space<vmem>>, vector<16x16xf32>
    %c0_107 = arith.constant 0 : index
    %c43 = arith.constant 43 : index
    %129 = vector.load %arg11[%c0_107, %c43] : memref<16x568xf32, #tpu.memory_space<vmem>>, vector<16x504xf32>
    %cst_108 = arith.constant dense<0.000000e+00> : vector<16x504xf32>
    %130 = tpu.matmul %128, %129, %cst_108 {dimension_numbers = #tpu.dot_dimension_numbers<[1], [0], [0], [1], [0, 0, 1, 1], [], []>} : vector<16x16xf32>, vector<16x504xf32>, vector<16x504xf32> -> vector<16x504xf32>
    %131 = arith.addf %127, %130 : vector<16x504xf32>
    %c224 = arith.constant 224 : index
    %c0_109 = arith.constant 0 : index
    %132 = vector.load %arg3[%c224, %c0_109] : memref<256x16xf32, #tpu.memory_space<vmem>>, vector<16x16xf32>
    %c0_110 = arith.constant 0 : index
    %c44 = arith.constant 44 : index
    %133 = vector.load %arg11[%c0_110, %c44] : memref<16x568xf32, #tpu.memory_space<vmem>>, vector<16x504xf32>
    %cst_111 = arith.constant dense<0.000000e+00> : vector<16x504xf32>
    %134 = tpu.matmul %132, %133, %cst_111 {dimension_numbers = #tpu.dot_dimension_numbers<[1], [0], [0], [1], [0, 0, 1, 1], [], []>} : vector<16x16xf32>, vector<16x504xf32>, vector<16x504xf32> -> vector<16x504xf32>
    %135 = arith.addf %131, %134 : vector<16x504xf32>
    %c240 = arith.constant 240 : index
    %c0_112 = arith.constant 0 : index
    %136 = vector.load %arg3[%c240, %c0_112] : memref<256x16xf32, #tpu.memory_space<vmem>>, vector<16x16xf32>
    %c0_113 = arith.constant 0 : index
    %c45 = arith.constant 45 : index
    %137 = vector.load %arg11[%c0_113, %c45] : memref<16x568xf32, #tpu.memory_space<vmem>>, vector<16x504xf32>
    %cst_114 = arith.constant dense<0.000000e+00> : vector<16x504xf32>
    %138 = tpu.matmul %136, %137, %cst_114 {dimension_numbers = #tpu.dot_dimension_numbers<[1], [0], [0], [1], [0, 0, 1, 1], [], []>} : vector<16x16xf32>, vector<16x504xf32>, vector<16x504xf32> -> vector<16x504xf32>
    %139 = arith.addf %135, %138 : vector<16x504xf32>
    %140 = vector.extract_strided_slice %0 {offsets = [0, 2], sizes = [16, 1], strides = [1, 1]} : vector<16x6xf32> to vector<16x1xf32>
    %141 = vector.extract_strided_slice %0 {offsets = [0, 3], sizes = [16, 1], strides = [1, 1]} : vector<16x6xf32> to vector<16x1xf32>
    %142 = vector.broadcast %3 : vector<1x504xf32> to vector<16x504xf32>
    %143 = arith.mulf %139, %142 : vector<16x504xf32>
    %cst_115 = arith.constant dense<0.000000e+00> : vector<16xf32>
    %144 = vector.multi_reduction <add>, %143, %cst_115 [1] : vector<16x504xf32> to vector<16xf32>
    %145 = vector.shape_cast %144 : vector<16xf32> to vector<16x1xf32>
    %cst_116 = arith.constant 0.010416667 : f32
    %146 = vector.broadcast %cst_116 : f32 to vector<16x1xf32>
    %147 = arith.mulf %145, %146 : vector<16x1xf32>
    %148 = vector.broadcast %147 : vector<16x1xf32> to vector<16x504xf32>
    %149 = arith.subf %139, %148 : vector<16x504xf32>
    %150 = vector.broadcast %3 : vector<1x504xf32> to vector<16x504xf32>
    %151 = arith.mulf %149, %150 : vector<16x504xf32>
    %152 = arith.mulf %151, %151 : vector<16x504xf32>
    %cst_117 = arith.constant dense<0.000000e+00> : vector<16xf32>
    %153 = vector.multi_reduction <add>, %152, %cst_117 [1] : vector<16x504xf32> to vector<16xf32>
    %154 = vector.shape_cast %153 : vector<16xf32> to vector<16x1xf32>
    %cst_118 = arith.constant 0.010416667 : f32
    %155 = vector.broadcast %cst_118 : f32 to vector<16x1xf32>
    %156 = arith.mulf %154, %155 : vector<16x1xf32>
    %cst_119 = arith.constant 9.99999974E-6 : f32
    %157 = vector.broadcast %cst_119 : f32 to vector<16x1xf32>
    %158 = arith.addf %156, %157 : vector<16x1xf32>
    %159 = math.rsqrt %158 : vector<16x1xf32>
    %160 = arith.mulf %140, %159 : vector<16x1xf32>
    %161 = arith.mulf %147, %160 : vector<16x1xf32>
    %162 = arith.subf %141, %161 : vector<16x1xf32>
    %163 = vector.broadcast %160 : vector<16x1xf32> to vector<16x504xf32>
    %164 = arith.mulf %139, %163 : vector<16x504xf32>
    %165 = vector.broadcast %162 : vector<16x1xf32> to vector<16x504xf32>
    %166 = arith.addf %164, %165 : vector<16x504xf32>
    %cst_120 = arith.constant 0.000000e+00 : f32
    %167 = vector.broadcast %cst_120 : f32 to vector<16x504xf32>
    %168 = arith.maximumf %166, %167 : vector<16x504xf32>
    %c0_121 = arith.constant 0 : index
    %c0_122 = arith.constant 0 : index
    %169 = vector.load %arg12[%c0_121, %c0_122] : memref<16x568xf32, #tpu.memory_space<vmem>>, vector<16x504xf32>
    tpu.vector_store %arg12[%c0_121, %c0_122], %168 {strides = array<i32>} : memref<16x568xf32, #tpu.memory_space<vmem>>, vector<16x504xf32>,
    %cst_123 = arith.constant 0.000000e+00 : f32
    %170 = vector.broadcast %cst_123 : f32 to vector<16x64xf32>
    %c0_124 = arith.constant 0 : index
    %c504_125 = arith.constant 504 : index
    %171 = vector.load %arg12[%c0_124, %c504_125] : memref<16x568xf32, #tpu.memory_space<vmem>>, vector<16x64xf32>
    tpu.vector_store %arg12[%c0_124, %c504_125], %170 {strides = array<i32>} : memref<16x568xf32, #tpu.memory_space<vmem>>, vector<16x64xf32>,
    %c0_126 = arith.constant 0 : index
    %c0_127 = arith.constant 0 : index
    %172 = vector.load %arg4[%c0_126, %c0_127] : memref<144x16xf32, #tpu.memory_space<vmem>>, vector<16x16xf32>
    %c0_128 = arith.constant 0 : index
    %c0_129 = arith.constant 0 : index
    %173 = vector.load %arg12[%c0_128, %c0_129] : memref<16x568xf32, #tpu.memory_space<vmem>>, vector<16x504xf32>
    %cst_130 = arith.constant dense<0.000000e+00> : vector<16x504xf32>
    %174 = tpu.matmul %172, %173, %cst_130 {dimension_numbers = #tpu.dot_dimension_numbers<[1], [0], [0], [1], [0, 0, 1, 1], [], []>} : vector<16x16xf32>, vector<16x504xf32>, vector<16x504xf32> -> vector<16x504xf32>
    %c16_131 = arith.constant 16 : index
    %c0_132 = arith.constant 0 : index
    %175 = vector.load %arg4[%c16_131, %c0_132] : memref<144x16xf32, #tpu.memory_space<vmem>>, vector<16x16xf32>
    %c0_133 = arith.constant 0 : index
    %c2_134 = arith.constant 2 : index
    %176 = vector.load %arg12[%c0_133, %c2_134] : memref<16x568xf32, #tpu.memory_space<vmem>>, vector<16x504xf32>
    %cst_135 = arith.constant dense<0.000000e+00> : vector<16x504xf32>
    %177 = tpu.matmul %175, %176, %cst_135 {dimension_numbers = #tpu.dot_dimension_numbers<[1], [0], [0], [1], [0, 0, 1, 1], [], []>} : vector<16x16xf32>, vector<16x504xf32>, vector<16x504xf32> -> vector<16x504xf32>
    %178 = arith.addf %174, %177 : vector<16x504xf32>
    %c32_136 = arith.constant 32 : index
    %c0_137 = arith.constant 0 : index
    %179 = vector.load %arg4[%c32_136, %c0_137] : memref<144x16xf32, #tpu.memory_space<vmem>>, vector<16x16xf32>
    %c0_138 = arith.constant 0 : index
    %c4 = arith.constant 4 : index
    %180 = vector.load %arg12[%c0_138, %c4] : memref<16x568xf32, #tpu.memory_space<vmem>>, vector<16x504xf32>
    %cst_139 = arith.constant dense<0.000000e+00> : vector<16x504xf32>
    %181 = tpu.matmul %179, %180, %cst_139 {dimension_numbers = #tpu.dot_dimension_numbers<[1], [0], [0], [1], [0, 0, 1, 1], [], []>} : vector<16x16xf32>, vector<16x504xf32>, vector<16x504xf32> -> vector<16x504xf32>
    %182 = arith.addf %178, %181 : vector<16x504xf32>
    %c48_140 = arith.constant 48 : index
    %c0_141 = arith.constant 0 : index
    %183 = vector.load %arg4[%c48_140, %c0_141] : memref<144x16xf32, #tpu.memory_space<vmem>>, vector<16x16xf32>
    %c0_142 = arith.constant 0 : index
    %c28_143 = arith.constant 28 : index
    %184 = vector.load %arg12[%c0_142, %c28_143] : memref<16x568xf32, #tpu.memory_space<vmem>>, vector<16x504xf32>
    %cst_144 = arith.constant dense<0.000000e+00> : vector<16x504xf32>
    %185 = tpu.matmul %183, %184, %cst_144 {dimension_numbers = #tpu.dot_dimension_numbers<[1], [0], [0], [1], [0, 0, 1, 1], [], []>} : vector<16x16xf32>, vector<16x504xf32>, vector<16x504xf32> -> vector<16x504xf32>
    %186 = arith.addf %182, %185 : vector<16x504xf32>
    %c64_145 = arith.constant 64 : index
    %c0_146 = arith.constant 0 : index
    %187 = vector.load %arg4[%c64_145, %c0_146] : memref<144x16xf32, #tpu.memory_space<vmem>>, vector<16x16xf32>
    %c0_147 = arith.constant 0 : index
    %c30_148 = arith.constant 30 : index
    %188 = vector.load %arg12[%c0_147, %c30_148] : memref<16x568xf32, #tpu.memory_space<vmem>>, vector<16x504xf32>
    %cst_149 = arith.constant dense<0.000000e+00> : vector<16x504xf32>
    %189 = tpu.matmul %187, %188, %cst_149 {dimension_numbers = #tpu.dot_dimension_numbers<[1], [0], [0], [1], [0, 0, 1, 1], [], []>} : vector<16x16xf32>, vector<16x504xf32>, vector<16x504xf32> -> vector<16x504xf32>
    %190 = arith.addf %186, %189 : vector<16x504xf32>
    %c80_150 = arith.constant 80 : index
    %c0_151 = arith.constant 0 : index
    %191 = vector.load %arg4[%c80_150, %c0_151] : memref<144x16xf32, #tpu.memory_space<vmem>>, vector<16x16xf32>
    %c0_152 = arith.constant 0 : index
    %c32_153 = arith.constant 32 : index
    %192 = vector.load %arg12[%c0_152, %c32_153] : memref<16x568xf32, #tpu.memory_space<vmem>>, vector<16x504xf32>
    %cst_154 = arith.constant dense<0.000000e+00> : vector<16x504xf32>
    %193 = tpu.matmul %191, %192, %cst_154 {dimension_numbers = #tpu.dot_dimension_numbers<[1], [0], [0], [1], [0, 0, 1, 1], [], []>} : vector<16x16xf32>, vector<16x504xf32>, vector<16x504xf32> -> vector<16x504xf32>
    %194 = arith.addf %190, %193 : vector<16x504xf32>
    %c96_155 = arith.constant 96 : index
    %c0_156 = arith.constant 0 : index
    %195 = vector.load %arg4[%c96_155, %c0_156] : memref<144x16xf32, #tpu.memory_space<vmem>>, vector<16x16xf32>
    %c0_157 = arith.constant 0 : index
    %c56 = arith.constant 56 : index
    %196 = vector.load %arg12[%c0_157, %c56] : memref<16x568xf32, #tpu.memory_space<vmem>>, vector<16x504xf32>
    %cst_158 = arith.constant dense<0.000000e+00> : vector<16x504xf32>
    %197 = tpu.matmul %195, %196, %cst_158 {dimension_numbers = #tpu.dot_dimension_numbers<[1], [0], [0], [1], [0, 0, 1, 1], [], []>} : vector<16x16xf32>, vector<16x504xf32>, vector<16x504xf32> -> vector<16x504xf32>
    %198 = arith.addf %194, %197 : vector<16x504xf32>
    %c112_159 = arith.constant 112 : index
    %c0_160 = arith.constant 0 : index
    %199 = vector.load %arg4[%c112_159, %c0_160] : memref<144x16xf32, #tpu.memory_space<vmem>>, vector<16x16xf32>
    %c0_161 = arith.constant 0 : index
    %c58 = arith.constant 58 : index
    %200 = vector.load %arg12[%c0_161, %c58] : memref<16x568xf32, #tpu.memory_space<vmem>>, vector<16x504xf32>
    %cst_162 = arith.constant dense<0.000000e+00> : vector<16x504xf32>
    %201 = tpu.matmul %199, %200, %cst_162 {dimension_numbers = #tpu.dot_dimension_numbers<[1], [0], [0], [1], [0, 0, 1, 1], [], []>} : vector<16x16xf32>, vector<16x504xf32>, vector<16x504xf32> -> vector<16x504xf32>
    %202 = arith.addf %198, %201 : vector<16x504xf32>
    %c128_163 = arith.constant 128 : index
    %c0_164 = arith.constant 0 : index
    %203 = vector.load %arg4[%c128_163, %c0_164] : memref<144x16xf32, #tpu.memory_space<vmem>>, vector<16x16xf32>
    %c0_165 = arith.constant 0 : index
    %c60 = arith.constant 60 : index
    %204 = vector.load %arg12[%c0_165, %c60] : memref<16x568xf32, #tpu.memory_space<vmem>>, vector<16x504xf32>
    %cst_166 = arith.constant dense<0.000000e+00> : vector<16x504xf32>
    %205 = tpu.matmul %203, %204, %cst_166 {dimension_numbers = #tpu.dot_dimension_numbers<[1], [0], [0], [1], [0, 0, 1, 1], [], []>} : vector<16x16xf32>, vector<16x504xf32>, vector<16x504xf32> -> vector<16x504xf32>
    %206 = arith.addf %202, %205 : vector<16x504xf32>
    %207 = vector.extract_strided_slice %0 {offsets = [0, 4], sizes = [16, 1], strides = [1, 1]} : vector<16x6xf32> to vector<16x1xf32>
    %208 = vector.extract_strided_slice %0 {offsets = [0, 5], sizes = [16, 1], strides = [1, 1]} : vector<16x6xf32> to vector<16x1xf32>
    %209 = vector.broadcast %4 : vector<1x504xf32> to vector<16x504xf32>
    %210 = arith.mulf %206, %209 : vector<16x504xf32>
    %cst_167 = arith.constant dense<0.000000e+00> : vector<16xf32>
    %211 = vector.multi_reduction <add>, %210, %cst_167 [1] : vector<16x504xf32> to vector<16xf32>
    %212 = vector.shape_cast %211 : vector<16xf32> to vector<16x1xf32>
    %cst_168 = arith.constant 0.020833334 : f32
    %213 = vector.broadcast %cst_168 : f32 to vector<16x1xf32>
    %214 = arith.mulf %212, %213 : vector<16x1xf32>
    %215 = vector.broadcast %214 : vector<16x1xf32> to vector<16x504xf32>
    %216 = arith.subf %206, %215 : vector<16x504xf32>
    %217 = vector.broadcast %4 : vector<1x504xf32> to vector<16x504xf32>
    %218 = arith.mulf %216, %217 : vector<16x504xf32>
    %219 = arith.mulf %218, %218 : vector<16x504xf32>
    %cst_169 = arith.constant dense<0.000000e+00> : vector<16xf32>
    %220 = vector.multi_reduction <add>, %219, %cst_169 [1] : vector<16x504xf32> to vector<16xf32>
    %221 = vector.shape_cast %220 : vector<16xf32> to vector<16x1xf32>
    %cst_170 = arith.constant 0.020833334 : f32
    %222 = vector.broadcast %cst_170 : f32 to vector<16x1xf32>
    %223 = arith.mulf %221, %222 : vector<16x1xf32>
    %cst_171 = arith.constant 9.99999974E-6 : f32
    %224 = vector.broadcast %cst_171 : f32 to vector<16x1xf32>
    %225 = arith.addf %223, %224 : vector<16x1xf32>
    %226 = math.rsqrt %225 : vector<16x1xf32>
    %227 = arith.mulf %207, %226 : vector<16x1xf32>
    %228 = arith.mulf %214, %227 : vector<16x1xf32>
    %229 = arith.subf %208, %228 : vector<16x1xf32>
    %230 = vector.broadcast %227 : vector<16x1xf32> to vector<16x504xf32>
    %231 = arith.mulf %206, %230 : vector<16x504xf32>
    %232 = vector.broadcast %229 : vector<16x1xf32> to vector<16x504xf32>
    %233 = arith.addf %231, %232 : vector<16x504xf32>
    %cst_172 = arith.constant 0.000000e+00 : f32
    %234 = vector.broadcast %cst_172 : f32 to vector<16x504xf32>
    %235 = arith.maximumf %233, %234 : vector<16x504xf32>
    %c0_173 = arith.constant 0 : index
    %c0_174 = arith.constant 0 : index
    %236 = vector.load %arg7[%c0_173, %c0_174] : memref<504x48xf32, #tpu.memory_space<vmem>>, vector<504x48xf32>
    %cst_175 = arith.constant dense<0.000000e+00> : vector<16x48xf32>
    %237 = tpu.matmul %235, %236, %cst_175 {dimension_numbers = #tpu.dot_dimension_numbers<[1], [0], [0], [1], [0, 0, 1, 1], [], []>} : vector<16x504xf32>, vector<504x48xf32>, vector<16x48xf32> -> vector<16x48xf32>
    %238 = vector.extract_strided_slice %237 {offsets = [0, 0], sizes = [16, 2], strides = [1, 1]} : vector<16x48xf32> to vector<16x2xf32>
    %239 = vector.extract_strided_slice %237 {offsets = [0, 2], sizes = [16, 2], strides = [1, 1]} : vector<16x48xf32> to vector<16x2xf32>
    %240 = vector.extract_strided_slice %237 {offsets = [0, 4], sizes = [16, 2], strides = [1, 1]} : vector<16x48xf32> to vector<16x2xf32>
    %241 = vector.extract_strided_slice %237 {offsets = [0, 6], sizes = [16, 2], strides = [1, 1]} : vector<16x48xf32> to vector<16x2xf32>
    %242 = vector.extract_strided_slice %237 {offsets = [0, 8], sizes = [16, 2], strides = [1, 1]} : vector<16x48xf32> to vector<16x2xf32>
    %243 = vector.extract_strided_slice %237 {offsets = [0, 10], sizes = [16, 2], strides = [1, 1]} : vector<16x48xf32> to vector<16x2xf32>
    %244 = vector.extract_strided_slice %237 {offsets = [0, 12], sizes = [16, 2], strides = [1, 1]} : vector<16x48xf32> to vector<16x2xf32>
    %245 = vector.extract_strided_slice %237 {offsets = [0, 14], sizes = [16, 2], strides = [1, 1]} : vector<16x48xf32> to vector<16x2xf32>
    %246 = vector.extract_strided_slice %237 {offsets = [0, 16], sizes = [16, 2], strides = [1, 1]} : vector<16x48xf32> to vector<16x2xf32>
    %247 = vector.extract_strided_slice %237 {offsets = [0, 18], sizes = [16, 2], strides = [1, 1]} : vector<16x48xf32> to vector<16x2xf32>
    %248 = vector.extract_strided_slice %237 {offsets = [0, 20], sizes = [16, 2], strides = [1, 1]} : vector<16x48xf32> to vector<16x2xf32>
    %249 = vector.extract_strided_slice %237 {offsets = [0, 22], sizes = [16, 2], strides = [1, 1]} : vector<16x48xf32> to vector<16x2xf32>
    %250 = vector.extract_strided_slice %237 {offsets = [0, 24], sizes = [16, 2], strides = [1, 1]} : vector<16x48xf32> to vector<16x2xf32>
    %251 = vector.extract_strided_slice %237 {offsets = [0, 26], sizes = [16, 2], strides = [1, 1]} : vector<16x48xf32> to vector<16x2xf32>
    %252 = vector.extract_strided_slice %237 {offsets = [0, 28], sizes = [16, 2], strides = [1, 1]} : vector<16x48xf32> to vector<16x2xf32>
    %253 = vector.extract_strided_slice %237 {offsets = [0, 30], sizes = [16, 2], strides = [1, 1]} : vector<16x48xf32> to vector<16x2xf32>
    %254 = vector.extract_strided_slice %237 {offsets = [0, 32], sizes = [16, 2], strides = [1, 1]} : vector<16x48xf32> to vector<16x2xf32>
    %255 = vector.extract_strided_slice %237 {offsets = [0, 34], sizes = [16, 2], strides = [1, 1]} : vector<16x48xf32> to vector<16x2xf32>
    %256 = vector.extract_strided_slice %237 {offsets = [0, 36], sizes = [16, 2], strides = [1, 1]} : vector<16x48xf32> to vector<16x2xf32>
    %257 = vector.extract_strided_slice %237 {offsets = [0, 38], sizes = [16, 2], strides = [1, 1]} : vector<16x48xf32> to vector<16x2xf32>
    %258 = vector.extract_strided_slice %237 {offsets = [0, 40], sizes = [16, 2], strides = [1, 1]} : vector<16x48xf32> to vector<16x2xf32>
    %259 = vector.extract_strided_slice %237 {offsets = [0, 42], sizes = [16, 2], strides = [1, 1]} : vector<16x48xf32> to vector<16x2xf32>
    %260 = vector.extract_strided_slice %237 {offsets = [0, 44], sizes = [16, 2], strides = [1, 1]} : vector<16x48xf32> to vector<16x2xf32>
    %261 = vector.extract_strided_slice %237 {offsets = [0, 46], sizes = [16, 2], strides = [1, 1]} : vector<16x48xf32> to vector<16x2xf32>
    %262 = tpu.concatenate %238, %239, %240, %241, %242, %243, %244, %245, %246, %247, %248, %249, %250, %251, %252, %253 in 0 : vector<16x2xf32>, vector<16x2xf32>, vector<16x2xf32>, vector<16x2xf32>, vector<16x2xf32>, vector<16x2xf32>, vector<16x2xf32>, vector<16x2xf32>, vector<16x2xf32>, vector<16x2xf32>, vector<16x2xf32>, vector<16x2xf32>, vector<16x2xf32>, vector<16x2xf32>, vector<16x2xf32>, vector<16x2xf32> -> vector<256x2xf32>
    %263 = tpu.concatenate %254, %255, %256, %257, %258, %259, %260, %261 in 0 : vector<16x2xf32>, vector<16x2xf32>, vector<16x2xf32>, vector<16x2xf32>, vector<16x2xf32>, vector<16x2xf32>, vector<16x2xf32>, vector<16x2xf32> -> vector<128x2xf32>
    %264 = tpu.concatenate %262, %263 in 0 : vector<256x2xf32>, vector<128x2xf32> -> vector<384x2xf32>
    %c0_176 = arith.constant 0 : index
    %c0_177 = arith.constant 0 : index
    %265 = vector.load %arg8[%c0_176, %c0_177] : memref<8x384xf32, #tpu.memory_space<vmem>>, vector<8x384xf32>
    %cst_178 = arith.constant dense<0.000000e+00> : vector<8x2xf32>
    %266 = tpu.matmul %265, %264, %cst_178 {dimension_numbers = #tpu.dot_dimension_numbers<[1], [0], [0], [1], [0, 0, 1, 1], [], []>} : vector<8x384xf32>, vector<384x2xf32>, vector<8x2xf32> -> vector<8x2xf32>
    %c0_179 = arith.constant 0 : index
    %c0_180 = arith.constant 0 : index
    %267 = vector.load %arg9[%c0_179, %c0_180] : memref<8x1xf32, #tpu.memory_space<vmem>>, vector<8x1xf32>
    %268 = vector.broadcast %267 : vector<8x1xf32> to vector<8x2xf32>
    %269 = arith.addf %266, %268 : vector<8x2xf32>
    %cst_181 = arith.constant dense<0xFF800000> : vector<2xf32>
    %270 = vector.multi_reduction <maximumf>, %269, %cst_181 [0] : vector<8x2xf32> to vector<2xf32>
    %271 = vector.shape_cast %270 : vector<2xf32> to vector<1x2xf32>
    %272 = vector.broadcast %271 : vector<1x2xf32> to vector<8x2xf32>
    %273 = arith.subf %269, %272 : vector<8x2xf32>
    %274 = math.exp %273 : vector<8x2xf32>
    %cst_182 = arith.constant dense<0.000000e+00> : vector<2xf32>
    %275 = vector.multi_reduction <add>, %274, %cst_182 [0] : vector<8x2xf32> to vector<2xf32>
    %276 = vector.shape_cast %275 : vector<2xf32> to vector<1x2xf32>
    %277 = vector.broadcast %276 : vector<1x2xf32> to vector<8x2xf32>
    %278 = arith.divf %274, %277 : vector<8x2xf32>
    %279 = tpu.transpose %278, [1, 0] : vector<8x2xf32> -> vector<2x8xf32>
    %c0_183 = arith.constant 0 : index
    %c0_184 = arith.constant 0 : index
    %280 = vector.load %arg10[%c0_183, %c0_184] : memref<2x8xf32, #tpu.memory_space<vmem>>, vector<2x8xf32>
    tpu.vector_store %arg10[%c0_183, %c0_184], %279 {strides = array<i32>} : memref<2x8xf32, #tpu.memory_space<vmem>>, vector<2x8xf32>,
    return
  }
  func.func @transform_0(%arg0: i32) -> (i32, i32) {
    %c0_i32 = arith.constant 0 : i32
    %c0_i32_0 = arith.constant 0 : i32
    %c0_i32_1 = arith.constant 0 : i32
    return %c0_i32, %c0_i32_0 : i32, i32
  }
  func.func @transform_1(%arg0: i32) -> (i32, i32) {
    %c0_i32 = arith.constant 0 : i32
    %c0_i32_0 = arith.constant 0 : i32
    %c0_i32_1 = arith.constant 0 : i32
    return %c0_i32, %c0_i32_0 : i32, i32
  }
  func.func @transform_2(%arg0: i32) -> (i32, i32) {
    %c0_i32 = arith.constant 0 : i32
    %c0_i32_0 = arith.constant 0 : i32
    %c0_i32_1 = arith.constant 0 : i32
    return %c0_i32, %c0_i32_0 : i32, i32
  }
  func.func @transform_3(%arg0: i32) -> (i32, i32) {
    %c0_i32 = arith.constant 0 : i32
    %c0_i32_0 = arith.constant 0 : i32
    %c0_i32_1 = arith.constant 0 : i32
    return %c0_i32, %c0_i32_0 : i32, i32
  }
  func.func @transform_4(%arg0: i32) -> (i32, i32) {
    %c0_i32 = arith.constant 0 : i32
    %c0_i32_0 = arith.constant 0 : i32
    %c0_i32_1 = arith.constant 0 : i32
    return %c0_i32, %c0_i32_0 : i32, i32
  }
  func.func @transform_5(%arg0: i32) -> (i32, i32) {
    %c0_i32 = arith.constant 0 : i32
    %c0_i32_0 = arith.constant 0 : i32
    %c0_i32_1 = arith.constant 0 : i32
    return %c0_i32, %c0_i32_0 : i32, i32
  }
  func.func @transform_6(%arg0: i32) -> (i32, i32) {
    %c0_i32 = arith.constant 0 : i32
    %c0_i32_0 = arith.constant 0 : i32
    %c0_i32_1 = arith.constant 0 : i32
    return %c0_i32, %c0_i32_0 : i32, i32
  }
  func.func @transform_7(%arg0: i32) -> (i32, i32) {
    %c0_i32 = arith.constant 0 : i32
    %c0_i32_0 = arith.constant 0 : i32
    %c0_i32_1 = arith.constant 0 : i32
    return %c0_i32, %c0_i32_0 : i32, i32
  }
  func.func @transform_8(%arg0: i32) -> (i32, i32) {
    %c0_i32 = arith.constant 0 : i32
    %c0_i32_0 = arith.constant 0 : i32
    %c0_i32_1 = arith.constant 0 : i32
    return %c0_i32, %c0_i32_0 : i32, i32
  }
  func.func @transform_9(%arg0: i32) -> (i32, i32) {
    %c0_i32 = arith.constant 0 : i32
    %c0_i32_0 = arith.constant 0 : i32
    %c0_i32_1 = arith.constant 0 : i32
    return %c0_i32, %c0_i32_0 : i32, i32
  }
}

</mosaic_0001>

<llo_original>
// kernel: forward.1
$region0: #{forward.1}
  #allocation0 [shape = 'u32[]', space=smem, size = 0x4, offset = 0x4, fixed_abs, tag = 'smem constant byte address 0x4 - core index']
  #allocation1 [shape = 'u32[144,128]{1,0:T(1,128)}', space=vmem, size = 0x12000, scoped, tag = 'internal scratch']
  #allocation2 [shape = 'f32[16,568]{1,0:T(8,128)}', space=vmem, size = 0xa000, scoped, tag = 'scratch operand']
  #allocation3 [shape = 'f32[16,568]{1,0:T(8,128)}', space=vmem, size = 0xa000, scoped, tag = 'scratch operand']
  %s0 = inlined_call_operand.vmem [shape: f32[4,568], index: 0, kind: input, shape index: {}]
  %s1 = inlined_call_operand.hbm [shape: f32[144,4], index: 1, kind: input, shape index: {}]
  %s2 = inlined_call_operand.vmem [shape: f32[256,16], index: 2, kind: input, shape index: {}]
  %s3 = inlined_call_operand.hbm [shape: f32[144,16], index: 3, kind: input, shape index: {}]
  %s4 = inlined_call_operand.vmem [shape: f32[16,6], index: 4, kind: input, shape index: {}]
  %s5 = inlined_call_operand.vmem [shape: f32[4,504], index: 5, kind: input, shape index: {}]
  %s6 = inlined_call_operand.vmem [shape: f32[504,48], index: 6, kind: input, shape index: {}]
  %s7 = inlined_call_operand.vmem [shape: f32[8,384], index: 7, kind: input, shape index: {}]
  %s8 = inlined_call_operand.vmem [shape: f32[8,1], index: 8, kind: input, shape index: {}]
  %s9 = inlined_call_operand.hbm [shape: f32[2,8], index: 9, kind: output, shape index: {}]
  %s10 = sld [smem:[#allocation0]]
  $region54: #{forward.1} parent=0
    _
  %s12 = ssub.s32 1, %s10
  %s13 = scalar_select 0, %s12, %s10
  $region1: #{forward.1} parent=0
    #allocation4 [shape = 'u8[73728]{0}', space=vmem, size = 0x12000, scoped, tag = 'input window, operand 1, single buffered']
    #allocation5 [shape = 's32[1]{0}', space=sflag, size = 0x4, scoped, tag = 'scoped memory for forward.1']
    #allocation6 [shape = 's32[1]{0}', space=sflag, size = 0x4, scoped, tag = 'scoped memory for forward.1']
    #allocation7 [shape = 'u8[73728]{0}', space=vmem, size = 0x12000, scoped, tag = 'input window, operand 3, single buffered']
    #allocation8 [shape = 's32[1]{0}', space=sflag, size = 0x4, scoped, tag = 'scoped memory for forward.1']
    #allocation9 [shape = 'u8[1024]{0}', space=vmem, size = 0x400, scoped, tag = 'output window, operand 0, single buffered']
    %14 = vsyncpa [#allocation5], 0
    %15 = vsyncpa [#allocation8], 0
    %16 = vsyncpa [#allocation6], 0
    // Predicated region
    $region2: #{forward.1} parent=1 // pred_check
      _
    $region3: #{forward.1} parent=1 // pred_check_branch
      %18 = sbr.rel (0) target = $region5
    $region4: #{forward.1} parent=1 // pred_region
      _
    $region5: #{forward.1} parent=1 // pred_fallthru
      _
    // Predicated region
    $region6: #{forward.1} parent=1 // pred_check
      _
    $region7: #{forward.1} parent=1 // pred_check_branch
      %20 = sbr.rel (0) target = $region9
    $region8: #{forward.1} parent=1 // pred_region
      %s22 = ssub.s32 2304, 2304
      %23 = vsyncadd [#allocation5], %s22
      %s24 = sshll.u32 [#allocation4], 4
      %s25 = int_to_ptr.vmem [resolvable:$true] %s24
      %30 = dma.hbm_to_vmem [thread:$0]  %s1, 2304, %s25, [#allocation5], 128, 128, 8
    $region9: #{forward.1} parent=1 // pred_fallthru
      _
    // Predicated region
    $region10: #{forward.1} parent=1 // pred_check
      _
    $region11: #{forward.1} parent=1 // pred_check_branch
      %32 = sbr.rel (0) target = $region13
    $region12: #{forward.1} parent=1 // pred_region
      _
    $region13: #{forward.1} parent=1 // pred_fallthru
      _
    // Predicated region
    $region14: #{forward.1} parent=1 // pred_check
      _
    $region15: #{forward.1} parent=1 // pred_check_branch
      %34 = sbr.rel (0) target = $region17
    $region16: #{forward.1} parent=1 // pred_region
      %s36 = ssub.s32 2304, 2304
      %37 = vsyncadd [#allocation8], %s36
      %s38 = sshll.u32 [#allocation7], 4
      %s39 = int_to_ptr.vmem [resolvable:$true] %s38
      %44 = dma.hbm_to_vmem [thread:$0]  %s3, 2304, %s39, [#allocation8], 128, 128, 8
    $region17: #{forward.1} parent=1 // pred_fallthru
      _
    // Predicated region
    $region18: #{forward.1} parent=1 // pred_check
      _
    $region19: #{forward.1} parent=1 // pred_check_branch
      %46 = sbr.rel (0) target = $region21
    $region20: #{forward.1} parent=1 // pred_region
      _
    $region21: #{forward.1} parent=1 // pred_fallthru
      _
    // Predicated region
    $region22: #{forward.1} parent=1 // pred_check
      _
    $region23: #{forward.1} parent=1 // pred_check_branch
      %48 = sbr.rel (0) target = $region25
    $region24: #{forward.1} parent=1 // pred_region
      _
    $region25: #{forward.1} parent=1 // pred_fallthru
      _
    // Predicated region
    $region26: #{forward.1} parent=1 // pred_check
      _
    $region27: #{forward.1} parent=1 // pred_check_branch
      %50 = sbr.rel (0) target = $region29
    $region28: #{forward.1} parent=1 // pred_region
      _
    $region29: #{forward.1} parent=1 // pred_fallthru
      _
    // Predicated region
    $region30: #{forward.1} parent=1 // pred_check
      _
    $region31: #{forward.1} parent=1 // pred_check_branch
      %52 = sbr.rel (0) target = $region33
    $region32: #{forward.1} parent=1 // pred_region
      _
    $region33: #{forward.1} parent=1 // pred_fallthru
      _
    // Predicated region
    $region34: #{forward.1} parent=1 // pred_check
      _
    $region35: #{forward.1} parent=1 // pred_check_branch
      %54 = sbr.rel (0) target = $region37
    $region36: #{forward.1} parent=1 // pred_region
      _
    $region37: #{forward.1} parent=1 // pred_fallthru
      _
    // Predicated region
    $region38: #{forward.1} parent=1 // pred_check
      _
    $region39: #{forward.1} parent=1 // pred_check_branch
      %56 = sbr.rel (0) target = $region41
    $region40: #{forward.1} parent=1 // pred_region
      %57 = dma.done [#allocation5], 2304
    $region41: #{forward.1} parent=1 // pred_fallthru
      _
    // Predicated region
    $region42: #{forward.1} parent=1 // pred_check
      _
    $region43: #{forward.1} parent=1 // pred_check_branch
      %59 = sbr.rel (0) target = $region45
    $region44: #{forward.1} parent=1 // pred_region
      %60 = dma.done [#allocation8], 2304
    $region45: #{forward.1} parent=1 // pred_fallthru
      _
    %v61 = vld [vmem:[%s4] sm:$0xff]
    %v62 = vld [vmem:[%s4 + $0x8] sm:$0xff]
    %v63 = vld [vmem:[%s5] ss:$4 sm:$0xf]
    %s64 = scalar_lea.vmem %s5, 1
    %v65 = vld [vmem:[%s64] ss:$4 sm:$0xf]
    %s66 = scalar_lea.vmem %s5, 2
    %v67 = vld [vmem:[%s66] ss:$4 sm:$0xf]
    %s68 = scalar_lea.vmem %s5, 3
    %v69 = vld [vmem:[%s68] ss:$4 sm:$0xf]
    %v70 = vld [vmem:[#allocation4] sm:$0xff]
    %v71 = vld [vmem:[#allocation4 + $0x8] sm:$0xff]
    %v72 = vld [vmem:[%s0] sm:$0xff]
    %v73 = vld [vmem:[%s0 + $0x8] sm:$0xff]
    %v74 = vld [vmem:[#allocation4 + $0x10] sm:$0xff]
    %v75 = vld [vmem:[#allocation4 + $0x18] sm:$0xff]
    %v78 = vcombine.high %v72, %v72
    %v79 = vcombine.high %v73, %v73
    %80 = vrot.lane.b32.xlu0 %v72, 127
    %v81 = vpop.permute.xlu0 %80
    %82 = vrot.lane.b32.xlu0 %v78, 127
    %v83 = vpop.permute.xlu0 %82
    %84 = vrot.lane.b32.xlu0 %v73, 127
    %v85 = vpop.permute.xlu0 %84
    %86 = vrot.lane.b32.xlu0 %v79, 127
    %v87 = vpop.permute.xlu0 %86
    %vm88 = vcmask 1039360
    %v89 = vsel %vm88, %v81, %v83
    %v90 = vsel %vm88, %v83, %v85
    %v91 = vsel %vm88, %v85, %v87
    %vm92 = vcmask 31744
    %v94 = vsel %vm92, %v74, 0
    %v97 = vsel %vm92, %v75, 0
    %vm99 = vcmask 1043456
    %v100 = vsel %vm99, %v89, 0
    %v102 = vsel %vm99, %v90, 0
    %v104 = vsel %vm99, %v91, 0
    %v106 = vsel %vm99, %v87, 0
    %108 = vmatprep.subr.mxu0 %v102
    %109 = vmatpush1.msra.mxu0 %v100
    %110 = vmatprep.subr.mxu0 0.0
    %111 = vmatpush1.msra.mxu0 0.0
    %112 = vmatprep.subr.mxu0 0.0
    %113 = vmatpush1.msra.mxu0 0.0
    %114 = vmatprep.subr.mxu0 0.0
    %115 = vmatpush1.msra.mxu0 0.0
    %116 = vmatprep.subr.mxu0 0.0
    %117 = vmatpush1.msra.mxu0 0.0
    %118 = vmatprep.subr.mxu0 0.0
    %119 = vmatpush1.msra.mxu0 0.0
    %120 = vmatprep.subr.mxu0 0.0
    %121 = vmatpush1.msra.mxu0 0.0
    %122 = vmatprep.subr.mxu0 0.0
    %123 = vmatpush1.msra.mxu0 0.0
    %124 = vmatprep.subr.mxu0 0.0
    %125 = vmatpush1.msra.mxu0 0.0
    %126 = vmatprep.subr.mxu0 0.0
    %127 = vmatpush1.msra.mxu0 0.0
    %128 = vmatprep.subr.mxu0 0.0
    %129 = vmatpush1.msra.mxu0 0.0
    %130 = vmatprep.subr.mxu0 0.0
    %131 = vmatpush1.msra.mxu0 0.0
    %132 = vmatprep.subr.mxu0 0.0
    %133 = vmatpush1.msra.mxu0 0.0
    %134 = vmatprep.subr.mxu0 0.0
    %135 = vmatpush1.msra.mxu0 0.0
    %136 = vmatprep.subr.mxu0 0.0
    %137 = vmatpush1.msra.mxu0 0.0
    %138 = vmatprep.subr.mxu0 0.0
    %139 = vmatpush1.msra.mxu0 0.0
    %140 = vmatprep.subr.mxu0 0.0
    %141 = vmatpush1.msra.mxu0 0.0
    %142 = vmatprep.subr.mxu0 0.0
    %143 = vmatpush1.msra.mxu0 0.0
    %144 = vmatprep.subr.mxu0 0.0
    %145 = vmatpush1.msra.mxu0 0.0
    %146 = vmatprep.subr.mxu0 0.0
    %147 = vmatpush1.msra.mxu0 0.0
    %148 = vmatprep.subr.mxu0 0.0
    %149 = vmatpush1.msra.mxu0 0.0
    %150 = vmatprep.subr.mxu0 0.0
    %151 = vmatpush1.msra.mxu0 0.0
    %152 = vmatprep.subr.mxu0 0.0
    %153 = vmatpush1.msra.mxu0 0.0
    %154 = vmatprep.subr.mxu0 0.0
    %155 = vmatpush1.msra.mxu0 0.0
    %156 = vmatprep.subr.mxu0 0.0
    %157 = vmatpush1.msra.mxu0 0.0
    %158 = vmatprep.subr.mxu0 0.0
    %159 = vmatpush1.msra.mxu0 0.0
    %160 = vmatprep.subr.mxu0 0.0
    %161 = vmatpush1.msra.mxu0 0.0
    %162 = vmatprep.subr.mxu0 0.0
    %163 = vmatpush1.msra.mxu0 0.0
    %164 = vmatprep.subr.mxu0 0.0
    %165 = vmatpush1.msra.mxu0 0.0
    %166 = vmatprep.subr.mxu0 0.0
    %167 = vmatpush1.msra.mxu0 0.0
    %168 = vmatprep.subr.mxu0 0.0
    %169 = vmatpush1.msra.mxu0 0.0
    %170 = vmatprep.subr.mxu0 0.0
    %171 = vmatpush1.msra.mxu0 0.0
    %172 = vmatprep.mubr.f32.mxu0 0.0
    %173 = vmatmul.mubr.f32.gmra.mrb[0].mxu0 %v94
    %v174 = vpop.f32.mrb[0].mxu0
    %v175 = vadd.f32 0.0, %v174
    %v176 = vpop.f32.mrb[0].mxu0
    %v177 = vadd.f32 0.0, %v176
    %178 = vmatprep.mubr.f32.mxu0 0.0
    %179 = vmatmul.mubr.f32.gmra.mrb[0].mxu0 %v97
    %v180 = vpop.f32.mrb[0].mxu0
    %v181 = vadd.f32 0.0, %v180
    %v182 = vpop.f32.mrb[0].mxu0
    %v183 = vadd.f32 0.0, %v182
    %184 = vdwg.mxu0
    %185 = vmatprep.subr.mxu0 %v106
    %186 = vmatpush1.msra.mxu0 %v104
    %187 = vmatprep.subr.mxu0 0.0
    %188 = vmatpush1.msra.mxu0 0.0
    %189 = vmatprep.subr.mxu0 0.0
    %190 = vmatpush1.msra.mxu0 0.0
    %191 = vmatprep.subr.mxu0 0.0
    %192 = vmatpush1.msra.mxu0 0.0
    %193 = vmatprep.subr.mxu0 0.0
    %194 = vmatpush1.msra.mxu0 0.0
    %195 = vmatprep.subr.mxu0 0.0
    %196 = vmatpush1.msra.mxu0 0.0
    %197 = vmatprep.subr.mxu0 0.0
    %198 = vmatpush1.msra.mxu0 0.0
    %199 = vmatprep.subr.mxu0 0.0
    %200 = vmatpush1.msra.mxu0 0.0
    %201 = vmatprep.subr.mxu0 0.0
    %202 = vmatpush1.msra.mxu0 0.0
    %203 = vmatprep.subr.mxu0 0.0
    %204 = vmatpush1.msra.mxu0 0.0
    %205 = vmatprep.subr.mxu0 0.0
    %206 = vmatpush1.msra.mxu0 0.0
    %207 = vmatprep.subr.mxu0 0.0
    %208 = vmatpush1.msra.mxu0 0.0
    %209 = vmatprep.subr.mxu0 0.0
    %210 = vmatpush1.msra.mxu0 0.0
    %211 = vmatprep.subr.mxu0 0.0
    %212 = vmatpush1.msra.mxu0 0.0
    %213 = vmatprep.subr.mxu0 0.0
    %214 = vmatpush1.msra.mxu0 0.0
    %215 = vmatprep.subr.mxu0 0.0
    %216 = vmatpush1.msra.mxu0 0.0
    %217 = vmatprep.subr.mxu0 0.0
    %218 = vmatpush1.msra.mxu0 0.0
    %219 = vmatprep.subr.mxu0 0.0
    %220 = vmatpush1.msra.mxu0 0.0
    %221 = vmatprep.subr.mxu0 0.0
    %222 = vmatpush1.msra.mxu0 0.0
    %223 = vmatprep.subr.mxu0 0.0
    %224 = vmatpush1.msra.mxu0 0.0
    %225 = vmatprep.subr.mxu0 0.0
    %226 = vmatpush1.msra.mxu0 0.0
    %227 = vmatprep.subr.mxu0 0.0
    %228 = vmatpush1.msra.mxu0 0.0
    %229 = vmatprep.subr.mxu0 0.0
    %230 = vmatpush1.msra.mxu0 0.0
    %231 = vmatprep.subr.mxu0 0.0
    %232 = vmatpush1.msra.mxu0 0.0
    %233 = vmatprep.subr.mxu0 0.0
    %234 = vmatpush1.msra.mxu0 0.0
    %235 = vmatprep.subr.mxu0 0.0
    %236 = vmatpush1.msra.mxu0 0.0
    %237 = vmatprep.subr.mxu0 0.0
    %238 = vmatpush1.msra.mxu0 0.0
    %239 = vmatprep.subr.mxu0 0.0
    %240 = vmatpush1.msra.mxu0 0.0
    %241 = vmatprep.subr.mxu0 0.0
    %242 = vmatpush1.msra.mxu0 0.0
    %243 = vmatprep.subr.mxu0 0.0
    %244 = vmatpush1.msra.mxu0 0.0
    %245 = vmatprep.subr.mxu0 0.0
    %246 = vmatpush1.msra.mxu0 0.0
    %247 = vmatprep.subr.mxu0 0.0
    %248 = vmatpush1.msra.mxu0 0.0
    %249 = vmatprep.mubr.f32.mxu0 0.0
    %250 = vmatmul.mubr.f32.gmra.mrb[0].mxu0 %v94
    %v251 = vpop.f32.mrb[0].mxu0
    %v252 = vadd.f32 0.0, %v251
    %v253 = vpop.f32.mrb[0].mxu0
    %v254 = vadd.f32 0.0, %v253
    %255 = vmatprep.mubr.f32.mxu0 0.0
    %256 = vmatmul.mubr.f32.gmra.mrb[0].mxu0 %v97
    %v257 = vpop.f32.mrb[0].mxu0
    %v258 = vadd.f32 0.0, %v257
    %v259 = vpop.f32.mrb[0].mxu0
    %v260 = vadd.f32 0.0, %v259
    %261 = vdwg.mxu0
    %v263 = vsel %vm92, %v70, 0
    %v266 = vsel %vm92, %v71, 0
    %v268 = vsel %vm99, %v72, 0
    %v270 = vsel %vm99, %v78, 0
    %v272 = vsel %vm99, %v73, 0
    %v274 = vsel %vm99, %v79, 0
    %276 = vmatprep.subr.mxu0 %v270
    %277 = vmatpush1.msra.mxu0 %v268
    %278 = vmatprep.subr.mxu0 0.0
    %279 = vmatpush1.msra.mxu0 0.0
    %280 = vmatprep.subr.mxu0 0.0
    %281 = vmatpush1.msra.mxu0 0.0
    %282 = vmatprep.subr.mxu0 0.0
    %283 = vmatpush1.msra.mxu0 0.0
    %284 = vmatprep.subr.mxu0 0.0
    %285 = vmatpush1.msra.mxu0 0.0
    %286 = vmatprep.subr.mxu0 0.0
    %287 = vmatpush1.msra.mxu0 0.0
    %288 = vmatprep.subr.mxu0 0.0
    %289 = vmatpush1.msra.mxu0 0.0
    %290 = vmatprep.subr.mxu0 0.0
    %291 = vmatpush1.msra.mxu0 0.0
    %292 = vmatprep.subr.mxu0 0.0
    %293 = vmatpush1.msra.mxu0 0.0
    %294 = vmatprep.subr.mxu0 0.0
    %295 = vmatpush1.msra.mxu0 0.0
    %296 = vmatprep.subr.mxu0 0.0
    %297 = vmatpush1.msra.mxu0 0.0
    %298 = vmatprep.subr.mxu0 0.0
    %299 = vmatpush1.msra.mxu0 0.0
    %300 = vmatprep.subr.mxu0 0.0
    %301 = vmatpush1.msra.mxu0 0.0
    %302 = vmatprep.subr.mxu0 0.0
    %303 = vmatpush1.msra.mxu0 0.0
    %304 = vmatprep.subr.mxu0 0.0
    %305 = vmatpush1.msra.mxu0 0.0
    %306 = vmatprep.subr.mxu0 0.0
    %307 = vmatpush1.msra.mxu0 0.0
    %308 = vmatprep.subr.mxu0 0.0
    %309 = vmatpush1.msra.mxu0 0.0
    %310 = vmatprep.subr.mxu0 0.0
    %311 = vmatpush1.msra.mxu0 0.0
    %312 = vmatprep.subr.mxu0 0.0
    %313 = vmatpush1.msra.mxu0 0.0
    %314 = vmatprep.subr.mxu0 0.0
    %315 = vmatpush1.msra.mxu0 0.0
    %316 = vmatprep.subr.mxu0 0.0
    %317 = vmatpush1.msra.mxu0 0.0
    %318 = vmatprep.subr.mxu0 0.0
    %319 = vmatpush1.msra.mxu0 0.0
    %320 = vmatprep.subr.mxu0 0.0
    %321 = vmatpush1.msra.mxu0 0.0
    %322 = vmatprep.subr.mxu0 0.0
    %323 = vmatpush1.msra.mxu0 0.0
    %324 = vmatprep.subr.mxu0 0.0
    %325 = vmatpush1.msra.mxu0 0.0
    %326 = vmatprep.subr.mxu0 0.0
    %327 = vmatpush1.msra.mxu0 0.0
    %328 = vmatprep.subr.mxu0 0.0
    %329 = vmatpush1.msra.mxu0 0.0
    %330 = vmatprep.subr.mxu0 0.0
    %331 = vmatpush1.msra.mxu0 0.0
    %332 = vmatprep.subr.mxu0 0.0
    %333 = vmatpush1.msra.mxu0 0.0
    %334 = vmatprep.subr.mxu0 0.0
    %335 = vmatpush1.msra.mxu0 0.0
    %336 = vmatprep.subr.mxu0 0.0
    %337 = vmatpush1.msra.mxu0 0.0
    %338 = vmatprep.subr.mxu0 0.0
    %339 = vmatpush1.msra.mxu0 0.0
    %340 = vmatprep.mubr.f32.mxu0 0.0
    %341 = vmatmul.mubr.f32.gmra.mrb[0].mxu0 %v263
    %v342 = vpop.f32.mrb[0].mxu0
    %v343 = vadd.f32 %v175, %v342
    %v344 = vpop.f32.mrb[0].mxu0
    %v345 = vadd.f32 %v177, %v344
    %346 = vmatprep.mubr.f32.mxu0 0.0
    %347 = vmatmul.mubr.f32.gmra.mrb[0].mxu0 %v266
    %v348 = vpop.f32.mrb[0].mxu0
    %v349 = vadd.f32 %v181, %v348
    %v350 = vpop.f32.mrb[0].mxu0
    %v351 = vadd.f32 %v183, %v350
    %352 = vdwg.mxu0
    %353 = vmatprep.subr.mxu0 %v274
    %354 = vmatpush1.msra.mxu0 %v272
    %355 = vmatprep.subr.mxu0 0.0
    %356 = vmatpush1.msra.mxu0 0.0
    %357 = vmatprep.subr.mxu0 0.0
    %358 = vmatpush1.msra.mxu0 0.0
    %359 = vmatprep.subr.mxu0 0.0
    %360 = vmatpush1.msra.mxu0 0.0
    %361 = vmatprep.subr.mxu0 0.0
    %362 = vmatpush1.msra.mxu0 0.0
    %363 = vmatprep.subr.mxu0 0.0
    %364 = vmatpush1.msra.mxu0 0.0
    %365 = vmatprep.subr.mxu0 0.0
    %366 = vmatpush1.msra.mxu0 0.0
    %367 = vmatprep.subr.mxu0 0.0
    %368 = vmatpush1.msra.mxu0 0.0
    %369 = vmatprep.subr.mxu0 0.0
    %370 = vmatpush1.msra.mxu0 0.0
    %371 = vmatprep.subr.mxu0 0.0
    %372 = vmatpush1.msra.mxu0 0.0
    %373 = vmatprep.subr.mxu0 0.0
    %374 = vmatpush1.msra.mxu0 0.0
    %375 = vmatprep.subr.mxu0 0.0
    %376 = vmatpush1.msra.mxu0 0.0
    %377 = vmatprep.subr.mxu0 0.0
    %378 = vmatpush1.msra.mxu0 0.0
    %379 = vmatprep.subr.mxu0 0.0
    %380 = vmatpush1.msra.mxu0 0.0
    %381 = vmatprep.subr.mxu0 0.0
    %382 = vmatpush1.msra.mxu0 0.0
    %383 = vmatprep.subr.mxu0 0.0
    %384 = vmatpush1.msra.mxu0 0.0
    %385 = vmatprep.subr.mxu0 0.0
    %386 = vmatpush1.msra.mxu0 0.0
    %387 = vmatprep.subr.mxu0 0.0
    %388 = vmatpush1.msra.mxu0 0.0
    %389 = vmatprep.subr.mxu0 0.0
    %390 = vmatpush1.msra.mxu0 0.0
    %391 = vmatprep.subr.mxu0 0.0
    %392 = vmatpush1.msra.mxu0 0.0
    %393 = vmatprep.subr.mxu0 0.0
    %394 = vmatpush1.msra.mxu0 0.0
    %395 = vmatprep.subr.mxu0 0.0
    %396 = vmatpush1.msra.mxu0 0.0
    %397 = vmatprep.subr.mxu0 0.0
    %398 = vmatpush1.msra.mxu0 0.0
    %399 = vmatprep.subr.mxu0 0.0
    %400 = vmatpush1.msra.mxu0 0.0
    %401 = vmatprep.subr.mxu0 0.0
    %402 = vmatpush1.msra.mxu0 0.0
    %403 = vmatprep.subr.mxu0 0.0
    %404 = vmatpush1.msra.mxu0 0.0
    %405 = vmatprep.subr.mxu0 0.0
    %406 = vmatpush1.msra.mxu0 0.0
    %407 = vmatprep.subr.mxu0 0.0
    %408 = vmatpush1.msra.mxu0 0.0
    %409 = vmatprep.subr.mxu0 0.0
    %410 = vmatpush1.msra.mxu0 0.0
    %411 = vmatprep.subr.mxu0 0.0
    %412 = vmatpush1.msra.mxu0 0.0
    %413 = vmatprep.subr.mxu0 0.0
    %414 = vmatpush1.msra.mxu0 0.0
    %415 = vmatprep.subr.mxu0 0.0
    %416 = vmatpush1.msra.mxu0 0.0
    %417 = vmatprep.mubr.f32.mxu0 0.0
    %418 = vmatmul.mubr.f32.gmra.mrb[0].mxu0 %v263
    %v419 = vpop.f32.mrb[0].mxu0
    %v420 = vadd.f32 %v252, %v419
    %v421 = vpop.f32.mrb[0].mxu0
    %v422 = vadd.f32 %v254, %v421
    %423 = vmatprep.mubr.f32.mxu0 0.0
    %424 = vmatmul.mubr.f32.gmra.mrb[0].mxu0 %v266
    %v425 = vpop.f32.mrb[0].mxu0
    %v426 = vadd.f32 %v258, %v425
    %v427 = vpop.f32.mrb[0].mxu0
    %v428 = vadd.f32 %v260, %v427
    %429 = vdwg.mxu0
    %v430 = vld [vmem:[#allocation4 + $0x20] sm:$0xff]
    %v431 = vld [vmem:[#allocation4 + $0x28] sm:$0xff]
    %v432 = vld [vmem:[%s0] sm:$0xff]
    %v433 = vld [vmem:[%s0 + $0x8] sm:$0xff]
    %v436 = vcombine.high %v432, %v432
    %v437 = vcombine.high %v433, %v433
    %438 = vrot.lane.b32.xlu0 %v432, 126
    %v439 = vpop.permute.xlu0 %438
    %440 = vrot.lane.b32.xlu0 %v436, 126
    %v441 = vpop.permute.xlu0 %440
    %442 = vrot.lane.b32.xlu0 %v433, 126
    %v443 = vpop.permute.xlu0 %442
    %444 = vrot.lane.b32.xlu0 %v437, 126
    %v445 = vpop.permute.xlu0 %444
    %vm446 = vcmask 1031168
    %v447 = vsel %vm446, %v439, %v441
    %v448 = vsel %vm446, %v441, %v443
    %v449 = vsel %vm446, %v443, %v445
    %v451 = vsel %vm92, %v430, 0
    %v454 = vsel %vm92, %v431, 0
    %v456 = vsel %vm99, %v447, 0
    %v458 = vsel %vm99, %v448, 0
    %v460 = vsel %vm99, %v449, 0
    %v462 = vsel %vm99, %v445, 0
    %464 = vmatprep.subr.mxu0 %v458
    %465 = vmatpush1.msra.mxu0 %v456
    %466 = vmatprep.subr.mxu0 0.0
    %467 = vmatpush1.msra.mxu0 0.0
    %468 = vmatprep.subr.mxu0 0.0
    %469 = vmatpush1.msra.mxu0 0.0
    %470 = vmatprep.subr.mxu0 0.0
    %471 = vmatpush1.msra.mxu0 0.0
    %472 = vmatprep.subr.mxu0 0.0
    %473 = vmatpush1.msra.mxu0 0.0
    %474 = vmatprep.subr.mxu0 0.0
    %475 = vmatpush1.msra.mxu0 0.0
    %476 = vmatprep.subr.mxu0 0.0
    %477 = vmatpush1.msra.mxu0 0.0
    %478 = vmatprep.subr.mxu0 0.0
    %479 = vmatpush1.msra.mxu0 0.0
    %480 = vmatprep.subr.mxu0 0.0
    %481 = vmatpush1.msra.mxu0 0.0
    %482 = vmatprep.subr.mxu0 0.0
    %483 = vmatpush1.msra.mxu0 0.0
    %484 = vmatprep.subr.mxu0 0.0
    %485 = vmatpush1.msra.mxu0 0.0
    %486 = vmatprep.subr.mxu0 0.0
    %487 = vmatpush1.msra.mxu0 0.0
    %488 = vmatprep.subr.mxu0 0.0
    %489 = vmatpush1.msra.mxu0 0.0
    %490 = vmatprep.subr.mxu0 0.0
    %491 = vmatpush1.msra.mxu0 0.0
    %492 = vmatprep.subr.mxu0 0.0
    %493 = vmatpush1.msra.mxu0 0.0
    %494 = vmatprep.subr.mxu0 0.0
    %495 = vmatpush1.msra.mxu0 0.0
    %496 = vmatprep.subr.mxu0 0.0
    %497 = vmatpush1.msra.mxu0 0.0
    %498 = vmatprep.subr.mxu0 0.0
    %499 = vmatpush1.msra.mxu0 0.0
    %500 = vmatprep.subr.mxu0 0.0
    %501 = vmatpush1.msra.mxu0 0.0
    %502 = vmatprep.subr.mxu0 0.0
    %503 = vmatpush1.msra.mxu0 0.0
    %504 = vmatprep.subr.mxu0 0.0
    %505 = vmatpush1.msra.mxu0 0.0
    %506 = vmatprep.subr.mxu0 0.0
    %507 = vmatpush1.msra.mxu0 0.0
    %508 = vmatprep.subr.mxu0 0.0
    %509 = vmatpush1.msra.mxu0 0.0
    %510 = vmatprep.subr.mxu0 0.0
    %511 = vmatpush1.msra.mxu0 0.0
    %512 = vmatprep.subr.mxu0 0.0
    %513 = vmatpush1.msra.mxu0 0.0
    %514 = vmatprep.subr.mxu0 0.0
    %515 = vmatpush1.msra.mxu0 0.0
    %516 = vmatprep.subr.mxu0 0.0
    %517 = vmatpush1.msra.mxu0 0.0
    %518 = vmatprep.subr.mxu0 0.0
    %519 = vmatpush1.msra.mxu0 0.0
    %520 = vmatprep.subr.mxu0 0.0
    %521 = vmatpush1.msra.mxu0 0.0
    %522 = vmatprep.subr.mxu0 0.0
    %523 = vmatpush1.msra.mxu0 0.0
    %524 = vmatprep.subr.mxu0 0.0
    %525 = vmatpush1.msra.mxu0 0.0
    %526 = vmatprep.subr.mxu0 0.0
    %527 = vmatpush1.msra.mxu0 0.0
    %528 = vmatprep.mubr.f32.mxu0 0.0
    %529 = vmatmul.mubr.f32.gmra.mrb[0].mxu0 %v451
    %v530 = vpop.f32.mrb[0].mxu0
    %v531 = vadd.f32 0.0, %v530
    %v532 = vpop.f32.mrb[0].mxu0
    %v533 = vadd.f32 0.0, %v532
    %534 = vmatprep.mubr.f32.mxu0 0.0
    %535 = vmatmul.mubr.f32.gmra.mrb[0].mxu0 %v454
    %v536 = vpop.f32.mrb[0].mxu0
    %v537 = vadd.f32 0.0, %v536
    %v538 = vpop.f32.mrb[0].mxu0
    %v539 = vadd.f32 0.0, %v538
    %540 = vdwg.mxu0
    %541 = vmatprep.subr.mxu0 %v462
    %542 = vmatpush1.msra.mxu0 %v460
    %543 = vmatprep.subr.mxu0 0.0
    %544 = vmatpush1.msra.mxu0 0.0
    %545 = vmatprep.subr.mxu0 0.0
    %546 = vmatpush1.msra.mxu0 0.0
    %547 = vmatprep.subr.mxu0 0.0
    %548 = vmatpush1.msra.mxu0 0.0
    %549 = vmatprep.subr.mxu0 0.0
    %550 = vmatpush1.msra.mxu0 0.0
    %551 = vmatprep.subr.mxu0 0.0
    %552 = vmatpush1.msra.mxu0 0.0
    %553 = vmatprep.subr.mxu0 0.0
    %554 = vmatpush1.msra.mxu0 0.0
    %555 = vmatprep.subr.mxu0 0.0
    %556 = vmatpush1.msra.mxu0 0.0
    %557 = vmatprep.subr.mxu0 0.0
    %558 = vmatpush1.msra.mxu0 0.0
    %559 = vmatprep.subr.mxu0 0.0
    %560 = vmatpush1.msra.mxu0 0.0
    %561 = vmatprep.subr.mxu0 0.0
    %562 = vmatpush1.msra.mxu0 0.0
    %563 = vmatprep.subr.mxu0 0.0
    %564 = vmatpush1.msra.mxu0 0.0
    %565 = vmatprep.subr.mxu0 0.0
    %566 = vmatpush1.msra.mxu0 0.0
    %567 = vmatprep.subr.mxu0 0.0
    %568 = vmatpush1.msra.mxu0 0.0
    %569 = vmatprep.subr.mxu0 0.0
    %570 = vmatpush1.msra.mxu0 0.0
    %571 = vmatprep.subr.mxu0 0.0
    %572 = vmatpush1.msra.mxu0 0.0
    %573 = vmatprep.subr.mxu0 0.0
    %574 = vmatpush1.msra.mxu0 0.0
    %575 = vmatprep.subr.mxu0 0.0
    %576 = vmatpush1.msra.mxu0 0.0
    %577 = vmatprep.subr.mxu0 0.0
    %578 = vmatpush1.msra.mxu0 0.0
    %579 = vmatprep.subr.mxu0 0.0
    %580 = vmatpush1.msra.mxu0 0.0
    %581 = vmatprep.subr.mxu0 0.0
    %582 = vmatpush1.msra.mxu0 0.0
    %583 = vmatprep.subr.mxu0 0.0
    %584 = vmatpush1.msra.mxu0 0.0
    %585 = vmatprep.subr.mxu0 0.0
    %586 = vmatpush1.msra.mxu0 0.0
    %587 = vmatprep.subr.mxu0 0.0
    %588 = vmatpush1.msra.mxu0 0.0
    %589 = vmatprep.subr.mxu0 0.0
    %590 = vmatpush1.msra.mxu0 0.0
    %591 = vmatprep.subr.mxu0 0.0
    %592 = vmatpush1.msra.mxu0 0.0
    %593 = vmatprep.subr.mxu0 0.0
    %594 = vmatpush1.msra.mxu0 0.0
    %595 = vmatprep.subr.mxu0 0.0
    %596 = vmatpush1.msra.mxu0 0.0
    %597 = vmatprep.subr.mxu0 0.0
    %598 = vmatpush1.msra.mxu0 0.0
    %599 = vmatprep.subr.mxu0 0.0
    %600 = vmatpush1.msra.mxu0 0.0
    %601 = vmatprep.subr.mxu0 0.0
    %602 = vmatpush1.msra.mxu0 0.0
    %603 = vmatprep.subr.mxu0 0.0
    %604 = vmatpush1.msra.mxu0 0.0
    %605 = vmatprep.mubr.f32.mxu0 0.0
    %606 = vmatmul.mubr.f32.gmra.mrb[0].mxu0 %v451
    %v607 = vpop.f32.mrb[0].mxu0
    %v608 = vadd.f32 0.0, %v607
    %v609 = vpop.f32.mrb[0].mxu0
    %v610 = vadd.f32 0.0, %v609
    %611 = vmatprep.mubr.f32.mxu0 0.0
    %612 = vmatmul.mubr.f32.gmra.mrb[0].mxu0 %v454
    %v613 = vpop.f32.mrb[0].mxu0
    %v614 = vadd.f32 0.0, %v613
    %v615 = vpop.f32.mrb[0].mxu0
    %v616 = vadd.f32 0.0, %v615
    %617 = vdwg.mxu0
    %v618 = vadd.f32 %v343, %v531
    %v619 = vadd.f32 %v345, %v533
    %v620 = vadd.f32 %v420, %v608
    %v621 = vadd.f32 %v422, %v610
    %v622 = vadd.f32 %v349, %v537
    %v623 = vadd.f32 %v351, %v539
    %v624 = vadd.f32 %v426, %v614
    %v625 = vadd.f32 %v428, %v616
    %v626 = vld [vmem:[#allocation4 + $0x30] sm:$0xff]
    %v627 = vld [vmem:[#allocation4 + $0x38] sm:$0xff]
    %v628 = vld [vmem:[%s0] sm:$0xff]
    %v629 = vld [vmem:[%s0 + $0x8] sm:$0xff]
    %v630 = vld [vmem:[%s0 + $0x10] sm:$0xf]
    %v634 = vcombine.high %v628, %v628
    %v635 = vcombine.high %v629, %v629
    %636 = vrot.lane.b32.xlu0 %v628, 114
    %v637 = vpop.permute.xlu0 %636
    %638 = vrot.lane.b32.xlu0 %v634, 114
    %v639 = vpop.permute.xlu0 %638
    %640 = vrot.lane.b32.xlu0 %v629, 114
    %v641 = vpop.permute.xlu0 %640
    %642 = vrot.lane.b32.xlu0 %v635, 114
    %v643 = vpop.permute.xlu0 %642
    %644 = vrot.lane.b32.xlu0 %v630, 114
    %v645 = vpop.permute.xlu0 %644
    %vm646 = vcmask 932864
    %v647 = vsel %vm646, %v637, %v639
    %v648 = vsel %vm646, %v639, %v641
    %v649 = vsel %vm646, %v641, %v643
    %v650 = vsel %vm646, %v643, %v645
    %v652 = vsel %vm92, %v626, 0
    %v655 = vsel %vm92, %v627, 0
    %v657 = vsel %vm99, %v647, 0
    %v659 = vsel %vm99, %v648, 0
    %v661 = vsel %vm99, %v649, 0
    %v663 = vsel %vm99, %v650, 0
    %665 = vmatprep.subr.mxu0 %v659
    %666 = vmatpush1.msra.mxu0 %v657
    %667 = vmatprep.subr.mxu0 0.0
    %668 = vmatpush1.msra.mxu0 0.0
    %669 = vmatprep.subr.mxu0 0.0
    %670 = vmatpush1.msra.mxu0 0.0
    %671 = vmatprep.subr.mxu0 0.0
    %672 = vmatpush1.msra.mxu0 0.0
    %673 = vmatprep.subr.mxu0 0.0
    %674 = vmatpush1.msra.mxu0 0.0
    %675 = vmatprep.subr.mxu0 0.0
    %676 = vmatpush1.msra.mxu0 0.0
    %677 = vmatprep.subr.mxu0 0.0
    %678 = vmatpush1.msra.mxu0 0.0
    %679 = vmatprep.subr.mxu0 0.0
    %680 = vmatpush1.msra.mxu0 0.0
    %681 = vmatprep.subr.mxu0 0.0
    %682 = vmatpush1.msra.mxu0 0.0
    %683 = vmatprep.subr.mxu0 0.0
    %684 = vmatpush1.msra.mxu0 0.0
    %685 = vmatprep.subr.mxu0 0.0
    %686 = vmatpush1.msra.mxu0 0.0
    %687 = vmatprep.subr.mxu0 0.0
    %688 = vmatpush1.msra.mxu0 0.0
    %689 = vmatprep.subr.mxu0 0.0
    %690 = vmatpush1.msra.mxu0 0.0
    %691 = vmatprep.subr.mxu0 0.0
    %692 = vmatpush1.msra.mxu0 0.0
    %693 = vmatprep.subr.mxu0 0.0
    %694 = vmatpush1.msra.mxu0 0.0
    %695 = vmatprep.subr.mxu0 0.0
    %696 = vmatpush1.msra.mxu0 0.0
    %697 = vmatprep.subr.mxu0 0.0
    %698 = vmatpush1.msra.mxu0 0.0
    %699 = vmatprep.subr.mxu0 0.0
    %700 = vmatpush1.msra.mxu0 0.0
    %701 = vmatprep.subr.mxu0 0.0
    %702 = vmatpush1.msra.mxu0 0.0
    %703 = vmatprep.subr.mxu0 0.0
    %704 = vmatpush1.msra.mxu0 0.0
    %705 = vmatprep.subr.mxu0 0.0
    %706 = vmatpush1.msra.mxu0 0.0
    %707 = vmatprep.subr.mxu0 0.0
    %708 = vmatpush1.msra.mxu0 0.0
    %709 = vmatprep.subr.mxu0 0.0
    %710 = vmatpush1.msra.mxu0 0.0
    %711 = vmatprep.subr.mxu0 0.0
    %712 = vmatpush1.msra.mxu0 0.0
    %713 = vmatprep.subr.mxu0 0.0
    %714 = vmatpush1.msra.mxu0 0.0
    %715 = vmatprep.subr.mxu0 0.0
    %716 = vmatpush1.msra.mxu0 0.0
    %717 = vmatprep.subr.mxu0 0.0
    %718 = vmatpush1.msra.mxu0 0.0
    %719 = vmatprep.subr.mxu0 0.0
    %720 = vmatpush1.msra.mxu0 0.0
    %721 = vmatprep.subr.mxu0 0.0
    %722 = vmatpush1.msra.mxu0 0.0
    %723 = vmatprep.subr.mxu0 0.0
    %724 = vmatpush1.msra.mxu0 0.0
    %725 = vmatprep.subr.mxu0 0.0
    %726 = vmatpush1.msra.mxu0 0.0
    %727 = vmatprep.subr.mxu0 0.0
    %728 = vmatpush1.msra.mxu0 0.0
    %729 = vmatprep.mubr.f32.mxu0 0.0
    %730 = vmatmul.mubr.f32.gmra.mrb[0].mxu0 %v652
    %v731 = vpop.f32.mrb[0].mxu0
    %v732 = vadd.f32 0.0, %v731
    %v733 = vpop.f32.mrb[0].mxu0
    %v734 = vadd.f32 0.0, %v733
    %735 = vmatprep.mubr.f32.mxu0 0.0
    %736 = vmatmul.mubr.f32.gmra.mrb[0].mxu0 %v655
    %v737 = vpop.f32.mrb[0].mxu0
    %v738 = vadd.f32 0.0, %v737
    %v739 = vpop.f32.mrb[0].mxu0
    %v740 = vadd.f32 0.0, %v739
    %741 = vdwg.mxu0
    %742 = vmatprep.subr.mxu0 %v663
    %743 = vmatpush1.msra.mxu0 %v661
    %744 = vmatprep.subr.mxu0 0.0
    %745 = vmatpush1.msra.mxu0 0.0
    %746 = vmatprep.subr.mxu0 0.0
    %747 = vmatpush1.msra.mxu0 0.0
    %748 = vmatprep.subr.mxu0 0.0
    %749 = vmatpush1.msra.mxu0 0.0
    %750 = vmatprep.subr.mxu0 0.0
    %751 = vmatpush1.msra.mxu0 0.0
    %752 = vmatprep.subr.mxu0 0.0
    %753 = vmatpush1.msra.mxu0 0.0
    %754 = vmatprep.subr.mxu0 0.0
    %755 = vmatpush1.msra.mxu0 0.0
    %756 = vmatprep.subr.mxu0 0.0
    %757 = vmatpush1.msra.mxu0 0.0
    %758 = vmatprep.subr.mxu0 0.0
    %759 = vmatpush1.msra.mxu0 0.0
    %760 = vmatprep.subr.mxu0 0.0
    %761 = vmatpush1.msra.mxu0 0.0
    %762 = vmatprep.subr.mxu0 0.0
    %763 = vmatpush1.msra.mxu0 0.0
    %764 = vmatprep.subr.mxu0 0.0
    %765 = vmatpush1.msra.mxu0 0.0
    %766 = vmatprep.subr.mxu0 0.0
    %767 = vmatpush1.msra.mxu0 0.0
    %768 = vmatprep.subr.mxu0 0.0
    %769 = vmatpush1.msra.mxu0 0.0
    %770 = vmatprep.subr.mxu0 0.0
    %771 = vmatpush1.msra.mxu0 0.0
    %772 = vmatprep.subr.mxu0 0.0
    %773 = vmatpush1.msra.mxu0 0.0
    %774 = vmatprep.subr.mxu0 0.0
    %775 = vmatpush1.msra.mxu0 0.0
    %776 = vmatprep.subr.mxu0 0.0
    %777 = vmatpush1.msra.mxu0 0.0
    %778 = vmatprep.subr.mxu0 0.0
    %779 = vmatpush1.msra.mxu0 0.0
    %780 = vmatprep.subr.mxu0 0.0
    %781 = vmatpush1.msra.mxu0 0.0
    %782 = vmatprep.subr.mxu0 0.0
    %783 = vmatpush1.msra.mxu0 0.0
    %784 = vmatprep.subr.mxu0 0.0
    %785 = vmatpush1.msra.mxu0 0.0
    %786 = vmatprep.subr.mxu0 0.0
    %787 = vmatpush1.msra.mxu0 0.0
    %788 = vmatprep.subr.mxu0 0.0
    %789 = vmatpush1.msra.mxu0 0.0
    %790 = vmatprep.subr.mxu0 0.0
    %791 = vmatpush1.msra.mxu0 0.0
    %792 = vmatprep.subr.mxu0 0.0
    %793 = vmatpush1.msra.mxu0 0.0
    %794 = vmatprep.subr.mxu0 0.0
    %795 = vmatpush1.msra.mxu0 0.0
    %796 = vmatprep.subr.mxu0 0.0
    %797 = vmatpush1.msra.mxu0 0.0
    %798 = vmatprep.subr.mxu0 0.0
    %799 = vmatpush1.msra.mxu0 0.0
    %800 = vmatprep.subr.mxu0 0.0
    %801 = vmatpush1.msra.mxu0 0.0
    %802 = vmatprep.subr.mxu0 0.0
    %803 = vmatpush1.msra.mxu0 0.0
    %804 = vmatprep.subr.mxu0 0.0
    %805 = vmatpush1.msra.mxu0 0.0
    %806 = vmatprep.mubr.f32.mxu0 0.0
    %807 = vmatmul.mubr.f32.gmra.mrb[0].mxu0 %v652
    %v808 = vpop.f32.mrb[0].mxu0
    %v809 = vadd.f32 0.0, %v808
    %v810 = vpop.f32.mrb[0].mxu0
    %v811 = vadd.f32 0.0, %v810
    %812 = vmatprep.mubr.f32.mxu0 0.0
    %813 = vmatmul.mubr.f32.gmra.mrb[0].mxu0 %v655
    %v814 = vpop.f32.mrb[0].mxu0
    %v815 = vadd.f32 0.0, %v814
    %v816 = vpop.f32.mrb[0].mxu0
    %v817 = vadd.f32 0.0, %v816
    %818 = vdwg.mxu0
    %v819 = vadd.f32 %v618, %v732
    %v820 = vadd.f32 %v619, %v734
    %v821 = vadd.f32 %v620, %v809
    %v822 = vadd.f32 %v621, %v811
    %v823 = vadd.f32 %v622, %v738
    %v824 = vadd.f32 %v623, %v740
    %v825 = vadd.f32 %v624, %v815
    %v826 = vadd.f32 %v625, %v817
    %v827 = vld [vmem:[#allocation4 + $0x40] sm:$0xff]
    %v828 = vld [vmem:[#allocation4 + $0x48] sm:$0xff]
    %v829 = vld [vmem:[%s0] sm:$0xff]
    %v830 = vld [vmem:[%s0 + $0x8] sm:$0xff]
    %v831 = vld [vmem:[%s0 + $0x10] sm:$0xf]
    %v835 = vcombine.high %v829, %v829
    %v836 = vcombine.high %v830, %v830
    %837 = vrot.lane.b32.xlu0 %v829, 113
    %v838 = vpop.permute.xlu0 %837
    %839 = vrot.lane.b32.xlu0 %v835, 113
    %v840 = vpop.permute.xlu0 %839
    %841 = vrot.lane.b32.xlu0 %v830, 113
    %v842 = vpop.permute.xlu0 %841
    %843 = vrot.lane.b32.xlu0 %v836, 113
    %v844 = vpop.permute.xlu0 %843
    %845 = vrot.lane.b32.xlu0 %v831, 113
    %v846 = vpop.permute.xlu0 %845
    %vm847 = vcmask 924672
    %v848 = vsel %vm847, %v838, %v840
    %v849 = vsel %vm847, %v840, %v842
    %v850 = vsel %vm847, %v842, %v844
    %v851 = vsel %vm847, %v844, %v846
    %v853 = vsel %vm92, %v827, 0
    %v856 = vsel %vm92, %v828, 0
    %v858 = vsel %vm99, %v848, 0
    %v860 = vsel %vm99, %v849, 0
    %v862 = vsel %vm99, %v850, 0
    %v864 = vsel %vm99, %v851, 0
    %866 = vmatprep.subr.mxu0 %v860
    %867 = vmatpush1.msra.mxu0 %v858
    %868 = vmatprep.subr.mxu0 0.0
    %869 = vmatpush1.msra.mxu0 0.0
    %870 = vmatprep.subr.mxu0 0.0
    %871 = vmatpush1.msra.mxu0 0.0
    %872 = vmatprep.subr.mxu0 0.0
    %873 = vmatpush1.msra.mxu0 0.0
    %874 = vmatprep.subr.mxu0 0.0
    %875 = vmatpush1.msra.mxu0 0.0
    %876 = vmatprep.subr.mxu0 0.0
    %877 = vmatpush1.msra.mxu0 0.0
    %878 = vmatprep.subr.mxu0 0.0
    %879 = vmatpush1.msra.mxu0 0.0
    %880 = vmatprep.subr.mxu0 0.0
    %881 = vmatpush1.msra.mxu0 0.0
    %882 = vmatprep.subr.mxu0 0.0
    %883 = vmatpush1.msra.mxu0 0.0
    %884 = vmatprep.subr.mxu0 0.0
    %885 = vmatpush1.msra.mxu0 0.0
    %886 = vmatprep.subr.mxu0 0.0
    %887 = vmatpush1.msra.mxu0 0.0
    %888 = vmatprep.subr.mxu0 0.0
    %889 = vmatpush1.msra.mxu0 0.0
    %890 = vmatprep.subr.mxu0 0.0
    %891 = vmatpush1.msra.mxu0 0.0
    %892 = vmatprep.subr.mxu0 0.0
    %893 = vmatpush1.msra.mxu0 0.0
    %894 = vmatprep.subr.mxu0 0.0
    %895 = vmatpush1.msra.mxu0 0.0
    %896 = vmatprep.subr.mxu0 0.0
    %897 = vmatpush1.msra.mxu0 0.0
    %898 = vmatprep.subr.mxu0 0.0
    %899 = vmatpush1.msra.mxu0 0.0
    %900 = vmatprep.subr.mxu0 0.0
    %901 = vmatpush1.msra.mxu0 0.0
    %902 = vmatprep.subr.mxu0 0.0
    %903 = vmatpush1.msra.mxu0 0.0
    %904 = vmatprep.subr.mxu0 0.0
    %905 = vmatpush1.msra.mxu0 0.0
    %906 = vmatprep.subr.mxu0 0.0
    %907 = vmatpush1.msra.mxu0 0.0
    %908 = vmatprep.subr.mxu0 0.0
    %909 = vmatpush1.msra.mxu0 0.0
    %910 = vmatprep.subr.mxu0 0.0
    %911 = vmatpush1.msra.mxu0 0.0
    %912 = vmatprep.subr.mxu0 0.0
    %913 = vmatpush1.msra.mxu0 0.0
    %914 = vmatprep.subr.mxu0 0.0
    %915 = vmatpush1.msra.mxu0 0.0
    %916 = vmatprep.subr.mxu0 0.0
    %917 = vmatpush1.msra.mxu0 0.0
    %918 = vmatprep.subr.mxu0 0.0
    %919 = vmatpush1.msra.mxu0 0.0
    %920 = vmatprep.subr.mxu0 0.0
    %921 = vmatpush1.msra.mxu0 0.0
    %922 = vmatprep.subr.mxu0 0.0
    %923 = vmatpush1.msra.mxu0 0.0
    %924 = vmatprep.subr.mxu0 0.0
    %925 = vmatpush1.msra.mxu0 0.0
    %926 = vmatprep.subr.mxu0 0.0
    %927 = vmatpush1.msra.mxu0 0.0
    %928 = vmatprep.subr.mxu0 0.0
    %929 = vmatpush1.msra.mxu0 0.0
    %930 = vmatprep.mubr.f32.mxu0 0.0
    %931 = vmatmul.mubr.f32.gmra.mrb[0].mxu0 %v853
    %v932 = vpop.f32.mrb[0].mxu0
    %v933 = vadd.f32 0.0, %v932
    %v934 = vpop.f32.mrb[0].mxu0
    %v935 = vadd.f32 0.0, %v934
    %936 = vmatprep.mubr.f32.mxu0 0.0
    %937 = vmatmul.mubr.f32.gmra.mrb[0].mxu0 %v856
    %v938 = vpop.f32.mrb[0].mxu0
    %v939 = vadd.f32 0.0, %v938
    %v940 = vpop.f32.mrb[0].mxu0
    %v941 = vadd.f32 0.0, %v940
    %942 = vdwg.mxu0
    %943 = vmatprep.subr.mxu0 %v864
    %944 = vmatpush1.msra.mxu0 %v862
    %945 = vmatprep.subr.mxu0 0.0
    %946 = vmatpush1.msra.mxu0 0.0
    %947 = vmatprep.subr.mxu0 0.0
    %948 = vmatpush1.msra.mxu0 0.0
    %949 = vmatprep.subr.mxu0 0.0
    %950 = vmatpush1.msra.mxu0 0.0
    %951 = vmatprep.subr.mxu0 0.0
    %952 = vmatpush1.msra.mxu0 0.0
    %953 = vmatprep.subr.mxu0 0.0
    %954 = vmatpush1.msra.mxu0 0.0
    %955 = vmatprep.subr.mxu0 0.0
    %956 = vmatpush1.msra.mxu0 0.0
    %957 = vmatprep.subr.mxu0 0.0
    %958 = vmatpush1.msra.mxu0 0.0
    %959 = vmatprep.subr.mxu0 0.0
    %960 = vmatpush1.msra.mxu0 0.0
    %961 = vmatprep.subr.mxu0 0.0
    %962 = vmatpush1.msra.mxu0 0.0
    %963 = vmatprep.subr.mxu0 0.0
    %964 = vmatpush1.msra.mxu0 0.0
    %965 = vmatprep.subr.mxu0 0.0
    %966 = vmatpush1.msra.mxu0 0.0
    %967 = vmatprep.subr.mxu0 0.0
    %968 = vmatpush1.msra.mxu0 0.0
    %969 = vmatprep.subr.mxu0 0.0
    %970 = vmatpush1.msra.mxu0 0.0
    %971 = vmatprep.subr.mxu0 0.0
    %972 = vmatpush1.msra.mxu0 0.0
    %973 = vmatprep.subr.mxu0 0.0
    %974 = vmatpush1.msra.mxu0 0.0
    %975 = vmatprep.subr.mxu0 0.0
    %976 = vmatpush1.msra.mxu0 0.0
    %977 = vmatprep.subr.mxu0 0.0
    %978 = vmatpush1.msra.mxu0 0.0
    %979 = vmatprep.subr.mxu0 0.0
    %980 = vmatpush1.msra.mxu0 0.0
    %981 = vmatprep.subr.mxu0 0.0
    %982 = vmatpush1.msra.mxu0 0.0
    %983 = vmatprep.subr.mxu0 0.0
    %984 = vmatpush1.msra.mxu0 0.0
    %985 = vmatprep.subr.mxu0 0.0
    %986 = vmatpush1.msra.mxu0 0.0
    %987 = vmatprep.subr.mxu0 0.0
    %988 = vmatpush1.msra.mxu0 0.0
    %989 = vmatprep.subr.mxu0 0.0
    %990 = vmatpush1.msra.mxu0 0.0
    %991 = vmatprep.subr.mxu0 0.0
    %992 = vmatpush1.msra.mxu0 0.0
    %993 = vmatprep.subr.mxu0 0.0
    %994 = vmatpush1.msra.mxu0 0.0
    %995 = vmatprep.subr.mxu0 0.0
    %996 = vmatpush1.msra.mxu0 0.0
    %997 = vmatprep.subr.mxu0 0.0
    %998 = vmatpush1.msra.mxu0 0.0
    %999 = vmatprep.subr.mxu0 0.0
    %1000 = vmatpush1.msra.mxu0 0.0
    %1001 = vmatprep.subr.mxu0 0.0
    %1002 = vmatpush1.msra.mxu0 0.0
    %1003 = vmatprep.subr.mxu0 0.0
    %1004 = vmatpush1.msra.mxu0 0.0
    %1005 = vmatprep.subr.mxu0 0.0
    %1006 = vmatpush1.msra.mxu0 0.0
    %1007 = vmatprep.mubr.f32.mxu0 0.0
    %1008 = vmatmul.mubr.f32.gmra.mrb[0].mxu0 %v853
    %v1009 = vpop.f32.mrb[0].mxu0
    %v1010 = vadd.f32 0.0, %v1009
    %v1011 = vpop.f32.mrb[0].mxu0
    %v1012 = vadd.f32 0.0, %v1011
    %1013 = vmatprep.mubr.f32.mxu0 0.0
    %1014 = vmatmul.mubr.f32.gmra.mrb[0].mxu0 %v856
    %v1015 = vpop.f32.mrb[0].mxu0
    %v1016 = vadd.f32 0.0, %v1015
    %v1017 = vpop.f32.mrb[0].mxu0
    %v1018 = vadd.f32 0.0, %v1017
    %1019 = vdwg.mxu0
    %v1020 = vadd.f32 %v819, %v933
    %v1021 = vadd.f32 %v820, %v935
    %v1022 = vadd.f32 %v821, %v1010
    %v1023 = vadd.f32 %v822, %v1012
    %v1024 = vadd.f32 %v823, %v939
    %v1025 = vadd.f32 %v824, %v941
    %v1026 = vadd.f32 %v825, %v1016
    %v1027 = vadd.f32 %v826, %v1018
    %v1028 = vld [vmem:[#allocation4 + $0x50] sm:$0xff]
    %v1029 = vld [vmem:[#allocation4 + $0x58] sm:$0xff]
    %v1030 = vld [vmem:[%s0] sm:$0xff]
    %v1031 = vld [vmem:[%s0 + $0x8] sm:$0xff]
    %v1032 = vld [vmem:[%s0 + $0x10] sm:$0xf]
    %v1036 = vcombine.high %v1030, %v1030
    %v1037 = vcombine.high %v1031, %v1031
    %1038 = vrot.lane.b32.xlu0 %v1030, 112
    %v1039 = vpop.permute.xlu0 %1038
    %1040 = vrot.lane.b32.xlu0 %v1036, 112
    %v1041 = vpop.permute.xlu0 %1040
    %1042 = vrot.lane.b32.xlu0 %v1031, 112
    %v1043 = vpop.permute.xlu0 %1042
    %1044 = vrot.lane.b32.xlu0 %v1037, 112
    %v1045 = vpop.permute.xlu0 %1044
    %1046 = vrot.lane.b32.xlu0 %v1032, 112
    %v1047 = vpop.permute.xlu0 %1046
    %vm1048 = vcmask 916480
    %v1049 = vsel %vm1048, %v1039, %v1041
    %v1050 = vsel %vm1048, %v1041, %v1043
    %v1051 = vsel %vm1048, %v1043, %v1045
    %v1052 = vsel %vm1048, %v1045, %v1047
    %v1054 = vsel %vm92, %v1028, 0
    %v1057 = vsel %vm92, %v1029, 0
    %v1059 = vsel %vm99, %v1049, 0
    %v1061 = vsel %vm99, %v1050, 0
    %v1063 = vsel %vm99, %v1051, 0
    %v1065 = vsel %vm99, %v1052, 0
    %1067 = vmatprep.subr.mxu0 %v1061
    %1068 = vmatpush1.msra.mxu0 %v1059
    %1069 = vmatprep.subr.mxu0 0.0
    %1070 = vmatpush1.msra.mxu0 0.0
    %1071 = vmatprep.subr.mxu0 0.0
    %1072 = vmatpush1.msra.mxu0 0.0
    %1073 = vmatprep.subr.mxu0 0.0
    %1074 = vmatpush1.msra.mxu0 0.0
    %1075 = vmatprep.subr.mxu0 0.0
    %1076 = vmatpush1.msra.mxu0 0.0
    %1077 = vmatprep.subr.mxu0 0.0
    %1078 = vmatpush1.msra.mxu0 0.0
    %1079 = vmatprep.subr.mxu0 0.0
    %1080 = vmatpush1.msra.mxu0 0.0
    %1081 = vmatprep.subr.mxu0 0.0
    %1082 = vmatpush1.msra.mxu0 0.0
    %1083 = vmatprep.subr.mxu0 0.0
    %1084 = vmatpush1.msra.mxu0 0.0
    %1085 = vmatprep.subr.mxu0 0.0
    %1086 = vmatpush1.msra.mxu0 0.0
    %1087 = vmatprep.subr.mxu0 0.0
    %1088 = vmatpush1.msra.mxu0 0.0
    %1089 = vmatprep.subr.mxu0 0.0
    %1090 = vmatpush1.msra.mxu0 0.0
    %1091 = vmatprep.subr.mxu0 0.0
    %1092 = vmatpush1.msra.mxu0 0.0
    %1093 = vmatprep.subr.mxu0 0.0
    %1094 = vmatpush1.msra.mxu0 0.0
    %1095 = vmatprep.subr.mxu0 0.0
    %1096 = vmatpush1.msra.mxu0 0.0
    %1097 = vmatprep.subr.mxu0 0.0
    %1098 = vmatpush1.msra.mxu0 0.0
    %1099 = vmatprep.subr.mxu0 0.0
    %1100 = vmatpush1.msra.mxu0 0.0
    %1101 = vmatprep.subr.mxu0 0.0
    %1102 = vmatpush1.msra.mxu0 0.0
    %1103 = vmatprep.subr.mxu0 0.0
    %1104 = vmatpush1.msra.mxu0 0.0
    %1105 = vmatprep.subr.mxu0 0.0
    %1106 = vmatpush1.msra.mxu0 0.0
    %1107 = vmatprep.subr.mxu0 0.0
    %1108 = vmatpush1.msra.mxu0 0.0
    %1109 = vmatprep.subr.mxu0 0.0
    %1110 = vmatpush1.msra.mxu0 0.0
    %1111 = vmatprep.subr.mxu0 0.0
    %1112 = vmatpush1.msra.mxu0 0.0
    %1113 = vmatprep.subr.mxu0 0.0
    %1114 = vmatpush1.msra.mxu0 0.0
    %1115 = vmatprep.subr.mxu0 0.0
    %1116 = vmatpush1.msra.mxu0 0.0
    %1117 = vmatprep.subr.mxu0 0.0
    %1118 = vmatpush1.msra.mxu0 0.0
    %1119 = vmatprep.subr.mxu0 0.0
    %1120 = vmatpush1.msra.mxu0 0.0
    %1121 = vmatprep.subr.mxu0 0.0
    %1122 = vmatpush1.msra.mxu0 0.0
    %1123 = vmatprep.subr.mxu0 0.0
    %1124 = vmatpush1.msra.mxu0 0.0
    %1125 = vmatprep.subr.mxu0 0.0
    %1126 = vmatpush1.msra.mxu0 0.0
    %1127 = vmatprep.subr.mxu0 0.0
    %1128 = vmatpush1.msra.mxu0 0.0
    %1129 = vmatprep.subr.mxu0 0.0
    %1130 = vmatpush1.msra.mxu0 0.0
    %1131 = vmatprep.mubr.f32.mxu0 0.0
    %1132 = vmatmul.mubr.f32.gmra.mrb[0].mxu0 %v1054
    %v1133 = vpop.f32.mrb[0].mxu0
    %v1134 = vadd.f32 0.0, %v1133
    %v1135 = vpop.f32.mrb[0].mxu0
    %v1136 = vadd.f32 0.0, %v1135
    %1137 = vmatprep.mubr.f32.mxu0 0.0
    %1138 = vmatmul.mubr.f32.gmra.mrb[0].mxu0 %v1057
    %v1139 = vpop.f32.mrb[0].mxu0
    %v1140 = vadd.f32 0.0, %v1139
    %v1141 = vpop.f32.mrb[0].mxu0
    %v1142 = vadd.f32 0.0, %v1141
    %1143 = vdwg.mxu0
    %1144 = vmatprep.subr.mxu0 %v1065
    %1145 = vmatpush1.msra.mxu0 %v1063
    %1146 = vmatprep.subr.mxu0 0.0
    %1147 = vmatpush1.msra.mxu0 0.0
    %1148 = vmatprep.subr.mxu0 0.0
    %1149 = vmatpush1.msra.mxu0 0.0
    %1150 = vmatprep.subr.mxu0 0.0
    %1151 = vmatpush1.msra.mxu0 0.0
    %1152 = vmatprep.subr.mxu0 0.0
    %1153 = vmatpush1.msra.mxu0 0.0
    %1154 = vmatprep.subr.mxu0 0.0
    %1155 = vmatpush1.msra.mxu0 0.0
    %1156 = vmatprep.subr.mxu0 0.0
    %1157 = vmatpush1.msra.mxu0 0.0
    %1158 = vmatprep.subr.mxu0 0.0
    %1159 = vmatpush1.msra.mxu0 0.0
    %1160 = vmatprep.subr.mxu0 0.0
    %1161 = vmatpush1.msra.mxu0 0.0
    %1162 = vmatprep.subr.mxu0 0.0
    %1163 = vmatpush1.msra.mxu0 0.0
    %1164 = vmatprep.subr.mxu0 0.0
    %1165 = vmatpush1.msra.mxu0 0.0
    %1166 = vmatprep.subr.mxu0 0.0
    %1167 = vmatpush1.msra.mxu0 0.0
    %1168 = vmatprep.subr.mxu0 0.0
    %1169 = vmatpush1.msra.mxu0 0.0
    %1170 = vmatprep.subr.mxu0 0.0
    %1171 = vmatpush1.msra.mxu0 0.0
    %1172 = vmatprep.subr.mxu0 0.0
    %1173 = vmatpush1.msra.mxu0 0.0
    %1174 = vmatprep.subr.mxu0 0.0
    %1175 = vmatpush1.msra.mxu0 0.0
    %1176 = vmatprep.subr.mxu0 0.0
    %1177 = vmatpush1.msra.mxu0 0.0
    %1178 = vmatprep.subr.mxu0 0.0
    %1179 = vmatpush1.msra.mxu0 0.0
    %1180 = vmatprep.subr.mxu0 0.0
    %1181 = vmatpush1.msra.mxu0 0.0
    %1182 = vmatprep.subr.mxu0 0.0
    %1183 = vmatpush1.msra.mxu0 0.0
    %1184 = vmatprep.subr.mxu0 0.0
    %1185 = vmatpush1.msra.mxu0 0.0
    %1186 = vmatprep.subr.mxu0 0.0
    %1187 = vmatpush1.msra.mxu0 0.0
    %1188 = vmatprep.subr.mxu0 0.0
    %1189 = vmatpush1.msra.mxu0 0.0
    %1190 = vmatprep.subr.mxu0 0.0
    %1191 = vmatpush1.msra.mxu0 0.0
    %1192 = vmatprep.subr.mxu0 0.0
    %1193 = vmatpush1.msra.mxu0 0.0
    %1194 = vmatprep.subr.mxu0 0.0
    %1195 = vmatpush1.msra.mxu0 0.0
    %1196 = vmatprep.subr.mxu0 0.0
    %1197 = vmatpush1.msra.mxu0 0.0
    %1198 = vmatprep.subr.mxu0 0.0
    %1199 = vmatpush1.msra.mxu0 0.0
    %1200 = vmatprep.subr.mxu0 0.0
    %1201 = vmatpush1.msra.mxu0 0.0
    %1202 = vmatprep.subr.mxu0 0.0
    %1203 = vmatpush1.msra.mxu0 0.0
    %1204 = vmatprep.subr.mxu0 0.0
    %1205 = vmatpush1.msra.mxu0 0.0
    %1206 = vmatprep.subr.mxu0 0.0
    %1207 = vmatpush1.msra.mxu0 0.0
    %1208 = vmatprep.mubr.f32.mxu0 0.0
    %1209 = vmatmul.mubr.f32.gmra.mrb[0].mxu0 %v1054
    %v1210 = vpop.f32.mrb[0].mxu0
    %v1211 = vadd.f32 0.0, %v1210
    %v1212 = vpop.f32.mrb[0].mxu0
    %v1213 = vadd.f32 0.0, %v1212
    %1214 = vmatprep.mubr.f32.mxu0 0.0
    %1215 = vmatmul.mubr.f32.gmra.mrb[0].mxu0 %v1057
    %v1216 = vpop.f32.mrb[0].mxu0
    %v1217 = vadd.f32 0.0, %v1216
    %v1218 = vpop.f32.mrb[0].mxu0
    %v1219 = vadd.f32 0.0, %v1218
    %1220 = vdwg.mxu0
    %v1221 = vadd.f32 %v1020, %v1134
    %v1222 = vadd.f32 %v1021, %v1136
    %v1223 = vadd.f32 %v1022, %v1211
    %v1224 = vadd.f32 %v1023, %v1213
    %v1225 = vadd.f32 %v1024, %v1140
    %v1226 = vadd.f32 %v1025, %v1142
    %v1227 = vadd.f32 %v1026, %v1217
    %v1228 = vadd.f32 %v1027, %v1219
    %v1229 = vld [vmem:[#allocation4 + $0x60] sm:$0xff]
    %v1230 = vld [vmem:[#allocation4 + $0x68] sm:$0xff]
    %v1231 = vld [vmem:[%s0] sm:$0xff]
    %v1232 = vld [vmem:[%s0 + $0x8] sm:$0xff]
    %v1233 = vld [vmem:[%s0 + $0x10] sm:$0xf]
    %v1237 = vcombine.high %v1231, %v1231
    %v1238 = vcombine.high %v1232, %v1232
    %1239 = vrot.lane.b32.xlu0 %v1231, 100
    %v1240 = vpop.permute.xlu0 %1239
    %1241 = vrot.lane.b32.xlu0 %v1237, 100
    %v1242 = vpop.permute.xlu0 %1241
    %1243 = vrot.lane.b32.xlu0 %v1232, 100
    %v1244 = vpop.permute.xlu0 %1243
    %1245 = vrot.lane.b32.xlu0 %v1238, 100
    %v1246 = vpop.permute.xlu0 %1245
    %1247 = vrot.lane.b32.xlu0 %v1233, 100
    %v1248 = vpop.permute.xlu0 %1247
    %vm1249 = vcmask 818176
    %v1250 = vsel %vm1249, %v1240, %v1242
    %v1251 = vsel %vm1249, %v1242, %v1244
    %v1252 = vsel %vm1249, %v1244, %v1246
    %v1253 = vsel %vm1249, %v1246, %v1248
    %v1255 = vsel %vm92, %v1229, 0
    %v1258 = vsel %vm92, %v1230, 0
    %v1260 = vsel %vm99, %v1250, 0
    %v1262 = vsel %vm99, %v1251, 0
    %v1264 = vsel %vm99, %v1252, 0
    %v1266 = vsel %vm99, %v1253, 0
    %1268 = vmatprep.subr.mxu0 %v1262
    %1269 = vmatpush1.msra.mxu0 %v1260
    %1270 = vmatprep.subr.mxu0 0.0
    %1271 = vmatpush1.msra.mxu0 0.0
    %1272 = vmatprep.subr.mxu0 0.0
    %1273 = vmatpush1.msra.mxu0 0.0
    %1274 = vmatprep.subr.mxu0 0.0
    %1275 = vmatpush1.msra.mxu0 0.0
    %1276 = vmatprep.subr.mxu0 0.0
    %1277 = vmatpush1.msra.mxu0 0.0
    %1278 = vmatprep.subr.mxu0 0.0
    %1279 = vmatpush1.msra.mxu0 0.0
    %1280 = vmatprep.subr.mxu0 0.0
    %1281 = vmatpush1.msra.mxu0 0.0
    %1282 = vmatprep.subr.mxu0 0.0
    %1283 = vmatpush1.msra.mxu0 0.0
    %1284 = vmatprep.subr.mxu0 0.0
    %1285 = vmatpush1.msra.mxu0 0.0
    %1286 = vmatprep.subr.mxu0 0.0
    %1287 = vmatpush1.msra.mxu0 0.0
    %1288 = vmatprep.subr.mxu0 0.0
    %1289 = vmatpush1.msra.mxu0 0.0
    %1290 = vmatprep.subr.mxu0 0.0
    %1291 = vmatpush1.msra.mxu0 0.0
    %1292 = vmatprep.subr.mxu0 0.0
    %1293 = vmatpush1.msra.mxu0 0.0
    %1294 = vmatprep.subr.mxu0 0.0
    %1295 = vmatpush1.msra.mxu0 0.0
    %1296 = vmatprep.subr.mxu0 0.0
    %1297 = vmatpush1.msra.mxu0 0.0
    %1298 = vmatprep.subr.mxu0 0.0
    %1299 = vmatpush1.msra.mxu0 0.0
    %1300 = vmatprep.subr.mxu0 0.0
    %1301 = vmatpush1.msra.mxu0 0.0
    %1302 = vmatprep.subr.mxu0 0.0
    %1303 = vmatpush1.msra.mxu0 0.0
    %1304 = vmatprep.subr.mxu0 0.0
    %1305 = vmatpush1.msra.mxu0 0.0
    %1306 = vmatprep.subr.mxu0 0.0
    %1307 = vmatpush1.msra.mxu0 0.0
    %1308 = vmatprep.subr.mxu0 0.0
    %1309 = vmatpush1.msra.mxu0 0.0
    %1310 = vmatprep.subr.mxu0 0.0
    %1311 = vmatpush1.msra.mxu0 0.0
    %1312 = vmatprep.subr.mxu0 0.0
    %1313 = vmatpush1.msra.mxu0 0.0
    %1314 = vmatprep.subr.mxu0 0.0
    %1315 = vmatpush1.msra.mxu0 0.0
    %1316 = vmatprep.subr.mxu0 0.0
    %1317 = vmatpush1.msra.mxu0 0.0
    %1318 = vmatprep.subr.mxu0 0.0
    %1319 = vmatpush1.msra.mxu0 0.0
    %1320 = vmatprep.subr.mxu0 0.0
    %1321 = vmatpush1.msra.mxu0 0.0
    %1322 = vmatprep.subr.mxu0 0.0
    %1323 = vmatpush1.msra.mxu0 0.0
    %1324 = vmatprep.subr.mxu0 0.0
    %1325 = vmatpush1.msra.mxu0 0.0
    %1326 = vmatprep.subr.mxu0 0.0
    %1327 = vmatpush1.msra.mxu0 0.0
    %1328 = vmatprep.subr.mxu0 0.0
    %1329 = vmatpush1.msra.mxu0 0.0
    %1330 = vmatprep.subr.mxu0 0.0
    %1331 = vmatpush1.msra.mxu0 0.0
    %1332 = vmatprep.mubr.f32.mxu0 0.0
    %1333 = vmatmul.mubr.f32.gmra.mrb[0].mxu0 %v1255
    %v1334 = vpop.f32.mrb[0].mxu0
    %v1335 = vadd.f32 0.0, %v1334
    %v1336 = vpop.f32.mrb[0].mxu0
    %v1337 = vadd.f32 0.0, %v1336
    %1338 = vmatprep.mubr.f32.mxu0 0.0
    %1339 = vmatmul.mubr.f32.gmra.mrb[0].mxu0 %v1258
    %v1340 = vpop.f32.mrb[0].mxu0
    %v1341 = vadd.f32 0.0, %v1340
    %v1342 = vpop.f32.mrb[0].mxu0
    %v1343 = vadd.f32 0.0, %v1342
    %1344 = vdwg.mxu0
    %1345 = vmatprep.subr.mxu0 %v1266
    %1346 = vmatpush1.msra.mxu0 %v1264
    %1347 = vmatprep.subr.mxu0 0.0
    %1348 = vmatpush1.msra.mxu0 0.0
    %1349 = vmatprep.subr.mxu0 0.0
    %1350 = vmatpush1.msra.mxu0 0.0
    %1351 = vmatprep.subr.mxu0 0.0
    %1352 = vmatpush1.msra.mxu0 0.0
    %1353 = vmatprep.subr.mxu0 0.0
    %1354 = vmatpush1.msra.mxu0 0.0
    %1355 = vmatprep.subr.mxu0 0.0
    %1356 = vmatpush1.msra.mxu0 0.0
    %1357 = vmatprep.subr.mxu0 0.0
    %1358 = vmatpush1.msra.mxu0 0.0
    %1359 = vmatprep.subr.mxu0 0.0
    %1360 = vmatpush1.msra.mxu0 0.0
    %1361 = vmatprep.subr.mxu0 0.0
    %1362 = vmatpush1.msra.mxu0 0.0
    %1363 = vmatprep.subr.mxu0 0.0
    %1364 = vmatpush1.msra.mxu0 0.0
    %1365 = vmatprep.subr.mxu0 0.0
    %1366 = vmatpush1.msra.mxu0 0.0
    %1367 = vmatprep.subr.mxu0 0.0
    %1368 = vmatpush1.msra.mxu0 0.0
    %1369 = vmatprep.subr.mxu0 0.0
    %1370 = vmatpush1.msra.mxu0 0.0
    %1371 = vmatprep.subr.mxu0 0.0
    %1372 = vmatpush1.msra.mxu0 0.0
    %1373 = vmatprep.subr.mxu0 0.0
    %1374 = vmatpush1.msra.mxu0 0.0
    %1375 = vmatprep.subr.mxu0 0.0
    %1376 = vmatpush1.msra.mxu0 0.0
    %1377 = vmatprep.subr.mxu0 0.0
    %1378 = vmatpush1.msra.mxu0 0.0
    %1379 = vmatprep.subr.mxu0 0.0
    %1380 = vmatpush1.msra.mxu0 0.0
    %1381 = vmatprep.subr.mxu0 0.0
    %1382 = vmatpush1.msra.mxu0 0.0
    %1383 = vmatprep.subr.mxu0 0.0
    %1384 = vmatpush1.msra.mxu0 0.0
    %1385 = vmatprep.subr.mxu0 0.0
    %1386 = vmatpush1.msra.mxu0 0.0
    %1387 = vmatprep.subr.mxu0 0.0
    %1388 = vmatpush1.msra.mxu0 0.0
    %1389 = vmatprep.subr.mxu0 0.0
    %1390 = vmatpush1.msra.mxu0 0.0
    %1391 = vmatprep.subr.mxu0 0.0
    %1392 = vmatpush1.msra.mxu0 0.0
    %1393 = vmatprep.subr.mxu0 0.0
    %1394 = vmatpush1.msra.mxu0 0.0
    %1395 = vmatprep.subr.mxu0 0.0
    %1396 = vmatpush1.msra.mxu0 0.0
    %1397 = vmatprep.subr.mxu0 0.0
    %1398 = vmatpush1.msra.mxu0 0.0
    %1399 = vmatprep.subr.mxu0 0.0
    %1400 = vmatpush1.msra.mxu0 0.0
    %1401 = vmatprep.subr.mxu0 0.0
    %1402 = vmatpush1.msra.mxu0 0.0
    %1403 = vmatprep.subr.mxu0 0.0
    %1404 = vmatpush1.msra.mxu0 0.0
    %1405 = vmatprep.subr.mxu0 0.0
    %1406 = vmatpush1.msra.mxu0 0.0
    %1407 = vmatprep.subr.mxu0 0.0
    %1408 = vmatpush1.msra.mxu0 0.0
    %1409 = vmatprep.mubr.f32.mxu0 0.0
    %1410 = vmatmul.mubr.f32.gmra.mrb[0].mxu0 %v1255
    %v1411 = vpop.f32.mrb[0].mxu0
    %v1412 = vadd.f32 0.0, %v1411
    %v1413 = vpop.f32.mrb[0].mxu0
    %v1414 = vadd.f32 0.0, %v1413
    %1415 = vmatprep.mubr.f32.mxu0 0.0
    %1416 = vmatmul.mubr.f32.gmra.mrb[0].mxu0 %v1258
    %v1417 = vpop.f32.mrb[0].mxu0
    %v1418 = vadd.f32 0.0, %v1417
    %v1419 = vpop.f32.mrb[0].mxu0
    %v1420 = vadd.f32 0.0, %v1419
    %1421 = vdwg.mxu0
    %v1422 = vadd.f32 %v1221, %v1335
    %v1423 = vadd.f32 %v1222, %v1337
    %v1424 = vadd.f32 %v1223, %v1412
    %v1425 = vadd.f32 %v1224, %v1414
    %v1426 = vadd.f32 %v1225, %v1341
    %v1427 = vadd.f32 %v1226, %v1343
    %v1428 = vadd.f32 %v1227, %v1418
    %v1429 = vadd.f32 %v1228, %v1420
    %v1430 = vld [vmem:[#allocation4 + $0x70] sm:$0xff]
    %v1431 = vld [vmem:[#allocation4 + $0x78] sm:$0xff]
    %v1432 = vld [vmem:[%s0] sm:$0xff]
    %v1433 = vld [vmem:[%s0 + $0x8] sm:$0xff]
    %v1434 = vld [vmem:[%s0 + $0x10] sm:$0xf]
    %v1438 = vcombine.high %v1432, %v1432
    %v1439 = vcombine.high %v1433, %v1433
    %1440 = vrot.lane.b32.xlu0 %v1432, 99
    %v1441 = vpop.permute.xlu0 %1440
    %1442 = vrot.lane.b32.xlu0 %v1438, 99
    %v1443 = vpop.permute.xlu0 %1442
    %1444 = vrot.lane.b32.xlu0 %v1433, 99
    %v1445 = vpop.permute.xlu0 %1444
    %1446 = vrot.lane.b32.xlu0 %v1439, 99
    %v1447 = vpop.permute.xlu0 %1446
    %1448 = vrot.lane.b32.xlu0 %v1434, 99
    %v1449 = vpop.permute.xlu0 %1448
    %vm1450 = vcmask 809984
    %v1451 = vsel %vm1450, %v1441, %v1443
    %v1452 = vsel %vm1450, %v1443, %v1445
    %v1453 = vsel %vm1450, %v1445, %v1447
    %v1454 = vsel %vm1450, %v1447, %v1449
    %v1456 = vsel %vm92, %v1430, 0
    %v1459 = vsel %vm92, %v1431, 0
    %v1461 = vsel %vm99, %v1451, 0
    %v1463 = vsel %vm99, %v1452, 0
    %v1465 = vsel %vm99, %v1453, 0
    %v1467 = vsel %vm99, %v1454, 0
    %1469 = vmatprep.subr.mxu0 %v1463
    %1470 = vmatpush1.msra.mxu0 %v1461
    %1471 = vmatprep.subr.mxu0 0.0
    %1472 = vmatpush1.msra.mxu0 0.0
    %1473 = vmatprep.subr.mxu0 0.0
    %1474 = vmatpush1.msra.mxu0 0.0
    %1475 = vmatprep.subr.mxu0 0.0
    %1476 = vmatpush1.msra.mxu0 0.0
    %1477 = vmatprep.subr.mxu0 0.0
    %1478 = vmatpush1.msra.mxu0 0.0
    %1479 = vmatprep.subr.mxu0 0.0
    %1480 = vmatpush1.msra.mxu0 0.0
    %1481 = vmatprep.subr.mxu0 0.0
    %1482 = vmatpush1.msra.mxu0 0.0
    %1483 = vmatprep.subr.mxu0 0.0
    %1484 = vmatpush1.msra.mxu0 0.0
    %1485 = vmatprep.subr.mxu0 0.0
    %1486 = vmatpush1.msra.mxu0 0.0
    %1487 = vmatprep.subr.mxu0 0.0
    %1488 = vmatpush1.msra.mxu0 0.0
    %1489 = vmatprep.subr.mxu0 0.0
    %1490 = vmatpush1.msra.mxu0 0.0
    %1491 = vmatprep.subr.mxu0 0.0
    %1492 = vmatpush1.msra.mxu0 0.0
    %1493 = vmatprep.subr.mxu0 0.0
    %1494 = vmatpush1.msra.mxu0 0.0
    %1495 = vmatprep.subr.mxu0 0.0
    %1496 = vmatpush1.msra.mxu0 0.0
    %1497 = vmatprep.subr.mxu0 0.0
    %1498 = vmatpush1.msra.mxu0 0.0
    %1499 = vmatprep.subr.mxu0 0.0
    %1500 = vmatpush1.msra.mxu0 0.0
    %1501 = vmatprep.subr.mxu0 0.0
    %1502 = vmatpush1.msra.mxu0 0.0
    %1503 = vmatprep.subr.mxu0 0.0
    %1504 = vmatpush1.msra.mxu0 0.0
    %1505 = vmatprep.subr.mxu0 0.0
    %1506 = vmatpush1.msra.mxu0 0.0
    %1507 = vmatprep.subr.mxu0 0.0
    %1508 = vmatpush1.msra.mxu0 0.0
    %1509 = vmatprep.subr.mxu0 0.0
    %1510 = vmatpush1.msra.mxu0 0.0
    %1511 = vmatprep.subr.mxu0 0.0
    %1512 = vmatpush1.msra.mxu0 0.0
    %1513 = vmatprep.subr.mxu0 0.0
    %1514 = vmatpush1.msra.mxu0 0.0
    %1515 = vmatprep.subr.mxu0 0.0
    %1516 = vmatpush1.msra.mxu0 0.0
    %1517 = vmatprep.subr.mxu0 0.0
    %1518 = vmatpush1.msra.mxu0 0.0
    %1519 = vmatprep.subr.mxu0 0.0
    %1520 = vmatpush1.msra.mxu0 0.0
    %1521 = vmatprep.subr.mxu0 0.0
    %1522 = vmatpush1.msra.mxu0 0.0
    %1523 = vmatprep.subr.mxu0 0.0
    %1524 = vmatpush1.msra.mxu0 0.0
    %1525 = vmatprep.subr.mxu0 0.0
    %1526 = vmatpush1.msra.mxu0 0.0
    %1527 = vmatprep.subr.mxu0 0.0
    %1528 = vmatpush1.msra.mxu0 0.0
    %1529 = vmatprep.subr.mxu0 0.0
    %1530 = vmatpush1.msra.mxu0 0.0
    %1531 = vmatprep.subr.mxu0 0.0
    %1532 = vmatpush1.msra.mxu0 0.0
    %1533 = vmatprep.mubr.f32.mxu0 0.0
    %1534 = vmatmul.mubr.f32.gmra.mrb[0].mxu0 %v1456
    %v1535 = vpop.f32.mrb[0].mxu0
    %v1536 = vadd.f32 0.0, %v1535
    %v1537 = vpop.f32.mrb[0].mxu0
    %v1538 = vadd.f32 0.0, %v1537
    %1539 = vmatprep.mubr.f32.mxu0 0.0
    %1540 = vmatmul.mubr.f32.gmra.mrb[0].mxu0 %v1459
    %v1541 = vpop.f32.mrb[0].mxu0
    %v1542 = vadd.f32 0.0, %v1541
    %v1543 = vpop.f32.mrb[0].mxu0
    %v1544 = vadd.f32 0.0, %v1543
    %1545 = vdwg.mxu0
    %1546 = vmatprep.subr.mxu0 %v1467
    %1547 = vmatpush1.msra.mxu0 %v1465
    %1548 = vmatprep.subr.mxu0 0.0
    %1549 = vmatpush1.msra.mxu0 0.0
    %1550 = vmatprep.subr.mxu0 0.0
    %1551 = vmatpush1.msra.mxu0 0.0
    %1552 = vmatprep.subr.mxu0 0.0
    %1553 = vmatpush1.msra.mxu0 0.0
    %1554 = vmatprep.subr.mxu0 0.0
    %1555 = vmatpush1.msra.mxu0 0.0
    %1556 = vmatprep.subr.mxu0 0.0
    %1557 = vmatpush1.msra.mxu0 0.0
    %1558 = vmatprep.subr.mxu0 0.0
    %1559 = vmatpush1.msra.mxu0 0.0
    %1560 = vmatprep.subr.mxu0 0.0
    %1561 = vmatpush1.msra.mxu0 0.0
    %1562 = vmatprep.subr.mxu0 0.0
    %1563 = vmatpush1.msra.mxu0 0.0
    %1564 = vmatprep.subr.mxu0 0.0
    %1565 = vmatpush1.msra.mxu0 0.0
    %1566 = vmatprep.subr.mxu0 0.0
    %1567 = vmatpush1.msra.mxu0 0.0
    %1568 = vmatprep.subr.mxu0 0.0
    %1569 = vmatpush1.msra.mxu0 0.0
    %1570 = vmatprep.subr.mxu0 0.0
    %1571 = vmatpush1.msra.mxu0 0.0
    %1572 = vmatprep.subr.mxu0 0.0
    %1573 = vmatpush1.msra.mxu0 0.0
    %1574 = vmatprep.subr.mxu0 0.0
    %1575 = vmatpush1.msra.mxu0 0.0
    %1576 = vmatprep.subr.mxu0 0.0
    %1577 = vmatpush1.msra.mxu0 0.0
    %1578 = vmatprep.subr.mxu0 0.0
    %1579 = vmatpush1.msra.mxu0 0.0
    %1580 = vmatprep.subr.mxu0 0.0
    %1581 = vmatpush1.msra.mxu0 0.0
    %1582 = vmatprep.subr.mxu0 0.0
    %1583 = vmatpush1.msra.mxu0 0.0
    %1584 = vmatprep.subr.mxu0 0.0
    %1585 = vmatpush1.msra.mxu0 0.0
    %1586 = vmatprep.subr.mxu0 0.0
    %1587 = vmatpush1.msra.mxu0 0.0
    %1588 = vmatprep.subr.mxu0 0.0
    %1589 = vmatpush1.msra.mxu0 0.0
    %1590 = vmatprep.subr.mxu0 0.0
    %1591 = vmatpush1.msra.mxu0 0.0
    %1592 = vmatprep.subr.mxu0 0.0
    %1593 = vmatpush1.msra.mxu0 0.0
    %1594 = vmatprep.subr.mxu0 0.0
    %1595 = vmatpush1.msra.mxu0 0.0
    %1596 = vmatprep.subr.mxu0 0.0
    %1597 = vmatpush1.msra.mxu0 0.0
    %1598 = vmatprep.subr.mxu0 0.0
    %1599 = vmatpush1.msra.mxu0 0.0
    %1600 = vmatprep.subr.mxu0 0.0
    %1601 = vmatpush1.msra.mxu0 0.0
    %1602 = vmatprep.subr.mxu0 0.0
    %1603 = vmatpush1.msra.mxu0 0.0
    %1604 = vmatprep.subr.mxu0 0.0
    %1605 = vmatpush1.msra.mxu0 0.0
    %1606 = vmatprep.subr.mxu0 0.0
    %1607 = vmatpush1.msra.mxu0 0.0
    %1608 = vmatprep.subr.mxu0 0.0
    %1609 = vmatpush1.msra.mxu0 0.0
    %1610 = vmatprep.mubr.f32.mxu0 0.0
    %1611 = vmatmul.mubr.f32.gmra.mrb[0].mxu0 %v1456
    %v1612 = vpop.f32.mrb[0].mxu0
    %v1613 = vadd.f32 0.0, %v1612
    %v1614 = vpop.f32.mrb[0].mxu0
    %v1615 = vadd.f32 0.0, %v1614
    %1616 = vmatprep.mubr.f32.mxu0 0.0
    %1617 = vmatmul.mubr.f32.gmra.mrb[0].mxu0 %v1459
    %v1618 = vpop.f32.mrb[0].mxu0
    %v1619 = vadd.f32 0.0, %v1618
    %v1620 = vpop.f32.mrb[0].mxu0
    %v1621 = vadd.f32 0.0, %v1620
    %1622 = vdwg.mxu0
    %v1623 = vadd.f32 %v1422, %v1536
    %v1624 = vadd.f32 %v1423, %v1538
    %v1625 = vadd.f32 %v1424, %v1613
    %v1626 = vadd.f32 %v1425, %v1615
    %v1627 = vadd.f32 %v1426, %v1542
    %v1628 = vadd.f32 %v1427, %v1544
    %v1629 = vadd.f32 %v1428, %v1619
    %v1630 = vadd.f32 %v1429, %v1621
    %v1631 = vld [vmem:[#allocation4 + $0x80] sm:$0xff]
    %v1632 = vld [vmem:[#allocation4 + $0x88] sm:$0xff]
    %v1633 = vld [vmem:[%s0] sm:$0xff]
    %v1634 = vld [vmem:[%s0 + $0x8] sm:$0xff]
    %v1635 = vld [vmem:[%s0 + $0x10] sm:$0xf]
    %v1639 = vcombine.high %v1633, %v1633
    %v1640 = vcombine.high %v1634, %v1634
    %1641 = vrot.lane.b32.xlu0 %v1633, 98
    %v1642 = vpop.permute.xlu0 %1641
    %1643 = vrot.lane.b32.xlu0 %v1639, 98
    %v1644 = vpop.permute.xlu0 %1643
    %1645 = vrot.lane.b32.xlu0 %v1634, 98
    %v1646 = vpop.permute.xlu0 %1645
    %1647 = vrot.lane.b32.xlu0 %v1640, 98
    %v1648 = vpop.permute.xlu0 %1647
    %1649 = vrot.lane.b32.xlu0 %v1635, 98
    %v1650 = vpop.permute.xlu0 %1649
    %vm1651 = vcmask 801792
    %v1652 = vsel %vm1651, %v1642, %v1644
    %v1653 = vsel %vm1651, %v1644, %v1646
    %v1654 = vsel %vm1651, %v1646, %v1648
    %v1655 = vsel %vm1651, %v1648, %v1650
    %v1657 = vsel %vm92, %v1631, 0
    %v1660 = vsel %vm92, %v1632, 0
    %v1662 = vsel %vm99, %v1652, 0
    %v1664 = vsel %vm99, %v1653, 0
    %v1666 = vsel %vm99, %v1654, 0
    %v1668 = vsel %vm99, %v1655, 0
    %1670 = vmatprep.subr.mxu0 %v1664
    %1671 = vmatpush1.msra.mxu0 %v1662
    %1672 = vmatprep.subr.mxu0 0.0
    %1673 = vmatpush1.msra.mxu0 0.0
    %1674 = vmatprep.subr.mxu0 0.0
    %1675 = vmatpush1.msra.mxu0 0.0
    %1676 = vmatprep.subr.mxu0 0.0
    %1677 = vmatpush1.msra.mxu0 0.0
    %1678 = vmatprep.subr.mxu0 0.0
    %1679 = vmatpush1.msra.mxu0 0.0
    %1680 = vmatprep.subr.mxu0 0.0
    %1681 = vmatpush1.msra.mxu0 0.0
    %1682 = vmatprep.subr.mxu0 0.0
    %1683 = vmatpush1.msra.mxu0 0.0
    %1684 = vmatprep.subr.mxu0 0.0
    %1685 = vmatpush1.msra.mxu0 0.0
    %1686 = vmatprep.subr.mxu0 0.0
    %1687 = vmatpush1.msra.mxu0 0.0
    %1688 = vmatprep.subr.mxu0 0.0
    %1689 = vmatpush1.msra.mxu0 0.0
    %1690 = vmatprep.subr.mxu0 0.0
    %1691 = vmatpush1.msra.mxu0 0.0
    %1692 = vmatprep.subr.mxu0 0.0
    %1693 = vmatpush1.msra.mxu0 0.0
    %1694 = vmatprep.subr.mxu0 0.0
    %1695 = vmatpush1.msra.mxu0 0.0
    %1696 = vmatprep.subr.mxu0 0.0
    %1697 = vmatpush1.msra.mxu0 0.0
    %1698 = vmatprep.subr.mxu0 0.0
    %1699 = vmatpush1.msra.mxu0 0.0
    %1700 = vmatprep.subr.mxu0 0.0
    %1701 = vmatpush1.msra.mxu0 0.0
    %1702 = vmatprep.subr.mxu0 0.0
    %1703 = vmatpush1.msra.mxu0 0.0
    %1704 = vmatprep.subr.mxu0 0.0
    %1705 = vmatpush1.msra.mxu0 0.0
    %1706 = vmatprep.subr.mxu0 0.0
    %1707 = vmatpush1.msra.mxu0 0.0
    %1708 = vmatprep.subr.mxu0 0.0
    %1709 = vmatpush1.msra.mxu0 0.0
    %1710 = vmatprep.subr.mxu0 0.0
    %1711 = vmatpush1.msra.mxu0 0.0
    %1712 = vmatprep.subr.mxu0 0.0
    %1713 = vmatpush1.msra.mxu0 0.0
    %1714 = vmatprep.subr.mxu0 0.0
    %1715 = vmatpush1.msra.mxu0 0.0
    %1716 = vmatprep.subr.mxu0 0.0
    %1717 = vmatpush1.msra.mxu0 0.0
    %1718 = vmatprep.subr.mxu0 0.0
    %1719 = vmatpush1.msra.mxu0 0.0
    %1720 = vmatprep.subr.mxu0 0.0
    %1721 = vmatpush1.msra.mxu0 0.0
    %1722 = vmatprep.subr.mxu0 0.0
    %1723 = vmatpush1.msra.mxu0 0.0
    %1724 = vmatprep.subr.mxu0 0.0
    %1725 = vmatpush1.msra.mxu0 0.0
    %1726 = vmatprep.subr.mxu0 0.0
    %1727 = vmatpush1.msra.mxu0 0.0
    %1728 = vmatprep.subr.mxu0 0.0
    %1729 = vmatpush1.msra.mxu0 0.0
    %1730 = vmatprep.subr.mxu0 0.0
    %1731 = vmatpush1.msra.mxu0 0.0
    %1732 = vmatprep.subr.mxu0 0.0
    %1733 = vmatpush1.msra.mxu0 0.0
    %1734 = vmatprep.mubr.f32.mxu0 0.0
    %1735 = vmatmul.mubr.f32.gmra.mrb[0].mxu0 %v1657
    %v1736 = vpop.f32.mrb[0].mxu0
    %v1737 = vadd.f32 0.0, %v1736
    %v1738 = vpop.f32.mrb[0].mxu0
    %v1739 = vadd.f32 0.0, %v1738
    %1740 = vmatprep.mubr.f32.mxu0 0.0
    %1741 = vmatmul.mubr.f32.gmra.mrb[0].mxu0 %v1660
    %v1742 = vpop.f32.mrb[0].mxu0
    %v1743 = vadd.f32 0.0, %v1742
    %v1744 = vpop.f32.mrb[0].mxu0
    %v1745 = vadd.f32 0.0, %v1744
    %1746 = vdwg.mxu0
    %1747 = vmatprep.subr.mxu0 %v1668
    %1748 = vmatpush1.msra.mxu0 %v1666
    %1749 = vmatprep.subr.mxu0 0.0
    %1750 = vmatpush1.msra.mxu0 0.0
    %1751 = vmatprep.subr.mxu0 0.0
    %1752 = vmatpush1.msra.mxu0 0.0
    %1753 = vmatprep.subr.mxu0 0.0
    %1754 = vmatpush1.msra.mxu0 0.0
    %1755 = vmatprep.subr.mxu0 0.0
    %1756 = vmatpush1.msra.mxu0 0.0
    %1757 = vmatprep.subr.mxu0 0.0
    %1758 = vmatpush1.msra.mxu0 0.0
    %1759 = vmatprep.subr.mxu0 0.0
    %1760 = vmatpush1.msra.mxu0 0.0
    %1761 = vmatprep.subr.mxu0 0.0
    %1762 = vmatpush1.msra.mxu0 0.0
    %1763 = vmatprep.subr.mxu0 0.0
    %1764 = vmatpush1.msra.mxu0 0.0
    %1765 = vmatprep.subr.mxu0 0.0
    %1766 = vmatpush1.msra.mxu0 0.0
    %1767 = vmatprep.subr.mxu0 0.0
    %1768 = vmatpush1.msra.mxu0 0.0
    %1769 = vmatprep.subr.mxu0 0.0
    %1770 = vmatpush1.msra.mxu0 0.0
    %1771 = vmatprep.subr.mxu0 0.0
    %1772 = vmatpush1.msra.mxu0 0.0
    %1773 = vmatprep.subr.mxu0 0.0
    %1774 = vmatpush1.msra.mxu0 0.0
    %1775 = vmatprep.subr.mxu0 0.0
    %1776 = vmatpush1.msra.mxu0 0.0
    %1777 = vmatprep.subr.mxu0 0.0
    %1778 = vmatpush1.msra.mxu0 0.0
    %1779 = vmatprep.subr.mxu0 0.0
    %1780 = vmatpush1.msra.mxu0 0.0
    %1781 = vmatprep.subr.mxu0 0.0
    %1782 = vmatpush1.msra.mxu0 0.0
    %1783 = vmatprep.subr.mxu0 0.0
    %1784 = vmatpush1.msra.mxu0 0.0
    %1785 = vmatprep.subr.mxu0 0.0
    %1786 = vmatpush1.msra.mxu0 0.0
    %1787 = vmatprep.subr.mxu0 0.0
    %1788 = vmatpush1.msra.mxu0 0.0
    %1789 = vmatprep.subr.mxu0 0.0
    %1790 = vmatpush1.msra.mxu0 0.0
    %1791 = vmatprep.subr.mxu0 0.0
    %1792 = vmatpush1.msra.mxu0 0.0
    %1793 = vmatprep.subr.mxu0 0.0
    %1794 = vmatpush1.msra.mxu0 0.0
    %1795 = vmatprep.subr.mxu0 0.0
    %1796 = vmatpush1.msra.mxu0 0.0
    %1797 = vmatprep.subr.mxu0 0.0
    %1798 = vmatpush1.msra.mxu0 0.0
    %1799 = vmatprep.subr.mxu0 0.0
    %1800 = vmatpush1.msra.mxu0 0.0
    %1801 = vmatprep.subr.mxu0 0.0
    %1802 = vmatpush1.msra.mxu0 0.0
    %1803 = vmatprep.subr.mxu0 0.0
    %1804 = vmatpush1.msra.mxu0 0.0
    %1805 = vmatprep.subr.mxu0 0.0
    %1806 = vmatpush1.msra.mxu0 0.0
    %1807 = vmatprep.subr.mxu0 0.0
    %1808 = vmatpush1.msra.mxu0 0.0
    %1809 = vmatprep.subr.mxu0 0.0
    %1810 = vmatpush1.msra.mxu0 0.0
    %1811 = vmatprep.mubr.f32.mxu0 0.0
    %1812 = vmatmul.mubr.f32.gmra.mrb[0].mxu0 %v1657
    %v1813 = vpop.f32.mrb[0].mxu0
    %v1814 = vadd.f32 0.0, %v1813
    %v1815 = vpop.f32.mrb[0].mxu0
    %v1816 = vadd.f32 0.0, %v1815
    %1817 = vmatprep.mubr.f32.mxu0 0.0
    %1818 = vmatmul.mubr.f32.gmra.mrb[0].mxu0 %v1660
    %v1819 = vpop.f32.mrb[0].mxu0
    %v1820 = vadd.f32 0.0, %v1819
    %v1821 = vpop.f32.mrb[0].mxu0
    %v1822 = vadd.f32 0.0, %v1821
    %1823 = vdwg.mxu0
    %v1824 = vadd.f32 %v1623, %v1737
    %v1825 = vadd.f32 %v1624, %v1739
    %v1826 = vadd.f32 %v1625, %v1814
    %v1827 = vadd.f32 %v1626, %v1816
    %v1828 = vadd.f32 %v1627, %v1743
    %v1829 = vadd.f32 %v1628, %v1745
    %v1830 = vadd.f32 %v1629, %v1820
    %v1831 = vadd.f32 %v1630, %v1822
    %v1833 = vlaneseq
    %v1834 = vshrl.u32 %v1833, 7
    %v1835 = vsub.s32 0, %v1834
    %v1836 = vrot.slane %v63, %v1835
    %v1837 = vlaneseq
    %v1838 = vshrl.u32 %v1837, 7
    %v1839 = vsub.s32 1, %v1838
    %v1840 = vrot.slane %v63, %v1839
    %v1841 = vlaneseq
    %v1842 = vshrl.u32 %v1841, 7
    %v1843 = vsub.s32 2, %v1842
    %v1844 = vrot.slane %v63, %v1843
    %v1845 = vlaneseq
    %v1846 = vshrl.u32 %v1845, 7
    %v1847 = vsub.s32 3, %v1846
    %v1848 = vrot.slane %v63, %v1847
    %v1853 = vmul.f32 %v1824, %v1836
    %v1854 = vmul.f32 %v1825, %v1840
    %v1855 = vmul.f32 %v1826, %v1844
    %v1856 = vmul.f32 %v1827, %v1848
    %v1857 = vmul.f32 %v1828, %v1836
    %v1858 = vmul.f32 %v1829, %v1840
    %v1859 = vmul.f32 %v1830, %v1844
    %v1860 = vmul.f32 %v1831, %v1848
    %v1861 = vadd.f32 %v1853, %v1854
    %v1862 = vadd.f32 %v1861, %v1855
    %vm1863 = vcmask 982016
    %v1864 = vsel %vm1863, %v1856, 0.0
    %v1865 = vadd.f32 %v1862, %v1864
    %1866 = vadd.xlane.f32.xlu0 %v1865
    %v1867 = vpop.xlane.xlu0 %1866
    %v1868 = vadd.f32 %v1857, %v1858
    %v1869 = vadd.f32 %v1868, %v1859
    %v1870 = vsel %vm1863, %v1860, 0.0
    %v1871 = vadd.f32 %v1869, %v1870
    %1872 = vadd.xlane.f32.xlu0 %v1871
    %v1873 = vpop.xlane.xlu0 %1872
    %v1874 = vmul.f32 %v1867, 0.0026041667
    %v1875 = vmul.f32 %v1873, 0.0026041667
    %v1876 = vsub.f32 %v1824, %v1874
    %v1877 = vsub.f32 %v1825, %v1874
    %v1878 = vsub.f32 %v1826, %v1874
    %v1879 = vsub.f32 %v1827, %v1874
    %v1880 = vsub.f32 %v1828, %v1875
    %v1881 = vsub.f32 %v1829, %v1875
    %v1882 = vsub.f32 %v1830, %v1875
    %v1883 = vsub.f32 %v1831, %v1875
    %v1884 = vmul.f32 %v1876, %v1836
    %v1885 = vmul.f32 %v1877, %v1840
    %v1886 = vmul.f32 %v1878, %v1844
    %v1887 = vmul.f32 %v1879, %v1848
    %v1888 = vmul.f32 %v1880, %v1836
    %v1889 = vmul.f32 %v1881, %v1840
    %v1890 = vmul.f32 %v1882, %v1844
    %v1891 = vmul.f32 %v1883, %v1848
    %v1892 = vmul.f32 %v1884, %v1884
    %v1893 = vmul.f32 %v1885, %v1885
    %v1894 = vmul.f32 %v1886, %v1886
    %v1895 = vmul.f32 %v1887, %v1887
    %v1896 = vmul.f32 %v1888, %v1888
    %v1897 = vmul.f32 %v1889, %v1889
    %v1898 = vmul.f32 %v1890, %v1890
    %v1899 = vmul.f32 %v1891, %v1891
    %v1900 = vadd.f32 %v1892, %v1893
    %v1901 = vadd.f32 %v1900, %v1894
    %v1902 = vsel %vm1863, %v1895, 0.0
    %v1903 = vadd.f32 %v1901, %v1902
    %1904 = vadd.xlane.f32.xlu0 %v1903
    %v1905 = vpop.xlane.xlu0 %1904
    %v1906 = vadd.f32 %v1896, %v1897
    %v1907 = vadd.f32 %v1906, %v1898
    %v1908 = vsel %vm1863, %v1899, 0.0
    %v1909 = vadd.f32 %v1907, %v1908
    %1910 = vadd.xlane.f32.xlu0 %v1909
    %v1911 = vpop.xlane.xlu0 %1910
    %v1912 = vmul.f32 %v1905, 0.0026041667
    %v1913 = vmul.f32 %v1911, 0.0026041667
    %v1914 = vadd.f32 %v1912, 1e-05
    %v1915 = vadd.f32 %v1913, 1e-05
    %v1916 = vrsqrt.pop %v1914
    %v1917 = vrsqrt.pop %v1915
    %v1918 = vmul.f32 %v61, %v1916
    %v1919 = vmul.f32 %v62, %v1917
    %v1920 = vmul.f32 %v1874, %v1918
    %v1921 = vmul.f32 %v1875, %v1919
    %1924 = vrot.lane.b32.xlu0 %v1920, 1
    %v1925 = vpop.permute.xlu0 %1924
    %1926 = vrot.lane.b32.xlu0 %v1921, 1
    %v1927 = vpop.permute.xlu0 %1926
    %v1930 = vsub.f32 %v61, %v1925
    %v1931 = vsub.f32 %v62, %v1927
    %1933 = vset.pattern.permute.xlu0 0
    %1934 = vperm.xlu0 %1933, %v1918
    %v1935 = vpop.permute.xlu0 %1934
    %1938 = vset.pattern.permute.xlu0 0
    %1939 = vperm.xlu0 %1938, %v1919
    %v1940 = vpop.permute.xlu0 %1939
    %v1942 = vmul.f32 %v1824, %v1935
    %v1943 = vmul.f32 %v1825, %v1935
    %v1944 = vmul.f32 %v1826, %v1935
    %v1945 = vmul.f32 %v1827, %v1935
    %v1946 = vmul.f32 %v1828, %v1940
    %v1947 = vmul.f32 %v1829, %v1940
    %v1948 = vmul.f32 %v1830, %v1940
    %v1949 = vmul.f32 %v1831, %v1940
    %1951 = vset.pattern.permute.xlu0 1
    %1952 = vperm.xlu0 %1951, %v1930
    %v1953 = vpop.permute.xlu0 %1952
    %1956 = vset.pattern.permute.xlu0 1
    %1957 = vperm.xlu0 %1956, %v1931
    %v1958 = vpop.permute.xlu0 %1957
    %v1960 = vadd.f32 %v1942, %v1953
    %v1961 = vadd.f32 %v1943, %v1953
    %v1962 = vadd.f32 %v1944, %v1953
    %v1963 = vadd.f32 %v1945, %v1953
    %v1964 = vadd.f32 %v1946, %v1958
    %v1965 = vadd.f32 %v1947, %v1958
    %v1966 = vadd.f32 %v1948, %v1958
    %v1967 = vadd.f32 %v1949, %v1958
    %v1968 = vmax.f32 %v1960, 0.0
    %v1969 = vmax.f32 %v1961, 0.0
    %v1970 = vmax.f32 %v1962, 0.0
    %v1971 = vmax.f32 %v1963, 0.0
    %v1972 = vmax.f32 %v1964, 0.0
    %v1973 = vmax.f32 %v1965, 0.0
    %v1974 = vmax.f32 %v1966, 0.0
    %v1975 = vmax.f32 %v1967, 0.0
    %1984 = vrot.lane.b32.xlu0 %v1968, 15
    %v1985 = vpop.permute.xlu0 %1984
    %1986 = vrot.lane.b32.xlu0 %v1969, 15
    %v1987 = vpop.permute.xlu0 %1986
    %1988 = vrot.lane.b32.xlu0 %v1970, 15
    %v1989 = vpop.permute.xlu0 %1988
    %1990 = vrot.lane.b32.xlu0 %v1971, 15
    %v1991 = vpop.permute.xlu0 %1990
    %1992 = vrot.lane.b32.xlu0 %v1972, 15
    %v1993 = vpop.permute.xlu0 %1992
    %1994 = vrot.lane.b32.xlu0 %v1973, 15
    %v1995 = vpop.permute.xlu0 %1994
    %1996 = vrot.lane.b32.xlu0 %v1974, 15
    %v1997 = vpop.permute.xlu0 %1996
    %1998 = vrot.lane.b32.xlu0 %v1975, 15
    %v1999 = vpop.permute.xlu0 %1998
    %vm2000 = vcmask 121856
    %v2001 = vsel %vm2000, %v1985, %v1987
    %v2002 = vsel %vm2000, %v1987, %v1989
    %v2003 = vsel %vm2000, %v1989, %v1991
    %v2004 = vsel %vm2000, %v1993, %v1995
    %v2005 = vsel %vm2000, %v1995, %v1997
    %v2006 = vsel %vm2000, %v1997, %v1999
    %v2015 = vsel %vm2000, 0.0, %v1985
    %v2016 = vsel %vm2000, 0.0, %v1993
    %v2018 = vlaneseq
    %v2019 = vshrl.u32 %v2018, 7
    %v2020 = vsub.s32 0, %v2019
    %v2021 = vrot.slane %v65, %v2020
    %v2022 = vlaneseq
    %v2023 = vshrl.u32 %v2022, 7
    %v2024 = vsub.s32 1, %v2023
    %v2025 = vrot.slane %v65, %v2024
    %v2026 = vlaneseq
    %v2027 = vshrl.u32 %v2026, 7
    %v2028 = vsub.s32 2, %v2027
    %v2029 = vrot.slane %v65, %v2028
    %v2030 = vlaneseq
    %v2031 = vshrl.u32 %v2030, 7
    %v2032 = vsub.s32 3, %v2031
    %v2033 = vrot.slane %v65, %v2032
    %v2038 = vmul.f32 %v2015, %v2021
    %v2039 = vmul.f32 %v2001, %v2025
    %v2040 = vmul.f32 %v2002, %v2029
    %v2041 = vmul.f32 %v2003, %v2033
    %v2042 = vmul.f32 %v2016, %v2021
    %v2043 = vmul.f32 %v2004, %v2025
    %v2044 = vmul.f32 %v2005, %v2029
    %v2045 = vmul.f32 %v2006, %v2033
    %2046 = vst [vmem:[#allocation2] sm:$0xff] %v2038
    %2047 = vst [vmem:[#allocation2 + $0x8] sm:$0xff] %v2039
    %2048 = vst [vmem:[#allocation2 + $0x10] sm:$0xff] %v2040
    %2049 = vst.msk [vmem:[#allocation2 + $0x18] sm:$0xff] %vm1863, %v2041
    %2050 = vst [vmem:[#allocation2 + $0x28] sm:$0xff] %v2042
    %2051 = vst [vmem:[#allocation2 + $0x30] sm:$0xff] %v2043
    %2052 = vst [vmem:[#allocation2 + $0x38] sm:$0xff] %v2044
    %2053 = vst.msk [vmem:[#allocation2 + $0x40] sm:$0xff] %vm1863, %v2045
    %vm2054 = vcmask 1048512
    %2055 = vst.msk [vmem:[#allocation2 + $0x18] sm:$0xff] %vm2054, 0.0
    %vm2056 = vcmask 457728
    %2057 = vst.msk [vmem:[#allocation2 + $0x20] sm:$0xff] %vm2056, 0.0
    %2058 = vst.msk [vmem:[#allocation2 + $0x40] sm:$0xff] %vm2054, 0.0
    %2059 = vst.msk [vmem:[#allocation2 + $0x48] sm:$0xff] %vm2056, 0.0
    %v2060 = vld [vmem:[%s2] sm:$0xff]
    %v2061 = vld [vmem:[%s2 + $0x8] sm:$0xff]
    %v2062 = vld [vmem:[#allocation2] sm:$0xff]
    %v2063 = vld [vmem:[#allocation2 + $0x8] sm:$0xff]
    %v2064 = vld [vmem:[#allocation2 + $0x10] sm:$0xff]
    %v2065 = vld [vmem:[#allocation2 + $0x18] sm:$0xff]
    %v2066 = vld [vmem:[#allocation2 + $0x28] sm:$0xff]
    %v2067 = vld [vmem:[#allocation2 + $0x30] sm:$0xff]
    %v2068 = vld [vmem:[#allocation2 + $0x38] sm:$0xff]
    %v2069 = vld [vmem:[#allocation2 + $0x40] sm:$0xff]
    %v2070 = vld [vmem:[%s2 + $0x10] sm:$0xff]
    %v2071 = vld [vmem:[%s2 + $0x18] sm:$0xff]
    %2080 = vrot.lane.b32.xlu0 %v2062, 127
    %v2081 = vpop.permute.xlu0 %2080
    %2082 = vrot.lane.b32.xlu0 %v2063, 127
    %v2083 = vpop.permute.xlu0 %2082
    %2084 = vrot.lane.b32.xlu0 %v2064, 127
    %v2085 = vpop.permute.xlu0 %2084
    %2086 = vrot.lane.b32.xlu0 %v2065, 127
    %v2087 = vpop.permute.xlu0 %2086
    %2088 = vrot.lane.b32.xlu0 %v2066, 127
    %v2089 = vpop.permute.xlu0 %2088
    %2090 = vrot.lane.b32.xlu0 %v2067, 127
    %v2091 = vpop.permute.xlu0 %2090
    %2092 = vrot.lane.b32.xlu0 %v2068, 127
    %v2093 = vpop.permute.xlu0 %2092
    %2094 = vrot.lane.b32.xlu0 %v2069, 127
    %v2095 = vpop.permute.xlu0 %2094
    %v2096 = vsel %vm88, %v2081, %v2083
    %v2097 = vsel %vm88, %v2083, %v2085
    %v2098 = vsel %vm88, %v2085, %v2087
    %v2099 = vsel %vm88, %v2089, %v2091
    %v2100 = vsel %vm88, %v2091, %v2093
    %v2101 = vsel %vm88, %v2093, %v2095
    %vm2110 = vcmask 130048
    %v2112 = vsel %vm2110, %v2070, 0
    %v2115 = vsel %vm2110, %v2071, 0
    %2117 = vmatprep.subr.mxu0 %v2097
    %2118 = vmatpush1.msra.mxu0 %v2096
    %2119 = vmatprep.subr.mxu0 %v2100
    %2120 = vmatpush1.msra.mxu0 %v2099
    %2121 = vmatprep.subr.mxu0 0.0
    %2122 = vmatpush1.msra.mxu0 0.0
    %2123 = vmatprep.subr.mxu0 0.0
    %2124 = vmatpush1.msra.mxu0 0.0
    %2125 = vmatprep.subr.mxu0 0.0
    %2126 = vmatpush1.msra.mxu0 0.0
    %2127 = vmatprep.subr.mxu0 0.0
    %2128 = vmatpush1.msra.mxu0 0.0
    %2129 = vmatprep.subr.mxu0 0.0
    %2130 = vmatpush1.msra.mxu0 0.0
    %2131 = vmatprep.subr.mxu0 0.0
    %2132 = vmatpush1.msra.mxu0 0.0
    %2133 = vmatprep.subr.mxu0 0.0
    %2134 = vmatpush1.msra.mxu0 0.0
    %2135 = vmatprep.subr.mxu0 0.0
    %2136 = vmatpush1.msra.mxu0 0.0
    %2137 = vmatprep.subr.mxu0 0.0
    %2138 = vmatpush1.msra.mxu0 0.0
    %2139 = vmatprep.subr.mxu0 0.0
    %2140 = vmatpush1.msra.mxu0 0.0
    %2141 = vmatprep.subr.mxu0 0.0
    %2142 = vmatpush1.msra.mxu0 0.0
    %2143 = vmatprep.subr.mxu0 0.0
    %2144 = vmatpush1.msra.mxu0 0.0
    %2145 = vmatprep.subr.mxu0 0.0
    %2146 = vmatpush1.msra.mxu0 0.0
    %2147 = vmatprep.subr.mxu0 0.0
    %2148 = vmatpush1.msra.mxu0 0.0
    %2149 = vmatprep.subr.mxu0 0.0
    %2150 = vmatpush1.msra.mxu0 0.0
    %2151 = vmatprep.subr.mxu0 0.0
    %2152 = vmatpush1.msra.mxu0 0.0
    %2153 = vmatprep.subr.mxu0 0.0
    %2154 = vmatpush1.msra.mxu0 0.0
    %2155 = vmatprep.subr.mxu0 0.0
    %2156 = vmatpush1.msra.mxu0 0.0
    %2157 = vmatprep.subr.mxu0 0.0
    %2158 = vmatpush1.msra.mxu0 0.0
    %2159 = vmatprep.subr.mxu0 0.0
    %2160 = vmatpush1.msra.mxu0 0.0
    %2161 = vmatprep.subr.mxu0 0.0
    %2162 = vmatpush1.msra.mxu0 0.0
    %2163 = vmatprep.subr.mxu0 0.0
    %2164 = vmatpush1.msra.mxu0 0.0
    %2165 = vmatprep.subr.mxu0 0.0
    %2166 = vmatpush1.msra.mxu0 0.0
    %2167 = vmatprep.subr.mxu0 0.0
    %2168 = vmatpush1.msra.mxu0 0.0
    %2169 = vmatprep.subr.mxu0 0.0
    %2170 = vmatpush1.msra.mxu0 0.0
    %2171 = vmatprep.subr.mxu0 0.0
    %2172 = vmatpush1.msra.mxu0 0.0
    %2173 = vmatprep.subr.mxu0 0.0
    %2174 = vmatpush1.msra.mxu0 0.0
    %2175 = vmatprep.subr.mxu0 0.0
    %2176 = vmatpush1.msra.mxu0 0.0
    %2177 = vmatprep.subr.mxu0 0.0
    %2178 = vmatpush1.msra.mxu0 0.0
    %2179 = vmatprep.subr.mxu0 0.0
    %2180 = vmatpush1.msra.mxu0 0.0
    %2181 = vmatprep.mubr.f32.mxu0 0.0
    %2182 = vmatmul.mubr.f32.gmra.mrb[0].mxu0 %v2112
    %v2183 = vpop.f32.mrb[0].mxu0
    %v2184 = vadd.f32 0.0, %v2183
    %v2185 = vpop.f32.mrb[0].mxu0
    %v2186 = vadd.f32 0.0, %v2185
    %2187 = vmatprep.mubr.f32.mxu0 0.0
    %2188 = vmatmul.mubr.f32.gmra.mrb[0].mxu0 %v2115
    %v2189 = vpop.f32.mrb[0].mxu0
    %v2190 = vadd.f32 0.0, %v2189
    %v2191 = vpop.f32.mrb[0].mxu0
    %v2192 = vadd.f32 0.0, %v2191
    %2193 = vdwg.mxu0
    %2194 = vmatprep.subr.mxu0 %v2087
    %2195 = vmatpush1.msra.mxu0 %v2098
    %2196 = vmatprep.subr.mxu0 %v2095
    %2197 = vmatpush1.msra.mxu0 %v2101
    %2198 = vmatprep.subr.mxu0 0.0
    %2199 = vmatpush1.msra.mxu0 0.0
    %2200 = vmatprep.subr.mxu0 0.0
    %2201 = vmatpush1.msra.mxu0 0.0
    %2202 = vmatprep.subr.mxu0 0.0
    %2203 = vmatpush1.msra.mxu0 0.0
    %2204 = vmatprep.subr.mxu0 0.0
    %2205 = vmatpush1.msra.mxu0 0.0
    %2206 = vmatprep.subr.mxu0 0.0
    %2207 = vmatpush1.msra.mxu0 0.0
    %2208 = vmatprep.subr.mxu0 0.0
    %2209 = vmatpush1.msra.mxu0 0.0
    %2210 = vmatprep.subr.mxu0 0.0
    %2211 = vmatpush1.msra.mxu0 0.0
    %2212 = vmatprep.subr.mxu0 0.0
    %2213 = vmatpush1.msra.mxu0 0.0
    %2214 = vmatprep.subr.mxu0 0.0
    %2215 = vmatpush1.msra.mxu0 0.0
    %2216 = vmatprep.subr.mxu0 0.0
    %2217 = vmatpush1.msra.mxu0 0.0
    %2218 = vmatprep.subr.mxu0 0.0
    %2219 = vmatpush1.msra.mxu0 0.0
    %2220 = vmatprep.subr.mxu0 0.0
    %2221 = vmatpush1.msra.mxu0 0.0
    %2222 = vmatprep.subr.mxu0 0.0
    %2223 = vmatpush1.msra.mxu0 0.0
    %2224 = vmatprep.subr.mxu0 0.0
    %2225 = vmatpush1.msra.mxu0 0.0
    %2226 = vmatprep.subr.mxu0 0.0
    %2227 = vmatpush1.msra.mxu0 0.0
    %2228 = vmatprep.subr.mxu0 0.0
    %2229 = vmatpush1.msra.mxu0 0.0
    %2230 = vmatprep.subr.mxu0 0.0
    %2231 = vmatpush1.msra.mxu0 0.0
    %2232 = vmatprep.subr.mxu0 0.0
    %2233 = vmatpush1.msra.mxu0 0.0
    %2234 = vmatprep.subr.mxu0 0.0
    %2235 = vmatpush1.msra.mxu0 0.0
    %2236 = vmatprep.subr.mxu0 0.0
    %2237 = vmatpush1.msra.mxu0 0.0
    %2238 = vmatprep.subr.mxu0 0.0
    %2239 = vmatpush1.msra.mxu0 0.0
    %2240 = vmatprep.subr.mxu0 0.0
    %2241 = vmatpush1.msra.mxu0 0.0
    %2242 = vmatprep.subr.mxu0 0.0
    %2243 = vmatpush1.msra.mxu0 0.0
    %2244 = vmatprep.subr.mxu0 0.0
    %2245 = vmatpush1.msra.mxu0 0.0
    %2246 = vmatprep.subr.mxu0 0.0
    %2247 = vmatpush1.msra.mxu0 0.0
    %2248 = vmatprep.subr.mxu0 0.0
    %2249 = vmatpush1.msra.mxu0 0.0
    %2250 = vmatprep.subr.mxu0 0.0
    %2251 = vmatpush1.msra.mxu0 0.0
    %2252 = vmatprep.subr.mxu0 0.0
    %2253 = vmatpush1.msra.mxu0 0.0
    %2254 = vmatprep.subr.mxu0 0.0
    %2255 = vmatpush1.msra.mxu0 0.0
    %2256 = vmatprep.subr.mxu0 0.0
    %2257 = vmatpush1.msra.mxu0 0.0
    %2258 = vmatprep.mubr.f32.mxu0 0.0
    %2259 = vmatmul.mubr.f32.gmra.mrb[0].mxu0 %v2112
    %v2260 = vpop.f32.mrb[0].mxu0
    %v2261 = vadd.f32 0.0, %v2260
    %v2262 = vpop.f32.mrb[0].mxu0
    %v2263 = vadd.f32 0.0, %v2262
    %2264 = vmatprep.mubr.f32.mxu0 0.0
    %2265 = vmatmul.mubr.f32.gmra.mrb[0].mxu0 %v2115
    %v2266 = vpop.f32.mrb[0].mxu0
    %v2267 = vadd.f32 0.0, %v2266
    %v2268 = vpop.f32.mrb[0].mxu0
    %v2269 = vadd.f32 0.0, %v2268
    %2270 = vdwg.mxu0
    %v2272 = vsel %vm2110, %v2060, 0
    %v2275 = vsel %vm2110, %v2061, 0
    %2277 = vmatprep.subr.mxu0 %v2063
    %2278 = vmatpush1.msra.mxu0 %v2062
    %2279 = vmatprep.subr.mxu0 %v2067
    %2280 = vmatpush1.msra.mxu0 %v2066
    %2281 = vmatprep.subr.mxu0 0.0
    %2282 = vmatpush1.msra.mxu0 0.0
    %2283 = vmatprep.subr.mxu0 0.0
    %2284 = vmatpush1.msra.mxu0 0.0
    %2285 = vmatprep.subr.mxu0 0.0
    %2286 = vmatpush1.msra.mxu0 0.0
    %2287 = vmatprep.subr.mxu0 0.0
    %2288 = vmatpush1.msra.mxu0 0.0
    %2289 = vmatprep.subr.mxu0 0.0
    %2290 = vmatpush1.msra.mxu0 0.0
    %2291 = vmatprep.subr.mxu0 0.0
    %2292 = vmatpush1.msra.mxu0 0.0
    %2293 = vmatprep.subr.mxu0 0.0
    %2294 = vmatpush1.msra.mxu0 0.0
    %2295 = vmatprep.subr.mxu0 0.0
    %2296 = vmatpush1.msra.mxu0 0.0
    %2297 = vmatprep.subr.mxu0 0.0
    %2298 = vmatpush1.msra.mxu0 0.0
    %2299 = vmatprep.subr.mxu0 0.0
    %2300 = vmatpush1.msra.mxu0 0.0
    %2301 = vmatprep.subr.mxu0 0.0
    %2302 = vmatpush1.msra.mxu0 0.0
    %2303 = vmatprep.subr.mxu0 0.0
    %2304 = vmatpush1.msra.mxu0 0.0
    %2305 = vmatprep.subr.mxu0 0.0
    %2306 = vmatpush1.msra.mxu0 0.0
    %2307 = vmatprep.subr.mxu0 0.0
    %2308 = vmatpush1.msra.mxu0 0.0
    %2309 = vmatprep.subr.mxu0 0.0
    %2310 = vmatpush1.msra.mxu0 0.0
    %2311 = vmatprep.subr.mxu0 0.0
    %2312 = vmatpush1.msra.mxu0 0.0
    %2313 = vmatprep.subr.mxu0 0.0
    %2314 = vmatpush1.msra.mxu0 0.0
    %2315 = vmatprep.subr.mxu0 0.0
    %2316 = vmatpush1.msra.mxu0 0.0
    %2317 = vmatprep.subr.mxu0 0.0
    %2318 = vmatpush1.msra.mxu0 0.0
    %2319 = vmatprep.subr.mxu0 0.0
    %2320 = vmatpush1.msra.mxu0 0.0
    %2321 = vmatprep.subr.mxu0 0.0
    %2322 = vmatpush1.msra.mxu0 0.0
    %2323 = vmatprep.subr.mxu0 0.0
    %2324 = vmatpush1.msra.mxu0 0.0
    %2325 = vmatprep.subr.mxu0 0.0
    %2326 = vmatpush1.msra.mxu0 0.0
    %2327 = vmatprep.subr.mxu0 0.0
    %2328 = vmatpush1.msra.mxu0 0.0
    %2329 = vmatprep.subr.mxu0 0.0
    %2330 = vmatpush1.msra.mxu0 0.0
    %2331 = vmatprep.subr.mxu0 0.0
    %2332 = vmatpush1.msra.mxu0 0.0
    %2333 = vmatprep.subr.mxu0 0.0
    %2334 = vmatpush1.msra.mxu0 0.0
    %2335 = vmatprep.subr.mxu0 0.0
    %2336 = vmatpush1.msra.mxu0 0.0
    %2337 = vmatprep.subr.mxu0 0.0
    %2338 = vmatpush1.msra.mxu0 0.0
    %2339 = vmatprep.subr.mxu0 0.0
    %2340 = vmatpush1.msra.mxu0 0.0
    %2341 = vmatprep.mubr.f32.mxu0 0.0
    %2342 = vmatmul.mubr.f32.gmra.mrb[0].mxu0 %v2272
    %v2343 = vpop.f32.mrb[0].mxu0
    %v2344 = vadd.f32 %v2184, %v2343
    %v2345 = vpop.f32.mrb[0].mxu0
    %v2346 = vadd.f32 %v2186, %v2345
    %2347 = vmatprep.mubr.f32.mxu0 0.0
    %2348 = vmatmul.mubr.f32.gmra.mrb[0].mxu0 %v2275
    %v2349 = vpop.f32.mrb[0].mxu0
    %v2350 = vadd.f32 %v2190, %v2349
    %v2351 = vpop.f32.mrb[0].mxu0
    %v2352 = vadd.f32 %v2192, %v2351
    %2353 = vdwg.mxu0
    %2354 = vmatprep.subr.mxu0 %v2065
    %2355 = vmatpush1.msra.mxu0 %v2064
    %2356 = vmatprep.subr.mxu0 %v2069
    %2357 = vmatpush1.msra.mxu0 %v2068
    %2358 = vmatprep.subr.mxu0 0.0
    %2359 = vmatpush1.msra.mxu0 0.0
    %2360 = vmatprep.subr.mxu0 0.0
    %2361 = vmatpush1.msra.mxu0 0.0
    %2362 = vmatprep.subr.mxu0 0.0
    %2363 = vmatpush1.msra.mxu0 0.0
    %2364 = vmatprep.subr.mxu0 0.0
    %2365 = vmatpush1.msra.mxu0 0.0
    %2366 = vmatprep.subr.mxu0 0.0
    %2367 = vmatpush1.msra.mxu0 0.0
    %2368 = vmatprep.subr.mxu0 0.0
    %2369 = vmatpush1.msra.mxu0 0.0
    %2370 = vmatprep.subr.mxu0 0.0
    %2371 = vmatpush1.msra.mxu0 0.0
    %2372 = vmatprep.subr.mxu0 0.0
    %2373 = vmatpush1.msra.mxu0 0.0
    %2374 = vmatprep.subr.mxu0 0.0
    %2375 = vmatpush1.msra.mxu0 0.0
    %2376 = vmatprep.subr.mxu0 0.0
    %2377 = vmatpush1.msra.mxu0 0.0
    %2378 = vmatprep.subr.mxu0 0.0
    %2379 = vmatpush1.msra.mxu0 0.0
    %2380 = vmatprep.subr.mxu0 0.0
    %2381 = vmatpush1.msra.mxu0 0.0
    %2382 = vmatprep.subr.mxu0 0.0
    %2383 = vmatpush1.msra.mxu0 0.0
    %2384 = vmatprep.subr.mxu0 0.0
    %2385 = vmatpush1.msra.mxu0 0.0
    %2386 = vmatprep.subr.mxu0 0.0
    %2387 = vmatpush1.msra.mxu0 0.0
    %2388 = vmatprep.subr.mxu0 0.0
    %2389 = vmatpush1.msra.mxu0 0.0
    %2390 = vmatprep.subr.mxu0 0.0
    %2391 = vmatpush1.msra.mxu0 0.0
    %2392 = vmatprep.subr.mxu0 0.0
    %2393 = vmatpush1.msra.mxu0 0.0
    %2394 = vmatprep.subr.mxu0 0.0
    %2395 = vmatpush1.msra.mxu0 0.0
    %2396 = vmatprep.subr.mxu0 0.0
    %2397 = vmatpush1.msra.mxu0 0.0
    %2398 = vmatprep.subr.mxu0 0.0
    %2399 = vmatpush1.msra.mxu0 0.0
    %2400 = vmatprep.subr.mxu0 0.0
    %2401 = vmatpush1.msra.mxu0 0.0
    %2402 = vmatprep.subr.mxu0 0.0
    %2403 = vmatpush1.msra.mxu0 0.0
    %2404 = vmatprep.subr.mxu0 0.0
    %2405 = vmatpush1.msra.mxu0 0.0
    %2406 = vmatprep.subr.mxu0 0.0
    %2407 = vmatpush1.msra.mxu0 0.0
    %2408 = vmatprep.subr.mxu0 0.0
    %2409 = vmatpush1.msra.mxu0 0.0
    %2410 = vmatprep.subr.mxu0 0.0
    %2411 = vmatpush1.msra.mxu0 0.0
    %2412 = vmatprep.subr.mxu0 0.0
    %2413 = vmatpush1.msra.mxu0 0.0
    %2414 = vmatprep.subr.mxu0 0.0
    %2415 = vmatpush1.msra.mxu0 0.0
    %2416 = vmatprep.subr.mxu0 0.0
    %2417 = vmatpush1.msra.mxu0 0.0
    %2418 = vmatprep.mubr.f32.mxu0 0.0
    %2419 = vmatmul.mubr.f32.gmra.mrb[0].mxu0 %v2272
    %v2420 = vpop.f32.mrb[0].mxu0
    %v2421 = vadd.f32 %v2261, %v2420
    %v2422 = vpop.f32.mrb[0].mxu0
    %v2423 = vadd.f32 %v2263, %v2422
    %2424 = vmatprep.mubr.f32.mxu0 0.0
    %2425 = vmatmul.mubr.f32.gmra.mrb[0].mxu0 %v2275
    %v2426 = vpop.f32.mrb[0].mxu0
    %v2427 = vadd.f32 %v2267, %v2426
    %v2428 = vpop.f32.mrb[0].mxu0
    %v2429 = vadd.f32 %v2269, %v2428
    %2430 = vdwg.mxu0
    %v2431 = vld [vmem:[%s2 + $0x20] sm:$0xff]
    %v2432 = vld [vmem:[%s2 + $0x28] sm:$0xff]
    %2433 = vrot.lane.b32.xlu0 %v2062, 126
    %v2434 = vpop.permute.xlu0 %2433
    %2435 = vrot.lane.b32.xlu0 %v2063, 126
    %v2436 = vpop.permute.xlu0 %2435
    %2437 = vrot.lane.b32.xlu0 %v2064, 126
    %v2438 = vpop.permute.xlu0 %2437
    %2439 = vrot.lane.b32.xlu0 %v2065, 126
    %v2440 = vpop.permute.xlu0 %2439
    %2441 = vrot.lane.b32.xlu0 %v2066, 126
    %v2442 = vpop.permute.xlu0 %2441
    %2443 = vrot.lane.b32.xlu0 %v2067, 126
    %v2444 = vpop.permute.xlu0 %2443
    %2445 = vrot.lane.b32.xlu0 %v2068, 126
    %v2446 = vpop.permute.xlu0 %2445
    %2447 = vrot.lane.b32.xlu0 %v2069, 126
    %v2448 = vpop.permute.xlu0 %2447
    %v2449 = vsel %vm446, %v2434, %v2436
    %v2450 = vsel %vm446, %v2436, %v2438
    %v2451 = vsel %vm446, %v2438, %v2440
    %v2452 = vsel %vm446, %v2442, %v2444
    %v2453 = vsel %vm446, %v2444, %v2446
    %v2454 = vsel %vm446, %v2446, %v2448
    %v2464 = vsel %vm2110, %v2431, 0
    %v2467 = vsel %vm2110, %v2432, 0
    %2469 = vmatprep.subr.mxu0 %v2450
    %2470 = vmatpush1.msra.mxu0 %v2449
    %2471 = vmatprep.subr.mxu0 %v2453
    %2472 = vmatpush1.msra.mxu0 %v2452
    %2473 = vmatprep.subr.mxu0 0.0
    %2474 = vmatpush1.msra.mxu0 0.0
    %2475 = vmatprep.subr.mxu0 0.0
    %2476 = vmatpush1.msra.mxu0 0.0
    %2477 = vmatprep.subr.mxu0 0.0
    %2478 = vmatpush1.msra.mxu0 0.0
    %2479 = vmatprep.subr.mxu0 0.0
    %2480 = vmatpush1.msra.mxu0 0.0
    %2481 = vmatprep.subr.mxu0 0.0
    %2482 = vmatpush1.msra.mxu0 0.0
    %2483 = vmatprep.subr.mxu0 0.0
    %2484 = vmatpush1.msra.mxu0 0.0
    %2485 = vmatprep.subr.mxu0 0.0
    %2486 = vmatpush1.msra.mxu0 0.0
    %2487 = vmatprep.subr.mxu0 0.0
    %2488 = vmatpush1.msra.mxu0 0.0
    %2489 = vmatprep.subr.mxu0 0.0
    %2490 = vmatpush1.msra.mxu0 0.0
    %2491 = vmatprep.subr.mxu0 0.0
    %2492 = vmatpush1.msra.mxu0 0.0
    %2493 = vmatprep.subr.mxu0 0.0
    %2494 = vmatpush1.msra.mxu0 0.0
    %2495 = vmatprep.subr.mxu0 0.0
    %2496 = vmatpush1.msra.mxu0 0.0
    %2497 = vmatprep.subr.mxu0 0.0
    %2498 = vmatpush1.msra.mxu0 0.0
    %2499 = vmatprep.subr.mxu0 0.0
    %2500 = vmatpush1.msra.mxu0 0.0
    %2501 = vmatprep.subr.mxu0 0.0
    %2502 = vmatpush1.msra.mxu0 0.0
    %2503 = vmatprep.subr.mxu0 0.0
    %2504 = vmatpush1.msra.mxu0 0.0
    %2505 = vmatprep.subr.mxu0 0.0
    %2506 = vmatpush1.msra.mxu0 0.0
    %2507 = vmatprep.subr.mxu0 0.0
    %2508 = vmatpush1.msra.mxu0 0.0
    %2509 = vmatprep.subr.mxu0 0.0
    %2510 = vmatpush1.msra.mxu0 0.0
    %2511 = vmatprep.subr.mxu0 0.0
    %2512 = vmatpush1.msra.mxu0 0.0
    %2513 = vmatprep.subr.mxu0 0.0
    %2514 = vmatpush1.msra.mxu0 0.0
    %2515 = vmatprep.subr.mxu0 0.0
    %2516 = vmatpush1.msra.mxu0 0.0
    %2517 = vmatprep.subr.mxu0 0.0
    %2518 = vmatpush1.msra.mxu0 0.0
    %2519 = vmatprep.subr.mxu0 0.0
    %2520 = vmatpush1.msra.mxu0 0.0
    %2521 = vmatprep.subr.mxu0 0.0
    %2522 = vmatpush1.msra.mxu0 0.0
    %2523 = vmatprep.subr.mxu0 0.0
    %2524 = vmatpush1.msra.mxu0 0.0
    %2525 = vmatprep.subr.mxu0 0.0
    %2526 = vmatpush1.msra.mxu0 0.0
    %2527 = vmatprep.subr.mxu0 0.0
    %2528 = vmatpush1.msra.mxu0 0.0
    %2529 = vmatprep.subr.mxu0 0.0
    %2530 = vmatpush1.msra.mxu0 0.0
    %2531 = vmatprep.subr.mxu0 0.0
    %2532 = vmatpush1.msra.mxu0 0.0
    %2533 = vmatprep.mubr.f32.mxu0 0.0
    %2534 = vmatmul.mubr.f32.gmra.mrb[0].mxu0 %v2464
    %v2535 = vpop.f32.mrb[0].mxu0
    %v2536 = vadd.f32 0.0, %v2535
    %v2537 = vpop.f32.mrb[0].mxu0
    %v2538 = vadd.f32 0.0, %v2537
    %2539 = vmatprep.mubr.f32.mxu0 0.0
    %2540 = vmatmul.mubr.f32.gmra.mrb[0].mxu0 %v2467
    %v2541 = vpop.f32.mrb[0].mxu0
    %v2542 = vadd.f32 0.0, %v2541
    %v2543 = vpop.f32.mrb[0].mxu0
    %v2544 = vadd.f32 0.0, %v2543
    %2545 = vdwg.mxu0
    %2546 = vmatprep.subr.mxu0 %v2440
    %2547 = vmatpush1.msra.mxu0 %v2451
    %2548 = vmatprep.subr.mxu0 %v2448
    %2549 = vmatpush1.msra.mxu0 %v2454
    %2550 = vmatprep.subr.mxu0 0.0
    %2551 = vmatpush1.msra.mxu0 0.0
    %2552 = vmatprep.subr.mxu0 0.0
    %2553 = vmatpush1.msra.mxu0 0.0
    %2554 = vmatprep.subr.mxu0 0.0
    %2555 = vmatpush1.msra.mxu0 0.0
    %2556 = vmatprep.subr.mxu0 0.0
    %2557 = vmatpush1.msra.mxu0 0.0
    %2558 = vmatprep.subr.mxu0 0.0
    %2559 = vmatpush1.msra.mxu0 0.0
    %2560 = vmatprep.subr.mxu0 0.0
    %2561 = vmatpush1.msra.mxu0 0.0
    %2562 = vmatprep.subr.mxu0 0.0
    %2563 = vmatpush1.msra.mxu0 0.0
    %2564 = vmatprep.subr.mxu0 0.0
    %2565 = vmatpush1.msra.mxu0 0.0
    %2566 = vmatprep.subr.mxu0 0.0
    %2567 = vmatpush1.msra.mxu0 0.0
    %2568 = vmatprep.subr.mxu0 0.0
    %2569 = vmatpush1.msra.mxu0 0.0
    %2570 = vmatprep.subr.mxu0 0.0
    %2571 = vmatpush1.msra.mxu0 0.0
    %2572 = vmatprep.subr.mxu0 0.0
    %2573 = vmatpush1.msra.mxu0 0.0
    %2574 = vmatprep.subr.mxu0 0.0
    %2575 = vmatpush1.msra.mxu0 0.0
    %2576 = vmatprep.subr.mxu0 0.0
    %2577 = vmatpush1.msra.mxu0 0.0
    %2578 = vmatprep.subr.mxu0 0.0
    %2579 = vmatpush1.msra.mxu0 0.0
    %2580 = vmatprep.subr.mxu0 0.0
    %2581 = vmatpush1.msra.mxu0 0.0
    %2582 = vmatprep.subr.mxu0 0.0
    %2583 = vmatpush1.msra.mxu0 0.0
    %2584 = vmatprep.subr.mxu0 0.0
    %2585 = vmatpush1.msra.mxu0 0.0
    %2586 = vmatprep.subr.mxu0 0.0
    %2587 = vmatpush1.msra.mxu0 0.0
    %2588 = vmatprep.subr.mxu0 0.0
    %2589 = vmatpush1.msra.mxu0 0.0
    %2590 = vmatprep.subr.mxu0 0.0
    %2591 = vmatpush1.msra.mxu0 0.0
    %2592 = vmatprep.subr.mxu0 0.0
    %2593 = vmatpush1.msra.mxu0 0.0
    %2594 = vmatprep.subr.mxu0 0.0
    %2595 = vmatpush1.msra.mxu0 0.0
    %2596 = vmatprep.subr.mxu0 0.0
    %2597 = vmatpush1.msra.mxu0 0.0
    %2598 = vmatprep.subr.mxu0 0.0
    %2599 = vmatpush1.msra.mxu0 0.0
    %2600 = vmatprep.subr.mxu0 0.0
    %2601 = vmatpush1.msra.mxu0 0.0
    %2602 = vmatprep.subr.mxu0 0.0
    %2603 = vmatpush1.msra.mxu0 0.0
    %2604 = vmatprep.subr.mxu0 0.0
    %2605 = vmatpush1.msra.mxu0 0.0
    %2606 = vmatprep.subr.mxu0 0.0
    %2607 = vmatpush1.msra.mxu0 0.0
    %2608 = vmatprep.subr.mxu0 0.0
    %2609 = vmatpush1.msra.mxu0 0.0
    %2610 = vmatprep.mubr.f32.mxu0 0.0
    %2611 = vmatmul.mubr.f32.gmra.mrb[0].mxu0 %v2464
    %v2612 = vpop.f32.mrb[0].mxu0
    %v2613 = vadd.f32 0.0, %v2612
    %v2614 = vpop.f32.mrb[0].mxu0
    %v2615 = vadd.f32 0.0, %v2614
    %2616 = vmatprep.mubr.f32.mxu0 0.0
    %2617 = vmatmul.mubr.f32.gmra.mrb[0].mxu0 %v2467
    %v2618 = vpop.f32.mrb[0].mxu0
    %v2619 = vadd.f32 0.0, %v2618
    %v2620 = vpop.f32.mrb[0].mxu0
    %v2621 = vadd.f32 0.0, %v2620
    %2622 = vdwg.mxu0
    %v2623 = vadd.f32 %v2344, %v2536
    %v2624 = vadd.f32 %v2346, %v2538
    %v2625 = vadd.f32 %v2421, %v2613
    %v2626 = vadd.f32 %v2423, %v2615
    %v2627 = vadd.f32 %v2350, %v2542
    %v2628 = vadd.f32 %v2352, %v2544
    %v2629 = vadd.f32 %v2427, %v2619
    %v2630 = vadd.f32 %v2429, %v2621
    %v2631 = vld [vmem:[%s2 + $0x30] sm:$0xff]
    %v2632 = vld [vmem:[%s2 + $0x38] sm:$0xff]
    %2633 = vrot.lane.b32.xlu0 %v2062, 125
    %v2634 = vpop.permute.xlu0 %2633
    %2635 = vrot.lane.b32.xlu0 %v2063, 125
    %v2636 = vpop.permute.xlu0 %2635
    %2637 = vrot.lane.b32.xlu0 %v2064, 125
    %v2638 = vpop.permute.xlu0 %2637
    %2639 = vrot.lane.b32.xlu0 %v2065, 125
    %v2640 = vpop.permute.xlu0 %2639
    %2641 = vrot.lane.b32.xlu0 %v2066, 125
    %v2642 = vpop.permute.xlu0 %2641
    %2643 = vrot.lane.b32.xlu0 %v2067, 125
    %v2644 = vpop.permute.xlu0 %2643
    %2645 = vrot.lane.b32.xlu0 %v2068, 125
    %v2646 = vpop.permute.xlu0 %2645
    %2647 = vrot.lane.b32.xlu0 %v2069, 125
    %v2648 = vpop.permute.xlu0 %2647
    %vm2649 = vcmask 1022976
    %v2650 = vsel %vm2649, %v2634, %v2636
    %v2651 = vsel %vm2649, %v2636, %v2638
    %v2652 = vsel %vm2649, %v2638, %v2640
    %v2653 = vsel %vm2649, %v2642, %v2644
    %v2654 = vsel %vm2649, %v2644, %v2646
    %v2655 = vsel %vm2649, %v2646, %v2648
    %v2665 = vsel %vm2110, %v2631, 0
    %v2668 = vsel %vm2110, %v2632, 0
    %2670 = vmatprep.subr.mxu0 %v2651
    %2671 = vmatpush1.msra.mxu0 %v2650
    %2672 = vmatprep.subr.mxu0 %v2654
    %2673 = vmatpush1.msra.mxu0 %v2653
    %2674 = vmatprep.subr.mxu0 0.0
    %2675 = vmatpush1.msra.mxu0 0.0
    %2676 = vmatprep.subr.mxu0 0.0
    %2677 = vmatpush1.msra.mxu0 0.0
    %2678 = vmatprep.subr.mxu0 0.0
    %2679 = vmatpush1.msra.mxu0 0.0
    %2680 = vmatprep.subr.mxu0 0.0
    %2681 = vmatpush1.msra.mxu0 0.0
    %2682 = vmatprep.subr.mxu0 0.0
    %2683 = vmatpush1.msra.mxu0 0.0
    %2684 = vmatprep.subr.mxu0 0.0
    %2685 = vmatpush1.msra.mxu0 0.0
    %2686 = vmatprep.subr.mxu0 0.0
    %2687 = vmatpush1.msra.mxu0 0.0
    %2688 = vmatprep.subr.mxu0 0.0
    %2689 = vmatpush1.msra.mxu0 0.0
    %2690 = vmatprep.subr.mxu0 0.0
    %2691 = vmatpush1.msra.mxu0 0.0
    %2692 = vmatprep.subr.mxu0 0.0
    %2693 = vmatpush1.msra.mxu0 0.0
    %2694 = vmatprep.subr.mxu0 0.0
    %2695 = vmatpush1.msra.mxu0 0.0
    %2696 = vmatprep.subr.mxu0 0.0
    %2697 = vmatpush1.msra.mxu0 0.0
    %2698 = vmatprep.subr.mxu0 0.0
    %2699 = vmatpush1.msra.mxu0 0.0
    %2700 = vmatprep.subr.mxu0 0.0
    %2701 = vmatpush1.msra.mxu0 0.0
    %2702 = vmatprep.subr.mxu0 0.0
    %2703 = vmatpush1.msra.mxu0 0.0
    %2704 = vmatprep.subr.mxu0 0.0
    %2705 = vmatpush1.msra.mxu0 0.0
    %2706 = vmatprep.subr.mxu0 0.0
    %2707 = vmatpush1.msra.mxu0 0.0
    %2708 = vmatprep.subr.mxu0 0.0
    %2709 = vmatpush1.msra.mxu0 0.0
    %2710 = vmatprep.subr.mxu0 0.0
    %2711 = vmatpush1.msra.mxu0 0.0
    %2712 = vmatprep.subr.mxu0 0.0
    %2713 = vmatpush1.msra.mxu0 0.0
    %2714 = vmatprep.subr.mxu0 0.0
    %2715 = vmatpush1.msra.mxu0 0.0
    %2716 = vmatprep.subr.mxu0 0.0
    %2717 = vmatpush1.msra.mxu0 0.0
    %2718 = vmatprep.subr.mxu0 0.0
    %2719 = vmatpush1.msra.mxu0 0.0
    %2720 = vmatprep.subr.mxu0 0.0
    %2721 = vmatpush1.msra.mxu0 0.0
    %2722 = vmatprep.subr.mxu0 0.0
    %2723 = vmatpush1.msra.mxu0 0.0
    %2724 = vmatprep.subr.mxu0 0.0
    %2725 = vmatpush1.msra.mxu0 0.0
    %2726 = vmatprep.subr.mxu0 0.0
    %2727 = vmatpush1.msra.mxu0 0.0
    %2728 = vmatprep.subr.mxu0 0.0
    %2729 = vmatpush1.msra.mxu0 0.0
    %2730 = vmatprep.subr.mxu0 0.0
    %2731 = vmatpush1.msra.mxu0 0.0
    %2732 = vmatprep.subr.mxu0 0.0
    %2733 = vmatpush1.msra.mxu0 0.0
    %2734 = vmatprep.mubr.f32.mxu0 0.0
    %2735 = vmatmul.mubr.f32.gmra.mrb[0].mxu0 %v2665
    %v2736 = vpop.f32.mrb[0].mxu0
    %v2737 = vadd.f32 0.0, %v2736
    %v2738 = vpop.f32.mrb[0].mxu0
    %v2739 = vadd.f32 0.0, %v2738
    %2740 = vmatprep.mubr.f32.mxu0 0.0
    %2741 = vmatmul.mubr.f32.gmra.mrb[0].mxu0 %v2668
    %v2742 = vpop.f32.mrb[0].mxu0
    %v2743 = vadd.f32 0.0, %v2742
    %v2744 = vpop.f32.mrb[0].mxu0
    %v2745 = vadd.f32 0.0, %v2744
    %2746 = vdwg.mxu0
    %2747 = vmatprep.subr.mxu0 %v2640
    %2748 = vmatpush1.msra.mxu0 %v2652
    %2749 = vmatprep.subr.mxu0 %v2648
    %2750 = vmatpush1.msra.mxu0 %v2655
    %2751 = vmatprep.subr.mxu0 0.0
    %2752 = vmatpush1.msra.mxu0 0.0
    %2753 = vmatprep.subr.mxu0 0.0
    %2754 = vmatpush1.msra.mxu0 0.0
    %2755 = vmatprep.subr.mxu0 0.0
    %2756 = vmatpush1.msra.mxu0 0.0
    %2757 = vmatprep.subr.mxu0 0.0
    %2758 = vmatpush1.msra.mxu0 0.0
    %2759 = vmatprep.subr.mxu0 0.0
    %2760 = vmatpush1.msra.mxu0 0.0
    %2761 = vmatprep.subr.mxu0 0.0
    %2762 = vmatpush1.msra.mxu0 0.0
    %2763 = vmatprep.subr.mxu0 0.0
    %2764 = vmatpush1.msra.mxu0 0.0
    %2765 = vmatprep.subr.mxu0 0.0
    %2766 = vmatpush1.msra.mxu0 0.0
    %2767 = vmatprep.subr.mxu0 0.0
    %2768 = vmatpush1.msra.mxu0 0.0
    %2769 = vmatprep.subr.mxu0 0.0
    %2770 = vmatpush1.msra.mxu0 0.0
    %2771 = vmatprep.subr.mxu0 0.0
    %2772 = vmatpush1.msra.mxu0 0.0
    %2773 = vmatprep.subr.mxu0 0.0
    %2774 = vmatpush1.msra.mxu0 0.0
    %2775 = vmatprep.subr.mxu0 0.0
    %2776 = vmatpush1.msra.mxu0 0.0
    %2777 = vmatprep.subr.mxu0 0.0
    %2778 = vmatpush1.msra.mxu0 0.0
    %2779 = vmatprep.subr.mxu0 0.0
    %2780 = vmatpush1.msra.mxu0 0.0
    %2781 = vmatprep.subr.mxu0 0.0
    %2782 = vmatpush1.msra.mxu0 0.0
    %2783 = vmatprep.subr.mxu0 0.0
    %2784 = vmatpush1.msra.mxu0 0.0
    %2785 = vmatprep.subr.mxu0 0.0
    %2786 = vmatpush1.msra.mxu0 0.0
    %2787 = vmatprep.subr.mxu0 0.0
    %2788 = vmatpush1.msra.mxu0 0.0
    %2789 = vmatprep.subr.mxu0 0.0
    %2790 = vmatpush1.msra.mxu0 0.0
    %2791 = vmatprep.subr.mxu0 0.0
    %2792 = vmatpush1.msra.mxu0 0.0
    %2793 = vmatprep.subr.mxu0 0.0
    %2794 = vmatpush1.msra.mxu0 0.0
    %2795 = vmatprep.subr.mxu0 0.0
    %2796 = vmatpush1.msra.mxu0 0.0
    %2797 = vmatprep.subr.mxu0 0.0
    %2798 = vmatpush1.msra.mxu0 0.0
    %2799 = vmatprep.subr.mxu0 0.0
    %2800 = vmatpush1.msra.mxu0 0.0
    %2801 = vmatprep.subr.mxu0 0.0
    %2802 = vmatpush1.msra.mxu0 0.0
    %2803 = vmatprep.subr.mxu0 0.0
    %2804 = vmatpush1.msra.mxu0 0.0
    %2805 = vmatprep.subr.mxu0 0.0
    %2806 = vmatpush1.msra.mxu0 0.0
    %2807 = vmatprep.subr.mxu0 0.0
    %2808 = vmatpush1.msra.mxu0 0.0
    %2809 = vmatprep.subr.mxu0 0.0
    %2810 = vmatpush1.msra.mxu0 0.0
    %2811 = vmatprep.mubr.f32.mxu0 0.0
    %2812 = vmatmul.mubr.f32.gmra.mrb[0].mxu0 %v2665
    %v2813 = vpop.f32.mrb[0].mxu0
    %v2814 = vadd.f32 0.0, %v2813
    %v2815 = vpop.f32.mrb[0].mxu0
    %v2816 = vadd.f32 0.0, %v2815
    %2817 = vmatprep.mubr.f32.mxu0 0.0
    %2818 = vmatmul.mubr.f32.gmra.mrb[0].mxu0 %v2668
    %v2819 = vpop.f32.mrb[0].mxu0
    %v2820 = vadd.f32 0.0, %v2819
    %v2821 = vpop.f32.mrb[0].mxu0
    %v2822 = vadd.f32 0.0, %v2821
    %2823 = vdwg.mxu0
    %v2824 = vadd.f32 %v2623, %v2737
    %v2825 = vadd.f32 %v2624, %v2739
    %v2826 = vadd.f32 %v2625, %v2814
    %v2827 = vadd.f32 %v2626, %v2816
    %v2828 = vadd.f32 %v2627, %v2743
    %v2829 = vadd.f32 %v2628, %v2745
    %v2830 = vadd.f32 %v2629, %v2820
    %v2831 = vadd.f32 %v2630, %v2822
    %v2832 = vld [vmem:[%s2 + $0x40] sm:$0xff]
    %v2833 = vld [vmem:[%s2 + $0x48] sm:$0xff]
    %v2834 = vld [vmem:[#allocation2] sm:$0xff]
    %v2835 = vld [vmem:[#allocation2 + $0x8] sm:$0xff]
    %v2836 = vld [vmem:[#allocation2 + $0x10] sm:$0xff]
    %v2837 = vld [vmem:[#allocation2 + $0x18] sm:$0xff]
    %v2838 = vld [vmem:[#allocation2 + $0x20] sm:$0xff]
    %v2839 = vld [vmem:[#allocation2 + $0x28] sm:$0xff]
    %v2840 = vld [vmem:[#allocation2 + $0x30] sm:$0xff]
    %v2841 = vld [vmem:[#allocation2 + $0x38] sm:$0xff]
    %v2842 = vld [vmem:[#allocation2 + $0x40] sm:$0xff]
    %v2843 = vld [vmem:[#allocation2 + $0x48] sm:$0xff]
    %2854 = vrot.lane.b32.xlu0 %v2834, 114
    %v2855 = vpop.permute.xlu0 %2854
    %2856 = vrot.lane.b32.xlu0 %v2835, 114
    %v2857 = vpop.permute.xlu0 %2856
    %2858 = vrot.lane.b32.xlu0 %v2836, 114
    %v2859 = vpop.permute.xlu0 %2858
    %2860 = vrot.lane.b32.xlu0 %v2837, 114
    %v2861 = vpop.permute.xlu0 %2860
    %2862 = vrot.lane.b32.xlu0 %v2838, 114
    %v2863 = vpop.permute.xlu0 %2862
    %2864 = vrot.lane.b32.xlu0 %v2839, 114
    %v2865 = vpop.permute.xlu0 %2864
    %2866 = vrot.lane.b32.xlu0 %v2840, 114
    %v2867 = vpop.permute.xlu0 %2866
    %2868 = vrot.lane.b32.xlu0 %v2841, 114
    %v2869 = vpop.permute.xlu0 %2868
    %2870 = vrot.lane.b32.xlu0 %v2842, 114
    %v2871 = vpop.permute.xlu0 %2870
    %2872 = vrot.lane.b32.xlu0 %v2843, 114
    %v2873 = vpop.permute.xlu0 %2872
    %v2874 = vsel %vm646, %v2855, %v2857
    %v2875 = vsel %vm646, %v2857, %v2859
    %v2876 = vsel %vm646, %v2859, %v2861
    %v2877 = vsel %vm646, %v2861, %v2863
    %v2878 = vsel %vm646, %v2865, %v2867
    %v2879 = vsel %vm646, %v2867, %v2869
    %v2880 = vsel %vm646, %v2869, %v2871
    %v2881 = vsel %vm646, %v2871, %v2873
    %v2891 = vsel %vm2110, %v2832, 0
    %v2894 = vsel %vm2110, %v2833, 0
    %2896 = vmatprep.subr.mxu0 %v2875
    %2897 = vmatpush1.msra.mxu0 %v2874
    %2898 = vmatprep.subr.mxu0 %v2879
    %2899 = vmatpush1.msra.mxu0 %v2878
    %2900 = vmatprep.subr.mxu0 0.0
    %2901 = vmatpush1.msra.mxu0 0.0
    %2902 = vmatprep.subr.mxu0 0.0
    %2903 = vmatpush1.msra.mxu0 0.0
    %2904 = vmatprep.subr.mxu0 0.0
    %2905 = vmatpush1.msra.mxu0 0.0
    %2906 = vmatprep.subr.mxu0 0.0
    %2907 = vmatpush1.msra.mxu0 0.0
    %2908 = vmatprep.subr.mxu0 0.0
    %2909 = vmatpush1.msra.mxu0 0.0
    %2910 = vmatprep.subr.mxu0 0.0
    %2911 = vmatpush1.msra.mxu0 0.0
    %2912 = vmatprep.subr.mxu0 0.0
    %2913 = vmatpush1.msra.mxu0 0.0
    %2914 = vmatprep.subr.mxu0 0.0
    %2915 = vmatpush1.msra.mxu0 0.0
    %2916 = vmatprep.subr.mxu0 0.0
    %2917 = vmatpush1.msra.mxu0 0.0
    %2918 = vmatprep.subr.mxu0 0.0
    %2919 = vmatpush1.msra.mxu0 0.0
    %2920 = vmatprep.subr.mxu0 0.0
    %2921 = vmatpush1.msra.mxu0 0.0
    %2922 = vmatprep.subr.mxu0 0.0
    %2923 = vmatpush1.msra.mxu0 0.0
    %2924 = vmatprep.subr.mxu0 0.0
    %2925 = vmatpush1.msra.mxu0 0.0
    %2926 = vmatprep.subr.mxu0 0.0
    %2927 = vmatpush1.msra.mxu0 0.0
    %2928 = vmatprep.subr.mxu0 0.0
    %2929 = vmatpush1.msra.mxu0 0.0
    %2930 = vmatprep.subr.mxu0 0.0
    %2931 = vmatpush1.msra.mxu0 0.0
    %2932 = vmatprep.subr.mxu0 0.0
    %2933 = vmatpush1.msra.mxu0 0.0
    %2934 = vmatprep.subr.mxu0 0.0
    %2935 = vmatpush1.msra.mxu0 0.0
    %2936 = vmatprep.subr.mxu0 0.0
    %2937 = vmatpush1.msra.mxu0 0.0
    %2938 = vmatprep.subr.mxu0 0.0
    %2939 = vmatpush1.msra.mxu0 0.0
    %2940 = vmatprep.subr.mxu0 0.0
    %2941 = vmatpush1.msra.mxu0 0.0
    %2942 = vmatprep.subr.mxu0 0.0
    %2943 = vmatpush1.msra.mxu0 0.0
    %2944 = vmatprep.subr.mxu0 0.0
    %2945 = vmatpush1.msra.mxu0 0.0
    %2946 = vmatprep.subr.mxu0 0.0
    %2947 = vmatpush1.msra.mxu0 0.0
    %2948 = vmatprep.subr.mxu0 0.0
    %2949 = vmatpush1.msra.mxu0 0.0
    %2950 = vmatprep.subr.mxu0 0.0
    %2951 = vmatpush1.msra.mxu0 0.0
    %2952 = vmatprep.subr.mxu0 0.0
    %2953 = vmatpush1.msra.mxu0 0.0
    %2954 = vmatprep.subr.mxu0 0.0
    %2955 = vmatpush1.msra.mxu0 0.0
    %2956 = vmatprep.subr.mxu0 0.0
    %2957 = vmatpush1.msra.mxu0 0.0
    %2958 = vmatprep.subr.mxu0 0.0
    %2959 = vmatpush1.msra.mxu0 0.0
    %2960 = vmatprep.mubr.f32.mxu0 0.0
    %2961 = vmatmul.mubr.f32.gmra.mrb[0].mxu0 %v2891
    %v2962 = vpop.f32.mrb[0].mxu0
    %v2963 = vadd.f32 0.0, %v2962
    %v2964 = vpop.f32.mrb[0].mxu0
    %v2965 = vadd.f32 0.0, %v2964
    %2966 = vmatprep.mubr.f32.mxu0 0.0
    %2967 = vmatmul.mubr.f32.gmra.mrb[0].mxu0 %v2894
    %v2968 = vpop.f32.mrb[0].mxu0
    %v2969 = vadd.f32 0.0, %v2968
    %v2970 = vpop.f32.mrb[0].mxu0
    %v2971 = vadd.f32 0.0, %v2970
    %2972 = vdwg.mxu0
    %2973 = vmatprep.subr.mxu0 %v2877
    %2974 = vmatpush1.msra.mxu0 %v2876
    %2975 = vmatprep.subr.mxu0 %v2881
    %2976 = vmatpush1.msra.mxu0 %v2880
    %2977 = vmatprep.subr.mxu0 0.0
    %2978 = vmatpush1.msra.mxu0 0.0
    %2979 = vmatprep.subr.mxu0 0.0
    %2980 = vmatpush1.msra.mxu0 0.0
    %2981 = vmatprep.subr.mxu0 0.0
    %2982 = vmatpush1.msra.mxu0 0.0
    %2983 = vmatprep.subr.mxu0 0.0
    %2984 = vmatpush1.msra.mxu0 0.0
    %2985 = vmatprep.subr.mxu0 0.0
    %2986 = vmatpush1.msra.mxu0 0.0
    %2987 = vmatprep.subr.mxu0 0.0
    %2988 = vmatpush1.msra.mxu0 0.0
    %2989 = vmatprep.subr.mxu0 0.0
    %2990 = vmatpush1.msra.mxu0 0.0
    %2991 = vmatprep.subr.mxu0 0.0
    %2992 = vmatpush1.msra.mxu0 0.0
    %2993 = vmatprep.subr.mxu0 0.0
    %2994 = vmatpush1.msra.mxu0 0.0
    %2995 = vmatprep.subr.mxu0 0.0
    %2996 = vmatpush1.msra.mxu0 0.0
    %2997 = vmatprep.subr.mxu0 0.0
    %2998 = vmatpush1.msra.mxu0 0.0
    %2999 = vmatprep.subr.mxu0 0.0
    %3000 = vmatpush1.msra.mxu0 0.0
    %3001 = vmatprep.subr.mxu0 0.0
    %3002 = vmatpush1.msra.mxu0 0.0
    %3003 = vmatprep.subr.mxu0 0.0
    %3004 = vmatpush1.msra.mxu0 0.0
    %3005 = vmatprep.subr.mxu0 0.0
    %3006 = vmatpush1.msra.mxu0 0.0
    %3007 = vmatprep.subr.mxu0 0.0
    %3008 = vmatpush1.msra.mxu0 0.0
    %3009 = vmatprep.subr.mxu0 0.0
    %3010 = vmatpush1.msra.mxu0 0.0
    %3011 = vmatprep.subr.mxu0 0.0
    %3012 = vmatpush1.msra.mxu0 0.0
    %3013 = vmatprep.subr.mxu0 0.0
    %3014 = vmatpush1.msra.mxu0 0.0
    %3015 = vmatprep.subr.mxu0 0.0
    %3016 = vmatpush1.msra.mxu0 0.0
    %3017 = vmatprep.subr.mxu0 0.0
    %3018 = vmatpush1.msra.mxu0 0.0
    %3019 = vmatprep.subr.mxu0 0.0
    %3020 = vmatpush1.msra.mxu0 0.0
    %3021 = vmatprep.subr.mxu0 0.0
    %3022 = vmatpush1.msra.mxu0 0.0
    %3023 = vmatprep.subr.mxu0 0.0
    %3024 = vmatpush1.msra.mxu0 0.0
    %3025 = vmatprep.subr.mxu0 0.0
    %3026 = vmatpush1.msra.mxu0 0.0
    %3027 = vmatprep.subr.mxu0 0.0
    %3028 = vmatpush1.msra.mxu0 0.0
    %3029 = vmatprep.subr.mxu0 0.0
    %3030 = vmatpush1.msra.mxu0 0.0
    %3031 = vmatprep.subr.mxu0 0.0
    %3032 = vmatpush1.msra.mxu0 0.0
    %3033 = vmatprep.subr.mxu0 0.0
    %3034 = vmatpush1.msra.mxu0 0.0
    %3035 = vmatprep.subr.mxu0 0.0
    %3036 = vmatpush1.msra.mxu0 0.0
    %3037 = vmatprep.mubr.f32.mxu0 0.0
    %3038 = vmatmul.mubr.f32.gmra.mrb[0].mxu0 %v2891
    %v3039 = vpop.f32.mrb[0].mxu0
    %v3040 = vadd.f32 0.0, %v3039
    %v3041 = vpop.f32.mrb[0].mxu0
    %v3042 = vadd.f32 0.0, %v3041
    %3043 = vmatprep.mubr.f32.mxu0 0.0
    %3044 = vmatmul.mubr.f32.gmra.mrb[0].mxu0 %v2894
    %v3045 = vpop.f32.mrb[0].mxu0
    %v3046 = vadd.f32 0.0, %v3045
    %v3047 = vpop.f32.mrb[0].mxu0
    %v3048 = vadd.f32 0.0, %v3047
    %3049 = vdwg.mxu0
    %v3050 = vadd.f32 %v2824, %v2963
    %v3051 = vadd.f32 %v2825, %v2965
    %v3052 = vadd.f32 %v2826, %v3040
    %v3053 = vadd.f32 %v2827, %v3042
    %v3054 = vadd.f32 %v2828, %v2969
    %v3055 = vadd.f32 %v2829, %v2971
    %v3056 = vadd.f32 %v2830, %v3046
    %v3057 = vadd.f32 %v2831, %v3048
    %v3058 = vld [vmem:[%s2 + $0x50] sm:$0xff]
    %v3059 = vld [vmem:[%s2 + $0x58] sm:$0xff]
    %3060 = vrot.lane.b32.xlu0 %v2834, 113
    %v3061 = vpop.permute.xlu0 %3060
    %3062 = vrot.lane.b32.xlu0 %v2835, 113
    %v3063 = vpop.permute.xlu0 %3062
    %3064 = vrot.lane.b32.xlu0 %v2836, 113
    %v3065 = vpop.permute.xlu0 %3064
    %3066 = vrot.lane.b32.xlu0 %v2837, 113
    %v3067 = vpop.permute.xlu0 %3066
    %3068 = vrot.lane.b32.xlu0 %v2838, 113
    %v3069 = vpop.permute.xlu0 %3068
    %3070 = vrot.lane.b32.xlu0 %v2839, 113
    %v3071 = vpop.permute.xlu0 %3070
    %3072 = vrot.lane.b32.xlu0 %v2840, 113
    %v3073 = vpop.permute.xlu0 %3072
    %3074 = vrot.lane.b32.xlu0 %v2841, 113
    %v3075 = vpop.permute.xlu0 %3074
    %3076 = vrot.lane.b32.xlu0 %v2842, 113
    %v3077 = vpop.permute.xlu0 %3076
    %3078 = vrot.lane.b32.xlu0 %v2843, 113
    %v3079 = vpop.permute.xlu0 %3078
    %v3080 = vsel %vm847, %v3061, %v3063
    %v3081 = vsel %vm847, %v3063, %v3065
    %v3082 = vsel %vm847, %v3065, %v3067
    %v3083 = vsel %vm847, %v3067, %v3069
    %v3084 = vsel %vm847, %v3071, %v3073
    %v3085 = vsel %vm847, %v3073, %v3075
    %v3086 = vsel %vm847, %v3075, %v3077
    %v3087 = vsel %vm847, %v3077, %v3079
    %v3097 = vsel %vm2110, %v3058, 0
    %v3100 = vsel %vm2110, %v3059, 0
    %3102 = vmatprep.subr.mxu0 %v3081
    %3103 = vmatpush1.msra.mxu0 %v3080
    %3104 = vmatprep.subr.mxu0 %v3085
    %3105 = vmatpush1.msra.mxu0 %v3084
    %3106 = vmatprep.subr.mxu0 0.0
    %3107 = vmatpush1.msra.mxu0 0.0
    %3108 = vmatprep.subr.mxu0 0.0
    %3109 = vmatpush1.msra.mxu0 0.0
    %3110 = vmatprep.subr.mxu0 0.0
    %3111 = vmatpush1.msra.mxu0 0.0
    %3112 = vmatprep.subr.mxu0 0.0
    %3113 = vmatpush1.msra.mxu0 0.0
    %3114 = vmatprep.subr.mxu0 0.0
    %3115 = vmatpush1.msra.mxu0 0.0
    %3116 = vmatprep.subr.mxu0 0.0
    %3117 = vmatpush1.msra.mxu0 0.0
    %3118 = vmatprep.subr.mxu0 0.0
    %3119 = vmatpush1.msra.mxu0 0.0
    %3120 = vmatprep.subr.mxu0 0.0
    %3121 = vmatpush1.msra.mxu0 0.0
    %3122 = vmatprep.subr.mxu0 0.0
    %3123 = vmatpush1.msra.mxu0 0.0
    %3124 = vmatprep.subr.mxu0 0.0
    %3125 = vmatpush1.msra.mxu0 0.0
    %3126 = vmatprep.subr.mxu0 0.0
    %3127 = vmatpush1.msra.mxu0 0.0
    %3128 = vmatprep.subr.mxu0 0.0
    %3129 = vmatpush1.msra.mxu0 0.0
    %3130 = vmatprep.subr.mxu0 0.0
    %3131 = vmatpush1.msra.mxu0 0.0
    %3132 = vmatprep.subr.mxu0 0.0
    %3133 = vmatpush1.msra.mxu0 0.0
    %3134 = vmatprep.subr.mxu0 0.0
    %3135 = vmatpush1.msra.mxu0 0.0
    %3136 = vmatprep.subr.mxu0 0.0
    %3137 = vmatpush1.msra.mxu0 0.0
    %3138 = vmatprep.subr.mxu0 0.0
    %3139 = vmatpush1.msra.mxu0 0.0
    %3140 = vmatprep.subr.mxu0 0.0
    %3141 = vmatpush1.msra.mxu0 0.0
    %3142 = vmatprep.subr.mxu0 0.0
    %3143 = vmatpush1.msra.mxu0 0.0
    %3144 = vmatprep.subr.mxu0 0.0
    %3145 = vmatpush1.msra.mxu0 0.0
    %3146 = vmatprep.subr.mxu0 0.0
    %3147 = vmatpush1.msra.mxu0 0.0
    %3148 = vmatprep.subr.mxu0 0.0
    %3149 = vmatpush1.msra.mxu0 0.0
    %3150 = vmatprep.subr.mxu0 0.0
    %3151 = vmatpush1.msra.mxu0 0.0
    %3152 = vmatprep.subr.mxu0 0.0
    %3153 = vmatpush1.msra.mxu0 0.0
    %3154 = vmatprep.subr.mxu0 0.0
    %3155 = vmatpush1.msra.mxu0 0.0
    %3156 = vmatprep.subr.mxu0 0.0
    %3157 = vmatpush1.msra.mxu0 0.0
    %3158 = vmatprep.subr.mxu0 0.0
    %3159 = vmatpush1.msra.mxu0 0.0
    %3160 = vmatprep.subr.mxu0 0.0
    %3161 = vmatpush1.msra.mxu0 0.0
    %3162 = vmatprep.subr.mxu0 0.0
    %3163 = vmatpush1.msra.mxu0 0.0
    %3164 = vmatprep.subr.mxu0 0.0
    %3165 = vmatpush1.msra.mxu0 0.0
    %3166 = vmatprep.mubr.f32.mxu0 0.0
    %3167 = vmatmul.mubr.f32.gmra.mrb[0].mxu0 %v3097
    %v3168 = vpop.f32.mrb[0].mxu0
    %v3169 = vadd.f32 0.0, %v3168
    %v3170 = vpop.f32.mrb[0].mxu0
    %v3171 = vadd.f32 0.0, %v3170
    %3172 = vmatprep.mubr.f32.mxu0 0.0
    %3173 = vmatmul.mubr.f32.gmra.mrb[0].mxu0 %v3100
    %v3174 = vpop.f32.mrb[0].mxu0
    %v3175 = vadd.f32 0.0, %v3174
    %v3176 = vpop.f32.mrb[0].mxu0
    %v3177 = vadd.f32 0.0, %v3176
    %3178 = vdwg.mxu0
    %3179 = vmatprep.subr.mxu0 %v3083
    %3180 = vmatpush1.msra.mxu0 %v3082
    %3181 = vmatprep.subr.mxu0 %v3087
    %3182 = vmatpush1.msra.mxu0 %v3086
    %3183 = vmatprep.subr.mxu0 0.0
    %3184 = vmatpush1.msra.mxu0 0.0
    %3185 = vmatprep.subr.mxu0 0.0
    %3186 = vmatpush1.msra.mxu0 0.0
    %3187 = vmatprep.subr.mxu0 0.0
    %3188 = vmatpush1.msra.mxu0 0.0
    %3189 = vmatprep.subr.mxu0 0.0
    %3190 = vmatpush1.msra.mxu0 0.0
    %3191 = vmatprep.subr.mxu0 0.0
    %3192 = vmatpush1.msra.mxu0 0.0
    %3193 = vmatprep.subr.mxu0 0.0
    %3194 = vmatpush1.msra.mxu0 0.0
    %3195 = vmatprep.subr.mxu0 0.0
    %3196 = vmatpush1.msra.mxu0 0.0
    %3197 = vmatprep.subr.mxu0 0.0
    %3198 = vmatpush1.msra.mxu0 0.0
    %3199 = vmatprep.subr.mxu0 0.0
    %3200 = vmatpush1.msra.mxu0 0.0
    %3201 = vmatprep.subr.mxu0 0.0
    %3202 = vmatpush1.msra.mxu0 0.0
    %3203 = vmatprep.subr.mxu0 0.0
    %3204 = vmatpush1.msra.mxu0 0.0
    %3205 = vmatprep.subr.mxu0 0.0
    %3206 = vmatpush1.msra.mxu0 0.0
    %3207 = vmatprep.subr.mxu0 0.0
    %3208 = vmatpush1.msra.mxu0 0.0
    %3209 = vmatprep.subr.mxu0 0.0
    %3210 = vmatpush1.msra.mxu0 0.0
    %3211 = vmatprep.subr.mxu0 0.0
    %3212 = vmatpush1.msra.mxu0 0.0
    %3213 = vmatprep.subr.mxu0 0.0
    %3214 = vmatpush1.msra.mxu0 0.0
    %3215 = vmatprep.subr.mxu0 0.0
    %3216 = vmatpush1.msra.mxu0 0.0
    %3217 = vmatprep.subr.mxu0 0.0
    %3218 = vmatpush1.msra.mxu0 0.0
    %3219 = vmatprep.subr.mxu0 0.0
    %3220 = vmatpush1.msra.mxu0 0.0
    %3221 = vmatprep.subr.mxu0 0.0
    %3222 = vmatpush1.msra.mxu0 0.0
    %3223 = vmatprep.subr.mxu0 0.0
    %3224 = vmatpush1.msra.mxu0 0.0
    %3225 = vmatprep.subr.mxu0 0.0
    %3226 = vmatpush1.msra.mxu0 0.0
    %3227 = vmatprep.subr.mxu0 0.0
    %3228 = vmatpush1.msra.mxu0 0.0
    %3229 = vmatprep.subr.mxu0 0.0
    %3230 = vmatpush1.msra.mxu0 0.0
    %3231 = vmatprep.subr.mxu0 0.0
    %3232 = vmatpush1.msra.mxu0 0.0
    %3233 = vmatprep.subr.mxu0 0.0
    %3234 = vmatpush1.msra.mxu0 0.0
    %3235 = vmatprep.subr.mxu0 0.0
    %3236 = vmatpush1.msra.mxu0 0.0
    %3237 = vmatprep.subr.mxu0 0.0
    %3238 = vmatpush1.msra.mxu0 0.0
    %3239 = vmatprep.subr.mxu0 0.0
    %3240 = vmatpush1.msra.mxu0 0.0
    %3241 = vmatprep.subr.mxu0 0.0
    %3242 = vmatpush1.msra.mxu0 0.0
    %3243 = vmatprep.mubr.f32.mxu0 0.0
    %3244 = vmatmul.mubr.f32.gmra.mrb[0].mxu0 %v3097
    %v3245 = vpop.f32.mrb[0].mxu0
    %v3246 = vadd.f32 0.0, %v3245
    %v3247 = vpop.f32.mrb[0].mxu0
    %v3248 = vadd.f32 0.0, %v3247
    %3249 = vmatprep.mubr.f32.mxu0 0.0
    %3250 = vmatmul.mubr.f32.gmra.mrb[0].mxu0 %v3100
    %v3251 = vpop.f32.mrb[0].mxu0
    %v3252 = vadd.f32 0.0, %v3251
    %v3253 = vpop.f32.mrb[0].mxu0
    %v3254 = vadd.f32 0.0, %v3253
    %3255 = vdwg.mxu0
    %v3256 = vadd.f32 %v3050, %v3169
    %v3257 = vadd.f32 %v3051, %v3171
    %v3258 = vadd.f32 %v3052, %v3246
    %v3259 = vadd.f32 %v3053, %v3248
    %v3260 = vadd.f32 %v3054, %v3175
    %v3261 = vadd.f32 %v3055, %v3177
    %v3262 = vadd.f32 %v3056, %v3252
    %v3263 = vadd.f32 %v3057, %v3254
    %v3264 = vld [vmem:[%s2 + $0x60] sm:$0xff]
    %v3265 = vld [vmem:[%s2 + $0x68] sm:$0xff]
    %3266 = vrot.lane.b32.xlu0 %v2834, 112
    %v3267 = vpop.permute.xlu0 %3266
    %3268 = vrot.lane.b32.xlu0 %v2835, 112
    %v3269 = vpop.permute.xlu0 %3268
    %3270 = vrot.lane.b32.xlu0 %v2836, 112
    %v3271 = vpop.permute.xlu0 %3270
    %3272 = vrot.lane.b32.xlu0 %v2837, 112
    %v3273 = vpop.permute.xlu0 %3272
    %3274 = vrot.lane.b32.xlu0 %v2838, 112
    %v3275 = vpop.permute.xlu0 %3274
    %3276 = vrot.lane.b32.xlu0 %v2839, 112
    %v3277 = vpop.permute.xlu0 %3276
    %3278 = vrot.lane.b32.xlu0 %v2840, 112
    %v3279 = vpop.permute.xlu0 %3278
    %3280 = vrot.lane.b32.xlu0 %v2841, 112
    %v3281 = vpop.permute.xlu0 %3280
    %3282 = vrot.lane.b32.xlu0 %v2842, 112
    %v3283 = vpop.permute.xlu0 %3282
    %3284 = vrot.lane.b32.xlu0 %v2843, 112
    %v3285 = vpop.permute.xlu0 %3284
    %v3286 = vsel %vm1048, %v3267, %v3269
    %v3287 = vsel %vm1048, %v3269, %v3271
    %v3288 = vsel %vm1048, %v3271, %v3273
    %v3289 = vsel %vm1048, %v3273, %v3275
    %v3290 = vsel %vm1048, %v3277, %v3279
    %v3291 = vsel %vm1048, %v3279, %v3281
    %v3292 = vsel %vm1048, %v3281, %v3283
    %v3293 = vsel %vm1048, %v3283, %v3285
    %v3303 = vsel %vm2110, %v3264, 0
    %v3306 = vsel %vm2110, %v3265, 0
    %3308 = vmatprep.subr.mxu0 %v3287
    %3309 = vmatpush1.msra.mxu0 %v3286
    %3310 = vmatprep.subr.mxu0 %v3291
    %3311 = vmatpush1.msra.mxu0 %v3290
    %3312 = vmatprep.subr.mxu0 0.0
    %3313 = vmatpush1.msra.mxu0 0.0
    %3314 = vmatprep.subr.mxu0 0.0
    %3315 = vmatpush1.msra.mxu0 0.0
    %3316 = vmatprep.subr.mxu0 0.0
    %3317 = vmatpush1.msra.mxu0 0.0
    %3318 = vmatprep.subr.mxu0 0.0
    %3319 = vmatpush1.msra.mxu0 0.0
    %3320 = vmatprep.subr.mxu0 0.0
    %3321 = vmatpush1.msra.mxu0 0.0
    %3322 = vmatprep.subr.mxu0 0.0
    %3323 = vmatpush1.msra.mxu0 0.0
    %3324 = vmatprep.subr.mxu0 0.0
    %3325 = vmatpush1.msra.mxu0 0.0
    %3326 = vmatprep.subr.mxu0 0.0
    %3327 = vmatpush1.msra.mxu0 0.0
    %3328 = vmatprep.subr.mxu0 0.0
    %3329 = vmatpush1.msra.mxu0 0.0
    %3330 = vmatprep.subr.mxu0 0.0
    %3331 = vmatpush1.msra.mxu0 0.0
    %3332 = vmatprep.subr.mxu0 0.0
    %3333 = vmatpush1.msra.mxu0 0.0
    %3334 = vmatprep.subr.mxu0 0.0
    %3335 = vmatpush1.msra.mxu0 0.0
    %3336 = vmatprep.subr.mxu0 0.0
    %3337 = vmatpush1.msra.mxu0 0.0
    %3338 = vmatprep.subr.mxu0 0.0
    %3339 = vmatpush1.msra.mxu0 0.0
    %3340 = vmatprep.subr.mxu0 0.0
    %3341 = vmatpush1.msra.mxu0 0.0
    %3342 = vmatprep.subr.mxu0 0.0
    %3343 = vmatpush1.msra.mxu0 0.0
    %3344 = vmatprep.subr.mxu0 0.0
    %3345 = vmatpush1.msra.mxu0 0.0
    %3346 = vmatprep.subr.mxu0 0.0
    %3347 = vmatpush1.msra.mxu0 0.0
    %3348 = vmatprep.subr.mxu0 0.0
    %3349 = vmatpush1.msra.mxu0 0.0
    %3350 = vmatprep.subr.mxu0 0.0
    %3351 = vmatpush1.msra.mxu0 0.0
    %3352 = vmatprep.subr.mxu0 0.0
    %3353 = vmatpush1.msra.mxu0 0.0
    %3354 = vmatprep.subr.mxu0 0.0
    %3355 = vmatpush1.msra.mxu0 0.0
    %3356 = vmatprep.subr.mxu0 0.0
    %3357 = vmatpush1.msra.mxu0 0.0
    %3358 = vmatprep.subr.mxu0 0.0
    %3359 = vmatpush1.msra.mxu0 0.0
    %3360 = vmatprep.subr.mxu0 0.0
    %3361 = vmatpush1.msra.mxu0 0.0
    %3362 = vmatprep.subr.mxu0 0.0
    %3363 = vmatpush1.msra.mxu0 0.0
    %3364 = vmatprep.subr.mxu0 0.0
    %3365 = vmatpush1.msra.mxu0 0.0
    %3366 = vmatprep.subr.mxu0 0.0
    %3367 = vmatpush1.msra.mxu0 0.0
    %3368 = vmatprep.subr.mxu0 0.0
    %3369 = vmatpush1.msra.mxu0 0.0
    %3370 = vmatprep.subr.mxu0 0.0
    %3371 = vmatpush1.msra.mxu0 0.0
    %3372 = vmatprep.mubr.f32.mxu0 0.0
    %3373 = vmatmul.mubr.f32.gmra.mrb[0].mxu0 %v3303
    %v3374 = vpop.f32.mrb[0].mxu0
    %v3375 = vadd.f32 0.0, %v3374
    %v3376 = vpop.f32.mrb[0].mxu0
    %v3377 = vadd.f32 0.0, %v3376
    %3378 = vmatprep.mubr.f32.mxu0 0.0
    %3379 = vmatmul.mubr.f32.gmra.mrb[0].mxu0 %v3306
    %v3380 = vpop.f32.mrb[0].mxu0
    %v3381 = vadd.f32 0.0, %v3380
    %v3382 = vpop.f32.mrb[0].mxu0
    %v3383 = vadd.f32 0.0, %v3382
    %3384 = vdwg.mxu0
    %3385 = vmatprep.subr.mxu0 %v3289
    %3386 = vmatpush1.msra.mxu0 %v3288
    %3387 = vmatprep.subr.mxu0 %v3293
    %3388 = vmatpush1.msra.mxu0 %v3292
    %3389 = vmatprep.subr.mxu0 0.0
    %3390 = vmatpush1.msra.mxu0 0.0
    %3391 = vmatprep.subr.mxu0 0.0
    %3392 = vmatpush1.msra.mxu0 0.0
    %3393 = vmatprep.subr.mxu0 0.0
    %3394 = vmatpush1.msra.mxu0 0.0
    %3395 = vmatprep.subr.mxu0 0.0
    %3396 = vmatpush1.msra.mxu0 0.0
    %3397 = vmatprep.subr.mxu0 0.0
    %3398 = vmatpush1.msra.mxu0 0.0
    %3399 = vmatprep.subr.mxu0 0.0
    %3400 = vmatpush1.msra.mxu0 0.0
    %3401 = vmatprep.subr.mxu0 0.0
    %3402 = vmatpush1.msra.mxu0 0.0
    %3403 = vmatprep.subr.mxu0 0.0
    %3404 = vmatpush1.msra.mxu0 0.0
    %3405 = vmatprep.subr.mxu0 0.0
    %3406 = vmatpush1.msra.mxu0 0.0
    %3407 = vmatprep.subr.mxu0 0.0
    %3408 = vmatpush1.msra.mxu0 0.0
    %3409 = vmatprep.subr.mxu0 0.0
    %3410 = vmatpush1.msra.mxu0 0.0
    %3411 = vmatprep.subr.mxu0 0.0
    %3412 = vmatpush1.msra.mxu0 0.0
    %3413 = vmatprep.subr.mxu0 0.0
    %3414 = vmatpush1.msra.mxu0 0.0
    %3415 = vmatprep.subr.mxu0 0.0
    %3416 = vmatpush1.msra.mxu0 0.0
    %3417 = vmatprep.subr.mxu0 0.0
    %3418 = vmatpush1.msra.mxu0 0.0
    %3419 = vmatprep.subr.mxu0 0.0
    %3420 = vmatpush1.msra.mxu0 0.0
    %3421 = vmatprep.subr.mxu0 0.0
    %3422 = vmatpush1.msra.mxu0 0.0
    %3423 = vmatprep.subr.mxu0 0.0
    %3424 = vmatpush1.msra.mxu0 0.0
    %3425 = vmatprep.subr.mxu0 0.0
    %3426 = vmatpush1.msra.mxu0 0.0
    %3427 = vmatprep.subr.mxu0 0.0
    %3428 = vmatpush1.msra.mxu0 0.0
    %3429 = vmatprep.subr.mxu0 0.0
    %3430 = vmatpush1.msra.mxu0 0.0
    %3431 = vmatprep.subr.mxu0 0.0
    %3432 = vmatpush1.msra.mxu0 0.0
    %3433 = vmatprep.subr.mxu0 0.0
    %3434 = vmatpush1.msra.mxu0 0.0
    %3435 = vmatprep.subr.mxu0 0.0
    %3436 = vmatpush1.msra.mxu0 0.0
    %3437 = vmatprep.subr.mxu0 0.0
    %3438 = vmatpush1.msra.mxu0 0.0
    %3439 = vmatprep.subr.mxu0 0.0
    %3440 = vmatpush1.msra.mxu0 0.0
    %3441 = vmatprep.subr.mxu0 0.0
    %3442 = vmatpush1.msra.mxu0 0.0
    %3443 = vmatprep.subr.mxu0 0.0
    %3444 = vmatpush1.msra.mxu0 0.0
    %3445 = vmatprep.subr.mxu0 0.0
    %3446 = vmatpush1.msra.mxu0 0.0
    %3447 = vmatprep.subr.mxu0 0.0
    %3448 = vmatpush1.msra.mxu0 0.0
    %3449 = vmatprep.mubr.f32.mxu0 0.0
    %3450 = vmatmul.mubr.f32.gmra.mrb[0].mxu0 %v3303
    %v3451 = vpop.f32.mrb[0].mxu0
    %v3452 = vadd.f32 0.0, %v3451
    %v3453 = vpop.f32.mrb[0].mxu0
    %v3454 = vadd.f32 0.0, %v3453
    %3455 = vmatprep.mubr.f32.mxu0 0.0
    %3456 = vmatmul.mubr.f32.gmra.mrb[0].mxu0 %v3306
    %v3457 = vpop.f32.mrb[0].mxu0
    %v3458 = vadd.f32 0.0, %v3457
    %v3459 = vpop.f32.mrb[0].mxu0
    %v3460 = vadd.f32 0.0, %v3459
    %3461 = vdwg.mxu0
    %v3462 = vadd.f32 %v3256, %v3375
    %v3463 = vadd.f32 %v3257, %v3377
    %v3464 = vadd.f32 %v3258, %v3452
    %v3465 = vadd.f32 %v3259, %v3454
    %v3466 = vadd.f32 %v3260, %v3381
    %v3467 = vadd.f32 %v3261, %v3383
    %v3468 = vadd.f32 %v3262, %v3458
    %v3469 = vadd.f32 %v3263, %v3460
    %v3470 = vld [vmem:[%s2 + $0x70] sm:$0xff]
    %v3471 = vld [vmem:[%s2 + $0x78] sm:$0xff]
    %3472 = vrot.lane.b32.xlu0 %v2834, 111
    %v3473 = vpop.permute.xlu0 %3472
    %3474 = vrot.lane.b32.xlu0 %v2835, 111
    %v3475 = vpop.permute.xlu0 %3474
    %3476 = vrot.lane.b32.xlu0 %v2836, 111
    %v3477 = vpop.permute.xlu0 %3476
    %3478 = vrot.lane.b32.xlu0 %v2837, 111
    %v3479 = vpop.permute.xlu0 %3478
    %3480 = vrot.lane.b32.xlu0 %v2838, 111
    %v3481 = vpop.permute.xlu0 %3480
    %3482 = vrot.lane.b32.xlu0 %v2839, 111
    %v3483 = vpop.permute.xlu0 %3482
    %3484 = vrot.lane.b32.xlu0 %v2840, 111
    %v3485 = vpop.permute.xlu0 %3484
    %3486 = vrot.lane.b32.xlu0 %v2841, 111
    %v3487 = vpop.permute.xlu0 %3486
    %3488 = vrot.lane.b32.xlu0 %v2842, 111
    %v3489 = vpop.permute.xlu0 %3488
    %3490 = vrot.lane.b32.xlu0 %v2843, 111
    %v3491 = vpop.permute.xlu0 %3490
    %vm3492 = vcmask 908288
    %v3493 = vsel %vm3492, %v3473, %v3475
    %v3494 = vsel %vm3492, %v3475, %v3477
    %v3495 = vsel %vm3492, %v3477, %v3479
    %v3496 = vsel %vm3492, %v3479, %v3481
    %v3497 = vsel %vm3492, %v3483, %v3485
    %v3498 = vsel %vm3492, %v3485, %v3487
    %v3499 = vsel %vm3492, %v3487, %v3489
    %v3500 = vsel %vm3492, %v3489, %v3491
    %v3510 = vsel %vm2110, %v3470, 0
    %v3513 = vsel %vm2110, %v3471, 0
    %3515 = vmatprep.subr.mxu0 %v3494
    %3516 = vmatpush1.msra.mxu0 %v3493
    %3517 = vmatprep.subr.mxu0 %v3498
    %3518 = vmatpush1.msra.mxu0 %v3497
    %3519 = vmatprep.subr.mxu0 0.0
    %3520 = vmatpush1.msra.mxu0 0.0
    %3521 = vmatprep.subr.mxu0 0.0
    %3522 = vmatpush1.msra.mxu0 0.0
    %3523 = vmatprep.subr.mxu0 0.0
    %3524 = vmatpush1.msra.mxu0 0.0
    %3525 = vmatprep.subr.mxu0 0.0
    %3526 = vmatpush1.msra.mxu0 0.0
    %3527 = vmatprep.subr.mxu0 0.0
    %3528 = vmatpush1.msra.mxu0 0.0
    %3529 = vmatprep.subr.mxu0 0.0
    %3530 = vmatpush1.msra.mxu0 0.0
    %3531 = vmatprep.subr.mxu0 0.0
    %3532 = vmatpush1.msra.mxu0 0.0
    %3533 = vmatprep.subr.mxu0 0.0
    %3534 = vmatpush1.msra.mxu0 0.0
    %3535 = vmatprep.subr.mxu0 0.0
    %3536 = vmatpush1.msra.mxu0 0.0
    %3537 = vmatprep.subr.mxu0 0.0
    %3538 = vmatpush1.msra.mxu0 0.0
    %3539 = vmatprep.subr.mxu0 0.0
    %3540 = vmatpush1.msra.mxu0 0.0
    %3541 = vmatprep.subr.mxu0 0.0
    %3542 = vmatpush1.msra.mxu0 0.0
    %3543 = vmatprep.subr.mxu0 0.0
    %3544 = vmatpush1.msra.mxu0 0.0
    %3545 = vmatprep.subr.mxu0 0.0
    %3546 = vmatpush1.msra.mxu0 0.0
    %3547 = vmatprep.subr.mxu0 0.0
    %3548 = vmatpush1.msra.mxu0 0.0
    %3549 = vmatprep.subr.mxu0 0.0
    %3550 = vmatpush1.msra.mxu0 0.0
    %3551 = vmatprep.subr.mxu0 0.0
    %3552 = vmatpush1.msra.mxu0 0.0
    %3553 = vmatprep.subr.mxu0 0.0
    %3554 = vmatpush1.msra.mxu0 0.0
    %3555 = vmatprep.subr.mxu0 0.0
    %3556 = vmatpush1.msra.mxu0 0.0
    %3557 = vmatprep.subr.mxu0 0.0
    %3558 = vmatpush1.msra.mxu0 0.0
    %3559 = vmatprep.subr.mxu0 0.0
    %3560 = vmatpush1.msra.mxu0 0.0
    %3561 = vmatprep.subr.mxu0 0.0
    %3562 = vmatpush1.msra.mxu0 0.0
    %3563 = vmatprep.subr.mxu0 0.0
    %3564 = vmatpush1.msra.mxu0 0.0
    %3565 = vmatprep.subr.mxu0 0.0
    %3566 = vmatpush1.msra.mxu0 0.0
    %3567 = vmatprep.subr.mxu0 0.0
    %3568 = vmatpush1.msra.mxu0 0.0
    %3569 = vmatprep.subr.mxu0 0.0
    %3570 = vmatpush1.msra.mxu0 0.0
    %3571 = vmatprep.subr.mxu0 0.0
    %3572 = vmatpush1.msra.mxu0 0.0
    %3573 = vmatprep.subr.mxu0 0.0
    %3574 = vmatpush1.msra.mxu0 0.0
    %3575 = vmatprep.subr.mxu0 0.0
    %3576 = vmatpush1.msra.mxu0 0.0
    %3577 = vmatprep.subr.mxu0 0.0
    %3578 = vmatpush1.msra.mxu0 0.0
    %3579 = vmatprep.mubr.f32.mxu0 0.0
    %3580 = vmatmul.mubr.f32.gmra.mrb[0].mxu0 %v3510
    %v3581 = vpop.f32.mrb[0].mxu0
    %v3582 = vadd.f32 0.0, %v3581
    %v3583 = vpop.f32.mrb[0].mxu0
    %v3584 = vadd.f32 0.0, %v3583
    %3585 = vmatprep.mubr.f32.mxu0 0.0
    %3586 = vmatmul.mubr.f32.gmra.mrb[0].mxu0 %v3513
    %v3587 = vpop.f32.mrb[0].mxu0
    %v3588 = vadd.f32 0.0, %v3587
    %v3589 = vpop.f32.mrb[0].mxu0
    %v3590 = vadd.f32 0.0, %v3589
    %3591 = vdwg.mxu0
    %3592 = vmatprep.subr.mxu0 %v3496
    %3593 = vmatpush1.msra.mxu0 %v3495
    %3594 = vmatprep.subr.mxu0 %v3500
    %3595 = vmatpush1.msra.mxu0 %v3499
    %3596 = vmatprep.subr.mxu0 0.0
    %3597 = vmatpush1.msra.mxu0 0.0
    %3598 = vmatprep.subr.mxu0 0.0
    %3599 = vmatpush1.msra.mxu0 0.0
    %3600 = vmatprep.subr.mxu0 0.0
    %3601 = vmatpush1.msra.mxu0 0.0
    %3602 = vmatprep.subr.mxu0 0.0
    %3603 = vmatpush1.msra.mxu0 0.0
    %3604 = vmatprep.subr.mxu0 0.0
    %3605 = vmatpush1.msra.mxu0 0.0
    %3606 = vmatprep.subr.mxu0 0.0
    %3607 = vmatpush1.msra.mxu0 0.0
    %3608 = vmatprep.subr.mxu0 0.0
    %3609 = vmatpush1.msra.mxu0 0.0
    %3610 = vmatprep.subr.mxu0 0.0
    %3611 = vmatpush1.msra.mxu0 0.0
    %3612 = vmatprep.subr.mxu0 0.0
    %3613 = vmatpush1.msra.mxu0 0.0
    %3614 = vmatprep.subr.mxu0 0.0
    %3615 = vmatpush1.msra.mxu0 0.0
    %3616 = vmatprep.subr.mxu0 0.0
    %3617 = vmatpush1.msra.mxu0 0.0
    %3618 = vmatprep.subr.mxu0 0.0
    %3619 = vmatpush1.msra.mxu0 0.0
    %3620 = vmatprep.subr.mxu0 0.0
    %3621 = vmatpush1.msra.mxu0 0.0
    %3622 = vmatprep.subr.mxu0 0.0
    %3623 = vmatpush1.msra.mxu0 0.0
    %3624 = vmatprep.subr.mxu0 0.0
    %3625 = vmatpush1.msra.mxu0 0.0
    %3626 = vmatprep.subr.mxu0 0.0
    %3627 = vmatpush1.msra.mxu0 0.0
    %3628 = vmatprep.subr.mxu0 0.0
    %3629 = vmatpush1.msra.mxu0 0.0
    %3630 = vmatprep.subr.mxu0 0.0
    %3631 = vmatpush1.msra.mxu0 0.0
    %3632 = vmatprep.subr.mxu0 0.0
    %3633 = vmatpush1.msra.mxu0 0.0
    %3634 = vmatprep.subr.mxu0 0.0
    %3635 = vmatpush1.msra.mxu0 0.0
    %3636 = vmatprep.subr.mxu0 0.0
    %3637 = vmatpush1.msra.mxu0 0.0
    %3638 = vmatprep.subr.mxu0 0.0
    %3639 = vmatpush1.msra.mxu0 0.0
    %3640 = vmatprep.subr.mxu0 0.0
    %3641 = vmatpush1.msra.mxu0 0.0
    %3642 = vmatprep.subr.mxu0 0.0
    %3643 = vmatpush1.msra.mxu0 0.0
    %3644 = vmatprep.subr.mxu0 0.0
    %3645 = vmatpush1.msra.mxu0 0.0
    %3646 = vmatprep.subr.mxu0 0.0
    %3647 = vmatpush1.msra.mxu0 0.0
    %3648 = vmatprep.subr.mxu0 0.0
    %3649 = vmatpush1.msra.mxu0 0.0
    %3650 = vmatprep.subr.mxu0 0.0
    %3651 = vmatpush1.msra.mxu0 0.0
    %3652 = vmatprep.subr.mxu0 0.0
    %3653 = vmatpush1.msra.mxu0 0.0
    %3654 = vmatprep.subr.mxu0 0.0
    %3655 = vmatpush1.msra.mxu0 0.0
    %3656 = vmatprep.mubr.f32.mxu0 0.0
    %3657 = vmatmul.mubr.f32.gmra.mrb[0].mxu0 %v3510
    %v3658 = vpop.f32.mrb[0].mxu0
    %v3659 = vadd.f32 0.0, %v3658
    %v3660 = vpop.f32.mrb[0].mxu0
    %v3661 = vadd.f32 0.0, %v3660
    %3662 = vmatprep.mubr.f32.mxu0 0.0
    %3663 = vmatmul.mubr.f32.gmra.mrb[0].mxu0 %v3513
    %v3664 = vpop.f32.mrb[0].mxu0
    %v3665 = vadd.f32 0.0, %v3664
    %v3666 = vpop.f32.mrb[0].mxu0
    %v3667 = vadd.f32 0.0, %v3666
    %3668 = vdwg.mxu0
    %v3669 = vadd.f32 %v3462, %v3582
    %v3670 = vadd.f32 %v3463, %v3584
    %v3671 = vadd.f32 %v3464, %v3659
    %v3672 = vadd.f32 %v3465, %v3661
    %v3673 = vadd.f32 %v3466, %v3588
    %v3674 = vadd.f32 %v3467, %v3590
    %v3675 = vadd.f32 %v3468, %v3665
    %v3676 = vadd.f32 %v3469, %v3667
    %v3677 = vld [vmem:[%s2 + $0x80] sm:$0xff]
    %v3678 = vld [vmem:[%s2 + $0x88] sm:$0xff]
    %3679 = vrot.lane.b32.xlu0 %v2834, 100
    %v3680 = vpop.permute.xlu0 %3679
    %3681 = vrot.lane.b32.xlu0 %v2835, 100
    %v3682 = vpop.permute.xlu0 %3681
    %3683 = vrot.lane.b32.xlu0 %v2836, 100
    %v3684 = vpop.permute.xlu0 %3683
    %3685 = vrot.lane.b32.xlu0 %v2837, 100
    %v3686 = vpop.permute.xlu0 %3685
    %3687 = vrot.lane.b32.xlu0 %v2838, 100
    %v3688 = vpop.permute.xlu0 %3687
    %3689 = vrot.lane.b32.xlu0 %v2839, 100
    %v3690 = vpop.permute.xlu0 %3689
    %3691 = vrot.lane.b32.xlu0 %v2840, 100
    %v3692 = vpop.permute.xlu0 %3691
    %3693 = vrot.lane.b32.xlu0 %v2841, 100
    %v3694 = vpop.permute.xlu0 %3693
    %3695 = vrot.lane.b32.xlu0 %v2842, 100
    %v3696 = vpop.permute.xlu0 %3695
    %3697 = vrot.lane.b32.xlu0 %v2843, 100
    %v3698 = vpop.permute.xlu0 %3697
    %v3699 = vsel %vm1249, %v3680, %v3682
    %v3700 = vsel %vm1249, %v3682, %v3684
    %v3701 = vsel %vm1249, %v3684, %v3686
    %v3702 = vsel %vm1249, %v3686, %v3688
    %v3703 = vsel %vm1249, %v3690, %v3692
    %v3704 = vsel %vm1249, %v3692, %v3694
    %v3705 = vsel %vm1249, %v3694, %v3696
    %v3706 = vsel %vm1249, %v3696, %v3698
    %v3716 = vsel %vm2110, %v3677, 0
    %v3719 = vsel %vm2110, %v3678, 0
    %3721 = vmatprep.subr.mxu0 %v3700
    %3722 = vmatpush1.msra.mxu0 %v3699
    %3723 = vmatprep.subr.mxu0 %v3704
    %3724 = vmatpush1.msra.mxu0 %v3703
    %3725 = vmatprep.subr.mxu0 0.0
    %3726 = vmatpush1.msra.mxu0 0.0
    %3727 = vmatprep.subr.mxu0 0.0
    %3728 = vmatpush1.msra.mxu0 0.0
    %3729 = vmatprep.subr.mxu0 0.0
    %3730 = vmatpush1.msra.mxu0 0.0
    %3731 = vmatprep.subr.mxu0 0.0
    %3732 = vmatpush1.msra.mxu0 0.0
    %3733 = vmatprep.subr.mxu0 0.0
    %3734 = vmatpush1.msra.mxu0 0.0
    %3735 = vmatprep.subr.mxu0 0.0
    %3736 = vmatpush1.msra.mxu0 0.0
    %3737 = vmatprep.subr.mxu0 0.0
    %3738 = vmatpush1.msra.mxu0 0.0
    %3739 = vmatprep.subr.mxu0 0.0
    %3740 = vmatpush1.msra.mxu0 0.0
    %3741 = vmatprep.subr.mxu0 0.0
    %3742 = vmatpush1.msra.mxu0 0.0
    %3743 = vmatprep.subr.mxu0 0.0
    %3744 = vmatpush1.msra.mxu0 0.0
    %3745 = vmatprep.subr.mxu0 0.0
    %3746 = vmatpush1.msra.mxu0 0.0
    %3747 = vmatprep.subr.mxu0 0.0
    %3748 = vmatpush1.msra.mxu0 0.0
    %3749 = vmatprep.subr.mxu0 0.0
    %3750 = vmatpush1.msra.mxu0 0.0
    %3751 = vmatprep.subr.mxu0 0.0
    %3752 = vmatpush1.msra.mxu0 0.0
    %3753 = vmatprep.subr.mxu0 0.0
    %3754 = vmatpush1.msra.mxu0 0.0
    %3755 = vmatprep.subr.mxu0 0.0
    %3756 = vmatpush1.msra.mxu0 0.0
    %3757 = vmatprep.subr.mxu0 0.0
    %3758 = vmatpush1.msra.mxu0 0.0
    %3759 = vmatprep.subr.mxu0 0.0
    %3760 = vmatpush1.msra.mxu0 0.0
    %3761 = vmatprep.subr.mxu0 0.0
    %3762 = vmatpush1.msra.mxu0 0.0
    %3763 = vmatprep.subr.mxu0 0.0
    %3764 = vmatpush1.msra.mxu0 0.0
    %3765 = vmatprep.subr.mxu0 0.0
    %3766 = vmatpush1.msra.mxu0 0.0
    %3767 = vmatprep.subr.mxu0 0.0
    %3768 = vmatpush1.msra.mxu0 0.0
    %3769 = vmatprep.subr.mxu0 0.0
    %3770 = vmatpush1.msra.mxu0 0.0
    %3771 = vmatprep.subr.mxu0 0.0
    %3772 = vmatpush1.msra.mxu0 0.0
    %3773 = vmatprep.subr.mxu0 0.0
    %3774 = vmatpush1.msra.mxu0 0.0
    %3775 = vmatprep.subr.mxu0 0.0
    %3776 = vmatpush1.msra.mxu0 0.0
    %3777 = vmatprep.subr.mxu0 0.0
    %3778 = vmatpush1.msra.mxu0 0.0
    %3779 = vmatprep.subr.mxu0 0.0
    %3780 = vmatpush1.msra.mxu0 0.0
    %3781 = vmatprep.subr.mxu0 0.0
    %3782 = vmatpush1.msra.mxu0 0.0
    %3783 = vmatprep.subr.mxu0 0.0
    %3784 = vmatpush1.msra.mxu0 0.0
    %3785 = vmatprep.mubr.f32.mxu0 0.0
    %3786 = vmatmul.mubr.f32.gmra.mrb[0].mxu0 %v3716
    %v3787 = vpop.f32.mrb[0].mxu0
    %v3788 = vadd.f32 0.0, %v3787
    %v3789 = vpop.f32.mrb[0].mxu0
    %v3790 = vadd.f32 0.0, %v3789
    %3791 = vmatprep.mubr.f32.mxu0 0.0
    %3792 = vmatmul.mubr.f32.gmra.mrb[0].mxu0 %v3719
    %v3793 = vpop.f32.mrb[0].mxu0
    %v3794 = vadd.f32 0.0, %v3793
    %v3795 = vpop.f32.mrb[0].mxu0
    %v3796 = vadd.f32 0.0, %v3795
    %3797 = vdwg.mxu0
    %3798 = vmatprep.subr.mxu0 %v3702
    %3799 = vmatpush1.msra.mxu0 %v3701
    %3800 = vmatprep.subr.mxu0 %v3706
    %3801 = vmatpush1.msra.mxu0 %v3705
    %3802 = vmatprep.subr.mxu0 0.0
    %3803 = vmatpush1.msra.mxu0 0.0
    %3804 = vmatprep.subr.mxu0 0.0
    %3805 = vmatpush1.msra.mxu0 0.0
    %3806 = vmatprep.subr.mxu0 0.0
    %3807 = vmatpush1.msra.mxu0 0.0
    %3808 = vmatprep.subr.mxu0 0.0
    %3809 = vmatpush1.msra.mxu0 0.0
    %3810 = vmatprep.subr.mxu0 0.0
    %3811 = vmatpush1.msra.mxu0 0.0
    %3812 = vmatprep.subr.mxu0 0.0
    %3813 = vmatpush1.msra.mxu0 0.0
    %3814 = vmatprep.subr.mxu0 0.0
    %3815 = vmatpush1.msra.mxu0 0.0
    %3816 = vmatprep.subr.mxu0 0.0
    %3817 = vmatpush1.msra.mxu0 0.0
    %3818 = vmatprep.subr.mxu0 0.0
    %3819 = vmatpush1.msra.mxu0 0.0
    %3820 = vmatprep.subr.mxu0 0.0
    %3821 = vmatpush1.msra.mxu0 0.0
    %3822 = vmatprep.subr.mxu0 0.0
    %3823 = vmatpush1.msra.mxu0 0.0
    %3824 = vmatprep.subr.mxu0 0.0
    %3825 = vmatpush1.msra.mxu0 0.0
    %3826 = vmatprep.subr.mxu0 0.0
    %3827 = vmatpush1.msra.mxu0 0.0
    %3828 = vmatprep.subr.mxu0 0.0
    %3829 = vmatpush1.msra.mxu0 0.0
    %3830 = vmatprep.subr.mxu0 0.0
    %3831 = vmatpush1.msra.mxu0 0.0
    %3832 = vmatprep.subr.mxu0 0.0
    %3833 = vmatpush1.msra.mxu0 0.0
    %3834 = vmatprep.subr.mxu0 0.0
    %3835 = vmatpush1.msra.mxu0 0.0
    %3836 = vmatprep.subr.mxu0 0.0
    %3837 = vmatpush1.msra.mxu0 0.0
    %3838 = vmatprep.subr.mxu0 0.0
    %3839 = vmatpush1.msra.mxu0 0.0
    %3840 = vmatprep.subr.mxu0 0.0
    %3841 = vmatpush1.msra.mxu0 0.0
    %3842 = vmatprep.subr.mxu0 0.0
    %3843 = vmatpush1.msra.mxu0 0.0
    %3844 = vmatprep.subr.mxu0 0.0
    %3845 = vmatpush1.msra.mxu0 0.0
    %3846 = vmatprep.subr.mxu0 0.0
    %3847 = vmatpush1.msra.mxu0 0.0
    %3848 = vmatprep.subr.mxu0 0.0
    %3849 = vmatpush1.msra.mxu0 0.0
    %3850 = vmatprep.subr.mxu0 0.0
    %3851 = vmatpush1.msra.mxu0 0.0
    %3852 = vmatprep.subr.mxu0 0.0
    %3853 = vmatpush1.msra.mxu0 0.0
    %3854 = vmatprep.subr.mxu0 0.0
    %3855 = vmatpush1.msra.mxu0 0.0
    %3856 = vmatprep.subr.mxu0 0.0
    %3857 = vmatpush1.msra.mxu0 0.0
    %3858 = vmatprep.subr.mxu0 0.0
    %3859 = vmatpush1.msra.mxu0 0.0
    %3860 = vmatprep.subr.mxu0 0.0
    %3861 = vmatpush1.msra.mxu0 0.0
    %3862 = vmatprep.mubr.f32.mxu0 0.0
    %3863 = vmatmul.mubr.f32.gmra.mrb[0].mxu0 %v3716
    %v3864 = vpop.f32.mrb[0].mxu0
    %v3865 = vadd.f32 0.0, %v3864
    %v3866 = vpop.f32.mrb[0].mxu0
    %v3867 = vadd.f32 0.0, %v3866
    %3868 = vmatprep.mubr.f32.mxu0 0.0
    %3869 = vmatmul.mubr.f32.gmra.mrb[0].mxu0 %v3719
    %v3870 = vpop.f32.mrb[0].mxu0
    %v3871 = vadd.f32 0.0, %v3870
    %v3872 = vpop.f32.mrb[0].mxu0
    %v3873 = vadd.f32 0.0, %v3872
    %3874 = vdwg.mxu0
    %v3875 = vadd.f32 %v3669, %v3788
    %v3876 = vadd.f32 %v3670, %v3790
    %v3877 = vadd.f32 %v3671, %v3865
    %v3878 = vadd.f32 %v3672, %v3867
    %v3879 = vadd.f32 %v3673, %v3794
    %v3880 = vadd.f32 %v3674, %v3796
    %v3881 = vadd.f32 %v3675, %v3871
    %v3882 = vadd.f32 %v3676, %v3873
    %v3883 = vld [vmem:[%s2 + $0x90] sm:$0xff]
    %v3884 = vld [vmem:[%s2 + $0x98] sm:$0xff]
    %3885 = vrot.lane.b32.xlu0 %v2834, 99
    %v3886 = vpop.permute.xlu0 %3885
    %3887 = vrot.lane.b32.xlu0 %v2835, 99
    %v3888 = vpop.permute.xlu0 %3887
    %3889 = vrot.lane.b32.xlu0 %v2836, 99
    %v3890 = vpop.permute.xlu0 %3889
    %3891 = vrot.lane.b32.xlu0 %v2837, 99
    %v3892 = vpop.permute.xlu0 %3891
    %3893 = vrot.lane.b32.xlu0 %v2838, 99
    %v3894 = vpop.permute.xlu0 %3893
    %3895 = vrot.lane.b32.xlu0 %v2839, 99
    %v3896 = vpop.permute.xlu0 %3895
    %3897 = vrot.lane.b32.xlu0 %v2840, 99
    %v3898 = vpop.permute.xlu0 %3897
    %3899 = vrot.lane.b32.xlu0 %v2841, 99
    %v3900 = vpop.permute.xlu0 %3899
    %3901 = vrot.lane.b32.xlu0 %v2842, 99
    %v3902 = vpop.permute.xlu0 %3901
    %3903 = vrot.lane.b32.xlu0 %v2843, 99
    %v3904 = vpop.permute.xlu0 %3903
    %v3905 = vsel %vm1450, %v3886, %v3888
    %v3906 = vsel %vm1450, %v3888, %v3890
    %v3907 = vsel %vm1450, %v3890, %v3892
    %v3908 = vsel %vm1450, %v3892, %v3894
    %v3909 = vsel %vm1450, %v3896, %v3898
    %v3910 = vsel %vm1450, %v3898, %v3900
    %v3911 = vsel %vm1450, %v3900, %v3902
    %v3912 = vsel %vm1450, %v3902, %v3904
    %v3922 = vsel %vm2110, %v3883, 0
    %v3925 = vsel %vm2110, %v3884, 0
    %3927 = vmatprep.subr.mxu0 %v3906
    %3928 = vmatpush1.msra.mxu0 %v3905
    %3929 = vmatprep.subr.mxu0 %v3910
    %3930 = vmatpush1.msra.mxu0 %v3909
    %3931 = vmatprep.subr.mxu0 0.0
    %3932 = vmatpush1.msra.mxu0 0.0
    %3933 = vmatprep.subr.mxu0 0.0
    %3934 = vmatpush1.msra.mxu0 0.0
    %3935 = vmatprep.subr.mxu0 0.0
    %3936 = vmatpush1.msra.mxu0 0.0
    %3937 = vmatprep.subr.mxu0 0.0
    %3938 = vmatpush1.msra.mxu0 0.0
    %3939 = vmatprep.subr.mxu0 0.0
    %3940 = vmatpush1.msra.mxu0 0.0
    %3941 = vmatprep.subr.mxu0 0.0
    %3942 = vmatpush1.msra.mxu0 0.0
    %3943 = vmatprep.subr.mxu0 0.0
    %3944 = vmatpush1.msra.mxu0 0.0
    %3945 = vmatprep.subr.mxu0 0.0
    %3946 = vmatpush1.msra.mxu0 0.0
    %3947 = vmatprep.subr.mxu0 0.0
    %3948 = vmatpush1.msra.mxu0 0.0
    %3949 = vmatprep.subr.mxu0 0.0
    %3950 = vmatpush1.msra.mxu0 0.0
    %3951 = vmatprep.subr.mxu0 0.0
    %3952 = vmatpush1.msra.mxu0 0.0
    %3953 = vmatprep.subr.mxu0 0.0
    %3954 = vmatpush1.msra.mxu0 0.0
    %3955 = vmatprep.subr.mxu0 0.0
    %3956 = vmatpush1.msra.mxu0 0.0
    %3957 = vmatprep.subr.mxu0 0.0
    %3958 = vmatpush1.msra.mxu0 0.0
    %3959 = vmatprep.subr.mxu0 0.0
    %3960 = vmatpush1.msra.mxu0 0.0
    %3961 = vmatprep.subr.mxu0 0.0
    %3962 = vmatpush1.msra.mxu0 0.0
    %3963 = vmatprep.subr.mxu0 0.0
    %3964 = vmatpush1.msra.mxu0 0.0
    %3965 = vmatprep.subr.mxu0 0.0
    %3966 = vmatpush1.msra.mxu0 0.0
    %3967 = vmatprep.subr.mxu0 0.0
    %3968 = vmatpush1.msra.mxu0 0.0
    %3969 = vmatprep.subr.mxu0 0.0
    %3970 = vmatpush1.msra.mxu0 0.0
    %3971 = vmatprep.subr.mxu0 0.0
    %3972 = vmatpush1.msra.mxu0 0.0
    %3973 = vmatprep.subr.mxu0 0.0
    %3974 = vmatpush1.msra.mxu0 0.0
    %3975 = vmatprep.subr.mxu0 0.0
    %3976 = vmatpush1.msra.mxu0 0.0
    %3977 = vmatprep.subr.mxu0 0.0
    %3978 = vmatpush1.msra.mxu0 0.0
    %3979 = vmatprep.subr.mxu0 0.0
    %3980 = vmatpush1.msra.mxu0 0.0
    %3981 = vmatprep.subr.mxu0 0.0
    %3982 = vmatpush1.msra.mxu0 0.0
    %3983 = vmatprep.subr.mxu0 0.0
    %3984 = vmatpush1.msra.mxu0 0.0
    %3985 = vmatprep.subr.mxu0 0.0
    %3986 = vmatpush1.msra.mxu0 0.0
    %3987 = vmatprep.subr.mxu0 0.0
    %3988 = vmatpush1.msra.mxu0 0.0
    %3989 = vmatprep.subr.mxu0 0.0
    %3990 = vmatpush1.msra.mxu0 0.0
    %3991 = vmatprep.mubr.f32.mxu0 0.0
    %3992 = vmatmul.mubr.f32.gmra.mrb[0].mxu0 %v3922
    %v3993 = vpop.f32.mrb[0].mxu0
    %v3994 = vadd.f32 0.0, %v3993
    %v3995 = vpop.f32.mrb[0].mxu0
    %v3996 = vadd.f32 0.0, %v3995
    %3997 = vmatprep.mubr.f32.mxu0 0.0
    %3998 = vmatmul.mubr.f32.gmra.mrb[0].mxu0 %v3925
    %v3999 = vpop.f32.mrb[0].mxu0
    %v4000 = vadd.f32 0.0, %v3999
    %v4001 = vpop.f32.mrb[0].mxu0
    %v4002 = vadd.f32 0.0, %v4001
    %4003 = vdwg.mxu0
    %4004 = vmatprep.subr.mxu0 %v3908
    %4005 = vmatpush1.msra.mxu0 %v3907
    %4006 = vmatprep.subr.mxu0 %v3912
    %4007 = vmatpush1.msra.mxu0 %v3911
    %4008 = vmatprep.subr.mxu0 0.0
    %4009 = vmatpush1.msra.mxu0 0.0
    %4010 = vmatprep.subr.mxu0 0.0
    %4011 = vmatpush1.msra.mxu0 0.0
    %4012 = vmatprep.subr.mxu0 0.0
    %4013 = vmatpush1.msra.mxu0 0.0
    %4014 = vmatprep.subr.mxu0 0.0
    %4015 = vmatpush1.msra.mxu0 0.0
    %4016 = vmatprep.subr.mxu0 0.0
    %4017 = vmatpush1.msra.mxu0 0.0
    %4018 = vmatprep.subr.mxu0 0.0
    %4019 = vmatpush1.msra.mxu0 0.0
    %4020 = vmatprep.subr.mxu0 0.0
    %4021 = vmatpush1.msra.mxu0 0.0
    %4022 = vmatprep.subr.mxu0 0.0
    %4023 = vmatpush1.msra.mxu0 0.0
    %4024 = vmatprep.subr.mxu0 0.0
    %4025 = vmatpush1.msra.mxu0 0.0
    %4026 = vmatprep.subr.mxu0 0.0
    %4027 = vmatpush1.msra.mxu0 0.0
    %4028 = vmatprep.subr.mxu0 0.0
    %4029 = vmatpush1.msra.mxu0 0.0
    %4030 = vmatprep.subr.mxu0 0.0
    %4031 = vmatpush1.msra.mxu0 0.0
    %4032 = vmatprep.subr.mxu0 0.0
    %4033 = vmatpush1.msra.mxu0 0.0
    %4034 = vmatprep.subr.mxu0 0.0
    %4035 = vmatpush1.msra.mxu0 0.0
    %4036 = vmatprep.subr.mxu0 0.0
    %4037 = vmatpush1.msra.mxu0 0.0
    %4038 = vmatprep.subr.mxu0 0.0
    %4039 = vmatpush1.msra.mxu0 0.0
    %4040 = vmatprep.subr.mxu0 0.0
    %4041 = vmatpush1.msra.mxu0 0.0
    %4042 = vmatprep.subr.mxu0 0.0
    %4043 = vmatpush1.msra.mxu0 0.0
    %4044 = vmatprep.subr.mxu0 0.0
    %4045 = vmatpush1.msra.mxu0 0.0
    %4046 = vmatprep.subr.mxu0 0.0
    %4047 = vmatpush1.msra.mxu0 0.0
    %4048 = vmatprep.subr.mxu0 0.0
    %4049 = vmatpush1.msra.mxu0 0.0
    %4050 = vmatprep.subr.mxu0 0.0
    %4051 = vmatpush1.msra.mxu0 0.0
    %4052 = vmatprep.subr.mxu0 0.0
    %4053 = vmatpush1.msra.mxu0 0.0
    %4054 = vmatprep.subr.mxu0 0.0
    %4055 = vmatpush1.msra.mxu0 0.0
    %4056 = vmatprep.subr.mxu0 0.0
    %4057 = vmatpush1.msra.mxu0 0.0
    %4058 = vmatprep.subr.mxu0 0.0
    %4059 = vmatpush1.msra.mxu0 0.0
    %4060 = vmatprep.subr.mxu0 0.0
    %4061 = vmatpush1.msra.mxu0 0.0
    %4062 = vmatprep.subr.mxu0 0.0
    %4063 = vmatpush1.msra.mxu0 0.0
    %4064 = vmatprep.subr.mxu0 0.0
    %4065 = vmatpush1.msra.mxu0 0.0
    %4066 = vmatprep.subr.mxu0 0.0
    %4067 = vmatpush1.msra.mxu0 0.0
    %4068 = vmatprep.mubr.f32.mxu0 0.0
    %4069 = vmatmul.mubr.f32.gmra.mrb[0].mxu0 %v3922
    %v4070 = vpop.f32.mrb[0].mxu0
    %v4071 = vadd.f32 0.0, %v4070
    %v4072 = vpop.f32.mrb[0].mxu0
    %v4073 = vadd.f32 0.0, %v4072
    %4074 = vmatprep.mubr.f32.mxu0 0.0
    %4075 = vmatmul.mubr.f32.gmra.mrb[0].mxu0 %v3925
    %v4076 = vpop.f32.mrb[0].mxu0
    %v4077 = vadd.f32 0.0, %v4076
    %v4078 = vpop.f32.mrb[0].mxu0
    %v4079 = vadd.f32 0.0, %v4078
    %4080 = vdwg.mxu0
    %v4081 = vadd.f32 %v3875, %v3994
    %v4082 = vadd.f32 %v3876, %v3996
    %v4083 = vadd.f32 %v3877, %v4071
    %v4084 = vadd.f32 %v3878, %v4073
    %v4085 = vadd.f32 %v3879, %v4000
    %v4086 = vadd.f32 %v3880, %v4002
    %v4087 = vadd.f32 %v3881, %v4077
    %v4088 = vadd.f32 %v3882, %v4079
    %v4089 = vld [vmem:[%s2 + $0xa0] sm:$0xff]
    %v4090 = vld [vmem:[%s2 + $0xa8] sm:$0xff]
    %4091 = vrot.lane.b32.xlu0 %v2834, 98
    %v4092 = vpop.permute.xlu0 %4091
    %4093 = vrot.lane.b32.xlu0 %v2835, 98
    %v4094 = vpop.permute.xlu0 %4093
    %4095 = vrot.lane.b32.xlu0 %v2836, 98
    %v4096 = vpop.permute.xlu0 %4095
    %4097 = vrot.lane.b32.xlu0 %v2837, 98
    %v4098 = vpop.permute.xlu0 %4097
    %4099 = vrot.lane.b32.xlu0 %v2838, 98
    %v4100 = vpop.permute.xlu0 %4099
    %4101 = vrot.lane.b32.xlu0 %v2839, 98
    %v4102 = vpop.permute.xlu0 %4101
    %4103 = vrot.lane.b32.xlu0 %v2840, 98
    %v4104 = vpop.permute.xlu0 %4103
    %4105 = vrot.lane.b32.xlu0 %v2841, 98
    %v4106 = vpop.permute.xlu0 %4105
    %4107 = vrot.lane.b32.xlu0 %v2842, 98
    %v4108 = vpop.permute.xlu0 %4107
    %4109 = vrot.lane.b32.xlu0 %v2843, 98
    %v4110 = vpop.permute.xlu0 %4109
    %v4111 = vsel %vm1651, %v4092, %v4094
    %v4112 = vsel %vm1651, %v4094, %v4096
    %v4113 = vsel %vm1651, %v4096, %v4098
    %v4114 = vsel %vm1651, %v4098, %v4100
    %v4115 = vsel %vm1651, %v4102, %v4104
    %v4116 = vsel %vm1651, %v4104, %v4106
    %v4117 = vsel %vm1651, %v4106, %v4108
    %v4118 = vsel %vm1651, %v4108, %v4110
    %v4128 = vsel %vm2110, %v4089, 0
    %v4131 = vsel %vm2110, %v4090, 0
    %4133 = vmatprep.subr.mxu0 %v4112
    %4134 = vmatpush1.msra.mxu0 %v4111
    %4135 = vmatprep.subr.mxu0 %v4116
    %4136 = vmatpush1.msra.mxu0 %v4115
    %4137 = vmatprep.subr.mxu0 0.0
    %4138 = vmatpush1.msra.mxu0 0.0
    %4139 = vmatprep.subr.mxu0 0.0
    %4140 = vmatpush1.msra.mxu0 0.0
    %4141 = vmatprep.subr.mxu0 0.0
    %4142 = vmatpush1.msra.mxu0 0.0
    %4143 = vmatprep.subr.mxu0 0.0
    %4144 = vmatpush1.msra.mxu0 0.0
    %4145 = vmatprep.subr.mxu0 0.0
    %4146 = vmatpush1.msra.mxu0 0.0
    %4147 = vmatprep.subr.mxu0 0.0
    %4148 = vmatpush1.msra.mxu0 0.0
    %4149 = vmatprep.subr.mxu0 0.0
    %4150 = vmatpush1.msra.mxu0 0.0
    %4151 = vmatprep.subr.mxu0 0.0
    %4152 = vmatpush1.msra.mxu0 0.0
    %4153 = vmatprep.subr.mxu0 0.0
    %4154 = vmatpush1.msra.mxu0 0.0
    %4155 = vmatprep.subr.mxu0 0.0
    %4156 = vmatpush1.msra.mxu0 0.0
    %4157 = vmatprep.subr.mxu0 0.0
    %4158 = vmatpush1.msra.mxu0 0.0
    %4159 = vmatprep.subr.mxu0 0.0
    %4160 = vmatpush1.msra.mxu0 0.0
    %4161 = vmatprep.subr.mxu0 0.0
    %4162 = vmatpush1.msra.mxu0 0.0
    %4163 = vmatprep.subr.mxu0 0.0
    %4164 = vmatpush1.msra.mxu0 0.0
    %4165 = vmatprep.subr.mxu0 0.0
    %4166 = vmatpush1.msra.mxu0 0.0
    %4167 = vmatprep.subr.mxu0 0.0
    %4168 = vmatpush1.msra.mxu0 0.0
    %4169 = vmatprep.subr.mxu0 0.0
    %4170 = vmatpush1.msra.mxu0 0.0
    %4171 = vmatprep.subr.mxu0 0.0
    %4172 = vmatpush1.msra.mxu0 0.0
    %4173 = vmatprep.subr.mxu0 0.0
    %4174 = vmatpush1.msra.mxu0 0.0
    %4175 = vmatprep.subr.mxu0 0.0
    %4176 = vmatpush1.msra.mxu0 0.0
    %4177 = vmatprep.subr.mxu0 0.0
    %4178 = vmatpush1.msra.mxu0 0.0
    %4179 = vmatprep.subr.mxu0 0.0
    %4180 = vmatpush1.msra.mxu0 0.0
    %4181 = vmatprep.subr.mxu0 0.0
    %4182 = vmatpush1.msra.mxu0 0.0
    %4183 = vmatprep.subr.mxu0 0.0
    %4184 = vmatpush1.msra.mxu0 0.0
    %4185 = vmatprep.subr.mxu0 0.0
    %4186 = vmatpush1.msra.mxu0 0.0
    %4187 = vmatprep.subr.mxu0 0.0
    %4188 = vmatpush1.msra.mxu0 0.0
    %4189 = vmatprep.subr.mxu0 0.0
    %4190 = vmatpush1.msra.mxu0 0.0
    %4191 = vmatprep.subr.mxu0 0.0
    %4192 = vmatpush1.msra.mxu0 0.0
    %4193 = vmatprep.subr.mxu0 0.0
    %4194 = vmatpush1.msra.mxu0 0.0
    %4195 = vmatprep.subr.mxu0 0.0
    %4196 = vmatpush1.msra.mxu0 0.0
    %4197 = vmatprep.mubr.f32.mxu0 0.0
    %4198 = vmatmul.mubr.f32.gmra.mrb[0].mxu0 %v4128
    %v4199 = vpop.f32.mrb[0].mxu0
    %v4200 = vadd.f32 0.0, %v4199
    %v4201 = vpop.f32.mrb[0].mxu0
    %v4202 = vadd.f32 0.0, %v4201
    %4203 = vmatprep.mubr.f32.mxu0 0.0
    %4204 = vmatmul.mubr.f32.gmra.mrb[0].mxu0 %v4131
    %v4205 = vpop.f32.mrb[0].mxu0
    %v4206 = vadd.f32 0.0, %v4205
    %v4207 = vpop.f32.mrb[0].mxu0
    %v4208 = vadd.f32 0.0, %v4207
    %4209 = vdwg.mxu0
    %4210 = vmatprep.subr.mxu0 %v4114
    %4211 = vmatpush1.msra.mxu0 %v4113
    %4212 = vmatprep.subr.mxu0 %v4118
    %4213 = vmatpush1.msra.mxu0 %v4117
    %4214 = vmatprep.subr.mxu0 0.0
    %4215 = vmatpush1.msra.mxu0 0.0
    %4216 = vmatprep.subr.mxu0 0.0
    %4217 = vmatpush1.msra.mxu0 0.0
    %4218 = vmatprep.subr.mxu0 0.0
    %4219 = vmatpush1.msra.mxu0 0.0
    %4220 = vmatprep.subr.mxu0 0.0
    %4221 = vmatpush1.msra.mxu0 0.0
    %4222 = vmatprep.subr.mxu0 0.0
    %4223 = vmatpush1.msra.mxu0 0.0
    %4224 = vmatprep.subr.mxu0 0.0
    %4225 = vmatpush1.msra.mxu0 0.0
    %4226 = vmatprep.subr.mxu0 0.0
    %4227 = vmatpush1.msra.mxu0 0.0
    %4228 = vmatprep.subr.mxu0 0.0
    %4229 = vmatpush1.msra.mxu0 0.0
    %4230 = vmatprep.subr.mxu0 0.0
    %4231 = vmatpush1.msra.mxu0 0.0
    %4232 = vmatprep.subr.mxu0 0.0
    %4233 = vmatpush1.msra.mxu0 0.0
    %4234 = vmatprep.subr.mxu0 0.0
    %4235 = vmatpush1.msra.mxu0 0.0
    %4236 = vmatprep.subr.mxu0 0.0
    %4237 = vmatpush1.msra.mxu0 0.0
    %4238 = vmatprep.subr.mxu0 0.0
    %4239 = vmatpush1.msra.mxu0 0.0
    %4240 = vmatprep.subr.mxu0 0.0
    %4241 = vmatpush1.msra.mxu0 0.0
    %4242 = vmatprep.subr.mxu0 0.0
    %4243 = vmatpush1.msra.mxu0 0.0
    %4244 = vmatprep.subr.mxu0 0.0
    %4245 = vmatpush1.msra.mxu0 0.0
    %4246 = vmatprep.subr.mxu0 0.0
    %4247 = vmatpush1.msra.mxu0 0.0
    %4248 = vmatprep.subr.mxu0 0.0
    %4249 = vmatpush1.msra.mxu0 0.0
    %4250 = vmatprep.subr.mxu0 0.0
    %4251 = vmatpush1.msra.mxu0 0.0
    %4252 = vmatprep.subr.mxu0 0.0
    %4253 = vmatpush1.msra.mxu0 0.0
    %4254 = vmatprep.subr.mxu0 0.0
    %4255 = vmatpush1.msra.mxu0 0.0
    %4256 = vmatprep.subr.mxu0 0.0
    %4257 = vmatpush1.msra.mxu0 0.0
    %4258 = vmatprep.subr.mxu0 0.0
    %4259 = vmatpush1.msra.mxu0 0.0
    %4260 = vmatprep.subr.mxu0 0.0
    %4261 = vmatpush1.msra.mxu0 0.0
    %4262 = vmatprep.subr.mxu0 0.0
    %4263 = vmatpush1.msra.mxu0 0.0
    %4264 = vmatprep.subr.mxu0 0.0
    %4265 = vmatpush1.msra.mxu0 0.0
    %4266 = vmatprep.subr.mxu0 0.0
    %4267 = vmatpush1.msra.mxu0 0.0
    %4268 = vmatprep.subr.mxu0 0.0
    %4269 = vmatpush1.msra.mxu0 0.0
    %4270 = vmatprep.subr.mxu0 0.0
    %4271 = vmatpush1.msra.mxu0 0.0
    %4272 = vmatprep.subr.mxu0 0.0
    %4273 = vmatpush1.msra.mxu0 0.0
    %4274 = vmatprep.mubr.f32.mxu0 0.0
    %4275 = vmatmul.mubr.f32.gmra.mrb[0].mxu0 %v4128
    %v4276 = vpop.f32.mrb[0].mxu0
    %v4277 = vadd.f32 0.0, %v4276
    %v4278 = vpop.f32.mrb[0].mxu0
    %v4279 = vadd.f32 0.0, %v4278
    %4280 = vmatprep.mubr.f32.mxu0 0.0
    %4281 = vmatmul.mubr.f32.gmra.mrb[0].mxu0 %v4131
    %v4282 = vpop.f32.mrb[0].mxu0
    %v4283 = vadd.f32 0.0, %v4282
    %v4284 = vpop.f32.mrb[0].mxu0
    %v4285 = vadd.f32 0.0, %v4284
    %4286 = vdwg.mxu0
    %v4287 = vadd.f32 %v4081, %v4200
    %v4288 = vadd.f32 %v4082, %v4202
    %v4289 = vadd.f32 %v4083, %v4277
    %v4290 = vadd.f32 %v4084, %v4279
    %v4291 = vadd.f32 %v4085, %v4206
    %v4292 = vadd.f32 %v4086, %v4208
    %v4293 = vadd.f32 %v4087, %v4283
    %v4294 = vadd.f32 %v4088, %v4285
    %v4295 = vld [vmem:[%s2 + $0xb0] sm:$0xff]
    %v4296 = vld [vmem:[%s2 + $0xb8] sm:$0xff]
    %4297 = vrot.lane.b32.xlu0 %v2834, 97
    %v4298 = vpop.permute.xlu0 %4297
    %4299 = vrot.lane.b32.xlu0 %v2835, 97
    %v4300 = vpop.permute.xlu0 %4299
    %4301 = vrot.lane.b32.xlu0 %v2836, 97
    %v4302 = vpop.permute.xlu0 %4301
    %4303 = vrot.lane.b32.xlu0 %v2837, 97
    %v4304 = vpop.permute.xlu0 %4303
    %4305 = vrot.lane.b32.xlu0 %v2838, 97
    %v4306 = vpop.permute.xlu0 %4305
    %4307 = vrot.lane.b32.xlu0 %v2839, 97
    %v4308 = vpop.permute.xlu0 %4307
    %4309 = vrot.lane.b32.xlu0 %v2840, 97
    %v4310 = vpop.permute.xlu0 %4309
    %4311 = vrot.lane.b32.xlu0 %v2841, 97
    %v4312 = vpop.permute.xlu0 %4311
    %4313 = vrot.lane.b32.xlu0 %v2842, 97
    %v4314 = vpop.permute.xlu0 %4313
    %4315 = vrot.lane.b32.xlu0 %v2843, 97
    %v4316 = vpop.permute.xlu0 %4315
    %vm4317 = vcmask 793600
    %v4318 = vsel %vm4317, %v4298, %v4300
    %v4319 = vsel %vm4317, %v4300, %v4302
    %v4320 = vsel %vm4317, %v4302, %v4304
    %v4321 = vsel %vm4317, %v4304, %v4306
    %v4322 = vsel %vm4317, %v4308, %v4310
    %v4323 = vsel %vm4317, %v4310, %v4312
    %v4324 = vsel %vm4317, %v4312, %v4314
    %v4325 = vsel %vm4317, %v4314, %v4316
    %v4335 = vsel %vm2110, %v4295, 0
    %v4338 = vsel %vm2110, %v4296, 0
    %4340 = vmatprep.subr.mxu0 %v4319
    %4341 = vmatpush1.msra.mxu0 %v4318
    %4342 = vmatprep.subr.mxu0 %v4323
    %4343 = vmatpush1.msra.mxu0 %v4322
    %4344 = vmatprep.subr.mxu0 0.0
    %4345 = vmatpush1.msra.mxu0 0.0
    %4346 = vmatprep.subr.mxu0 0.0
    %4347 = vmatpush1.msra.mxu0 0.0
    %4348 = vmatprep.subr.mxu0 0.0
    %4349 = vmatpush1.msra.mxu0 0.0
    %4350 = vmatprep.subr.mxu0 0.0
    %4351 = vmatpush1.msra.mxu0 0.0
    %4352 = vmatprep.subr.mxu0 0.0
    %4353 = vmatpush1.msra.mxu0 0.0
    %4354 = vmatprep.subr.mxu0 0.0
    %4355 = vmatpush1.msra.mxu0 0.0
    %4356 = vmatprep.subr.mxu0 0.0
    %4357 = vmatpush1.msra.mxu0 0.0
    %4358 = vmatprep.subr.mxu0 0.0
    %4359 = vmatpush1.msra.mxu0 0.0
    %4360 = vmatprep.subr.mxu0 0.0
    %4361 = vmatpush1.msra.mxu0 0.0
    %4362 = vmatprep.subr.mxu0 0.0
    %4363 = vmatpush1.msra.mxu0 0.0
    %4364 = vmatprep.subr.mxu0 0.0
    %4365 = vmatpush1.msra.mxu0 0.0
    %4366 = vmatprep.subr.mxu0 0.0
    %4367 = vmatpush1.msra.mxu0 0.0
    %4368 = vmatprep.subr.mxu0 0.0
    %4369 = vmatpush1.msra.mxu0 0.0
    %4370 = vmatprep.subr.mxu0 0.0
    %4371 = vmatpush1.msra.mxu0 0.0
    %4372 = vmatprep.subr.mxu0 0.0
    %4373 = vmatpush1.msra.mxu0 0.0
    %4374 = vmatprep.subr.mxu0 0.0
    %4375 = vmatpush1.msra.mxu0 0.0
    %4376 = vmatprep.subr.mxu0 0.0
    %4377 = vmatpush1.msra.mxu0 0.0
    %4378 = vmatprep.subr.mxu0 0.0
    %4379 = vmatpush1.msra.mxu0 0.0
    %4380 = vmatprep.subr.mxu0 0.0
    %4381 = vmatpush1.msra.mxu0 0.0
    %4382 = vmatprep.subr.mxu0 0.0
    %4383 = vmatpush1.msra.mxu0 0.0
    %4384 = vmatprep.subr.mxu0 0.0
    %4385 = vmatpush1.msra.mxu0 0.0
    %4386 = vmatprep.subr.mxu0 0.0
    %4387 = vmatpush1.msra.mxu0 0.0
    %4388 = vmatprep.subr.mxu0 0.0
    %4389 = vmatpush1.msra.mxu0 0.0
    %4390 = vmatprep.subr.mxu0 0.0
    %4391 = vmatpush1.msra.mxu0 0.0
    %4392 = vmatprep.subr.mxu0 0.0
    %4393 = vmatpush1.msra.mxu0 0.0
    %4394 = vmatprep.subr.mxu0 0.0
    %4395 = vmatpush1.msra.mxu0 0.0
    %4396 = vmatprep.subr.mxu0 0.0
    %4397 = vmatpush1.msra.mxu0 0.0
    %4398 = vmatprep.subr.mxu0 0.0
    %4399 = vmatpush1.msra.mxu0 0.0
    %4400 = vmatprep.subr.mxu0 0.0
    %4401 = vmatpush1.msra.mxu0 0.0
    %4402 = vmatprep.subr.mxu0 0.0
    %4403 = vmatpush1.msra.mxu0 0.0
    %4404 = vmatprep.mubr.f32.mxu0 0.0
    %4405 = vmatmul.mubr.f32.gmra.mrb[0].mxu0 %v4335
    %v4406 = vpop.f32.mrb[0].mxu0
    %v4407 = vadd.f32 0.0, %v4406
    %v4408 = vpop.f32.mrb[0].mxu0
    %v4409 = vadd.f32 0.0, %v4408
    %4410 = vmatprep.mubr.f32.mxu0 0.0
    %4411 = vmatmul.mubr.f32.gmra.mrb[0].mxu0 %v4338
    %v4412 = vpop.f32.mrb[0].mxu0
    %v4413 = vadd.f32 0.0, %v4412
    %v4414 = vpop.f32.mrb[0].mxu0
    %v4415 = vadd.f32 0.0, %v4414
    %4416 = vdwg.mxu0
    %4417 = vmatprep.subr.mxu0 %v4321
    %4418 = vmatpush1.msra.mxu0 %v4320
    %4419 = vmatprep.subr.mxu0 %v4325
    %4420 = vmatpush1.msra.mxu0 %v4324
    %4421 = vmatprep.subr.mxu0 0.0
    %4422 = vmatpush1.msra.mxu0 0.0
    %4423 = vmatprep.subr.mxu0 0.0
    %4424 = vmatpush1.msra.mxu0 0.0
    %4425 = vmatprep.subr.mxu0 0.0
    %4426 = vmatpush1.msra.mxu0 0.0
    %4427 = vmatprep.subr.mxu0 0.0
    %4428 = vmatpush1.msra.mxu0 0.0
    %4429 = vmatprep.subr.mxu0 0.0
    %4430 = vmatpush1.msra.mxu0 0.0
    %4431 = vmatprep.subr.mxu0 0.0
    %4432 = vmatpush1.msra.mxu0 0.0
    %4433 = vmatprep.subr.mxu0 0.0
    %4434 = vmatpush1.msra.mxu0 0.0
    %4435 = vmatprep.subr.mxu0 0.0
    %4436 = vmatpush1.msra.mxu0 0.0
    %4437 = vmatprep.subr.mxu0 0.0
    %4438 = vmatpush1.msra.mxu0 0.0
    %4439 = vmatprep.subr.mxu0 0.0
    %4440 = vmatpush1.msra.mxu0 0.0
    %4441 = vmatprep.subr.mxu0 0.0
    %4442 = vmatpush1.msra.mxu0 0.0
    %4443 = vmatprep.subr.mxu0 0.0
    %4444 = vmatpush1.msra.mxu0 0.0
    %4445 = vmatprep.subr.mxu0 0.0
    %4446 = vmatpush1.msra.mxu0 0.0
    %4447 = vmatprep.subr.mxu0 0.0
    %4448 = vmatpush1.msra.mxu0 0.0
    %4449 = vmatprep.subr.mxu0 0.0
    %4450 = vmatpush1.msra.mxu0 0.0
    %4451 = vmatprep.subr.mxu0 0.0
    %4452 = vmatpush1.msra.mxu0 0.0
    %4453 = vmatprep.subr.mxu0 0.0
    %4454 = vmatpush1.msra.mxu0 0.0
    %4455 = vmatprep.subr.mxu0 0.0
    %4456 = vmatpush1.msra.mxu0 0.0
    %4457 = vmatprep.subr.mxu0 0.0
    %4458 = vmatpush1.msra.mxu0 0.0
    %4459 = vmatprep.subr.mxu0 0.0
    %4460 = vmatpush1.msra.mxu0 0.0
    %4461 = vmatprep.subr.mxu0 0.0
    %4462 = vmatpush1.msra.mxu0 0.0
    %4463 = vmatprep.subr.mxu0 0.0
    %4464 = vmatpush1.msra.mxu0 0.0
    %4465 = vmatprep.subr.mxu0 0.0
    %4466 = vmatpush1.msra.mxu0 0.0
    %4467 = vmatprep.subr.mxu0 0.0
    %4468 = vmatpush1.msra.mxu0 0.0
    %4469 = vmatprep.subr.mxu0 0.0
    %4470 = vmatpush1.msra.mxu0 0.0
    %4471 = vmatprep.subr.mxu0 0.0
    %4472 = vmatpush1.msra.mxu0 0.0
    %4473 = vmatprep.subr.mxu0 0.0
    %4474 = vmatpush1.msra.mxu0 0.0
    %4475 = vmatprep.subr.mxu0 0.0
    %4476 = vmatpush1.msra.mxu0 0.0
    %4477 = vmatprep.subr.mxu0 0.0
    %4478 = vmatpush1.msra.mxu0 0.0
    %4479 = vmatprep.subr.mxu0 0.0
    %4480 = vmatpush1.msra.mxu0 0.0
    %4481 = vmatprep.mubr.f32.mxu0 0.0
    %4482 = vmatmul.mubr.f32.gmra.mrb[0].mxu0 %v4335
    %v4483 = vpop.f32.mrb[0].mxu0
    %v4484 = vadd.f32 0.0, %v4483
    %v4485 = vpop.f32.mrb[0].mxu0
    %v4486 = vadd.f32 0.0, %v4485
    %4487 = vmatprep.mubr.f32.mxu0 0.0
    %4488 = vmatmul.mubr.f32.gmra.mrb[0].mxu0 %v4338
    %v4489 = vpop.f32.mrb[0].mxu0
    %v4490 = vadd.f32 0.0, %v4489
    %v4491 = vpop.f32.mrb[0].mxu0
    %v4492 = vadd.f32 0.0, %v4491
    %4493 = vdwg.mxu0
    %v4494 = vadd.f32 %v4287, %v4407
    %v4495 = vadd.f32 %v4288, %v4409
    %v4496 = vadd.f32 %v4289, %v4484
    %v4497 = vadd.f32 %v4290, %v4486
    %v4498 = vadd.f32 %v4291, %v4413
    %v4499 = vadd.f32 %v4292, %v4415
    %v4500 = vadd.f32 %v4293, %v4490
    %v4501 = vadd.f32 %v4294, %v4492
    %v4502 = vld [vmem:[%s2 + $0xc0] sm:$0xff]
    %v4503 = vld [vmem:[%s2 + $0xc8] sm:$0xff]
    %4504 = vrot.lane.b32.xlu0 %v2834, 86
    %v4505 = vpop.permute.xlu0 %4504
    %4506 = vrot.lane.b32.xlu0 %v2835, 86
    %v4507 = vpop.permute.xlu0 %4506
    %4508 = vrot.lane.b32.xlu0 %v2836, 86
    %v4509 = vpop.permute.xlu0 %4508
    %4510 = vrot.lane.b32.xlu0 %v2837, 86
    %v4511 = vpop.permute.xlu0 %4510
    %4512 = vrot.lane.b32.xlu0 %v2838, 86
    %v4513 = vpop.permute.xlu0 %4512
    %4514 = vrot.lane.b32.xlu0 %v2839, 86
    %v4515 = vpop.permute.xlu0 %4514
    %4516 = vrot.lane.b32.xlu0 %v2840, 86
    %v4517 = vpop.permute.xlu0 %4516
    %4518 = vrot.lane.b32.xlu0 %v2841, 86
    %v4519 = vpop.permute.xlu0 %4518
    %4520 = vrot.lane.b32.xlu0 %v2842, 86
    %v4521 = vpop.permute.xlu0 %4520
    %4522 = vrot.lane.b32.xlu0 %v2843, 86
    %v4523 = vpop.permute.xlu0 %4522
    %vm4524 = vcmask 703488
    %v4525 = vsel %vm4524, %v4505, %v4507
    %v4526 = vsel %vm4524, %v4507, %v4509
    %v4527 = vsel %vm4524, %v4509, %v4511
    %v4528 = vsel %vm4524, %v4511, %v4513
    %v4529 = vsel %vm4524, %v4515, %v4517
    %v4530 = vsel %vm4524, %v4517, %v4519
    %v4531 = vsel %vm4524, %v4519, %v4521
    %v4532 = vsel %vm4524, %v4521, %v4523
    %v4542 = vsel %vm2110, %v4502, 0
    %v4545 = vsel %vm2110, %v4503, 0
    %4547 = vmatprep.subr.mxu0 %v4526
    %4548 = vmatpush1.msra.mxu0 %v4525
    %4549 = vmatprep.subr.mxu0 %v4530
    %4550 = vmatpush1.msra.mxu0 %v4529
    %4551 = vmatprep.subr.mxu0 0.0
    %4552 = vmatpush1.msra.mxu0 0.0
    %4553 = vmatprep.subr.mxu0 0.0
    %4554 = vmatpush1.msra.mxu0 0.0
    %4555 = vmatprep.subr.mxu0 0.0
    %4556 = vmatpush1.msra.mxu0 0.0
    %4557 = vmatprep.subr.mxu0 0.0
    %4558 = vmatpush1.msra.mxu0 0.0
    %4559 = vmatprep.subr.mxu0 0.0
    %4560 = vmatpush1.msra.mxu0 0.0
    %4561 = vmatprep.subr.mxu0 0.0
    %4562 = vmatpush1.msra.mxu0 0.0
    %4563 = vmatprep.subr.mxu0 0.0
    %4564 = vmatpush1.msra.mxu0 0.0
    %4565 = vmatprep.subr.mxu0 0.0
    %4566 = vmatpush1.msra.mxu0 0.0
    %4567 = vmatprep.subr.mxu0 0.0
    %4568 = vmatpush1.msra.mxu0 0.0
    %4569 = vmatprep.subr.mxu0 0.0
    %4570 = vmatpush1.msra.mxu0 0.0
    %4571 = vmatprep.subr.mxu0 0.0
    %4572 = vmatpush1.msra.mxu0 0.0
    %4573 = vmatprep.subr.mxu0 0.0
    %4574 = vmatpush1.msra.mxu0 0.0
    %4575 = vmatprep.subr.mxu0 0.0
    %4576 = vmatpush1.msra.mxu0 0.0
    %4577 = vmatprep.subr.mxu0 0.0
    %4578 = vmatpush1.msra.mxu0 0.0
    %4579 = vmatprep.subr.mxu0 0.0
    %4580 = vmatpush1.msra.mxu0 0.0
    %4581 = vmatprep.subr.mxu0 0.0
    %4582 = vmatpush1.msra.mxu0 0.0
    %4583 = vmatprep.subr.mxu0 0.0
    %4584 = vmatpush1.msra.mxu0 0.0
    %4585 = vmatprep.subr.mxu0 0.0
    %4586 = vmatpush1.msra.mxu0 0.0
    %4587 = vmatprep.subr.mxu0 0.0
    %4588 = vmatpush1.msra.mxu0 0.0
    %4589 = vmatprep.subr.mxu0 0.0
    %4590 = vmatpush1.msra.mxu0 0.0
    %4591 = vmatprep.subr.mxu0 0.0
    %4592 = vmatpush1.msra.mxu0 0.0
    %4593 = vmatprep.subr.mxu0 0.0
    %4594 = vmatpush1.msra.mxu0 0.0
    %4595 = vmatprep.subr.mxu0 0.0
    %4596 = vmatpush1.msra.mxu0 0.0
    %4597 = vmatprep.subr.mxu0 0.0
    %4598 = vmatpush1.msra.mxu0 0.0
    %4599 = vmatprep.subr.mxu0 0.0
    %4600 = vmatpush1.msra.mxu0 0.0
    %4601 = vmatprep.subr.mxu0 0.0
    %4602 = vmatpush1.msra.mxu0 0.0
    %4603 = vmatprep.subr.mxu0 0.0
    %4604 = vmatpush1.msra.mxu0 0.0
    %4605 = vmatprep.subr.mxu0 0.0
    %4606 = vmatpush1.msra.mxu0 0.0
    %4607 = vmatprep.subr.mxu0 0.0
    %4608 = vmatpush1.msra.mxu0 0.0
    %4609 = vmatprep.subr.mxu0 0.0
    %4610 = vmatpush1.msra.mxu0 0.0
    %4611 = vmatprep.mubr.f32.mxu0 0.0
    %4612 = vmatmul.mubr.f32.gmra.mrb[0].mxu0 %v4542
    %v4613 = vpop.f32.mrb[0].mxu0
    %v4614 = vadd.f32 0.0, %v4613
    %v4615 = vpop.f32.mrb[0].mxu0
    %v4616 = vadd.f32 0.0, %v4615
    %4617 = vmatprep.mubr.f32.mxu0 0.0
    %4618 = vmatmul.mubr.f32.gmra.mrb[0].mxu0 %v4545
    %v4619 = vpop.f32.mrb[0].mxu0
    %v4620 = vadd.f32 0.0, %v4619
    %v4621 = vpop.f32.mrb[0].mxu0
    %v4622 = vadd.f32 0.0, %v4621
    %4623 = vdwg.mxu0
    %4624 = vmatprep.subr.mxu0 %v4528
    %4625 = vmatpush1.msra.mxu0 %v4527
    %4626 = vmatprep.subr.mxu0 %v4532
    %4627 = vmatpush1.msra.mxu0 %v4531
    %4628 = vmatprep.subr.mxu0 0.0
    %4629 = vmatpush1.msra.mxu0 0.0
    %4630 = vmatprep.subr.mxu0 0.0
    %4631 = vmatpush1.msra.mxu0 0.0
    %4632 = vmatprep.subr.mxu0 0.0
    %4633 = vmatpush1.msra.mxu0 0.0
    %4634 = vmatprep.subr.mxu0 0.0
    %4635 = vmatpush1.msra.mxu0 0.0
    %4636 = vmatprep.subr.mxu0 0.0
    %4637 = vmatpush1.msra.mxu0 0.0
    %4638 = vmatprep.subr.mxu0 0.0
    %4639 = vmatpush1.msra.mxu0 0.0
    %4640 = vmatprep.subr.mxu0 0.0
    %4641 = vmatpush1.msra.mxu0 0.0
    %4642 = vmatprep.subr.mxu0 0.0
    %4643 = vmatpush1.msra.mxu0 0.0
    %4644 = vmatprep.subr.mxu0 0.0
    %4645 = vmatpush1.msra.mxu0 0.0
    %4646 = vmatprep.subr.mxu0 0.0
    %4647 = vmatpush1.msra.mxu0 0.0
    %4648 = vmatprep.subr.mxu0 0.0
    %4649 = vmatpush1.msra.mxu0 0.0
    %4650 = vmatprep.subr.mxu0 0.0
    %4651 = vmatpush1.msra.mxu0 0.0
    %4652 = vmatprep.subr.mxu0 0.0
    %4653 = vmatpush1.msra.mxu0 0.0
    %4654 = vmatprep.subr.mxu0 0.0
    %4655 = vmatpush1.msra.mxu0 0.0
    %4656 = vmatprep.subr.mxu0 0.0
    %4657 = vmatpush1.msra.mxu0 0.0
    %4658 = vmatprep.subr.mxu0 0.0
    %4659 = vmatpush1.msra.mxu0 0.0
    %4660 = vmatprep.subr.mxu0 0.0
    %4661 = vmatpush1.msra.mxu0 0.0
    %4662 = vmatprep.subr.mxu0 0.0
    %4663 = vmatpush1.msra.mxu0 0.0
    %4664 = vmatprep.subr.mxu0 0.0
    %4665 = vmatpush1.msra.mxu0 0.0
    %4666 = vmatprep.subr.mxu0 0.0
    %4667 = vmatpush1.msra.mxu0 0.0
    %4668 = vmatprep.subr.mxu0 0.0
    %4669 = vmatpush1.msra.mxu0 0.0
    %4670 = vmatprep.subr.mxu0 0.0
    %4671 = vmatpush1.msra.mxu0 0.0
    %4672 = vmatprep.subr.mxu0 0.0
    %4673 = vmatpush1.msra.mxu0 0.0
    %4674 = vmatprep.subr.mxu0 0.0
    %4675 = vmatpush1.msra.mxu0 0.0
    %4676 = vmatprep.subr.mxu0 0.0
    %4677 = vmatpush1.msra.mxu0 0.0
    %4678 = vmatprep.subr.mxu0 0.0
    %4679 = vmatpush1.msra.mxu0 0.0
    %4680 = vmatprep.subr.mxu0 0.0
    %4681 = vmatpush1.msra.mxu0 0.0
    %4682 = vmatprep.subr.mxu0 0.0
    %4683 = vmatpush1.msra.mxu0 0.0
    %4684 = vmatprep.subr.mxu0 0.0
    %4685 = vmatpush1.msra.mxu0 0.0
    %4686 = vmatprep.subr.mxu0 0.0
    %4687 = vmatpush1.msra.mxu0 0.0
    %4688 = vmatprep.mubr.f32.mxu0 0.0
    %4689 = vmatmul.mubr.f32.gmra.mrb[0].mxu0 %v4542
    %v4690 = vpop.f32.mrb[0].mxu0
    %v4691 = vadd.f32 0.0, %v4690
    %v4692 = vpop.f32.mrb[0].mxu0
    %v4693 = vadd.f32 0.0, %v4692
    %4694 = vmatprep.mubr.f32.mxu0 0.0
    %4695 = vmatmul.mubr.f32.gmra.mrb[0].mxu0 %v4545
    %v4696 = vpop.f32.mrb[0].mxu0
    %v4697 = vadd.f32 0.0, %v4696
    %v4698 = vpop.f32.mrb[0].mxu0
    %v4699 = vadd.f32 0.0, %v4698
    %4700 = vdwg.mxu0
    %v4701 = vadd.f32 %v4494, %v4614
    %v4702 = vadd.f32 %v4495, %v4616
    %v4703 = vadd.f32 %v4496, %v4691
    %v4704 = vadd.f32 %v4497, %v4693
    %v4705 = vadd.f32 %v4498, %v4620
    %v4706 = vadd.f32 %v4499, %v4622
    %v4707 = vadd.f32 %v4500, %v4697
    %v4708 = vadd.f32 %v4501, %v4699
    %v4709 = vld [vmem:[%s2 + $0xd0] sm:$0xff]
    %v4710 = vld [vmem:[%s2 + $0xd8] sm:$0xff]
    %4711 = vrot.lane.b32.xlu0 %v2834, 85
    %v4712 = vpop.permute.xlu0 %4711
    %4713 = vrot.lane.b32.xlu0 %v2835, 85
    %v4714 = vpop.permute.xlu0 %4713
    %4715 = vrot.lane.b32.xlu0 %v2836, 85
    %v4716 = vpop.permute.xlu0 %4715
    %4717 = vrot.lane.b32.xlu0 %v2837, 85
    %v4718 = vpop.permute.xlu0 %4717
    %4719 = vrot.lane.b32.xlu0 %v2838, 85
    %v4720 = vpop.permute.xlu0 %4719
    %4721 = vrot.lane.b32.xlu0 %v2839, 85
    %v4722 = vpop.permute.xlu0 %4721
    %4723 = vrot.lane.b32.xlu0 %v2840, 85
    %v4724 = vpop.permute.xlu0 %4723
    %4725 = vrot.lane.b32.xlu0 %v2841, 85
    %v4726 = vpop.permute.xlu0 %4725
    %4727 = vrot.lane.b32.xlu0 %v2842, 85
    %v4728 = vpop.permute.xlu0 %4727
    %4729 = vrot.lane.b32.xlu0 %v2843, 85
    %v4730 = vpop.permute.xlu0 %4729
    %vm4731 = vcmask 695296
    %v4732 = vsel %vm4731, %v4712, %v4714
    %v4733 = vsel %vm4731, %v4714, %v4716
    %v4734 = vsel %vm4731, %v4716, %v4718
    %v4735 = vsel %vm4731, %v4718, %v4720
    %v4736 = vsel %vm4731, %v4722, %v4724
    %v4737 = vsel %vm4731, %v4724, %v4726
    %v4738 = vsel %vm4731, %v4726, %v4728
    %v4739 = vsel %vm4731, %v4728, %v4730
    %v4749 = vsel %vm2110, %v4709, 0
    %v4752 = vsel %vm2110, %v4710, 0
    %4754 = vmatprep.subr.mxu0 %v4733
    %4755 = vmatpush1.msra.mxu0 %v4732
    %4756 = vmatprep.subr.mxu0 %v4737
    %4757 = vmatpush1.msra.mxu0 %v4736
    %4758 = vmatprep.subr.mxu0 0.0
    %4759 = vmatpush1.msra.mxu0 0.0
    %4760 = vmatprep.subr.mxu0 0.0
    %4761 = vmatpush1.msra.mxu0 0.0
    %4762 = vmatprep.subr.mxu0 0.0
    %4763 = vmatpush1.msra.mxu0 0.0
    %4764 = vmatprep.subr.mxu0 0.0
    %4765 = vmatpush1.msra.mxu0 0.0
    %4766 = vmatprep.subr.mxu0 0.0
    %4767 = vmatpush1.msra.mxu0 0.0
    %4768 = vmatprep.subr.mxu0 0.0
    %4769 = vmatpush1.msra.mxu0 0.0
    %4770 = vmatprep.subr.mxu0 0.0
    %4771 = vmatpush1.msra.mxu0 0.0
    %4772 = vmatprep.subr.mxu0 0.0
    %4773 = vmatpush1.msra.mxu0 0.0
    %4774 = vmatprep.subr.mxu0 0.0
    %4775 = vmatpush1.msra.mxu0 0.0
    %4776 = vmatprep.subr.mxu0 0.0
    %4777 = vmatpush1.msra.mxu0 0.0
    %4778 = vmatprep.subr.mxu0 0.0
    %4779 = vmatpush1.msra.mxu0 0.0
    %4780 = vmatprep.subr.mxu0 0.0
    %4781 = vmatpush1.msra.mxu0 0.0
    %4782 = vmatprep.subr.mxu0 0.0
    %4783 = vmatpush1.msra.mxu0 0.0
    %4784 = vmatprep.subr.mxu0 0.0
    %4785 = vmatpush1.msra.mxu0 0.0
    %4786 = vmatprep.subr.mxu0 0.0
    %4787 = vmatpush1.msra.mxu0 0.0
    %4788 = vmatprep.subr.mxu0 0.0
    %4789 = vmatpush1.msra.mxu0 0.0
    %4790 = vmatprep.subr.mxu0 0.0
    %4791 = vmatpush1.msra.mxu0 0.0
    %4792 = vmatprep.subr.mxu0 0.0
    %4793 = vmatpush1.msra.mxu0 0.0
    %4794 = vmatprep.subr.mxu0 0.0
    %4795 = vmatpush1.msra.mxu0 0.0
    %4796 = vmatprep.subr.mxu0 0.0
    %4797 = vmatpush1.msra.mxu0 0.0
    %4798 = vmatprep.subr.mxu0 0.0
    %4799 = vmatpush1.msra.mxu0 0.0
    %4800 = vmatprep.subr.mxu0 0.0
    %4801 = vmatpush1.msra.mxu0 0.0
    %4802 = vmatprep.subr.mxu0 0.0
    %4803 = vmatpush1.msra.mxu0 0.0
    %4804 = vmatprep.subr.mxu0 0.0
    %4805 = vmatpush1.msra.mxu0 0.0
    %4806 = vmatprep.subr.mxu0 0.0
    %4807 = vmatpush1.msra.mxu0 0.0
    %4808 = vmatprep.subr.mxu0 0.0
    %4809 = vmatpush1.msra.mxu0 0.0
    %4810 = vmatprep.subr.mxu0 0.0
    %4811 = vmatpush1.msra.mxu0 0.0
    %4812 = vmatprep.subr.mxu0 0.0
    %4813 = vmatpush1.msra.mxu0 0.0
    %4814 = vmatprep.subr.mxu0 0.0
    %4815 = vmatpush1.msra.mxu0 0.0
    %4816 = vmatprep.subr.mxu0 0.0
    %4817 = vmatpush1.msra.mxu0 0.0
    %4818 = vmatprep.mubr.f32.mxu0 0.0
    %4819 = vmatmul.mubr.f32.gmra.mrb[0].mxu0 %v4749
    %v4820 = vpop.f32.mrb[0].mxu0
    %v4821 = vadd.f32 0.0, %v4820
    %v4822 = vpop.f32.mrb[0].mxu0
    %v4823 = vadd.f32 0.0, %v4822
    %4824 = vmatprep.mubr.f32.mxu0 0.0
    %4825 = vmatmul.mubr.f32.gmra.mrb[0].mxu0 %v4752
    %v4826 = vpop.f32.mrb[0].mxu0
    %v4827 = vadd.f32 0.0, %v4826
    %v4828 = vpop.f32.mrb[0].mxu0
    %v4829 = vadd.f32 0.0, %v4828
    %4830 = vdwg.mxu0
    %4831 = vmatprep.subr.mxu0 %v4735
    %4832 = vmatpush1.msra.mxu0 %v4734
    %4833 = vmatprep.subr.mxu0 %v4739
    %4834 = vmatpush1.msra.mxu0 %v4738
    %4835 = vmatprep.subr.mxu0 0.0
    %4836 = vmatpush1.msra.mxu0 0.0
    %4837 = vmatprep.subr.mxu0 0.0
    %4838 = vmatpush1.msra.mxu0 0.0
    %4839 = vmatprep.subr.mxu0 0.0
    %4840 = vmatpush1.msra.mxu0 0.0
    %4841 = vmatprep.subr.mxu0 0.0
    %4842 = vmatpush1.msra.mxu0 0.0
    %4843 = vmatprep.subr.mxu0 0.0
    %4844 = vmatpush1.msra.mxu0 0.0
    %4845 = vmatprep.subr.mxu0 0.0
    %4846 = vmatpush1.msra.mxu0 0.0
    %4847 = vmatprep.subr.mxu0 0.0
    %4848 = vmatpush1.msra.mxu0 0.0
    %4849 = vmatprep.subr.mxu0 0.0
    %4850 = vmatpush1.msra.mxu0 0.0
    %4851 = vmatprep.subr.mxu0 0.0
    %4852 = vmatpush1.msra.mxu0 0.0
    %4853 = vmatprep.subr.mxu0 0.0
    %4854 = vmatpush1.msra.mxu0 0.0
    %4855 = vmatprep.subr.mxu0 0.0
    %4856 = vmatpush1.msra.mxu0 0.0
    %4857 = vmatprep.subr.mxu0 0.0
    %4858 = vmatpush1.msra.mxu0 0.0
    %4859 = vmatprep.subr.mxu0 0.0
    %4860 = vmatpush1.msra.mxu0 0.0
    %4861 = vmatprep.subr.mxu0 0.0
    %4862 = vmatpush1.msra.mxu0 0.0
    %4863 = vmatprep.subr.mxu0 0.0
    %4864 = vmatpush1.msra.mxu0 0.0
    %4865 = vmatprep.subr.mxu0 0.0
    %4866 = vmatpush1.msra.mxu0 0.0
    %4867 = vmatprep.subr.mxu0 0.0
    %4868 = vmatpush1.msra.mxu0 0.0
    %4869 = vmatprep.subr.mxu0 0.0
    %4870 = vmatpush1.msra.mxu0 0.0
    %4871 = vmatprep.subr.mxu0 0.0
    %4872 = vmatpush1.msra.mxu0 0.0
    %4873 = vmatprep.subr.mxu0 0.0
    %4874 = vmatpush1.msra.mxu0 0.0
    %4875 = vmatprep.subr.mxu0 0.0
    %4876 = vmatpush1.msra.mxu0 0.0
    %4877 = vmatprep.subr.mxu0 0.0
    %4878 = vmatpush1.msra.mxu0 0.0
    %4879 = vmatprep.subr.mxu0 0.0
    %4880 = vmatpush1.msra.mxu0 0.0
    %4881 = vmatprep.subr.mxu0 0.0
    %4882 = vmatpush1.msra.mxu0 0.0
    %4883 = vmatprep.subr.mxu0 0.0
    %4884 = vmatpush1.msra.mxu0 0.0
    %4885 = vmatprep.subr.mxu0 0.0
    %4886 = vmatpush1.msra.mxu0 0.0
    %4887 = vmatprep.subr.mxu0 0.0
    %4888 = vmatpush1.msra.mxu0 0.0
    %4889 = vmatprep.subr.mxu0 0.0
    %4890 = vmatpush1.msra.mxu0 0.0
    %4891 = vmatprep.subr.mxu0 0.0
    %4892 = vmatpush1.msra.mxu0 0.0
    %4893 = vmatprep.subr.mxu0 0.0
    %4894 = vmatpush1.msra.mxu0 0.0
    %4895 = vmatprep.mubr.f32.mxu0 0.0
    %4896 = vmatmul.mubr.f32.gmra.mrb[0].mxu0 %v4749
    %v4897 = vpop.f32.mrb[0].mxu0
    %v4898 = vadd.f32 0.0, %v4897
    %v4899 = vpop.f32.mrb[0].mxu0
    %v4900 = vadd.f32 0.0, %v4899
    %4901 = vmatprep.mubr.f32.mxu0 0.0
    %4902 = vmatmul.mubr.f32.gmra.mrb[0].mxu0 %v4752
    %v4903 = vpop.f32.mrb[0].mxu0
    %v4904 = vadd.f32 0.0, %v4903
    %v4905 = vpop.f32.mrb[0].mxu0
    %v4906 = vadd.f32 0.0, %v4905
    %4907 = vdwg.mxu0
    %v4908 = vadd.f32 %v4701, %v4821
    %v4909 = vadd.f32 %v4702, %v4823
    %v4910 = vadd.f32 %v4703, %v4898
    %v4911 = vadd.f32 %v4704, %v4900
    %v4912 = vadd.f32 %v4705, %v4827
    %v4913 = vadd.f32 %v4706, %v4829
    %v4914 = vadd.f32 %v4707, %v4904
    %v4915 = vadd.f32 %v4708, %v4906
    %v4916 = vld [vmem:[%s2 + $0xe0] sm:$0xff]
    %v4917 = vld [vmem:[%s2 + $0xe8] sm:$0xff]
    %4918 = vrot.lane.b32.xlu0 %v2834, 84
    %v4919 = vpop.permute.xlu0 %4918
    %4920 = vrot.lane.b32.xlu0 %v2835, 84
    %v4921 = vpop.permute.xlu0 %4920
    %4922 = vrot.lane.b32.xlu0 %v2836, 84
    %v4923 = vpop.permute.xlu0 %4922
    %4924 = vrot.lane.b32.xlu0 %v2837, 84
    %v4925 = vpop.permute.xlu0 %4924
    %4926 = vrot.lane.b32.xlu0 %v2838, 84
    %v4927 = vpop.permute.xlu0 %4926
    %4928 = vrot.lane.b32.xlu0 %v2839, 84
    %v4929 = vpop.permute.xlu0 %4928
    %4930 = vrot.lane.b32.xlu0 %v2840, 84
    %v4931 = vpop.permute.xlu0 %4930
    %4932 = vrot.lane.b32.xlu0 %v2841, 84
    %v4933 = vpop.permute.xlu0 %4932
    %4934 = vrot.lane.b32.xlu0 %v2842, 84
    %v4935 = vpop.permute.xlu0 %4934
    %4936 = vrot.lane.b32.xlu0 %v2843, 84
    %v4937 = vpop.permute.xlu0 %4936
    %vm4938 = vcmask 687104
    %v4939 = vsel %vm4938, %v4919, %v4921
    %v4940 = vsel %vm4938, %v4921, %v4923
    %v4941 = vsel %vm4938, %v4923, %v4925
    %v4942 = vsel %vm4938, %v4925, %v4927
    %v4943 = vsel %vm4938, %v4929, %v4931
    %v4944 = vsel %vm4938, %v4931, %v4933
    %v4945 = vsel %vm4938, %v4933, %v4935
    %v4946 = vsel %vm4938, %v4935, %v4937
    %v4956 = vsel %vm2110, %v4916, 0
    %v4959 = vsel %vm2110, %v4917, 0
    %4961 = vmatprep.subr.mxu0 %v4940
    %4962 = vmatpush1.msra.mxu0 %v4939
    %4963 = vmatprep.subr.mxu0 %v4944
    %4964 = vmatpush1.msra.mxu0 %v4943
    %4965 = vmatprep.subr.mxu0 0.0
    %4966 = vmatpush1.msra.mxu0 0.0
    %4967 = vmatprep.subr.mxu0 0.0
    %4968 = vmatpush1.msra.mxu0 0.0
    %4969 = vmatprep.subr.mxu0 0.0
    %4970 = vmatpush1.msra.mxu0 0.0
    %4971 = vmatprep.subr.mxu0 0.0
    %4972 = vmatpush1.msra.mxu0 0.0
    %4973 = vmatprep.subr.mxu0 0.0
    %4974 = vmatpush1.msra.mxu0 0.0
    %4975 = vmatprep.subr.mxu0 0.0
    %4976 = vmatpush1.msra.mxu0 0.0
    %4977 = vmatprep.subr.mxu0 0.0
    %4978 = vmatpush1.msra.mxu0 0.0
    %4979 = vmatprep.subr.mxu0 0.0
    %4980 = vmatpush1.msra.mxu0 0.0
    %4981 = vmatprep.subr.mxu0 0.0
    %4982 = vmatpush1.msra.mxu0 0.0
    %4983 = vmatprep.subr.mxu0 0.0
    %4984 = vmatpush1.msra.mxu0 0.0
    %4985 = vmatprep.subr.mxu0 0.0
    %4986 = vmatpush1.msra.mxu0 0.0
    %4987 = vmatprep.subr.mxu0 0.0
    %4988 = vmatpush1.msra.mxu0 0.0
    %4989 = vmatprep.subr.mxu0 0.0
    %4990 = vmatpush1.msra.mxu0 0.0
    %4991 = vmatprep.subr.mxu0 0.0
    %4992 = vmatpush1.msra.mxu0 0.0
    %4993 = vmatprep.subr.mxu0 0.0
    %4994 = vmatpush1.msra.mxu0 0.0
    %4995 = vmatprep.subr.mxu0 0.0
    %4996 = vmatpush1.msra.mxu0 0.0
    %4997 = vmatprep.subr.mxu0 0.0
    %4998 = vmatpush1.msra.mxu0 0.0
    %4999 = vmatprep.subr.mxu0 0.0
    %5000 = vmatpush1.msra.mxu0 0.0
    %5001 = vmatprep.subr.mxu0 0.0
    %5002 = vmatpush1.msra.mxu0 0.0
    %5003 = vmatprep.subr.mxu0 0.0
    %5004 = vmatpush1.msra.mxu0 0.0
    %5005 = vmatprep.subr.mxu0 0.0
    %5006 = vmatpush1.msra.mxu0 0.0
    %5007 = vmatprep.subr.mxu0 0.0
    %5008 = vmatpush1.msra.mxu0 0.0
    %5009 = vmatprep.subr.mxu0 0.0
    %5010 = vmatpush1.msra.mxu0 0.0
    %5011 = vmatprep.subr.mxu0 0.0
    %5012 = vmatpush1.msra.mxu0 0.0
    %5013 = vmatprep.subr.mxu0 0.0
    %5014 = vmatpush1.msra.mxu0 0.0
    %5015 = vmatprep.subr.mxu0 0.0
    %5016 = vmatpush1.msra.mxu0 0.0
    %5017 = vmatprep.subr.mxu0 0.0
    %5018 = vmatpush1.msra.mxu0 0.0
    %5019 = vmatprep.subr.mxu0 0.0
    %5020 = vmatpush1.msra.mxu0 0.0
    %5021 = vmatprep.subr.mxu0 0.0
    %5022 = vmatpush1.msra.mxu0 0.0
    %5023 = vmatprep.subr.mxu0 0.0
    %5024 = vmatpush1.msra.mxu0 0.0
    %5025 = vmatprep.mubr.f32.mxu0 0.0
    %5026 = vmatmul.mubr.f32.gmra.mrb[0].mxu0 %v4956
    %v5027 = vpop.f32.mrb[0].mxu0
    %v5028 = vadd.f32 0.0, %v5027
    %v5029 = vpop.f32.mrb[0].mxu0
    %v5030 = vadd.f32 0.0, %v5029
    %5031 = vmatprep.mubr.f32.mxu0 0.0
    %5032 = vmatmul.mubr.f32.gmra.mrb[0].mxu0 %v4959
    %v5033 = vpop.f32.mrb[0].mxu0
    %v5034 = vadd.f32 0.0, %v5033
    %v5035 = vpop.f32.mrb[0].mxu0
    %v5036 = vadd.f32 0.0, %v5035
    %5037 = vdwg.mxu0
    %5038 = vmatprep.subr.mxu0 %v4942
    %5039 = vmatpush1.msra.mxu0 %v4941
    %5040 = vmatprep.subr.mxu0 %v4946
    %5041 = vmatpush1.msra.mxu0 %v4945
    %5042 = vmatprep.subr.mxu0 0.0
    %5043 = vmatpush1.msra.mxu0 0.0
    %5044 = vmatprep.subr.mxu0 0.0
    %5045 = vmatpush1.msra.mxu0 0.0
    %5046 = vmatprep.subr.mxu0 0.0
    %5047 = vmatpush1.msra.mxu0 0.0
    %5048 = vmatprep.subr.mxu0 0.0
    %5049 = vmatpush1.msra.mxu0 0.0
    %5050 = vmatprep.subr.mxu0 0.0
    %5051 = vmatpush1.msra.mxu0 0.0
    %5052 = vmatprep.subr.mxu0 0.0
    %5053 = vmatpush1.msra.mxu0 0.0
    %5054 = vmatprep.subr.mxu0 0.0
    %5055 = vmatpush1.msra.mxu0 0.0
    %5056 = vmatprep.subr.mxu0 0.0
    %5057 = vmatpush1.msra.mxu0 0.0
    %5058 = vmatprep.subr.mxu0 0.0
    %5059 = vmatpush1.msra.mxu0 0.0
    %5060 = vmatprep.subr.mxu0 0.0
    %5061 = vmatpush1.msra.mxu0 0.0
    %5062 = vmatprep.subr.mxu0 0.0
    %5063 = vmatpush1.msra.mxu0 0.0
    %5064 = vmatprep.subr.mxu0 0.0
    %5065 = vmatpush1.msra.mxu0 0.0
    %5066 = vmatprep.subr.mxu0 0.0
    %5067 = vmatpush1.msra.mxu0 0.0
    %5068 = vmatprep.subr.mxu0 0.0
    %5069 = vmatpush1.msra.mxu0 0.0
    %5070 = vmatprep.subr.mxu0 0.0
    %5071 = vmatpush1.msra.mxu0 0.0
    %5072 = vmatprep.subr.mxu0 0.0
    %5073 = vmatpush1.msra.mxu0 0.0
    %5074 = vmatprep.subr.mxu0 0.0
    %5075 = vmatpush1.msra.mxu0 0.0
    %5076 = vmatprep.subr.mxu0 0.0
    %5077 = vmatpush1.msra.mxu0 0.0
    %5078 = vmatprep.subr.mxu0 0.0
    %5079 = vmatpush1.msra.mxu0 0.0
    %5080 = vmatprep.subr.mxu0 0.0
    %5081 = vmatpush1.msra.mxu0 0.0
    %5082 = vmatprep.subr.mxu0 0.0
    %5083 = vmatpush1.msra.mxu0 0.0
    %5084 = vmatprep.subr.mxu0 0.0
    %5085 = vmatpush1.msra.mxu0 0.0
    %5086 = vmatprep.subr.mxu0 0.0
    %5087 = vmatpush1.msra.mxu0 0.0
    %5088 = vmatprep.subr.mxu0 0.0
    %5089 = vmatpush1.msra.mxu0 0.0
    %5090 = vmatprep.subr.mxu0 0.0
    %5091 = vmatpush1.msra.mxu0 0.0
    %5092 = vmatprep.subr.mxu0 0.0
    %5093 = vmatpush1.msra.mxu0 0.0
    %5094 = vmatprep.subr.mxu0 0.0
    %5095 = vmatpush1.msra.mxu0 0.0
    %5096 = vmatprep.subr.mxu0 0.0
    %5097 = vmatpush1.msra.mxu0 0.0
    %5098 = vmatprep.subr.mxu0 0.0
    %5099 = vmatpush1.msra.mxu0 0.0
    %5100 = vmatprep.subr.mxu0 0.0
    %5101 = vmatpush1.msra.mxu0 0.0
    %5102 = vmatprep.mubr.f32.mxu0 0.0
    %5103 = vmatmul.mubr.f32.gmra.mrb[0].mxu0 %v4956
    %v5104 = vpop.f32.mrb[0].mxu0
    %v5105 = vadd.f32 0.0, %v5104
    %v5106 = vpop.f32.mrb[0].mxu0
    %v5107 = vadd.f32 0.0, %v5106
    %5108 = vmatprep.mubr.f32.mxu0 0.0
    %5109 = vmatmul.mubr.f32.gmra.mrb[0].mxu0 %v4959
    %v5110 = vpop.f32.mrb[0].mxu0
    %v5111 = vadd.f32 0.0, %v5110
    %v5112 = vpop.f32.mrb[0].mxu0
    %v5113 = vadd.f32 0.0, %v5112
    %5114 = vdwg.mxu0
    %v5115 = vadd.f32 %v4908, %v5028
    %v5116 = vadd.f32 %v4909, %v5030
    %v5117 = vadd.f32 %v4910, %v5105
    %v5118 = vadd.f32 %v4911, %v5107
    %v5119 = vadd.f32 %v4912, %v5034
    %v5120 = vadd.f32 %v4913, %v5036
    %v5121 = vadd.f32 %v4914, %v5111
    %v5122 = vadd.f32 %v4915, %v5113
    %v5123 = vld [vmem:[%s2 + $0xf0] sm:$0xff]
    %v5124 = vld [vmem:[%s2 + $0xf8] sm:$0xff]
    %5125 = vrot.lane.b32.xlu0 %v2834, 83
    %v5126 = vpop.permute.xlu0 %5125
    %5127 = vrot.lane.b32.xlu0 %v2835, 83
    %v5128 = vpop.permute.xlu0 %5127
    %5129 = vrot.lane.b32.xlu0 %v2836, 83
    %v5130 = vpop.permute.xlu0 %5129
    %5131 = vrot.lane.b32.xlu0 %v2837, 83
    %v5132 = vpop.permute.xlu0 %5131
    %5133 = vrot.lane.b32.xlu0 %v2838, 83
    %v5134 = vpop.permute.xlu0 %5133
    %5135 = vrot.lane.b32.xlu0 %v2839, 83
    %v5136 = vpop.permute.xlu0 %5135
    %5137 = vrot.lane.b32.xlu0 %v2840, 83
    %v5138 = vpop.permute.xlu0 %5137
    %5139 = vrot.lane.b32.xlu0 %v2841, 83
    %v5140 = vpop.permute.xlu0 %5139
    %5141 = vrot.lane.b32.xlu0 %v2842, 83
    %v5142 = vpop.permute.xlu0 %5141
    %5143 = vrot.lane.b32.xlu0 %v2843, 83
    %v5144 = vpop.permute.xlu0 %5143
    %vm5145 = vcmask 678912
    %v5146 = vsel %vm5145, %v5126, %v5128
    %v5147 = vsel %vm5145, %v5128, %v5130
    %v5148 = vsel %vm5145, %v5130, %v5132
    %v5149 = vsel %vm5145, %v5132, %v5134
    %v5150 = vsel %vm5145, %v5136, %v5138
    %v5151 = vsel %vm5145, %v5138, %v5140
    %v5152 = vsel %vm5145, %v5140, %v5142
    %v5153 = vsel %vm5145, %v5142, %v5144
    %v5163 = vsel %vm2110, %v5123, 0
    %v5166 = vsel %vm2110, %v5124, 0
    %5168 = vmatprep.subr.mxu0 %v5147
    %5169 = vmatpush1.msra.mxu0 %v5146
    %5170 = vmatprep.subr.mxu0 %v5151
    %5171 = vmatpush1.msra.mxu0 %v5150
    %5172 = vmatprep.subr.mxu0 0.0
    %5173 = vmatpush1.msra.mxu0 0.0
    %5174 = vmatprep.subr.mxu0 0.0
    %5175 = vmatpush1.msra.mxu0 0.0
    %5176 = vmatprep.subr.mxu0 0.0
    %5177 = vmatpush1.msra.mxu0 0.0
    %5178 = vmatprep.subr.mxu0 0.0
    %5179 = vmatpush1.msra.mxu0 0.0
    %5180 = vmatprep.subr.mxu0 0.0
    %5181 = vmatpush1.msra.mxu0 0.0
    %5182 = vmatprep.subr.mxu0 0.0
    %5183 = vmatpush1.msra.mxu0 0.0
    %5184 = vmatprep.subr.mxu0 0.0
    %5185 = vmatpush1.msra.mxu0 0.0
    %5186 = vmatprep.subr.mxu0 0.0
    %5187 = vmatpush1.msra.mxu0 0.0
    %5188 = vmatprep.subr.mxu0 0.0
    %5189 = vmatpush1.msra.mxu0 0.0
    %5190 = vmatprep.subr.mxu0 0.0
    %5191 = vmatpush1.msra.mxu0 0.0
    %5192 = vmatprep.subr.mxu0 0.0
    %5193 = vmatpush1.msra.mxu0 0.0
    %5194 = vmatprep.subr.mxu0 0.0
    %5195 = vmatpush1.msra.mxu0 0.0
    %5196 = vmatprep.subr.mxu0 0.0
    %5197 = vmatpush1.msra.mxu0 0.0
    %5198 = vmatprep.subr.mxu0 0.0
    %5199 = vmatpush1.msra.mxu0 0.0
    %5200 = vmatprep.subr.mxu0 0.0
    %5201 = vmatpush1.msra.mxu0 0.0
    %5202 = vmatprep.subr.mxu0 0.0
    %5203 = vmatpush1.msra.mxu0 0.0
    %5204 = vmatprep.subr.mxu0 0.0
    %5205 = vmatpush1.msra.mxu0 0.0
    %5206 = vmatprep.subr.mxu0 0.0
    %5207 = vmatpush1.msra.mxu0 0.0
    %5208 = vmatprep.subr.mxu0 0.0
    %5209 = vmatpush1.msra.mxu0 0.0
    %5210 = vmatprep.subr.mxu0 0.0
    %5211 = vmatpush1.msra.mxu0 0.0
    %5212 = vmatprep.subr.mxu0 0.0
    %5213 = vmatpush1.msra.mxu0 0.0
    %5214 = vmatprep.subr.mxu0 0.0
    %5215 = vmatpush1.msra.mxu0 0.0
    %5216 = vmatprep.subr.mxu0 0.0
    %5217 = vmatpush1.msra.mxu0 0.0
    %5218 = vmatprep.subr.mxu0 0.0
    %5219 = vmatpush1.msra.mxu0 0.0
    %5220 = vmatprep.subr.mxu0 0.0
    %5221 = vmatpush1.msra.mxu0 0.0
    %5222 = vmatprep.subr.mxu0 0.0
    %5223 = vmatpush1.msra.mxu0 0.0
    %5224 = vmatprep.subr.mxu0 0.0
    %5225 = vmatpush1.msra.mxu0 0.0
    %5226 = vmatprep.subr.mxu0 0.0
    %5227 = vmatpush1.msra.mxu0 0.0
    %5228 = vmatprep.subr.mxu0 0.0
    %5229 = vmatpush1.msra.mxu0 0.0
    %5230 = vmatprep.subr.mxu0 0.0
    %5231 = vmatpush1.msra.mxu0 0.0
    %5232 = vmatprep.mubr.f32.mxu0 0.0
    %5233 = vmatmul.mubr.f32.gmra.mrb[0].mxu0 %v5163
    %v5234 = vpop.f32.mrb[0].mxu0
    %v5235 = vadd.f32 0.0, %v5234
    %v5236 = vpop.f32.mrb[0].mxu0
    %v5237 = vadd.f32 0.0, %v5236
    %5238 = vmatprep.mubr.f32.mxu0 0.0
    %5239 = vmatmul.mubr.f32.gmra.mrb[0].mxu0 %v5166
    %v5240 = vpop.f32.mrb[0].mxu0
    %v5241 = vadd.f32 0.0, %v5240
    %v5242 = vpop.f32.mrb[0].mxu0
    %v5243 = vadd.f32 0.0, %v5242
    %5244 = vdwg.mxu0
    %5245 = vmatprep.subr.mxu0 %v5149
    %5246 = vmatpush1.msra.mxu0 %v5148
    %5247 = vmatprep.subr.mxu0 %v5153
    %5248 = vmatpush1.msra.mxu0 %v5152
    %5249 = vmatprep.subr.mxu0 0.0
    %5250 = vmatpush1.msra.mxu0 0.0
    %5251 = vmatprep.subr.mxu0 0.0
    %5252 = vmatpush1.msra.mxu0 0.0
    %5253 = vmatprep.subr.mxu0 0.0
    %5254 = vmatpush1.msra.mxu0 0.0
    %5255 = vmatprep.subr.mxu0 0.0
    %5256 = vmatpush1.msra.mxu0 0.0
    %5257 = vmatprep.subr.mxu0 0.0
    %5258 = vmatpush1.msra.mxu0 0.0
    %5259 = vmatprep.subr.mxu0 0.0
    %5260 = vmatpush1.msra.mxu0 0.0
    %5261 = vmatprep.subr.mxu0 0.0
    %5262 = vmatpush1.msra.mxu0 0.0
    %5263 = vmatprep.subr.mxu0 0.0
    %5264 = vmatpush1.msra.mxu0 0.0
    %5265 = vmatprep.subr.mxu0 0.0
    %5266 = vmatpush1.msra.mxu0 0.0
    %5267 = vmatprep.subr.mxu0 0.0
    %5268 = vmatpush1.msra.mxu0 0.0
    %5269 = vmatprep.subr.mxu0 0.0
    %5270 = vmatpush1.msra.mxu0 0.0
    %5271 = vmatprep.subr.mxu0 0.0
    %5272 = vmatpush1.msra.mxu0 0.0
    %5273 = vmatprep.subr.mxu0 0.0
    %5274 = vmatpush1.msra.mxu0 0.0
    %5275 = vmatprep.subr.mxu0 0.0
    %5276 = vmatpush1.msra.mxu0 0.0
    %5277 = vmatprep.subr.mxu0 0.0
    %5278 = vmatpush1.msra.mxu0 0.0
    %5279 = vmatprep.subr.mxu0 0.0
    %5280 = vmatpush1.msra.mxu0 0.0
    %5281 = vmatprep.subr.mxu0 0.0
    %5282 = vmatpush1.msra.mxu0 0.0
    %5283 = vmatprep.subr.mxu0 0.0
    %5284 = vmatpush1.msra.mxu0 0.0
    %5285 = vmatprep.subr.mxu0 0.0
    %5286 = vmatpush1.msra.mxu0 0.0
    %5287 = vmatprep.subr.mxu0 0.0
    %5288 = vmatpush1.msra.mxu0 0.0
    %5289 = vmatprep.subr.mxu0 0.0
    %5290 = vmatpush1.msra.mxu0 0.0
    %5291 = vmatprep.subr.mxu0 0.0
    %5292 = vmatpush1.msra.mxu0 0.0
    %5293 = vmatprep.subr.mxu0 0.0
    %5294 = vmatpush1.msra.mxu0 0.0
    %5295 = vmatprep.subr.mxu0 0.0
    %5296 = vmatpush1.msra.mxu0 0.0
    %5297 = vmatprep.subr.mxu0 0.0
    %5298 = vmatpush1.msra.mxu0 0.0
    %5299 = vmatprep.subr.mxu0 0.0
    %5300 = vmatpush1.msra.mxu0 0.0
    %5301 = vmatprep.subr.mxu0 0.0
    %5302 = vmatpush1.msra.mxu0 0.0
    %5303 = vmatprep.subr.mxu0 0.0
    %5304 = vmatpush1.msra.mxu0 0.0
    %5305 = vmatprep.subr.mxu0 0.0
    %5306 = vmatpush1.msra.mxu0 0.0
    %5307 = vmatprep.subr.mxu0 0.0
    %5308 = vmatpush1.msra.mxu0 0.0
    %5309 = vmatprep.mubr.f32.mxu0 0.0
    %5310 = vmatmul.mubr.f32.gmra.mrb[0].mxu0 %v5163
    %v5311 = vpop.f32.mrb[0].mxu0
    %v5312 = vadd.f32 0.0, %v5311
    %v5313 = vpop.f32.mrb[0].mxu0
    %v5314 = vadd.f32 0.0, %v5313
    %5315 = vmatprep.mubr.f32.mxu0 0.0
    %5316 = vmatmul.mubr.f32.gmra.mrb[0].mxu0 %v5166
    %v5317 = vpop.f32.mrb[0].mxu0
    %v5318 = vadd.f32 0.0, %v5317
    %v5319 = vpop.f32.mrb[0].mxu0
    %v5320 = vadd.f32 0.0, %v5319
    %5321 = vdwg.mxu0
    %v5322 = vadd.f32 %v5115, %v5235
    %v5323 = vadd.f32 %v5116, %v5237
    %v5324 = vadd.f32 %v5117, %v5312
    %v5325 = vadd.f32 %v5118, %v5314
    %v5326 = vadd.f32 %v5119, %v5241
    %v5327 = vadd.f32 %v5120, %v5243
    %v5328 = vadd.f32 %v5121, %v5318
    %v5329 = vadd.f32 %v5122, %v5320
    %v5331 = vlaneseq
    %v5332 = vshrl.u32 %v5331, 7
    %v5333 = vsub.s32 0, %v5332
    %v5334 = vrot.slane %v67, %v5333
    %v5335 = vlaneseq
    %v5336 = vshrl.u32 %v5335, 7
    %v5337 = vsub.s32 1, %v5336
    %v5338 = vrot.slane %v67, %v5337
    %v5339 = vlaneseq
    %v5340 = vshrl.u32 %v5339, 7
    %v5341 = vsub.s32 2, %v5340
    %v5342 = vrot.slane %v67, %v5341
    %v5343 = vlaneseq
    %v5344 = vshrl.u32 %v5343, 7
    %v5345 = vsub.s32 3, %v5344
    %v5346 = vrot.slane %v67, %v5345
    %v5351 = vmul.f32 %v5322, %v5334
    %v5352 = vmul.f32 %v5323, %v5338
    %v5353 = vmul.f32 %v5324, %v5342
    %v5354 = vmul.f32 %v5325, %v5346
    %v5355 = vmul.f32 %v5326, %v5334
    %v5356 = vmul.f32 %v5327, %v5338
    %v5357 = vmul.f32 %v5328, %v5342
    %v5358 = vmul.f32 %v5329, %v5346
    %v5359 = vadd.f32 %v5351, %v5352
    %v5360 = vadd.f32 %v5359, %v5353
    %v5361 = vsel %vm1863, %v5354, 0.0
    %v5362 = vadd.f32 %v5360, %v5361
    %5363 = vadd.xlane.f32.xlu0 %v5362
    %v5364 = vpop.xlane.xlu0 %5363
    %v5365 = vadd.f32 %v5355, %v5356
    %v5366 = vadd.f32 %v5365, %v5357
    %v5367 = vsel %vm1863, %v5358, 0.0
    %v5368 = vadd.f32 %v5366, %v5367
    %5369 = vadd.xlane.f32.xlu0 %v5368
    %v5370 = vpop.xlane.xlu0 %5369
    %v5371 = vmul.f32 %v5364, 0.010416667
    %v5372 = vmul.f32 %v5370, 0.010416667
    %v5373 = vsub.f32 %v5322, %v5371
    %v5374 = vsub.f32 %v5323, %v5371
    %v5375 = vsub.f32 %v5324, %v5371
    %v5376 = vsub.f32 %v5325, %v5371
    %v5377 = vsub.f32 %v5326, %v5372
    %v5378 = vsub.f32 %v5327, %v5372
    %v5379 = vsub.f32 %v5328, %v5372
    %v5380 = vsub.f32 %v5329, %v5372
    %v5381 = vmul.f32 %v5373, %v5334
    %v5382 = vmul.f32 %v5374, %v5338
    %v5383 = vmul.f32 %v5375, %v5342
    %v5384 = vmul.f32 %v5376, %v5346
    %v5385 = vmul.f32 %v5377, %v5334
    %v5386 = vmul.f32 %v5378, %v5338
    %v5387 = vmul.f32 %v5379, %v5342
    %v5388 = vmul.f32 %v5380, %v5346
    %v5389 = vmul.f32 %v5381, %v5381
    %v5390 = vmul.f32 %v5382, %v5382
    %v5391 = vmul.f32 %v5383, %v5383
    %v5392 = vmul.f32 %v5384, %v5384
    %v5393 = vmul.f32 %v5385, %v5385
    %v5394 = vmul.f32 %v5386, %v5386
    %v5395 = vmul.f32 %v5387, %v5387
    %v5396 = vmul.f32 %v5388, %v5388
    %v5397 = vadd.f32 %v5389, %v5390
    %v5398 = vadd.f32 %v5397, %v5391
    %v5399 = vsel %vm1863, %v5392, 0.0
    %v5400 = vadd.f32 %v5398, %v5399
    %5401 = vadd.xlane.f32.xlu0 %v5400
    %v5402 = vpop.xlane.xlu0 %5401
    %v5403 = vadd.f32 %v5393, %v5394
    %v5404 = vadd.f32 %v5403, %v5395
    %v5405 = vsel %vm1863, %v5396, 0.0
    %v5406 = vadd.f32 %v5404, %v5405
    %5407 = vadd.xlane.f32.xlu0 %v5406
    %v5408 = vpop.xlane.xlu0 %5407
    %v5409 = vmul.f32 %v5402, 0.010416667
    %v5410 = vmul.f32 %v5408, 0.010416667
    %v5411 = vadd.f32 %v5409, 1e-05
    %v5412 = vadd.f32 %v5410, 1e-05
    %v5413 = vrsqrt.pop %v5411
    %v5414 = vrsqrt.pop %v5412
    %v5415 = vmul.f32 %v61, %v5413
    %v5416 = vmul.f32 %v62, %v5414
    %v5417 = vmul.f32 %v5371, %v5415
    %v5418 = vmul.f32 %v5372, %v5416
    %5421 = vrot.lane.b32.xlu0 %v5417, 1
    %v5422 = vpop.permute.xlu0 %5421
    %5423 = vrot.lane.b32.xlu0 %v5418, 1
    %v5424 = vpop.permute.xlu0 %5423
    %v5427 = vsub.f32 %v61, %v5422
    %v5428 = vsub.f32 %v62, %v5424
    %5430 = vset.pattern.permute.xlu0 2
    %5431 = vperm.xlu0 %5430, %v5415
    %v5432 = vpop.permute.xlu0 %5431
    %5435 = vset.pattern.permute.xlu0 2
    %5436 = vperm.xlu0 %5435, %v5416
    %v5437 = vpop.permute.xlu0 %5436
    %v5439 = vmul.f32 %v5322, %v5432
    %v5440 = vmul.f32 %v5323, %v5432
    %v5441 = vmul.f32 %v5324, %v5432
    %v5442 = vmul.f32 %v5325, %v5432
    %v5443 = vmul.f32 %v5326, %v5437
    %v5444 = vmul.f32 %v5327, %v5437
    %v5445 = vmul.f32 %v5328, %v5437
    %v5446 = vmul.f32 %v5329, %v5437
    %5448 = vset.pattern.permute.xlu0 3
    %5449 = vperm.xlu0 %5448, %v5427
    %v5450 = vpop.permute.xlu0 %5449
    %5453 = vset.pattern.permute.xlu0 3
    %5454 = vperm.xlu0 %5453, %v5428
    %v5455 = vpop.permute.xlu0 %5454
    %v5457 = vadd.f32 %v5439, %v5450
    %v5458 = vadd.f32 %v5440, %v5450
    %v5459 = vadd.f32 %v5441, %v5450
    %v5460 = vadd.f32 %v5442, %v5450
    %v5461 = vadd.f32 %v5443, %v5455
    %v5462 = vadd.f32 %v5444, %v5455
    %v5463 = vadd.f32 %v5445, %v5455
    %v5464 = vadd.f32 %v5446, %v5455
    %v5465 = vmax.f32 %v5457, 0.0
    %v5466 = vmax.f32 %v5458, 0.0
    %v5467 = vmax.f32 %v5459, 0.0
    %v5468 = vmax.f32 %v5460, 0.0
    %v5469 = vmax.f32 %v5461, 0.0
    %v5470 = vmax.f32 %v5462, 0.0
    %v5471 = vmax.f32 %v5463, 0.0
    %v5472 = vmax.f32 %v5464, 0.0
    %5473 = vst [vmem:[#allocation3] sm:$0xff] %v5465
    %5474 = vst [vmem:[#allocation3 + $0x8] sm:$0xff] %v5466
    %5475 = vst [vmem:[#allocation3 + $0x10] sm:$0xff] %v5467
    %5476 = vst.msk [vmem:[#allocation3 + $0x18] sm:$0xff] %vm1863, %v5468
    %5477 = vst [vmem:[#allocation3 + $0x28] sm:$0xff] %v5469
    %5478 = vst [vmem:[#allocation3 + $0x30] sm:$0xff] %v5470
    %5479 = vst [vmem:[#allocation3 + $0x38] sm:$0xff] %v5471
    %5480 = vst.msk [vmem:[#allocation3 + $0x40] sm:$0xff] %vm1863, %v5472
    %5481 = vst.msk [vmem:[#allocation3 + $0x18] sm:$0xff] %vm2054, 0.0
    %5482 = vst.msk [vmem:[#allocation3 + $0x20] sm:$0xff] %vm2056, 0.0
    %5483 = vst.msk [vmem:[#allocation3 + $0x40] sm:$0xff] %vm2054, 0.0
    %5484 = vst.msk [vmem:[#allocation3 + $0x48] sm:$0xff] %vm2056, 0.0
    %v5485 = vld [vmem:[#allocation7] sm:$0xff]
    %v5486 = vld [vmem:[#allocation7 + $0x8] sm:$0xff]
    %v5487 = vld [vmem:[#allocation3] sm:$0xff]
    %v5488 = vld [vmem:[#allocation3 + $0x8] sm:$0xff]
    %v5489 = vld [vmem:[#allocation3 + $0x10] sm:$0xff]
    %v5490 = vld [vmem:[#allocation3 + $0x18] sm:$0xff]
    %v5491 = vld [vmem:[#allocation3 + $0x28] sm:$0xff]
    %v5492 = vld [vmem:[#allocation3 + $0x30] sm:$0xff]
    %v5493 = vld [vmem:[#allocation3 + $0x38] sm:$0xff]
    %v5494 = vld [vmem:[#allocation3 + $0x40] sm:$0xff]
    %v5495 = vld [vmem:[#allocation7 + $0x10] sm:$0xff]
    %v5496 = vld [vmem:[#allocation7 + $0x18] sm:$0xff]
    %5505 = vrot.lane.b32.xlu0 %v5487, 126
    %v5506 = vpop.permute.xlu0 %5505
    %5507 = vrot.lane.b32.xlu0 %v5488, 126
    %v5508 = vpop.permute.xlu0 %5507
    %5509 = vrot.lane.b32.xlu0 %v5489, 126
    %v5510 = vpop.permute.xlu0 %5509
    %5511 = vrot.lane.b32.xlu0 %v5490, 126
    %v5512 = vpop.permute.xlu0 %5511
    %5513 = vrot.lane.b32.xlu0 %v5491, 126
    %v5514 = vpop.permute.xlu0 %5513
    %5515 = vrot.lane.b32.xlu0 %v5492, 126
    %v5516 = vpop.permute.xlu0 %5515
    %5517 = vrot.lane.b32.xlu0 %v5493, 126
    %v5518 = vpop.permute.xlu0 %5517
    %5519 = vrot.lane.b32.xlu0 %v5494, 126
    %v5520 = vpop.permute.xlu0 %5519
    %v5521 = vsel %vm446, %v5506, %v5508
    %v5522 = vsel %vm446, %v5508, %v5510
    %v5523 = vsel %vm446, %v5510, %v5512
    %v5524 = vsel %vm446, %v5514, %v5516
    %v5525 = vsel %vm446, %v5516, %v5518
    %v5526 = vsel %vm446, %v5518, %v5520
    %v5536 = vsel %vm2110, %v5495, 0
    %v5539 = vsel %vm2110, %v5496, 0
    %5541 = vmatprep.subr.mxu0 %v5522
    %5542 = vmatpush1.msra.mxu0 %v5521
    %5543 = vmatprep.subr.mxu0 %v5525
    %5544 = vmatpush1.msra.mxu0 %v5524
    %5545 = vmatprep.subr.mxu0 0.0
    %5546 = vmatpush1.msra.mxu0 0.0
    %5547 = vmatprep.subr.mxu0 0.0
    %5548 = vmatpush1.msra.mxu0 0.0
    %5549 = vmatprep.subr.mxu0 0.0
    %5550 = vmatpush1.msra.mxu0 0.0
    %5551 = vmatprep.subr.mxu0 0.0
    %5552 = vmatpush1.msra.mxu0 0.0
    %5553 = vmatprep.subr.mxu0 0.0
    %5554 = vmatpush1.msra.mxu0 0.0
    %5555 = vmatprep.subr.mxu0 0.0
    %5556 = vmatpush1.msra.mxu0 0.0
    %5557 = vmatprep.subr.mxu0 0.0
    %5558 = vmatpush1.msra.mxu0 0.0
    %5559 = vmatprep.subr.mxu0 0.0
    %5560 = vmatpush1.msra.mxu0 0.0
    %5561 = vmatprep.subr.mxu0 0.0
    %5562 = vmatpush1.msra.mxu0 0.0
    %5563 = vmatprep.subr.mxu0 0.0
    %5564 = vmatpush1.msra.mxu0 0.0
    %5565 = vmatprep.subr.mxu0 0.0
    %5566 = vmatpush1.msra.mxu0 0.0
    %5567 = vmatprep.subr.mxu0 0.0
    %5568 = vmatpush1.msra.mxu0 0.0
    %5569 = vmatprep.subr.mxu0 0.0
    %5570 = vmatpush1.msra.mxu0 0.0
    %5571 = vmatprep.subr.mxu0 0.0
    %5572 = vmatpush1.msra.mxu0 0.0
    %5573 = vmatprep.subr.mxu0 0.0
    %5574 = vmatpush1.msra.mxu0 0.0
    %5575 = vmatprep.subr.mxu0 0.0
    %5576 = vmatpush1.msra.mxu0 0.0
    %5577 = vmatprep.subr.mxu0 0.0
    %5578 = vmatpush1.msra.mxu0 0.0
    %5579 = vmatprep.subr.mxu0 0.0
    %5580 = vmatpush1.msra.mxu0 0.0
    %5581 = vmatprep.subr.mxu0 0.0
    %5582 = vmatpush1.msra.mxu0 0.0
    %5583 = vmatprep.subr.mxu0 0.0
    %5584 = vmatpush1.msra.mxu0 0.0
    %5585 = vmatprep.subr.mxu0 0.0
    %5586 = vmatpush1.msra.mxu0 0.0
    %5587 = vmatprep.subr.mxu0 0.0
    %5588 = vmatpush1.msra.mxu0 0.0
    %5589 = vmatprep.subr.mxu0 0.0
    %5590 = vmatpush1.msra.mxu0 0.0
    %5591 = vmatprep.subr.mxu0 0.0
    %5592 = vmatpush1.msra.mxu0 0.0
    %5593 = vmatprep.subr.mxu0 0.0
    %5594 = vmatpush1.msra.mxu0 0.0
    %5595 = vmatprep.subr.mxu0 0.0
    %5596 = vmatpush1.msra.mxu0 0.0
    %5597 = vmatprep.subr.mxu0 0.0
    %5598 = vmatpush1.msra.mxu0 0.0
    %5599 = vmatprep.subr.mxu0 0.0
    %5600 = vmatpush1.msra.mxu0 0.0
    %5601 = vmatprep.subr.mxu0 0.0
    %5602 = vmatpush1.msra.mxu0 0.0
    %5603 = vmatprep.subr.mxu0 0.0
    %5604 = vmatpush1.msra.mxu0 0.0
    %5605 = vmatprep.mubr.f32.mxu0 0.0
    %5606 = vmatmul.mubr.f32.gmra.mrb[0].mxu0 %v5536
    %v5607 = vpop.f32.mrb[0].mxu0
    %v5608 = vadd.f32 0.0, %v5607
    %v5609 = vpop.f32.mrb[0].mxu0
    %v5610 = vadd.f32 0.0, %v5609
    %5611 = vmatprep.mubr.f32.mxu0 0.0
    %5612 = vmatmul.mubr.f32.gmra.mrb[0].mxu0 %v5539
    %v5613 = vpop.f32.mrb[0].mxu0
    %v5614 = vadd.f32 0.0, %v5613
    %v5615 = vpop.f32.mrb[0].mxu0
    %v5616 = vadd.f32 0.0, %v5615
    %5617 = vdwg.mxu0
    %5618 = vmatprep.subr.mxu0 %v5512
    %5619 = vmatpush1.msra.mxu0 %v5523
    %5620 = vmatprep.subr.mxu0 %v5520
    %5621 = vmatpush1.msra.mxu0 %v5526
    %5622 = vmatprep.subr.mxu0 0.0
    %5623 = vmatpush1.msra.mxu0 0.0
    %5624 = vmatprep.subr.mxu0 0.0
    %5625 = vmatpush1.msra.mxu0 0.0
    %5626 = vmatprep.subr.mxu0 0.0
    %5627 = vmatpush1.msra.mxu0 0.0
    %5628 = vmatprep.subr.mxu0 0.0
    %5629 = vmatpush1.msra.mxu0 0.0
    %5630 = vmatprep.subr.mxu0 0.0
    %5631 = vmatpush1.msra.mxu0 0.0
    %5632 = vmatprep.subr.mxu0 0.0
    %5633 = vmatpush1.msra.mxu0 0.0
    %5634 = vmatprep.subr.mxu0 0.0
    %5635 = vmatpush1.msra.mxu0 0.0
    %5636 = vmatprep.subr.mxu0 0.0
    %5637 = vmatpush1.msra.mxu0 0.0
    %5638 = vmatprep.subr.mxu0 0.0
    %5639 = vmatpush1.msra.mxu0 0.0
    %5640 = vmatprep.subr.mxu0 0.0
    %5641 = vmatpush1.msra.mxu0 0.0
    %5642 = vmatprep.subr.mxu0 0.0
    %5643 = vmatpush1.msra.mxu0 0.0
    %5644 = vmatprep.subr.mxu0 0.0
    %5645 = vmatpush1.msra.mxu0 0.0
    %5646 = vmatprep.subr.mxu0 0.0
    %5647 = vmatpush1.msra.mxu0 0.0
    %5648 = vmatprep.subr.mxu0 0.0
    %5649 = vmatpush1.msra.mxu0 0.0
    %5650 = vmatprep.subr.mxu0 0.0
    %5651 = vmatpush1.msra.mxu0 0.0
    %5652 = vmatprep.subr.mxu0 0.0
    %5653 = vmatpush1.msra.mxu0 0.0
    %5654 = vmatprep.subr.mxu0 0.0
    %5655 = vmatpush1.msra.mxu0 0.0
    %5656 = vmatprep.subr.mxu0 0.0
    %5657 = vmatpush1.msra.mxu0 0.0
    %5658 = vmatprep.subr.mxu0 0.0
    %5659 = vmatpush1.msra.mxu0 0.0
    %5660 = vmatprep.subr.mxu0 0.0
    %5661 = vmatpush1.msra.mxu0 0.0
    %5662 = vmatprep.subr.mxu0 0.0
    %5663 = vmatpush1.msra.mxu0 0.0
    %5664 = vmatprep.subr.mxu0 0.0
    %5665 = vmatpush1.msra.mxu0 0.0
    %5666 = vmatprep.subr.mxu0 0.0
    %5667 = vmatpush1.msra.mxu0 0.0
    %5668 = vmatprep.subr.mxu0 0.0
    %5669 = vmatpush1.msra.mxu0 0.0
    %5670 = vmatprep.subr.mxu0 0.0
    %5671 = vmatpush1.msra.mxu0 0.0
    %5672 = vmatprep.subr.mxu0 0.0
    %5673 = vmatpush1.msra.mxu0 0.0
    %5674 = vmatprep.subr.mxu0 0.0
    %5675 = vmatpush1.msra.mxu0 0.0
    %5676 = vmatprep.subr.mxu0 0.0
    %5677 = vmatpush1.msra.mxu0 0.0
    %5678 = vmatprep.subr.mxu0 0.0
    %5679 = vmatpush1.msra.mxu0 0.0
    %5680 = vmatprep.subr.mxu0 0.0
    %5681 = vmatpush1.msra.mxu0 0.0
    %5682 = vmatprep.mubr.f32.mxu0 0.0
    %5683 = vmatmul.mubr.f32.gmra.mrb[0].mxu0 %v5536
    %v5684 = vpop.f32.mrb[0].mxu0
    %v5685 = vadd.f32 0.0, %v5684
    %v5686 = vpop.f32.mrb[0].mxu0
    %v5687 = vadd.f32 0.0, %v5686
    %5688 = vmatprep.mubr.f32.mxu0 0.0
    %5689 = vmatmul.mubr.f32.gmra.mrb[0].mxu0 %v5539
    %v5690 = vpop.f32.mrb[0].mxu0
    %v5691 = vadd.f32 0.0, %v5690
    %v5692 = vpop.f32.mrb[0].mxu0
    %v5693 = vadd.f32 0.0, %v5692
    %5694 = vdwg.mxu0
    %v5696 = vsel %vm2110, %v5485, 0
    %v5699 = vsel %vm2110, %v5486, 0
    %5701 = vmatprep.subr.mxu0 %v5488
    %5702 = vmatpush1.msra.mxu0 %v5487
    %5703 = vmatprep.subr.mxu0 %v5492
    %5704 = vmatpush1.msra.mxu0 %v5491
    %5705 = vmatprep.subr.mxu0 0.0
    %5706 = vmatpush1.msra.mxu0 0.0
    %5707 = vmatprep.subr.mxu0 0.0
    %5708 = vmatpush1.msra.mxu0 0.0
    %5709 = vmatprep.subr.mxu0 0.0
    %5710 = vmatpush1.msra.mxu0 0.0
    %5711 = vmatprep.subr.mxu0 0.0
    %5712 = vmatpush1.msra.mxu0 0.0
    %5713 = vmatprep.subr.mxu0 0.0
    %5714 = vmatpush1.msra.mxu0 0.0
    %5715 = vmatprep.subr.mxu0 0.0
    %5716 = vmatpush1.msra.mxu0 0.0
    %5717 = vmatprep.subr.mxu0 0.0
    %5718 = vmatpush1.msra.mxu0 0.0
    %5719 = vmatprep.subr.mxu0 0.0
    %5720 = vmatpush1.msra.mxu0 0.0
    %5721 = vmatprep.subr.mxu0 0.0
    %5722 = vmatpush1.msra.mxu0 0.0
    %5723 = vmatprep.subr.mxu0 0.0
    %5724 = vmatpush1.msra.mxu0 0.0
    %5725 = vmatprep.subr.mxu0 0.0
    %5726 = vmatpush1.msra.mxu0 0.0
    %5727 = vmatprep.subr.mxu0 0.0
    %5728 = vmatpush1.msra.mxu0 0.0
    %5729 = vmatprep.subr.mxu0 0.0
    %5730 = vmatpush1.msra.mxu0 0.0
    %5731 = vmatprep.subr.mxu0 0.0
    %5732 = vmatpush1.msra.mxu0 0.0
    %5733 = vmatprep.subr.mxu0 0.0
    %5734 = vmatpush1.msra.mxu0 0.0
    %5735 = vmatprep.subr.mxu0 0.0
    %5736 = vmatpush1.msra.mxu0 0.0
    %5737 = vmatprep.subr.mxu0 0.0
    %5738 = vmatpush1.msra.mxu0 0.0
    %5739 = vmatprep.subr.mxu0 0.0
    %5740 = vmatpush1.msra.mxu0 0.0
    %5741 = vmatprep.subr.mxu0 0.0
    %5742 = vmatpush1.msra.mxu0 0.0
    %5743 = vmatprep.subr.mxu0 0.0
    %5744 = vmatpush1.msra.mxu0 0.0
    %5745 = vmatprep.subr.mxu0 0.0
    %5746 = vmatpush1.msra.mxu0 0.0
    %5747 = vmatprep.subr.mxu0 0.0
    %5748 = vmatpush1.msra.mxu0 0.0
    %5749 = vmatprep.subr.mxu0 0.0
    %5750 = vmatpush1.msra.mxu0 0.0
    %5751 = vmatprep.subr.mxu0 0.0
    %5752 = vmatpush1.msra.mxu0 0.0
    %5753 = vmatprep.subr.mxu0 0.0
    %5754 = vmatpush1.msra.mxu0 0.0
    %5755 = vmatprep.subr.mxu0 0.0
    %5756 = vmatpush1.msra.mxu0 0.0
    %5757 = vmatprep.subr.mxu0 0.0
    %5758 = vmatpush1.msra.mxu0 0.0
    %5759 = vmatprep.subr.mxu0 0.0
    %5760 = vmatpush1.msra.mxu0 0.0
    %5761 = vmatprep.subr.mxu0 0.0
    %5762 = vmatpush1.msra.mxu0 0.0
    %5763 = vmatprep.subr.mxu0 0.0
    %5764 = vmatpush1.msra.mxu0 0.0
    %5765 = vmatprep.mubr.f32.mxu0 0.0
    %5766 = vmatmul.mubr.f32.gmra.mrb[0].mxu0 %v5696
    %v5767 = vpop.f32.mrb[0].mxu0
    %v5768 = vadd.f32 %v5608, %v5767
    %v5769 = vpop.f32.mrb[0].mxu0
    %v5770 = vadd.f32 %v5610, %v5769
    %5771 = vmatprep.mubr.f32.mxu0 0.0
    %5772 = vmatmul.mubr.f32.gmra.mrb[0].mxu0 %v5699
    %v5773 = vpop.f32.mrb[0].mxu0
    %v5774 = vadd.f32 %v5614, %v5773
    %v5775 = vpop.f32.mrb[0].mxu0
    %v5776 = vadd.f32 %v5616, %v5775
    %5777 = vdwg.mxu0
    %5778 = vmatprep.subr.mxu0 %v5490
    %5779 = vmatpush1.msra.mxu0 %v5489
    %5780 = vmatprep.subr.mxu0 %v5494
    %5781 = vmatpush1.msra.mxu0 %v5493
    %5782 = vmatprep.subr.mxu0 0.0
    %5783 = vmatpush1.msra.mxu0 0.0
    %5784 = vmatprep.subr.mxu0 0.0
    %5785 = vmatpush1.msra.mxu0 0.0
    %5786 = vmatprep.subr.mxu0 0.0
    %5787 = vmatpush1.msra.mxu0 0.0
    %5788 = vmatprep.subr.mxu0 0.0
    %5789 = vmatpush1.msra.mxu0 0.0
    %5790 = vmatprep.subr.mxu0 0.0
    %5791 = vmatpush1.msra.mxu0 0.0
    %5792 = vmatprep.subr.mxu0 0.0
    %5793 = vmatpush1.msra.mxu0 0.0
    %5794 = vmatprep.subr.mxu0 0.0
    %5795 = vmatpush1.msra.mxu0 0.0
    %5796 = vmatprep.subr.mxu0 0.0
    %5797 = vmatpush1.msra.mxu0 0.0
    %5798 = vmatprep.subr.mxu0 0.0
    %5799 = vmatpush1.msra.mxu0 0.0
    %5800 = vmatprep.subr.mxu0 0.0
    %5801 = vmatpush1.msra.mxu0 0.0
    %5802 = vmatprep.subr.mxu0 0.0
    %5803 = vmatpush1.msra.mxu0 0.0
    %5804 = vmatprep.subr.mxu0 0.0
    %5805 = vmatpush1.msra.mxu0 0.0
    %5806 = vmatprep.subr.mxu0 0.0
    %5807 = vmatpush1.msra.mxu0 0.0
    %5808 = vmatprep.subr.mxu0 0.0
    %5809 = vmatpush1.msra.mxu0 0.0
    %5810 = vmatprep.subr.mxu0 0.0
    %5811 = vmatpush1.msra.mxu0 0.0
    %5812 = vmatprep.subr.mxu0 0.0
    %5813 = vmatpush1.msra.mxu0 0.0
    %5814 = vmatprep.subr.mxu0 0.0
    %5815 = vmatpush1.msra.mxu0 0.0
    %5816 = vmatprep.subr.mxu0 0.0
    %5817 = vmatpush1.msra.mxu0 0.0
    %5818 = vmatprep.subr.mxu0 0.0
    %5819 = vmatpush1.msra.mxu0 0.0
    %5820 = vmatprep.subr.mxu0 0.0
    %5821 = vmatpush1.msra.mxu0 0.0
    %5822 = vmatprep.subr.mxu0 0.0
    %5823 = vmatpush1.msra.mxu0 0.0
    %5824 = vmatprep.subr.mxu0 0.0
    %5825 = vmatpush1.msra.mxu0 0.0
    %5826 = vmatprep.subr.mxu0 0.0
    %5827 = vmatpush1.msra.mxu0 0.0
    %5828 = vmatprep.subr.mxu0 0.0
    %5829 = vmatpush1.msra.mxu0 0.0
    %5830 = vmatprep.subr.mxu0 0.0
    %5831 = vmatpush1.msra.mxu0 0.0
    %5832 = vmatprep.subr.mxu0 0.0
    %5833 = vmatpush1.msra.mxu0 0.0
    %5834 = vmatprep.subr.mxu0 0.0
    %5835 = vmatpush1.msra.mxu0 0.0
    %5836 = vmatprep.subr.mxu0 0.0
    %5837 = vmatpush1.msra.mxu0 0.0
    %5838 = vmatprep.subr.mxu0 0.0
    %5839 = vmatpush1.msra.mxu0 0.0
    %5840 = vmatprep.subr.mxu0 0.0
    %5841 = vmatpush1.msra.mxu0 0.0
    %5842 = vmatprep.mubr.f32.mxu0 0.0
    %5843 = vmatmul.mubr.f32.gmra.mrb[0].mxu0 %v5696
    %v5844 = vpop.f32.mrb[0].mxu0
    %v5845 = vadd.f32 %v5685, %v5844
    %v5846 = vpop.f32.mrb[0].mxu0
    %v5847 = vadd.f32 %v5687, %v5846
    %5848 = vmatprep.mubr.f32.mxu0 0.0
    %5849 = vmatmul.mubr.f32.gmra.mrb[0].mxu0 %v5699
    %v5850 = vpop.f32.mrb[0].mxu0
    %v5851 = vadd.f32 %v5691, %v5850
    %v5852 = vpop.f32.mrb[0].mxu0
    %v5853 = vadd.f32 %v5693, %v5852
    %5854 = vdwg.mxu0
    %v5855 = vld [vmem:[#allocation7 + $0x20] sm:$0xff]
    %v5856 = vld [vmem:[#allocation7 + $0x28] sm:$0xff]
    %5857 = vrot.lane.b32.xlu0 %v5487, 124
    %v5858 = vpop.permute.xlu0 %5857
    %5859 = vrot.lane.b32.xlu0 %v5488, 124
    %v5860 = vpop.permute.xlu0 %5859
    %5861 = vrot.lane.b32.xlu0 %v5489, 124
    %v5862 = vpop.permute.xlu0 %5861
    %5863 = vrot.lane.b32.xlu0 %v5490, 124
    %v5864 = vpop.permute.xlu0 %5863
    %5865 = vrot.lane.b32.xlu0 %v5491, 124
    %v5866 = vpop.permute.xlu0 %5865
    %5867 = vrot.lane.b32.xlu0 %v5492, 124
    %v5868 = vpop.permute.xlu0 %5867
    %5869 = vrot.lane.b32.xlu0 %v5493, 124
    %v5870 = vpop.permute.xlu0 %5869
    %5871 = vrot.lane.b32.xlu0 %v5494, 124
    %v5872 = vpop.permute.xlu0 %5871
    %vm5873 = vcmask 1014784
    %v5874 = vsel %vm5873, %v5858, %v5860
    %v5875 = vsel %vm5873, %v5860, %v5862
    %v5876 = vsel %vm5873, %v5862, %v5864
    %v5877 = vsel %vm5873, %v5866, %v5868
    %v5878 = vsel %vm5873, %v5868, %v5870
    %v5879 = vsel %vm5873, %v5870, %v5872
    %v5889 = vsel %vm2110, %v5855, 0
    %v5892 = vsel %vm2110, %v5856, 0
    %5894 = vmatprep.subr.mxu0 %v5875
    %5895 = vmatpush1.msra.mxu0 %v5874
    %5896 = vmatprep.subr.mxu0 %v5878
    %5897 = vmatpush1.msra.mxu0 %v5877
    %5898 = vmatprep.subr.mxu0 0.0
    %5899 = vmatpush1.msra.mxu0 0.0
    %5900 = vmatprep.subr.mxu0 0.0
    %5901 = vmatpush1.msra.mxu0 0.0
    %5902 = vmatprep.subr.mxu0 0.0
    %5903 = vmatpush1.msra.mxu0 0.0
    %5904 = vmatprep.subr.mxu0 0.0
    %5905 = vmatpush1.msra.mxu0 0.0
    %5906 = vmatprep.subr.mxu0 0.0
    %5907 = vmatpush1.msra.mxu0 0.0
    %5908 = vmatprep.subr.mxu0 0.0
    %5909 = vmatpush1.msra.mxu0 0.0
    %5910 = vmatprep.subr.mxu0 0.0
    %5911 = vmatpush1.msra.mxu0 0.0
    %5912 = vmatprep.subr.mxu0 0.0
    %5913 = vmatpush1.msra.mxu0 0.0
    %5914 = vmatprep.subr.mxu0 0.0
    %5915 = vmatpush1.msra.mxu0 0.0
    %5916 = vmatprep.subr.mxu0 0.0
    %5917 = vmatpush1.msra.mxu0 0.0
    %5918 = vmatprep.subr.mxu0 0.0
    %5919 = vmatpush1.msra.mxu0 0.0
    %5920 = vmatprep.subr.mxu0 0.0
    %5921 = vmatpush1.msra.mxu0 0.0
    %5922 = vmatprep.subr.mxu0 0.0
    %5923 = vmatpush1.msra.mxu0 0.0
    %5924 = vmatprep.subr.mxu0 0.0
    %5925 = vmatpush1.msra.mxu0 0.0
    %5926 = vmatprep.subr.mxu0 0.0
    %5927 = vmatpush1.msra.mxu0 0.0
    %5928 = vmatprep.subr.mxu0 0.0
    %5929 = vmatpush1.msra.mxu0 0.0
    %5930 = vmatprep.subr.mxu0 0.0
    %5931 = vmatpush1.msra.mxu0 0.0
    %5932 = vmatprep.subr.mxu0 0.0
    %5933 = vmatpush1.msra.mxu0 0.0
    %5934 = vmatprep.subr.mxu0 0.0
    %5935 = vmatpush1.msra.mxu0 0.0
    %5936 = vmatprep.subr.mxu0 0.0
    %5937 = vmatpush1.msra.mxu0 0.0
    %5938 = vmatprep.subr.mxu0 0.0
    %5939 = vmatpush1.msra.mxu0 0.0
    %5940 = vmatprep.subr.mxu0 0.0
    %5941 = vmatpush1.msra.mxu0 0.0
    %5942 = vmatprep.subr.mxu0 0.0
    %5943 = vmatpush1.msra.mxu0 0.0
    %5944 = vmatprep.subr.mxu0 0.0
    %5945 = vmatpush1.msra.mxu0 0.0
    %5946 = vmatprep.subr.mxu0 0.0
    %5947 = vmatpush1.msra.mxu0 0.0
    %5948 = vmatprep.subr.mxu0 0.0
    %5949 = vmatpush1.msra.mxu0 0.0
    %5950 = vmatprep.subr.mxu0 0.0
    %5951 = vmatpush1.msra.mxu0 0.0
    %5952 = vmatprep.subr.mxu0 0.0
    %5953 = vmatpush1.msra.mxu0 0.0
    %5954 = vmatprep.subr.mxu0 0.0
    %5955 = vmatpush1.msra.mxu0 0.0
    %5956 = vmatprep.subr.mxu0 0.0
    %5957 = vmatpush1.msra.mxu0 0.0
    %5958 = vmatprep.mubr.f32.mxu0 0.0
    %5959 = vmatmul.mubr.f32.gmra.mrb[0].mxu0 %v5889
    %v5960 = vpop.f32.mrb[0].mxu0
    %v5961 = vadd.f32 0.0, %v5960
    %v5962 = vpop.f32.mrb[0].mxu0
    %v5963 = vadd.f32 0.0, %v5962
    %5964 = vmatprep.mubr.f32.mxu0 0.0
    %5965 = vmatmul.mubr.f32.gmra.mrb[0].mxu0 %v5892
    %v5966 = vpop.f32.mrb[0].mxu0
    %v5967 = vadd.f32 0.0, %v5966
    %v5968 = vpop.f32.mrb[0].mxu0
    %v5969 = vadd.f32 0.0, %v5968
    %5970 = vdwg.mxu0
    %5971 = vmatprep.subr.mxu0 %v5864
    %5972 = vmatpush1.msra.mxu0 %v5876
    %5973 = vmatprep.subr.mxu0 %v5872
    %5974 = vmatpush1.msra.mxu0 %v5879
    %5975 = vmatprep.subr.mxu0 0.0
    %5976 = vmatpush1.msra.mxu0 0.0
    %5977 = vmatprep.subr.mxu0 0.0
    %5978 = vmatpush1.msra.mxu0 0.0
    %5979 = vmatprep.subr.mxu0 0.0
    %5980 = vmatpush1.msra.mxu0 0.0
    %5981 = vmatprep.subr.mxu0 0.0
    %5982 = vmatpush1.msra.mxu0 0.0
    %5983 = vmatprep.subr.mxu0 0.0
    %5984 = vmatpush1.msra.mxu0 0.0
    %5985 = vmatprep.subr.mxu0 0.0
    %5986 = vmatpush1.msra.mxu0 0.0
    %5987 = vmatprep.subr.mxu0 0.0
    %5988 = vmatpush1.msra.mxu0 0.0
    %5989 = vmatprep.subr.mxu0 0.0
    %5990 = vmatpush1.msra.mxu0 0.0
    %5991 = vmatprep.subr.mxu0 0.0
    %5992 = vmatpush1.msra.mxu0 0.0
    %5993 = vmatprep.subr.mxu0 0.0
    %5994 = vmatpush1.msra.mxu0 0.0
    %5995 = vmatprep.subr.mxu0 0.0
    %5996 = vmatpush1.msra.mxu0 0.0
    %5997 = vmatprep.subr.mxu0 0.0
    %5998 = vmatpush1.msra.mxu0 0.0
    %5999 = vmatprep.subr.mxu0 0.0
    %6000 = vmatpush1.msra.mxu0 0.0
    %6001 = vmatprep.subr.mxu0 0.0
    %6002 = vmatpush1.msra.mxu0 0.0
    %6003 = vmatprep.subr.mxu0 0.0
    %6004 = vmatpush1.msra.mxu0 0.0
    %6005 = vmatprep.subr.mxu0 0.0
    %6006 = vmatpush1.msra.mxu0 0.0
    %6007 = vmatprep.subr.mxu0 0.0
    %6008 = vmatpush1.msra.mxu0 0.0
    %6009 = vmatprep.subr.mxu0 0.0
    %6010 = vmatpush1.msra.mxu0 0.0
    %6011 = vmatprep.subr.mxu0 0.0
    %6012 = vmatpush1.msra.mxu0 0.0
    %6013 = vmatprep.subr.mxu0 0.0
    %6014 = vmatpush1.msra.mxu0 0.0
    %6015 = vmatprep.subr.mxu0 0.0
    %6016 = vmatpush1.msra.mxu0 0.0
    %6017 = vmatprep.subr.mxu0 0.0
    %6018 = vmatpush1.msra.mxu0 0.0
    %6019 = vmatprep.subr.mxu0 0.0
    %6020 = vmatpush1.msra.mxu0 0.0
    %6021 = vmatprep.subr.mxu0 0.0
    %6022 = vmatpush1.msra.mxu0 0.0
    %6023 = vmatprep.subr.mxu0 0.0
    %6024 = vmatpush1.msra.mxu0 0.0
    %6025 = vmatprep.subr.mxu0 0.0
    %6026 = vmatpush1.msra.mxu0 0.0
    %6027 = vmatprep.subr.mxu0 0.0
    %6028 = vmatpush1.msra.mxu0 0.0
    %6029 = vmatprep.subr.mxu0 0.0
    %6030 = vmatpush1.msra.mxu0 0.0
    %6031 = vmatprep.subr.mxu0 0.0
    %6032 = vmatpush1.msra.mxu0 0.0
    %6033 = vmatprep.subr.mxu0 0.0
    %6034 = vmatpush1.msra.mxu0 0.0
    %6035 = vmatprep.mubr.f32.mxu0 0.0
    %6036 = vmatmul.mubr.f32.gmra.mrb[0].mxu0 %v5889
    %v6037 = vpop.f32.mrb[0].mxu0
    %v6038 = vadd.f32 0.0, %v6037
    %v6039 = vpop.f32.mrb[0].mxu0
    %v6040 = vadd.f32 0.0, %v6039
    %6041 = vmatprep.mubr.f32.mxu0 0.0
    %6042 = vmatmul.mubr.f32.gmra.mrb[0].mxu0 %v5892
    %v6043 = vpop.f32.mrb[0].mxu0
    %v6044 = vadd.f32 0.0, %v6043
    %v6045 = vpop.f32.mrb[0].mxu0
    %v6046 = vadd.f32 0.0, %v6045
    %6047 = vdwg.mxu0
    %v6048 = vadd.f32 %v5768, %v5961
    %v6049 = vadd.f32 %v5770, %v5963
    %v6050 = vadd.f32 %v5845, %v6038
    %v6051 = vadd.f32 %v5847, %v6040
    %v6052 = vadd.f32 %v5774, %v5967
    %v6053 = vadd.f32 %v5776, %v5969
    %v6054 = vadd.f32 %v5851, %v6044
    %v6055 = vadd.f32 %v5853, %v6046
    %v6056 = vld [vmem:[#allocation7 + $0x30] sm:$0xff]
    %v6057 = vld [vmem:[#allocation7 + $0x38] sm:$0xff]
    %v6058 = vld [vmem:[#allocation3] sm:$0xff]
    %v6059 = vld [vmem:[#allocation3 + $0x8] sm:$0xff]
    %v6060 = vld [vmem:[#allocation3 + $0x10] sm:$0xff]
    %v6061 = vld [vmem:[#allocation3 + $0x18] sm:$0xff]
    %v6062 = vld [vmem:[#allocation3 + $0x20] sm:$0xff]
    %v6063 = vld [vmem:[#allocation3 + $0x28] sm:$0xff]
    %v6064 = vld [vmem:[#allocation3 + $0x30] sm:$0xff]
    %v6065 = vld [vmem:[#allocation3 + $0x38] sm:$0xff]
    %v6066 = vld [vmem:[#allocation3 + $0x40] sm:$0xff]
    %v6067 = vld [vmem:[#allocation3 + $0x48] sm:$0xff]
    %6078 = vrot.lane.b32.xlu0 %v6058, 100
    %v6079 = vpop.permute.xlu0 %6078
    %6080 = vrot.lane.b32.xlu0 %v6059, 100
    %v6081 = vpop.permute.xlu0 %6080
    %6082 = vrot.lane.b32.xlu0 %v6060, 100
    %v6083 = vpop.permute.xlu0 %6082
    %6084 = vrot.lane.b32.xlu0 %v6061, 100
    %v6085 = vpop.permute.xlu0 %6084
    %6086 = vrot.lane.b32.xlu0 %v6062, 100
    %v6087 = vpop.permute.xlu0 %6086
    %6088 = vrot.lane.b32.xlu0 %v6063, 100
    %v6089 = vpop.permute.xlu0 %6088
    %6090 = vrot.lane.b32.xlu0 %v6064, 100
    %v6091 = vpop.permute.xlu0 %6090
    %6092 = vrot.lane.b32.xlu0 %v6065, 100
    %v6093 = vpop.permute.xlu0 %6092
    %6094 = vrot.lane.b32.xlu0 %v6066, 100
    %v6095 = vpop.permute.xlu0 %6094
    %6096 = vrot.lane.b32.xlu0 %v6067, 100
    %v6097 = vpop.permute.xlu0 %6096
    %v6098 = vsel %vm1249, %v6079, %v6081
    %v6099 = vsel %vm1249, %v6081, %v6083
    %v6100 = vsel %vm1249, %v6083, %v6085
    %v6101 = vsel %vm1249, %v6085, %v6087
    %v6102 = vsel %vm1249, %v6089, %v6091
    %v6103 = vsel %vm1249, %v6091, %v6093
    %v6104 = vsel %vm1249, %v6093, %v6095
    %v6105 = vsel %vm1249, %v6095, %v6097
    %v6115 = vsel %vm2110, %v6056, 0
    %v6118 = vsel %vm2110, %v6057, 0
    %6120 = vmatprep.subr.mxu0 %v6099
    %6121 = vmatpush1.msra.mxu0 %v6098
    %6122 = vmatprep.subr.mxu0 %v6103
    %6123 = vmatpush1.msra.mxu0 %v6102
    %6124 = vmatprep.subr.mxu0 0.0
    %6125 = vmatpush1.msra.mxu0 0.0
    %6126 = vmatprep.subr.mxu0 0.0
    %6127 = vmatpush1.msra.mxu0 0.0
    %6128 = vmatprep.subr.mxu0 0.0
    %6129 = vmatpush1.msra.mxu0 0.0
    %6130 = vmatprep.subr.mxu0 0.0
    %6131 = vmatpush1.msra.mxu0 0.0
    %6132 = vmatprep.subr.mxu0 0.0
    %6133 = vmatpush1.msra.mxu0 0.0
    %6134 = vmatprep.subr.mxu0 0.0
    %6135 = vmatpush1.msra.mxu0 0.0
    %6136 = vmatprep.subr.mxu0 0.0
    %6137 = vmatpush1.msra.mxu0 0.0
    %6138 = vmatprep.subr.mxu0 0.0
    %6139 = vmatpush1.msra.mxu0 0.0
    %6140 = vmatprep.subr.mxu0 0.0
    %6141 = vmatpush1.msra.mxu0 0.0
    %6142 = vmatprep.subr.mxu0 0.0
    %6143 = vmatpush1.msra.mxu0 0.0
    %6144 = vmatprep.subr.mxu0 0.0
    %6145 = vmatpush1.msra.mxu0 0.0
    %6146 = vmatprep.subr.mxu0 0.0
    %6147 = vmatpush1.msra.mxu0 0.0
    %6148 = vmatprep.subr.mxu0 0.0
    %6149 = vmatpush1.msra.mxu0 0.0
    %6150 = vmatprep.subr.mxu0 0.0
    %6151 = vmatpush1.msra.mxu0 0.0
    %6152 = vmatprep.subr.mxu0 0.0
    %6153 = vmatpush1.msra.mxu0 0.0
    %6154 = vmatprep.subr.mxu0 0.0
    %6155 = vmatpush1.msra.mxu0 0.0
    %6156 = vmatprep.subr.mxu0 0.0
    %6157 = vmatpush1.msra.mxu0 0.0
    %6158 = vmatprep.subr.mxu0 0.0
    %6159 = vmatpush1.msra.mxu0 0.0
    %6160 = vmatprep.subr.mxu0 0.0
    %6161 = vmatpush1.msra.mxu0 0.0
    %6162 = vmatprep.subr.mxu0 0.0
    %6163 = vmatpush1.msra.mxu0 0.0
    %6164 = vmatprep.subr.mxu0 0.0
    %6165 = vmatpush1.msra.mxu0 0.0
    %6166 = vmatprep.subr.mxu0 0.0
    %6167 = vmatpush1.msra.mxu0 0.0
    %6168 = vmatprep.subr.mxu0 0.0
    %6169 = vmatpush1.msra.mxu0 0.0
    %6170 = vmatprep.subr.mxu0 0.0
    %6171 = vmatpush1.msra.mxu0 0.0
    %6172 = vmatprep.subr.mxu0 0.0
    %6173 = vmatpush1.msra.mxu0 0.0
    %6174 = vmatprep.subr.mxu0 0.0
    %6175 = vmatpush1.msra.mxu0 0.0
    %6176 = vmatprep.subr.mxu0 0.0
    %6177 = vmatpush1.msra.mxu0 0.0
    %6178 = vmatprep.subr.mxu0 0.0
    %6179 = vmatpush1.msra.mxu0 0.0
    %6180 = vmatprep.subr.mxu0 0.0
    %6181 = vmatpush1.msra.mxu0 0.0
    %6182 = vmatprep.subr.mxu0 0.0
    %6183 = vmatpush1.msra.mxu0 0.0
    %6184 = vmatprep.mubr.f32.mxu0 0.0
    %6185 = vmatmul.mubr.f32.gmra.mrb[0].mxu0 %v6115
    %v6186 = vpop.f32.mrb[0].mxu0
    %v6187 = vadd.f32 0.0, %v6186
    %v6188 = vpop.f32.mrb[0].mxu0
    %v6189 = vadd.f32 0.0, %v6188
    %6190 = vmatprep.mubr.f32.mxu0 0.0
    %6191 = vmatmul.mubr.f32.gmra.mrb[0].mxu0 %v6118
    %v6192 = vpop.f32.mrb[0].mxu0
    %v6193 = vadd.f32 0.0, %v6192
    %v6194 = vpop.f32.mrb[0].mxu0
    %v6195 = vadd.f32 0.0, %v6194
    %6196 = vdwg.mxu0
    %6197 = vmatprep.subr.mxu0 %v6101
    %6198 = vmatpush1.msra.mxu0 %v6100
    %6199 = vmatprep.subr.mxu0 %v6105
    %6200 = vmatpush1.msra.mxu0 %v6104
    %6201 = vmatprep.subr.mxu0 0.0
    %6202 = vmatpush1.msra.mxu0 0.0
    %6203 = vmatprep.subr.mxu0 0.0
    %6204 = vmatpush1.msra.mxu0 0.0
    %6205 = vmatprep.subr.mxu0 0.0
    %6206 = vmatpush1.msra.mxu0 0.0
    %6207 = vmatprep.subr.mxu0 0.0
    %6208 = vmatpush1.msra.mxu0 0.0
    %6209 = vmatprep.subr.mxu0 0.0
    %6210 = vmatpush1.msra.mxu0 0.0
    %6211 = vmatprep.subr.mxu0 0.0
    %6212 = vmatpush1.msra.mxu0 0.0
    %6213 = vmatprep.subr.mxu0 0.0
    %6214 = vmatpush1.msra.mxu0 0.0
    %6215 = vmatprep.subr.mxu0 0.0
    %6216 = vmatpush1.msra.mxu0 0.0
    %6217 = vmatprep.subr.mxu0 0.0
    %6218 = vmatpush1.msra.mxu0 0.0
    %6219 = vmatprep.subr.mxu0 0.0
    %6220 = vmatpush1.msra.mxu0 0.0
    %6221 = vmatprep.subr.mxu0 0.0
    %6222 = vmatpush1.msra.mxu0 0.0
    %6223 = vmatprep.subr.mxu0 0.0
    %6224 = vmatpush1.msra.mxu0 0.0
    %6225 = vmatprep.subr.mxu0 0.0
    %6226 = vmatpush1.msra.mxu0 0.0
    %6227 = vmatprep.subr.mxu0 0.0
    %6228 = vmatpush1.msra.mxu0 0.0
    %6229 = vmatprep.subr.mxu0 0.0
    %6230 = vmatpush1.msra.mxu0 0.0
    %6231 = vmatprep.subr.mxu0 0.0
    %6232 = vmatpush1.msra.mxu0 0.0
    %6233 = vmatprep.subr.mxu0 0.0
    %6234 = vmatpush1.msra.mxu0 0.0
    %6235 = vmatprep.subr.mxu0 0.0
    %6236 = vmatpush1.msra.mxu0 0.0
    %6237 = vmatprep.subr.mxu0 0.0
    %6238 = vmatpush1.msra.mxu0 0.0
    %6239 = vmatprep.subr.mxu0 0.0
    %6240 = vmatpush1.msra.mxu0 0.0
    %6241 = vmatprep.subr.mxu0 0.0
    %6242 = vmatpush1.msra.mxu0 0.0
    %6243 = vmatprep.subr.mxu0 0.0
    %6244 = vmatpush1.msra.mxu0 0.0
    %6245 = vmatprep.subr.mxu0 0.0
    %6246 = vmatpush1.msra.mxu0 0.0
    %6247 = vmatprep.subr.mxu0 0.0
    %6248 = vmatpush1.msra.mxu0 0.0
    %6249 = vmatprep.subr.mxu0 0.0
    %6250 = vmatpush1.msra.mxu0 0.0
    %6251 = vmatprep.subr.mxu0 0.0
    %6252 = vmatpush1.msra.mxu0 0.0
    %6253 = vmatprep.subr.mxu0 0.0
    %6254 = vmatpush1.msra.mxu0 0.0
    %6255 = vmatprep.subr.mxu0 0.0
    %6256 = vmatpush1.msra.mxu0 0.0
    %6257 = vmatprep.subr.mxu0 0.0
    %6258 = vmatpush1.msra.mxu0 0.0
    %6259 = vmatprep.subr.mxu0 0.0
    %6260 = vmatpush1.msra.mxu0 0.0
    %6261 = vmatprep.mubr.f32.mxu0 0.0
    %6262 = vmatmul.mubr.f32.gmra.mrb[0].mxu0 %v6115
    %v6263 = vpop.f32.mrb[0].mxu0
    %v6264 = vadd.f32 0.0, %v6263
    %v6265 = vpop.f32.mrb[0].mxu0
    %v6266 = vadd.f32 0.0, %v6265
    %6267 = vmatprep.mubr.f32.mxu0 0.0
    %6268 = vmatmul.mubr.f32.gmra.mrb[0].mxu0 %v6118
    %v6269 = vpop.f32.mrb[0].mxu0
    %v6270 = vadd.f32 0.0, %v6269
    %v6271 = vpop.f32.mrb[0].mxu0
    %v6272 = vadd.f32 0.0, %v6271
    %6273 = vdwg.mxu0
    %v6274 = vadd.f32 %v6048, %v6187
    %v6275 = vadd.f32 %v6049, %v6189
    %v6276 = vadd.f32 %v6050, %v6264
    %v6277 = vadd.f32 %v6051, %v6266
    %v6278 = vadd.f32 %v6052, %v6193
    %v6279 = vadd.f32 %v6053, %v6195
    %v6280 = vadd.f32 %v6054, %v6270
    %v6281 = vadd.f32 %v6055, %v6272
    %v6282 = vld [vmem:[#allocation7 + $0x40] sm:$0xff]
    %v6283 = vld [vmem:[#allocation7 + $0x48] sm:$0xff]
    %6284 = vrot.lane.b32.xlu0 %v6058, 98
    %v6285 = vpop.permute.xlu0 %6284
    %6286 = vrot.lane.b32.xlu0 %v6059, 98
    %v6287 = vpop.permute.xlu0 %6286
    %6288 = vrot.lane.b32.xlu0 %v6060, 98
    %v6289 = vpop.permute.xlu0 %6288
    %6290 = vrot.lane.b32.xlu0 %v6061, 98
    %v6291 = vpop.permute.xlu0 %6290
    %6292 = vrot.lane.b32.xlu0 %v6062, 98
    %v6293 = vpop.permute.xlu0 %6292
    %6294 = vrot.lane.b32.xlu0 %v6063, 98
    %v6295 = vpop.permute.xlu0 %6294
    %6296 = vrot.lane.b32.xlu0 %v6064, 98
    %v6297 = vpop.permute.xlu0 %6296
    %6298 = vrot.lane.b32.xlu0 %v6065, 98
    %v6299 = vpop.permute.xlu0 %6298
    %6300 = vrot.lane.b32.xlu0 %v6066, 98
    %v6301 = vpop.permute.xlu0 %6300
    %6302 = vrot.lane.b32.xlu0 %v6067, 98
    %v6303 = vpop.permute.xlu0 %6302
    %v6304 = vsel %vm1651, %v6285, %v6287
    %v6305 = vsel %vm1651, %v6287, %v6289
    %v6306 = vsel %vm1651, %v6289, %v6291
    %v6307 = vsel %vm1651, %v6291, %v6293
    %v6308 = vsel %vm1651, %v6295, %v6297
    %v6309 = vsel %vm1651, %v6297, %v6299
    %v6310 = vsel %vm1651, %v6299, %v6301
    %v6311 = vsel %vm1651, %v6301, %v6303
    %v6321 = vsel %vm2110, %v6282, 0
    %v6324 = vsel %vm2110, %v6283, 0
    %6326 = vmatprep.subr.mxu0 %v6305
    %6327 = vmatpush1.msra.mxu0 %v6304
    %6328 = vmatprep.subr.mxu0 %v6309
    %6329 = vmatpush1.msra.mxu0 %v6308
    %6330 = vmatprep.subr.mxu0 0.0
    %6331 = vmatpush1.msra.mxu0 0.0
    %6332 = vmatprep.subr.mxu0 0.0
    %6333 = vmatpush1.msra.mxu0 0.0
    %6334 = vmatprep.subr.mxu0 0.0
    %6335 = vmatpush1.msra.mxu0 0.0
    %6336 = vmatprep.subr.mxu0 0.0
    %6337 = vmatpush1.msra.mxu0 0.0
    %6338 = vmatprep.subr.mxu0 0.0
    %6339 = vmatpush1.msra.mxu0 0.0
    %6340 = vmatprep.subr.mxu0 0.0
    %6341 = vmatpush1.msra.mxu0 0.0
    %6342 = vmatprep.subr.mxu0 0.0
    %6343 = vmatpush1.msra.mxu0 0.0
    %6344 = vmatprep.subr.mxu0 0.0
    %6345 = vmatpush1.msra.mxu0 0.0
    %6346 = vmatprep.subr.mxu0 0.0
    %6347 = vmatpush1.msra.mxu0 0.0
    %6348 = vmatprep.subr.mxu0 0.0
    %6349 = vmatpush1.msra.mxu0 0.0
    %6350 = vmatprep.subr.mxu0 0.0
    %6351 = vmatpush1.msra.mxu0 0.0
    %6352 = vmatprep.subr.mxu0 0.0
    %6353 = vmatpush1.msra.mxu0 0.0
    %6354 = vmatprep.subr.mxu0 0.0
    %6355 = vmatpush1.msra.mxu0 0.0
    %6356 = vmatprep.subr.mxu0 0.0
    %6357 = vmatpush1.msra.mxu0 0.0
    %6358 = vmatprep.subr.mxu0 0.0
    %6359 = vmatpush1.msra.mxu0 0.0
    %6360 = vmatprep.subr.mxu0 0.0
    %6361 = vmatpush1.msra.mxu0 0.0
    %6362 = vmatprep.subr.mxu0 0.0
    %6363 = vmatpush1.msra.mxu0 0.0
    %6364 = vmatprep.subr.mxu0 0.0
    %6365 = vmatpush1.msra.mxu0 0.0
    %6366 = vmatprep.subr.mxu0 0.0
    %6367 = vmatpush1.msra.mxu0 0.0
    %6368 = vmatprep.subr.mxu0 0.0
    %6369 = vmatpush1.msra.mxu0 0.0
    %6370 = vmatprep.subr.mxu0 0.0
    %6371 = vmatpush1.msra.mxu0 0.0
    %6372 = vmatprep.subr.mxu0 0.0
    %6373 = vmatpush1.msra.mxu0 0.0
    %6374 = vmatprep.subr.mxu0 0.0
    %6375 = vmatpush1.msra.mxu0 0.0
    %6376 = vmatprep.subr.mxu0 0.0
    %6377 = vmatpush1.msra.mxu0 0.0
    %6378 = vmatprep.subr.mxu0 0.0
    %6379 = vmatpush1.msra.mxu0 0.0
    %6380 = vmatprep.subr.mxu0 0.0
    %6381 = vmatpush1.msra.mxu0 0.0
    %6382 = vmatprep.subr.mxu0 0.0
    %6383 = vmatpush1.msra.mxu0 0.0
    %6384 = vmatprep.subr.mxu0 0.0
    %6385 = vmatpush1.msra.mxu0 0.0
    %6386 = vmatprep.subr.mxu0 0.0
    %6387 = vmatpush1.msra.mxu0 0.0
    %6388 = vmatprep.subr.mxu0 0.0
    %6389 = vmatpush1.msra.mxu0 0.0
    %6390 = vmatprep.mubr.f32.mxu0 0.0
    %6391 = vmatmul.mubr.f32.gmra.mrb[0].mxu0 %v6321
    %v6392 = vpop.f32.mrb[0].mxu0
    %v6393 = vadd.f32 0.0, %v6392
    %v6394 = vpop.f32.mrb[0].mxu0
    %v6395 = vadd.f32 0.0, %v6394
    %6396 = vmatprep.mubr.f32.mxu0 0.0
    %6397 = vmatmul.mubr.f32.gmra.mrb[0].mxu0 %v6324
    %v6398 = vpop.f32.mrb[0].mxu0
    %v6399 = vadd.f32 0.0, %v6398
    %v6400 = vpop.f32.mrb[0].mxu0
    %v6401 = vadd.f32 0.0, %v6400
    %6402 = vdwg.mxu0
    %6403 = vmatprep.subr.mxu0 %v6307
    %6404 = vmatpush1.msra.mxu0 %v6306
    %6405 = vmatprep.subr.mxu0 %v6311
    %6406 = vmatpush1.msra.mxu0 %v6310
    %6407 = vmatprep.subr.mxu0 0.0
    %6408 = vmatpush1.msra.mxu0 0.0
    %6409 = vmatprep.subr.mxu0 0.0
    %6410 = vmatpush1.msra.mxu0 0.0
    %6411 = vmatprep.subr.mxu0 0.0
    %6412 = vmatpush1.msra.mxu0 0.0
    %6413 = vmatprep.subr.mxu0 0.0
    %6414 = vmatpush1.msra.mxu0 0.0
    %6415 = vmatprep.subr.mxu0 0.0
    %6416 = vmatpush1.msra.mxu0 0.0
    %6417 = vmatprep.subr.mxu0 0.0
    %6418 = vmatpush1.msra.mxu0 0.0
    %6419 = vmatprep.subr.mxu0 0.0
    %6420 = vmatpush1.msra.mxu0 0.0
    %6421 = vmatprep.subr.mxu0 0.0
    %6422 = vmatpush1.msra.mxu0 0.0
    %6423 = vmatprep.subr.mxu0 0.0
    %6424 = vmatpush1.msra.mxu0 0.0
    %6425 = vmatprep.subr.mxu0 0.0
    %6426 = vmatpush1.msra.mxu0 0.0
    %6427 = vmatprep.subr.mxu0 0.0
    %6428 = vmatpush1.msra.mxu0 0.0
    %6429 = vmatprep.subr.mxu0 0.0
    %6430 = vmatpush1.msra.mxu0 0.0
    %6431 = vmatprep.subr.mxu0 0.0
    %6432 = vmatpush1.msra.mxu0 0.0
    %6433 = vmatprep.subr.mxu0 0.0
    %6434 = vmatpush1.msra.mxu0 0.0
    %6435 = vmatprep.subr.mxu0 0.0
    %6436 = vmatpush1.msra.mxu0 0.0
    %6437 = vmatprep.subr.mxu0 0.0
    %6438 = vmatpush1.msra.mxu0 0.0
    %6439 = vmatprep.subr.mxu0 0.0
    %6440 = vmatpush1.msra.mxu0 0.0
    %6441 = vmatprep.subr.mxu0 0.0
    %6442 = vmatpush1.msra.mxu0 0.0
    %6443 = vmatprep.subr.mxu0 0.0
    %6444 = vmatpush1.msra.mxu0 0.0
    %6445 = vmatprep.subr.mxu0 0.0
    %6446 = vmatpush1.msra.mxu0 0.0
    %6447 = vmatprep.subr.mxu0 0.0
    %6448 = vmatpush1.msra.mxu0 0.0
    %6449 = vmatprep.subr.mxu0 0.0
    %6450 = vmatpush1.msra.mxu0 0.0
    %6451 = vmatprep.subr.mxu0 0.0
    %6452 = vmatpush1.msra.mxu0 0.0
    %6453 = vmatprep.subr.mxu0 0.0
    %6454 = vmatpush1.msra.mxu0 0.0
    %6455 = vmatprep.subr.mxu0 0.0
    %6456 = vmatpush1.msra.mxu0 0.0
    %6457 = vmatprep.subr.mxu0 0.0
    %6458 = vmatpush1.msra.mxu0 0.0
    %6459 = vmatprep.subr.mxu0 0.0
    %6460 = vmatpush1.msra.mxu0 0.0
    %6461 = vmatprep.subr.mxu0 0.0
    %6462 = vmatpush1.msra.mxu0 0.0
    %6463 = vmatprep.subr.mxu0 0.0
    %6464 = vmatpush1.msra.mxu0 0.0
    %6465 = vmatprep.subr.mxu0 0.0
    %6466 = vmatpush1.msra.mxu0 0.0
    %6467 = vmatprep.mubr.f32.mxu0 0.0
    %6468 = vmatmul.mubr.f32.gmra.mrb[0].mxu0 %v6321
    %v6469 = vpop.f32.mrb[0].mxu0
    %v6470 = vadd.f32 0.0, %v6469
    %v6471 = vpop.f32.mrb[0].mxu0
    %v6472 = vadd.f32 0.0, %v6471
    %6473 = vmatprep.mubr.f32.mxu0 0.0
    %6474 = vmatmul.mubr.f32.gmra.mrb[0].mxu0 %v6324
    %v6475 = vpop.f32.mrb[0].mxu0
    %v6476 = vadd.f32 0.0, %v6475
    %v6477 = vpop.f32.mrb[0].mxu0
    %v6478 = vadd.f32 0.0, %v6477
    %6479 = vdwg.mxu0
    %v6480 = vadd.f32 %v6274, %v6393
    %v6481 = vadd.f32 %v6275, %v6395
    %v6482 = vadd.f32 %v6276, %v6470
    %v6483 = vadd.f32 %v6277, %v6472
    %v6484 = vadd.f32 %v6278, %v6399
    %v6485 = vadd.f32 %v6279, %v6401
    %v6486 = vadd.f32 %v6280, %v6476
    %v6487 = vadd.f32 %v6281, %v6478
    %v6488 = vld [vmem:[#allocation7 + $0x50] sm:$0xff]
    %v6489 = vld [vmem:[#allocation7 + $0x58] sm:$0xff]
    %6490 = vrot.lane.b32.xlu0 %v6058, 96
    %v6491 = vpop.permute.xlu0 %6490
    %6492 = vrot.lane.b32.xlu0 %v6059, 96
    %v6493 = vpop.permute.xlu0 %6492
    %6494 = vrot.lane.b32.xlu0 %v6060, 96
    %v6495 = vpop.permute.xlu0 %6494
    %6496 = vrot.lane.b32.xlu0 %v6061, 96
    %v6497 = vpop.permute.xlu0 %6496
    %6498 = vrot.lane.b32.xlu0 %v6062, 96
    %v6499 = vpop.permute.xlu0 %6498
    %6500 = vrot.lane.b32.xlu0 %v6063, 96
    %v6501 = vpop.permute.xlu0 %6500
    %6502 = vrot.lane.b32.xlu0 %v6064, 96
    %v6503 = vpop.permute.xlu0 %6502
    %6504 = vrot.lane.b32.xlu0 %v6065, 96
    %v6505 = vpop.permute.xlu0 %6504
    %6506 = vrot.lane.b32.xlu0 %v6066, 96
    %v6507 = vpop.permute.xlu0 %6506
    %6508 = vrot.lane.b32.xlu0 %v6067, 96
    %v6509 = vpop.permute.xlu0 %6508
    %vm6510 = vcmask 785408
    %v6511 = vsel %vm6510, %v6491, %v6493
    %v6512 = vsel %vm6510, %v6493, %v6495
    %v6513 = vsel %vm6510, %v6495, %v6497
    %v6514 = vsel %vm6510, %v6497, %v6499
    %v6515 = vsel %vm6510, %v6501, %v6503
    %v6516 = vsel %vm6510, %v6503, %v6505
    %v6517 = vsel %vm6510, %v6505, %v6507
    %v6518 = vsel %vm6510, %v6507, %v6509
    %v6528 = vsel %vm2110, %v6488, 0
    %v6531 = vsel %vm2110, %v6489, 0
    %6533 = vmatprep.subr.mxu0 %v6512
    %6534 = vmatpush1.msra.mxu0 %v6511
    %6535 = vmatprep.subr.mxu0 %v6516
    %6536 = vmatpush1.msra.mxu0 %v6515
    %6537 = vmatprep.subr.mxu0 0.0
    %6538 = vmatpush1.msra.mxu0 0.0
    %6539 = vmatprep.subr.mxu0 0.0
    %6540 = vmatpush1.msra.mxu0 0.0
    %6541 = vmatprep.subr.mxu0 0.0
    %6542 = vmatpush1.msra.mxu0 0.0
    %6543 = vmatprep.subr.mxu0 0.0
    %6544 = vmatpush1.msra.mxu0 0.0
    %6545 = vmatprep.subr.mxu0 0.0
    %6546 = vmatpush1.msra.mxu0 0.0
    %6547 = vmatprep.subr.mxu0 0.0
    %6548 = vmatpush1.msra.mxu0 0.0
    %6549 = vmatprep.subr.mxu0 0.0
    %6550 = vmatpush1.msra.mxu0 0.0
    %6551 = vmatprep.subr.mxu0 0.0
    %6552 = vmatpush1.msra.mxu0 0.0
    %6553 = vmatprep.subr.mxu0 0.0
    %6554 = vmatpush1.msra.mxu0 0.0
    %6555 = vmatprep.subr.mxu0 0.0
    %6556 = vmatpush1.msra.mxu0 0.0
    %6557 = vmatprep.subr.mxu0 0.0
    %6558 = vmatpush1.msra.mxu0 0.0
    %6559 = vmatprep.subr.mxu0 0.0
    %6560 = vmatpush1.msra.mxu0 0.0
    %6561 = vmatprep.subr.mxu0 0.0
    %6562 = vmatpush1.msra.mxu0 0.0
    %6563 = vmatprep.subr.mxu0 0.0
    %6564 = vmatpush1.msra.mxu0 0.0
    %6565 = vmatprep.subr.mxu0 0.0
    %6566 = vmatpush1.msra.mxu0 0.0
    %6567 = vmatprep.subr.mxu0 0.0
    %6568 = vmatpush1.msra.mxu0 0.0
    %6569 = vmatprep.subr.mxu0 0.0
    %6570 = vmatpush1.msra.mxu0 0.0
    %6571 = vmatprep.subr.mxu0 0.0
    %6572 = vmatpush1.msra.mxu0 0.0
    %6573 = vmatprep.subr.mxu0 0.0
    %6574 = vmatpush1.msra.mxu0 0.0
    %6575 = vmatprep.subr.mxu0 0.0
    %6576 = vmatpush1.msra.mxu0 0.0
    %6577 = vmatprep.subr.mxu0 0.0
    %6578 = vmatpush1.msra.mxu0 0.0
    %6579 = vmatprep.subr.mxu0 0.0
    %6580 = vmatpush1.msra.mxu0 0.0
    %6581 = vmatprep.subr.mxu0 0.0
    %6582 = vmatpush1.msra.mxu0 0.0
    %6583 = vmatprep.subr.mxu0 0.0
    %6584 = vmatpush1.msra.mxu0 0.0
    %6585 = vmatprep.subr.mxu0 0.0
    %6586 = vmatpush1.msra.mxu0 0.0
    %6587 = vmatprep.subr.mxu0 0.0
    %6588 = vmatpush1.msra.mxu0 0.0
    %6589 = vmatprep.subr.mxu0 0.0
    %6590 = vmatpush1.msra.mxu0 0.0
    %6591 = vmatprep.subr.mxu0 0.0
    %6592 = vmatpush1.msra.mxu0 0.0
    %6593 = vmatprep.subr.mxu0 0.0
    %6594 = vmatpush1.msra.mxu0 0.0
    %6595 = vmatprep.subr.mxu0 0.0
    %6596 = vmatpush1.msra.mxu0 0.0
    %6597 = vmatprep.mubr.f32.mxu0 0.0
    %6598 = vmatmul.mubr.f32.gmra.mrb[0].mxu0 %v6528
    %v6599 = vpop.f32.mrb[0].mxu0
    %v6600 = vadd.f32 0.0, %v6599
    %v6601 = vpop.f32.mrb[0].mxu0
    %v6602 = vadd.f32 0.0, %v6601
    %6603 = vmatprep.mubr.f32.mxu0 0.0
    %6604 = vmatmul.mubr.f32.gmra.mrb[0].mxu0 %v6531
    %v6605 = vpop.f32.mrb[0].mxu0
    %v6606 = vadd.f32 0.0, %v6605
    %v6607 = vpop.f32.mrb[0].mxu0
    %v6608 = vadd.f32 0.0, %v6607
    %6609 = vdwg.mxu0
    %6610 = vmatprep.subr.mxu0 %v6514
    %6611 = vmatpush1.msra.mxu0 %v6513
    %6612 = vmatprep.subr.mxu0 %v6518
    %6613 = vmatpush1.msra.mxu0 %v6517
    %6614 = vmatprep.subr.mxu0 0.0
    %6615 = vmatpush1.msra.mxu0 0.0
    %6616 = vmatprep.subr.mxu0 0.0
    %6617 = vmatpush1.msra.mxu0 0.0
    %6618 = vmatprep.subr.mxu0 0.0
    %6619 = vmatpush1.msra.mxu0 0.0
    %6620 = vmatprep.subr.mxu0 0.0
    %6621 = vmatpush1.msra.mxu0 0.0
    %6622 = vmatprep.subr.mxu0 0.0
    %6623 = vmatpush1.msra.mxu0 0.0
    %6624 = vmatprep.subr.mxu0 0.0
    %6625 = vmatpush1.msra.mxu0 0.0
    %6626 = vmatprep.subr.mxu0 0.0
    %6627 = vmatpush1.msra.mxu0 0.0
    %6628 = vmatprep.subr.mxu0 0.0
    %6629 = vmatpush1.msra.mxu0 0.0
    %6630 = vmatprep.subr.mxu0 0.0
    %6631 = vmatpush1.msra.mxu0 0.0
    %6632 = vmatprep.subr.mxu0 0.0
    %6633 = vmatpush1.msra.mxu0 0.0
    %6634 = vmatprep.subr.mxu0 0.0
    %6635 = vmatpush1.msra.mxu0 0.0
    %6636 = vmatprep.subr.mxu0 0.0
    %6637 = vmatpush1.msra.mxu0 0.0
    %6638 = vmatprep.subr.mxu0 0.0
    %6639 = vmatpush1.msra.mxu0 0.0
    %6640 = vmatprep.subr.mxu0 0.0
    %6641 = vmatpush1.msra.mxu0 0.0
    %6642 = vmatprep.subr.mxu0 0.0
    %6643 = vmatpush1.msra.mxu0 0.0
    %6644 = vmatprep.subr.mxu0 0.0
    %6645 = vmatpush1.msra.mxu0 0.0
    %6646 = vmatprep.subr.mxu0 0.0
    %6647 = vmatpush1.msra.mxu0 0.0
    %6648 = vmatprep.subr.mxu0 0.0
    %6649 = vmatpush1.msra.mxu0 0.0
    %6650 = vmatprep.subr.mxu0 0.0
    %6651 = vmatpush1.msra.mxu0 0.0
    %6652 = vmatprep.subr.mxu0 0.0
    %6653 = vmatpush1.msra.mxu0 0.0
    %6654 = vmatprep.subr.mxu0 0.0
    %6655 = vmatpush1.msra.mxu0 0.0
    %6656 = vmatprep.subr.mxu0 0.0
    %6657 = vmatpush1.msra.mxu0 0.0
    %6658 = vmatprep.subr.mxu0 0.0
    %6659 = vmatpush1.msra.mxu0 0.0
    %6660 = vmatprep.subr.mxu0 0.0
    %6661 = vmatpush1.msra.mxu0 0.0
    %6662 = vmatprep.subr.mxu0 0.0
    %6663 = vmatpush1.msra.mxu0 0.0
    %6664 = vmatprep.subr.mxu0 0.0
    %6665 = vmatpush1.msra.mxu0 0.0
    %6666 = vmatprep.subr.mxu0 0.0
    %6667 = vmatpush1.msra.mxu0 0.0
    %6668 = vmatprep.subr.mxu0 0.0
    %6669 = vmatpush1.msra.mxu0 0.0
    %6670 = vmatprep.subr.mxu0 0.0
    %6671 = vmatpush1.msra.mxu0 0.0
    %6672 = vmatprep.subr.mxu0 0.0
    %6673 = vmatpush1.msra.mxu0 0.0
    %6674 = vmatprep.mubr.f32.mxu0 0.0
    %6675 = vmatmul.mubr.f32.gmra.mrb[0].mxu0 %v6528
    %v6676 = vpop.f32.mrb[0].mxu0
    %v6677 = vadd.f32 0.0, %v6676
    %v6678 = vpop.f32.mrb[0].mxu0
    %v6679 = vadd.f32 0.0, %v6678
    %6680 = vmatprep.mubr.f32.mxu0 0.0
    %6681 = vmatmul.mubr.f32.gmra.mrb[0].mxu0 %v6531
    %v6682 = vpop.f32.mrb[0].mxu0
    %v6683 = vadd.f32 0.0, %v6682
    %v6684 = vpop.f32.mrb[0].mxu0
    %v6685 = vadd.f32 0.0, %v6684
    %6686 = vdwg.mxu0
    %v6687 = vadd.f32 %v6480, %v6600
    %v6688 = vadd.f32 %v6481, %v6602
    %v6689 = vadd.f32 %v6482, %v6677
    %v6690 = vadd.f32 %v6483, %v6679
    %v6691 = vadd.f32 %v6484, %v6606
    %v6692 = vadd.f32 %v6485, %v6608
    %v6693 = vadd.f32 %v6486, %v6683
    %v6694 = vadd.f32 %v6487, %v6685
    %v6695 = vld [vmem:[#allocation7 + $0x60] sm:$0xff]
    %v6696 = vld [vmem:[#allocation7 + $0x68] sm:$0xff]
    %6697 = vrot.lane.b32.xlu0 %v6058, 72
    %v6698 = vpop.permute.xlu0 %6697
    %6699 = vrot.lane.b32.xlu0 %v6059, 72
    %v6700 = vpop.permute.xlu0 %6699
    %6701 = vrot.lane.b32.xlu0 %v6060, 72
    %v6702 = vpop.permute.xlu0 %6701
    %6703 = vrot.lane.b32.xlu0 %v6061, 72
    %v6704 = vpop.permute.xlu0 %6703
    %6705 = vrot.lane.b32.xlu0 %v6062, 72
    %v6706 = vpop.permute.xlu0 %6705
    %6707 = vrot.lane.b32.xlu0 %v6063, 72
    %v6708 = vpop.permute.xlu0 %6707
    %6709 = vrot.lane.b32.xlu0 %v6064, 72
    %v6710 = vpop.permute.xlu0 %6709
    %6711 = vrot.lane.b32.xlu0 %v6065, 72
    %v6712 = vpop.permute.xlu0 %6711
    %6713 = vrot.lane.b32.xlu0 %v6066, 72
    %v6714 = vpop.permute.xlu0 %6713
    %6715 = vrot.lane.b32.xlu0 %v6067, 72
    %v6716 = vpop.permute.xlu0 %6715
    %vm6717 = vcmask 588800
    %v6718 = vsel %vm6717, %v6698, %v6700
    %v6719 = vsel %vm6717, %v6700, %v6702
    %v6720 = vsel %vm6717, %v6702, %v6704
    %v6721 = vsel %vm6717, %v6704, %v6706
    %v6722 = vsel %vm6717, %v6708, %v6710
    %v6723 = vsel %vm6717, %v6710, %v6712
    %v6724 = vsel %vm6717, %v6712, %v6714
    %v6725 = vsel %vm6717, %v6714, %v6716
    %v6735 = vsel %vm2110, %v6695, 0
    %v6738 = vsel %vm2110, %v6696, 0
    %6740 = vmatprep.subr.mxu0 %v6719
    %6741 = vmatpush1.msra.mxu0 %v6718
    %6742 = vmatprep.subr.mxu0 %v6723
    %6743 = vmatpush1.msra.mxu0 %v6722
    %6744 = vmatprep.subr.mxu0 0.0
    %6745 = vmatpush1.msra.mxu0 0.0
    %6746 = vmatprep.subr.mxu0 0.0
    %6747 = vmatpush1.msra.mxu0 0.0
    %6748 = vmatprep.subr.mxu0 0.0
    %6749 = vmatpush1.msra.mxu0 0.0
    %6750 = vmatprep.subr.mxu0 0.0
    %6751 = vmatpush1.msra.mxu0 0.0
    %6752 = vmatprep.subr.mxu0 0.0
    %6753 = vmatpush1.msra.mxu0 0.0
    %6754 = vmatprep.subr.mxu0 0.0
    %6755 = vmatpush1.msra.mxu0 0.0
    %6756 = vmatprep.subr.mxu0 0.0
    %6757 = vmatpush1.msra.mxu0 0.0
    %6758 = vmatprep.subr.mxu0 0.0
    %6759 = vmatpush1.msra.mxu0 0.0
    %6760 = vmatprep.subr.mxu0 0.0
    %6761 = vmatpush1.msra.mxu0 0.0
    %6762 = vmatprep.subr.mxu0 0.0
    %6763 = vmatpush1.msra.mxu0 0.0
    %6764 = vmatprep.subr.mxu0 0.0
    %6765 = vmatpush1.msra.mxu0 0.0
    %6766 = vmatprep.subr.mxu0 0.0
    %6767 = vmatpush1.msra.mxu0 0.0
    %6768 = vmatprep.subr.mxu0 0.0
    %6769 = vmatpush1.msra.mxu0 0.0
    %6770 = vmatprep.subr.mxu0 0.0
    %6771 = vmatpush1.msra.mxu0 0.0
    %6772 = vmatprep.subr.mxu0 0.0
    %6773 = vmatpush1.msra.mxu0 0.0
    %6774 = vmatprep.subr.mxu0 0.0
    %6775 = vmatpush1.msra.mxu0 0.0
    %6776 = vmatprep.subr.mxu0 0.0
    %6777 = vmatpush1.msra.mxu0 0.0
    %6778 = vmatprep.subr.mxu0 0.0
    %6779 = vmatpush1.msra.mxu0 0.0
    %6780 = vmatprep.subr.mxu0 0.0
    %6781 = vmatpush1.msra.mxu0 0.0
    %6782 = vmatprep.subr.mxu0 0.0
    %6783 = vmatpush1.msra.mxu0 0.0
    %6784 = vmatprep.subr.mxu0 0.0
    %6785 = vmatpush1.msra.mxu0 0.0
    %6786 = vmatprep.subr.mxu0 0.0
    %6787 = vmatpush1.msra.mxu0 0.0
    %6788 = vmatprep.subr.mxu0 0.0
    %6789 = vmatpush1.msra.mxu0 0.0
    %6790 = vmatprep.subr.mxu0 0.0
    %6791 = vmatpush1.msra.mxu0 0.0
    %6792 = vmatprep.subr.mxu0 0.0
    %6793 = vmatpush1.msra.mxu0 0.0
    %6794 = vmatprep.subr.mxu0 0.0
    %6795 = vmatpush1.msra.mxu0 0.0
    %6796 = vmatprep.subr.mxu0 0.0
    %6797 = vmatpush1.msra.mxu0 0.0
    %6798 = vmatprep.subr.mxu0 0.0
    %6799 = vmatpush1.msra.mxu0 0.0
    %6800 = vmatprep.subr.mxu0 0.0
    %6801 = vmatpush1.msra.mxu0 0.0
    %6802 = vmatprep.subr.mxu0 0.0
    %6803 = vmatpush1.msra.mxu0 0.0
    %6804 = vmatprep.mubr.f32.mxu0 0.0
    %6805 = vmatmul.mubr.f32.gmra.mrb[0].mxu0 %v6735
    %v6806 = vpop.f32.mrb[0].mxu0
    %v6807 = vadd.f32 0.0, %v6806
    %v6808 = vpop.f32.mrb[0].mxu0
    %v6809 = vadd.f32 0.0, %v6808
    %6810 = vmatprep.mubr.f32.mxu0 0.0
    %6811 = vmatmul.mubr.f32.gmra.mrb[0].mxu0 %v6738
    %v6812 = vpop.f32.mrb[0].mxu0
    %v6813 = vadd.f32 0.0, %v6812
    %v6814 = vpop.f32.mrb[0].mxu0
    %v6815 = vadd.f32 0.0, %v6814
    %6816 = vdwg.mxu0
    %6817 = vmatprep.subr.mxu0 %v6721
    %6818 = vmatpush1.msra.mxu0 %v6720
    %6819 = vmatprep.subr.mxu0 %v6725
    %6820 = vmatpush1.msra.mxu0 %v6724
    %6821 = vmatprep.subr.mxu0 0.0
    %6822 = vmatpush1.msra.mxu0 0.0
    %6823 = vmatprep.subr.mxu0 0.0
    %6824 = vmatpush1.msra.mxu0 0.0
    %6825 = vmatprep.subr.mxu0 0.0
    %6826 = vmatpush1.msra.mxu0 0.0
    %6827 = vmatprep.subr.mxu0 0.0
    %6828 = vmatpush1.msra.mxu0 0.0
    %6829 = vmatprep.subr.mxu0 0.0
    %6830 = vmatpush1.msra.mxu0 0.0
    %6831 = vmatprep.subr.mxu0 0.0
    %6832 = vmatpush1.msra.mxu0 0.0
    %6833 = vmatprep.subr.mxu0 0.0
    %6834 = vmatpush1.msra.mxu0 0.0
    %6835 = vmatprep.subr.mxu0 0.0
    %6836 = vmatpush1.msra.mxu0 0.0
    %6837 = vmatprep.subr.mxu0 0.0
    %6838 = vmatpush1.msra.mxu0 0.0
    %6839 = vmatprep.subr.mxu0 0.0
    %6840 = vmatpush1.msra.mxu0 0.0
    %6841 = vmatprep.subr.mxu0 0.0
    %6842 = vmatpush1.msra.mxu0 0.0
    %6843 = vmatprep.subr.mxu0 0.0
    %6844 = vmatpush1.msra.mxu0 0.0
    %6845 = vmatprep.subr.mxu0 0.0
    %6846 = vmatpush1.msra.mxu0 0.0
    %6847 = vmatprep.subr.mxu0 0.0
    %6848 = vmatpush1.msra.mxu0 0.0
    %6849 = vmatprep.subr.mxu0 0.0
    %6850 = vmatpush1.msra.mxu0 0.0
    %6851 = vmatprep.subr.mxu0 0.0
    %6852 = vmatpush1.msra.mxu0 0.0
    %6853 = vmatprep.subr.mxu0 0.0
    %6854 = vmatpush1.msra.mxu0 0.0
    %6855 = vmatprep.subr.mxu0 0.0
    %6856 = vmatpush1.msra.mxu0 0.0
    %6857 = vmatprep.subr.mxu0 0.0
    %6858 = vmatpush1.msra.mxu0 0.0
    %6859 = vmatprep.subr.mxu0 0.0
    %6860 = vmatpush1.msra.mxu0 0.0
    %6861 = vmatprep.subr.mxu0 0.0
    %6862 = vmatpush1.msra.mxu0 0.0
    %6863 = vmatprep.subr.mxu0 0.0
    %6864 = vmatpush1.msra.mxu0 0.0
    %6865 = vmatprep.subr.mxu0 0.0
    %6866 = vmatpush1.msra.mxu0 0.0
    %6867 = vmatprep.subr.mxu0 0.0
    %6868 = vmatpush1.msra.mxu0 0.0
    %6869 = vmatprep.subr.mxu0 0.0
    %6870 = vmatpush1.msra.mxu0 0.0
    %6871 = vmatprep.subr.mxu0 0.0
    %6872 = vmatpush1.msra.mxu0 0.0
    %6873 = vmatprep.subr.mxu0 0.0
    %6874 = vmatpush1.msra.mxu0 0.0
    %6875 = vmatprep.subr.mxu0 0.0
    %6876 = vmatpush1.msra.mxu0 0.0
    %6877 = vmatprep.subr.mxu0 0.0
    %6878 = vmatpush1.msra.mxu0 0.0
    %6879 = vmatprep.subr.mxu0 0.0
    %6880 = vmatpush1.msra.mxu0 0.0
    %6881 = vmatprep.mubr.f32.mxu0 0.0
    %6882 = vmatmul.mubr.f32.gmra.mrb[0].mxu0 %v6735
    %v6883 = vpop.f32.mrb[0].mxu0
    %v6884 = vadd.f32 0.0, %v6883
    %v6885 = vpop.f32.mrb[0].mxu0
    %v6886 = vadd.f32 0.0, %v6885
    %6887 = vmatprep.mubr.f32.mxu0 0.0
    %6888 = vmatmul.mubr.f32.gmra.mrb[0].mxu0 %v6738
    %v6889 = vpop.f32.mrb[0].mxu0
    %v6890 = vadd.f32 0.0, %v6889
    %v6891 = vpop.f32.mrb[0].mxu0
    %v6892 = vadd.f32 0.0, %v6891
    %6893 = vdwg.mxu0
    %v6894 = vadd.f32 %v6687, %v6807
    %v6895 = vadd.f32 %v6688, %v6809
    %v6896 = vadd.f32 %v6689, %v6884
    %v6897 = vadd.f32 %v6690, %v6886
    %v6898 = vadd.f32 %v6691, %v6813
    %v6899 = vadd.f32 %v6692, %v6815
    %v6900 = vadd.f32 %v6693, %v6890
    %v6901 = vadd.f32 %v6694, %v6892
    %v6902 = vld [vmem:[#allocation7 + $0x70] sm:$0xff]
    %v6903 = vld [vmem:[#allocation7 + $0x78] sm:$0xff]
    %6904 = vrot.lane.b32.xlu0 %v6058, 70
    %v6905 = vpop.permute.xlu0 %6904
    %6906 = vrot.lane.b32.xlu0 %v6059, 70
    %v6907 = vpop.permute.xlu0 %6906
    %6908 = vrot.lane.b32.xlu0 %v6060, 70
    %v6909 = vpop.permute.xlu0 %6908
    %6910 = vrot.lane.b32.xlu0 %v6061, 70
    %v6911 = vpop.permute.xlu0 %6910
    %6912 = vrot.lane.b32.xlu0 %v6062, 70
    %v6913 = vpop.permute.xlu0 %6912
    %6914 = vrot.lane.b32.xlu0 %v6063, 70
    %v6915 = vpop.permute.xlu0 %6914
    %6916 = vrot.lane.b32.xlu0 %v6064, 70
    %v6917 = vpop.permute.xlu0 %6916
    %6918 = vrot.lane.b32.xlu0 %v6065, 70
    %v6919 = vpop.permute.xlu0 %6918
    %6920 = vrot.lane.b32.xlu0 %v6066, 70
    %v6921 = vpop.permute.xlu0 %6920
    %6922 = vrot.lane.b32.xlu0 %v6067, 70
    %v6923 = vpop.permute.xlu0 %6922
    %vm6924 = vcmask 572416
    %v6925 = vsel %vm6924, %v6905, %v6907
    %v6926 = vsel %vm6924, %v6907, %v6909
    %v6927 = vsel %vm6924, %v6909, %v6911
    %v6928 = vsel %vm6924, %v6911, %v6913
    %v6929 = vsel %vm6924, %v6915, %v6917
    %v6930 = vsel %vm6924, %v6917, %v6919
    %v6931 = vsel %vm6924, %v6919, %v6921
    %v6932 = vsel %vm6924, %v6921, %v6923
    %v6942 = vsel %vm2110, %v6902, 0
    %v6945 = vsel %vm2110, %v6903, 0
    %6947 = vmatprep.subr.mxu0 %v6926
    %6948 = vmatpush1.msra.mxu0 %v6925
    %6949 = vmatprep.subr.mxu0 %v6930
    %6950 = vmatpush1.msra.mxu0 %v6929
    %6951 = vmatprep.subr.mxu0 0.0
    %6952 = vmatpush1.msra.mxu0 0.0
    %6953 = vmatprep.subr.mxu0 0.0
    %6954 = vmatpush1.msra.mxu0 0.0
    %6955 = vmatprep.subr.mxu0 0.0
    %6956 = vmatpush1.msra.mxu0 0.0
    %6957 = vmatprep.subr.mxu0 0.0
    %6958 = vmatpush1.msra.mxu0 0.0
    %6959 = vmatprep.subr.mxu0 0.0
    %6960 = vmatpush1.msra.mxu0 0.0
    %6961 = vmatprep.subr.mxu0 0.0
    %6962 = vmatpush1.msra.mxu0 0.0
    %6963 = vmatprep.subr.mxu0 0.0
    %6964 = vmatpush1.msra.mxu0 0.0
    %6965 = vmatprep.subr.mxu0 0.0
    %6966 = vmatpush1.msra.mxu0 0.0
    %6967 = vmatprep.subr.mxu0 0.0
    %6968 = vmatpush1.msra.mxu0 0.0
    %6969 = vmatprep.subr.mxu0 0.0
    %6970 = vmatpush1.msra.mxu0 0.0
    %6971 = vmatprep.subr.mxu0 0.0
    %6972 = vmatpush1.msra.mxu0 0.0
    %6973 = vmatprep.subr.mxu0 0.0
    %6974 = vmatpush1.msra.mxu0 0.0
    %6975 = vmatprep.subr.mxu0 0.0
    %6976 = vmatpush1.msra.mxu0 0.0
    %6977 = vmatprep.subr.mxu0 0.0
    %6978 = vmatpush1.msra.mxu0 0.0
    %6979 = vmatprep.subr.mxu0 0.0
    %6980 = vmatpush1.msra.mxu0 0.0
    %6981 = vmatprep.subr.mxu0 0.0
    %6982 = vmatpush1.msra.mxu0 0.0
    %6983 = vmatprep.subr.mxu0 0.0
    %6984 = vmatpush1.msra.mxu0 0.0
    %6985 = vmatprep.subr.mxu0 0.0
    %6986 = vmatpush1.msra.mxu0 0.0
    %6987 = vmatprep.subr.mxu0 0.0
    %6988 = vmatpush1.msra.mxu0 0.0
    %6989 = vmatprep.subr.mxu0 0.0
    %6990 = vmatpush1.msra.mxu0 0.0
    %6991 = vmatprep.subr.mxu0 0.0
    %6992 = vmatpush1.msra.mxu0 0.0
    %6993 = vmatprep.subr.mxu0 0.0
    %6994 = vmatpush1.msra.mxu0 0.0
    %6995 = vmatprep.subr.mxu0 0.0
    %6996 = vmatpush1.msra.mxu0 0.0
    %6997 = vmatprep.subr.mxu0 0.0
    %6998 = vmatpush1.msra.mxu0 0.0
    %6999 = vmatprep.subr.mxu0 0.0
    %7000 = vmatpush1.msra.mxu0 0.0
    %7001 = vmatprep.subr.mxu0 0.0
    %7002 = vmatpush1.msra.mxu0 0.0
    %7003 = vmatprep.subr.mxu0 0.0
    %7004 = vmatpush1.msra.mxu0 0.0
    %7005 = vmatprep.subr.mxu0 0.0
    %7006 = vmatpush1.msra.mxu0 0.0
    %7007 = vmatprep.subr.mxu0 0.0
    %7008 = vmatpush1.msra.mxu0 0.0
    %7009 = vmatprep.subr.mxu0 0.0
    %7010 = vmatpush1.msra.mxu0 0.0
    %7011 = vmatprep.mubr.f32.mxu0 0.0
    %7012 = vmatmul.mubr.f32.gmra.mrb[0].mxu0 %v6942
    %v7013 = vpop.f32.mrb[0].mxu0
    %v7014 = vadd.f32 0.0, %v7013
    %v7015 = vpop.f32.mrb[0].mxu0
    %v7016 = vadd.f32 0.0, %v7015
    %7017 = vmatprep.mubr.f32.mxu0 0.0
    %7018 = vmatmul.mubr.f32.gmra.mrb[0].mxu0 %v6945
    %v7019 = vpop.f32.mrb[0].mxu0
    %v7020 = vadd.f32 0.0, %v7019
    %v7021 = vpop.f32.mrb[0].mxu0
    %v7022 = vadd.f32 0.0, %v7021
    %7023 = vdwg.mxu0
    %7024 = vmatprep.subr.mxu0 %v6928
    %7025 = vmatpush1.msra.mxu0 %v6927
    %7026 = vmatprep.subr.mxu0 %v6932
    %7027 = vmatpush1.msra.mxu0 %v6931
    %7028 = vmatprep.subr.mxu0 0.0
    %7029 = vmatpush1.msra.mxu0 0.0
    %7030 = vmatprep.subr.mxu0 0.0
    %7031 = vmatpush1.msra.mxu0 0.0
    %7032 = vmatprep.subr.mxu0 0.0
    %7033 = vmatpush1.msra.mxu0 0.0
    %7034 = vmatprep.subr.mxu0 0.0
    %7035 = vmatpush1.msra.mxu0 0.0
    %7036 = vmatprep.subr.mxu0 0.0
    %7037 = vmatpush1.msra.mxu0 0.0
    %7038 = vmatprep.subr.mxu0 0.0
    %7039 = vmatpush1.msra.mxu0 0.0
    %7040 = vmatprep.subr.mxu0 0.0
    %7041 = vmatpush1.msra.mxu0 0.0
    %7042 = vmatprep.subr.mxu0 0.0
    %7043 = vmatpush1.msra.mxu0 0.0
    %7044 = vmatprep.subr.mxu0 0.0
    %7045 = vmatpush1.msra.mxu0 0.0
    %7046 = vmatprep.subr.mxu0 0.0
    %7047 = vmatpush1.msra.mxu0 0.0
    %7048 = vmatprep.subr.mxu0 0.0
    %7049 = vmatpush1.msra.mxu0 0.0
    %7050 = vmatprep.subr.mxu0 0.0
    %7051 = vmatpush1.msra.mxu0 0.0
    %7052 = vmatprep.subr.mxu0 0.0
    %7053 = vmatpush1.msra.mxu0 0.0
    %7054 = vmatprep.subr.mxu0 0.0
    %7055 = vmatpush1.msra.mxu0 0.0
    %7056 = vmatprep.subr.mxu0 0.0
    %7057 = vmatpush1.msra.mxu0 0.0
    %7058 = vmatprep.subr.mxu0 0.0
    %7059 = vmatpush1.msra.mxu0 0.0
    %7060 = vmatprep.subr.mxu0 0.0
    %7061 = vmatpush1.msra.mxu0 0.0
    %7062 = vmatprep.subr.mxu0 0.0
    %7063 = vmatpush1.msra.mxu0 0.0
    %7064 = vmatprep.subr.mxu0 0.0
    %7065 = vmatpush1.msra.mxu0 0.0
    %7066 = vmatprep.subr.mxu0 0.0
    %7067 = vmatpush1.msra.mxu0 0.0
    %7068 = vmatprep.subr.mxu0 0.0
    %7069 = vmatpush1.msra.mxu0 0.0
    %7070 = vmatprep.subr.mxu0 0.0
    %7071 = vmatpush1.msra.mxu0 0.0
    %7072 = vmatprep.subr.mxu0 0.0
    %7073 = vmatpush1.msra.mxu0 0.0
    %7074 = vmatprep.subr.mxu0 0.0
    %7075 = vmatpush1.msra.mxu0 0.0
    %7076 = vmatprep.subr.mxu0 0.0
    %7077 = vmatpush1.msra.mxu0 0.0
    %7078 = vmatprep.subr.mxu0 0.0
    %7079 = vmatpush1.msra.mxu0 0.0
    %7080 = vmatprep.subr.mxu0 0.0
    %7081 = vmatpush1.msra.mxu0 0.0
    %7082 = vmatprep.subr.mxu0 0.0
    %7083 = vmatpush1.msra.mxu0 0.0
    %7084 = vmatprep.subr.mxu0 0.0
    %7085 = vmatpush1.msra.mxu0 0.0
    %7086 = vmatprep.subr.mxu0 0.0
    %7087 = vmatpush1.msra.mxu0 0.0
    %7088 = vmatprep.mubr.f32.mxu0 0.0
    %7089 = vmatmul.mubr.f32.gmra.mrb[0].mxu0 %v6942
    %v7090 = vpop.f32.mrb[0].mxu0
    %v7091 = vadd.f32 0.0, %v7090
    %v7092 = vpop.f32.mrb[0].mxu0
    %v7093 = vadd.f32 0.0, %v7092
    %7094 = vmatprep.mubr.f32.mxu0 0.0
    %7095 = vmatmul.mubr.f32.gmra.mrb[0].mxu0 %v6945
    %v7096 = vpop.f32.mrb[0].mxu0
    %v7097 = vadd.f32 0.0, %v7096
    %v7098 = vpop.f32.mrb[0].mxu0
    %v7099 = vadd.f32 0.0, %v7098
    %7100 = vdwg.mxu0
    %v7101 = vadd.f32 %v6894, %v7014
    %v7102 = vadd.f32 %v6895, %v7016
    %v7103 = vadd.f32 %v6896, %v7091
    %v7104 = vadd.f32 %v6897, %v7093
    %v7105 = vadd.f32 %v6898, %v7020
    %v7106 = vadd.f32 %v6899, %v7022
    %v7107 = vadd.f32 %v6900, %v7097
    %v7108 = vadd.f32 %v6901, %v7099
    %v7109 = vld [vmem:[#allocation7 + $0x80] sm:$0xff]
    %v7110 = vld [vmem:[#allocation7 + $0x88] sm:$0xff]
    %7111 = vrot.lane.b32.xlu0 %v6058, 68
    %v7112 = vpop.permute.xlu0 %7111
    %7113 = vrot.lane.b32.xlu0 %v6059, 68
    %v7114 = vpop.permute.xlu0 %7113
    %7115 = vrot.lane.b32.xlu0 %v6060, 68
    %v7116 = vpop.permute.xlu0 %7115
    %7117 = vrot.lane.b32.xlu0 %v6061, 68
    %v7118 = vpop.permute.xlu0 %7117
    %7119 = vrot.lane.b32.xlu0 %v6062, 68
    %v7120 = vpop.permute.xlu0 %7119
    %7121 = vrot.lane.b32.xlu0 %v6063, 68
    %v7122 = vpop.permute.xlu0 %7121
    %7123 = vrot.lane.b32.xlu0 %v6064, 68
    %v7124 = vpop.permute.xlu0 %7123
    %7125 = vrot.lane.b32.xlu0 %v6065, 68
    %v7126 = vpop.permute.xlu0 %7125
    %7127 = vrot.lane.b32.xlu0 %v6066, 68
    %v7128 = vpop.permute.xlu0 %7127
    %7129 = vrot.lane.b32.xlu0 %v6067, 68
    %v7130 = vpop.permute.xlu0 %7129
    %vm7131 = vcmask 556032
    %v7132 = vsel %vm7131, %v7112, %v7114
    %v7133 = vsel %vm7131, %v7114, %v7116
    %v7134 = vsel %vm7131, %v7116, %v7118
    %v7135 = vsel %vm7131, %v7118, %v7120
    %v7136 = vsel %vm7131, %v7122, %v7124
    %v7137 = vsel %vm7131, %v7124, %v7126
    %v7138 = vsel %vm7131, %v7126, %v7128
    %v7139 = vsel %vm7131, %v7128, %v7130
    %v7149 = vsel %vm2110, %v7109, 0
    %v7152 = vsel %vm2110, %v7110, 0
    %7154 = vmatprep.subr.mxu0 %v7133
    %7155 = vmatpush1.msra.mxu0 %v7132
    %7156 = vmatprep.subr.mxu0 %v7137
    %7157 = vmatpush1.msra.mxu0 %v7136
    %7158 = vmatprep.subr.mxu0 0.0
    %7159 = vmatpush1.msra.mxu0 0.0
    %7160 = vmatprep.subr.mxu0 0.0
    %7161 = vmatpush1.msra.mxu0 0.0
    %7162 = vmatprep.subr.mxu0 0.0
    %7163 = vmatpush1.msra.mxu0 0.0
    %7164 = vmatprep.subr.mxu0 0.0
    %7165 = vmatpush1.msra.mxu0 0.0
    %7166 = vmatprep.subr.mxu0 0.0
    %7167 = vmatpush1.msra.mxu0 0.0
    %7168 = vmatprep.subr.mxu0 0.0
    %7169 = vmatpush1.msra.mxu0 0.0
    %7170 = vmatprep.subr.mxu0 0.0
    %7171 = vmatpush1.msra.mxu0 0.0
    %7172 = vmatprep.subr.mxu0 0.0
    %7173 = vmatpush1.msra.mxu0 0.0
    %7174 = vmatprep.subr.mxu0 0.0
    %7175 = vmatpush1.msra.mxu0 0.0
    %7176 = vmatprep.subr.mxu0 0.0
    %7177 = vmatpush1.msra.mxu0 0.0
    %7178 = vmatprep.subr.mxu0 0.0
    %7179 = vmatpush1.msra.mxu0 0.0
    %7180 = vmatprep.subr.mxu0 0.0
    %7181 = vmatpush1.msra.mxu0 0.0
    %7182 = vmatprep.subr.mxu0 0.0
    %7183 = vmatpush1.msra.mxu0 0.0
    %7184 = vmatprep.subr.mxu0 0.0
    %7185 = vmatpush1.msra.mxu0 0.0
    %7186 = vmatprep.subr.mxu0 0.0
    %7187 = vmatpush1.msra.mxu0 0.0
    %7188 = vmatprep.subr.mxu0 0.0
    %7189 = vmatpush1.msra.mxu0 0.0
    %7190 = vmatprep.subr.mxu0 0.0
    %7191 = vmatpush1.msra.mxu0 0.0
    %7192 = vmatprep.subr.mxu0 0.0
    %7193 = vmatpush1.msra.mxu0 0.0
    %7194 = vmatprep.subr.mxu0 0.0
    %7195 = vmatpush1.msra.mxu0 0.0
    %7196 = vmatprep.subr.mxu0 0.0
    %7197 = vmatpush1.msra.mxu0 0.0
    %7198 = vmatprep.subr.mxu0 0.0
    %7199 = vmatpush1.msra.mxu0 0.0
    %7200 = vmatprep.subr.mxu0 0.0
    %7201 = vmatpush1.msra.mxu0 0.0
    %7202 = vmatprep.subr.mxu0 0.0
    %7203 = vmatpush1.msra.mxu0 0.0
    %7204 = vmatprep.subr.mxu0 0.0
    %7205 = vmatpush1.msra.mxu0 0.0
    %7206 = vmatprep.subr.mxu0 0.0
    %7207 = vmatpush1.msra.mxu0 0.0
    %7208 = vmatprep.subr.mxu0 0.0
    %7209 = vmatpush1.msra.mxu0 0.0
    %7210 = vmatprep.subr.mxu0 0.0
    %7211 = vmatpush1.msra.mxu0 0.0
    %7212 = vmatprep.subr.mxu0 0.0
    %7213 = vmatpush1.msra.mxu0 0.0
    %7214 = vmatprep.subr.mxu0 0.0
    %7215 = vmatpush1.msra.mxu0 0.0
    %7216 = vmatprep.subr.mxu0 0.0
    %7217 = vmatpush1.msra.mxu0 0.0
    %7218 = vmatprep.mubr.f32.mxu0 0.0
    %7219 = vmatmul.mubr.f32.gmra.mrb[0].mxu0 %v7149
    %v7220 = vpop.f32.mrb[0].mxu0
    %v7221 = vadd.f32 0.0, %v7220
    %v7222 = vpop.f32.mrb[0].mxu0
    %v7223 = vadd.f32 0.0, %v7222
    %7224 = vmatprep.mubr.f32.mxu0 0.0
    %7225 = vmatmul.mubr.f32.gmra.mrb[0].mxu0 %v7152
    %v7226 = vpop.f32.mrb[0].mxu0
    %v7227 = vadd.f32 0.0, %v7226
    %v7228 = vpop.f32.mrb[0].mxu0
    %v7229 = vadd.f32 0.0, %v7228
    %7230 = vdwg.mxu0
    %7231 = vmatprep.subr.mxu0 %v7135
    %7232 = vmatpush1.msra.mxu0 %v7134
    %7233 = vmatprep.subr.mxu0 %v7139
    %7234 = vmatpush1.msra.mxu0 %v7138
    %7235 = vmatprep.subr.mxu0 0.0
    %7236 = vmatpush1.msra.mxu0 0.0
    %7237 = vmatprep.subr.mxu0 0.0
    %7238 = vmatpush1.msra.mxu0 0.0
    %7239 = vmatprep.subr.mxu0 0.0
    %7240 = vmatpush1.msra.mxu0 0.0
    %7241 = vmatprep.subr.mxu0 0.0
    %7242 = vmatpush1.msra.mxu0 0.0
    %7243 = vmatprep.subr.mxu0 0.0
    %7244 = vmatpush1.msra.mxu0 0.0
    %7245 = vmatprep.subr.mxu0 0.0
    %7246 = vmatpush1.msra.mxu0 0.0
    %7247 = vmatprep.subr.mxu0 0.0
    %7248 = vmatpush1.msra.mxu0 0.0
    %7249 = vmatprep.subr.mxu0 0.0
    %7250 = vmatpush1.msra.mxu0 0.0
    %7251 = vmatprep.subr.mxu0 0.0
    %7252 = vmatpush1.msra.mxu0 0.0
    %7253 = vmatprep.subr.mxu0 0.0
    %7254 = vmatpush1.msra.mxu0 0.0
    %7255 = vmatprep.subr.mxu0 0.0
    %7256 = vmatpush1.msra.mxu0 0.0
    %7257 = vmatprep.subr.mxu0 0.0
    %7258 = vmatpush1.msra.mxu0 0.0
    %7259 = vmatprep.subr.mxu0 0.0
    %7260 = vmatpush1.msra.mxu0 0.0
    %7261 = vmatprep.subr.mxu0 0.0
    %7262 = vmatpush1.msra.mxu0 0.0
    %7263 = vmatprep.subr.mxu0 0.0
    %7264 = vmatpush1.msra.mxu0 0.0
    %7265 = vmatprep.subr.mxu0 0.0
    %7266 = vmatpush1.msra.mxu0 0.0
    %7267 = vmatprep.subr.mxu0 0.0
    %7268 = vmatpush1.msra.mxu0 0.0
    %7269 = vmatprep.subr.mxu0 0.0
    %7270 = vmatpush1.msra.mxu0 0.0
    %7271 = vmatprep.subr.mxu0 0.0
    %7272 = vmatpush1.msra.mxu0 0.0
    %7273 = vmatprep.subr.mxu0 0.0
    %7274 = vmatpush1.msra.mxu0 0.0
    %7275 = vmatprep.subr.mxu0 0.0
    %7276 = vmatpush1.msra.mxu0 0.0
    %7277 = vmatprep.subr.mxu0 0.0
    %7278 = vmatpush1.msra.mxu0 0.0
    %7279 = vmatprep.subr.mxu0 0.0
    %7280 = vmatpush1.msra.mxu0 0.0
    %7281 = vmatprep.subr.mxu0 0.0
    %7282 = vmatpush1.msra.mxu0 0.0
    %7283 = vmatprep.subr.mxu0 0.0
    %7284 = vmatpush1.msra.mxu0 0.0
    %7285 = vmatprep.subr.mxu0 0.0
    %7286 = vmatpush1.msra.mxu0 0.0
    %7287 = vmatprep.subr.mxu0 0.0
    %7288 = vmatpush1.msra.mxu0 0.0
    %7289 = vmatprep.subr.mxu0 0.0
    %7290 = vmatpush1.msra.mxu0 0.0
    %7291 = vmatprep.subr.mxu0 0.0
    %7292 = vmatpush1.msra.mxu0 0.0
    %7293 = vmatprep.subr.mxu0 0.0
    %7294 = vmatpush1.msra.mxu0 0.0
    %7295 = vmatprep.mubr.f32.mxu0 0.0
    %7296 = vmatmul.mubr.f32.gmra.mrb[0].mxu0 %v7149
    %v7297 = vpop.f32.mrb[0].mxu0
    %v7298 = vadd.f32 0.0, %v7297
    %v7299 = vpop.f32.mrb[0].mxu0
    %v7300 = vadd.f32 0.0, %v7299
    %7301 = vmatprep.mubr.f32.mxu0 0.0
    %7302 = vmatmul.mubr.f32.gmra.mrb[0].mxu0 %v7152
    %v7303 = vpop.f32.mrb[0].mxu0
    %v7304 = vadd.f32 0.0, %v7303
    %v7305 = vpop.f32.mrb[0].mxu0
    %v7306 = vadd.f32 0.0, %v7305
    %7307 = vdwg.mxu0
    %v7308 = vadd.f32 %v7101, %v7221
    %v7309 = vadd.f32 %v7102, %v7223
    %v7310 = vadd.f32 %v7103, %v7298
    %v7311 = vadd.f32 %v7104, %v7300
    %v7312 = vadd.f32 %v7105, %v7227
    %v7313 = vadd.f32 %v7106, %v7229
    %v7314 = vadd.f32 %v7107, %v7304
    %v7315 = vadd.f32 %v7108, %v7306
    %v7317 = vlaneseq
    %v7318 = vshrl.u32 %v7317, 7
    %v7319 = vsub.s32 0, %v7318
    %v7320 = vrot.slane %v69, %v7319
    %v7321 = vlaneseq
    %v7322 = vshrl.u32 %v7321, 7
    %v7323 = vsub.s32 1, %v7322
    %v7324 = vrot.slane %v69, %v7323
    %v7325 = vlaneseq
    %v7326 = vshrl.u32 %v7325, 7
    %v7327 = vsub.s32 2, %v7326
    %v7328 = vrot.slane %v69, %v7327
    %v7329 = vlaneseq
    %v7330 = vshrl.u32 %v7329, 7
    %v7331 = vsub.s32 3, %v7330
    %v7332 = vrot.slane %v69, %v7331
    %v7337 = vmul.f32 %v7308, %v7320
    %v7338 = vmul.f32 %v7309, %v7324
    %v7339 = vmul.f32 %v7310, %v7328
    %v7340 = vmul.f32 %v7311, %v7332
    %v7341 = vmul.f32 %v7312, %v7320
    %v7342 = vmul.f32 %v7313, %v7324
    %v7343 = vmul.f32 %v7314, %v7328
    %v7344 = vmul.f32 %v7315, %v7332
    %v7345 = vadd.f32 %v7337, %v7338
    %v7346 = vadd.f32 %v7345, %v7339
    %v7347 = vsel %vm1863, %v7340, 0.0
    %v7348 = vadd.f32 %v7346, %v7347
    %7349 = vadd.xlane.f32.xlu0 %v7348
    %v7350 = vpop.xlane.xlu0 %7349
    %v7351 = vadd.f32 %v7341, %v7342
    %v7352 = vadd.f32 %v7351, %v7343
    %v7353 = vsel %vm1863, %v7344, 0.0
    %v7354 = vadd.f32 %v7352, %v7353
    %7355 = vadd.xlane.f32.xlu0 %v7354
    %v7356 = vpop.xlane.xlu0 %7355
    %v7357 = vmul.f32 %v7350, 0.020833334
    %v7358 = vmul.f32 %v7356, 0.020833334
    %v7359 = vsub.f32 %v7308, %v7357
    %v7360 = vsub.f32 %v7309, %v7357
    %v7361 = vsub.f32 %v7310, %v7357
    %v7362 = vsub.f32 %v7311, %v7357
    %v7363 = vsub.f32 %v7312, %v7358
    %v7364 = vsub.f32 %v7313, %v7358
    %v7365 = vsub.f32 %v7314, %v7358
    %v7366 = vsub.f32 %v7315, %v7358
    %v7367 = vmul.f32 %v7359, %v7320
    %v7368 = vmul.f32 %v7360, %v7324
    %v7369 = vmul.f32 %v7361, %v7328
    %v7370 = vmul.f32 %v7362, %v7332
    %v7371 = vmul.f32 %v7363, %v7320
    %v7372 = vmul.f32 %v7364, %v7324
    %v7373 = vmul.f32 %v7365, %v7328
    %v7374 = vmul.f32 %v7366, %v7332
    %v7375 = vmul.f32 %v7367, %v7367
    %v7376 = vmul.f32 %v7368, %v7368
    %v7377 = vmul.f32 %v7369, %v7369
    %v7378 = vmul.f32 %v7370, %v7370
    %v7379 = vmul.f32 %v7371, %v7371
    %v7380 = vmul.f32 %v7372, %v7372
    %v7381 = vmul.f32 %v7373, %v7373
    %v7382 = vmul.f32 %v7374, %v7374
    %v7383 = vadd.f32 %v7375, %v7376
    %v7384 = vadd.f32 %v7383, %v7377
    %v7385 = vsel %vm1863, %v7378, 0.0
    %v7386 = vadd.f32 %v7384, %v7385
    %7387 = vadd.xlane.f32.xlu0 %v7386
    %v7388 = vpop.xlane.xlu0 %7387
    %v7389 = vadd.f32 %v7379, %v7380
    %v7390 = vadd.f32 %v7389, %v7381
    %v7391 = vsel %vm1863, %v7382, 0.0
    %v7392 = vadd.f32 %v7390, %v7391
    %7393 = vadd.xlane.f32.xlu0 %v7392
    %v7394 = vpop.xlane.xlu0 %7393
    %v7395 = vmul.f32 %v7388, 0.020833334
    %v7396 = vmul.f32 %v7394, 0.020833334
    %v7397 = vadd.f32 %v7395, 1e-05
    %v7398 = vadd.f32 %v7396, 1e-05
    %v7399 = vrsqrt.pop %v7397
    %v7400 = vrsqrt.pop %v7398
    %v7401 = vmul.f32 %v61, %v7399
    %v7402 = vmul.f32 %v62, %v7400
    %v7403 = vmul.f32 %v7357, %v7401
    %v7404 = vmul.f32 %v7358, %v7402
    %7407 = vrot.lane.b32.xlu0 %v7403, 1
    %v7408 = vpop.permute.xlu0 %7407
    %7409 = vrot.lane.b32.xlu0 %v7404, 1
    %v7410 = vpop.permute.xlu0 %7409
    %v7413 = vsub.f32 %v61, %v7408
    %v7414 = vsub.f32 %v62, %v7410
    %7416 = vset.pattern.permute.xlu0 4
    %7417 = vperm.xlu0 %7416, %v7401
    %v7418 = vpop.permute.xlu0 %7417
    %7421 = vset.pattern.permute.xlu0 4
    %7422 = vperm.xlu0 %7421, %v7402
    %v7423 = vpop.permute.xlu0 %7422
    %v7425 = vmul.f32 %v7308, %v7418
    %v7426 = vmul.f32 %v7309, %v7418
    %v7427 = vmul.f32 %v7310, %v7418
    %v7428 = vmul.f32 %v7311, %v7418
    %v7429 = vmul.f32 %v7312, %v7423
    %v7430 = vmul.f32 %v7313, %v7423
    %v7431 = vmul.f32 %v7314, %v7423
    %v7432 = vmul.f32 %v7315, %v7423
    %7434 = vset.pattern.permute.xlu0 5
    %7435 = vperm.xlu0 %7434, %v7413
    %v7436 = vpop.permute.xlu0 %7435
    %7439 = vset.pattern.permute.xlu0 5
    %7440 = vperm.xlu0 %7439, %v7414
    %v7441 = vpop.permute.xlu0 %7440
    %v7443 = vadd.f32 %v7425, %v7436
    %v7444 = vadd.f32 %v7426, %v7436
    %v7445 = vadd.f32 %v7427, %v7436
    %v7446 = vadd.f32 %v7428, %v7436
    %v7447 = vadd.f32 %v7429, %v7441
    %v7448 = vadd.f32 %v7430, %v7441
    %v7449 = vadd.f32 %v7431, %v7441
    %v7450 = vadd.f32 %v7432, %v7441
    %v7451 = vmax.f32 %v7443, 0.0
    %v7452 = vmax.f32 %v7444, 0.0
    %v7453 = vmax.f32 %v7445, 0.0
    %v7454 = vmax.f32 %v7446, 0.0
    %v7455 = vmax.f32 %v7447, 0.0
    %v7456 = vmax.f32 %v7448, 0.0
    %v7457 = vmax.f32 %v7449, 0.0
    %v7458 = vmax.f32 %v7450, 0.0
    %v7459 = vld [vmem:[%s6] sm:$0xff]
    %v7460 = vld [vmem:[%s6 + $0x8] sm:$0xff]
    %v7461 = vld [vmem:[%s6 + $0x10] sm:$0xff]
    %v7462 = vld [vmem:[%s6 + $0x18] sm:$0xff]
    %v7463 = vld [vmem:[%s6 + $0x20] sm:$0xff]
    %v7464 = vld [vmem:[%s6 + $0x28] sm:$0xff]
    %v7465 = vld [vmem:[%s6 + $0x30] sm:$0xff]
    %v7466 = vld [vmem:[%s6 + $0x38] sm:$0xff]
    %v7467 = vld [vmem:[%s6 + $0x40] sm:$0xff]
    %v7468 = vld [vmem:[%s6 + $0x48] sm:$0xff]
    %v7469 = vld [vmem:[%s6 + $0x50] sm:$0xff]
    %v7470 = vld [vmem:[%s6 + $0x58] sm:$0xff]
    %v7471 = vld [vmem:[%s6 + $0x60] sm:$0xff]
    %v7472 = vld [vmem:[%s6 + $0x68] sm:$0xff]
    %v7473 = vld [vmem:[%s6 + $0x70] sm:$0xff]
    %v7474 = vld [vmem:[%s6 + $0x78] sm:$0xff]
    %v7475 = vld [vmem:[%s6 + $0x80] sm:$0xff]
    %v7476 = vld [vmem:[%s6 + $0x88] sm:$0xff]
    %v7477 = vld [vmem:[%s6 + $0x90] sm:$0xff]
    %v7478 = vld [vmem:[%s6 + $0x98] sm:$0xff]
    %v7479 = vld [vmem:[%s6 + $0xa0] sm:$0xff]
    %v7480 = vld [vmem:[%s6 + $0xa8] sm:$0xff]
    %v7481 = vld [vmem:[%s6 + $0xb0] sm:$0xff]
    %v7482 = vld [vmem:[%s6 + $0xb8] sm:$0xff]
    %v7483 = vld [vmem:[%s6 + $0xc0] sm:$0xff]
    %v7484 = vld [vmem:[%s6 + $0xc8] sm:$0xff]
    %v7485 = vld [vmem:[%s6 + $0xd0] sm:$0xff]
    %v7486 = vld [vmem:[%s6 + $0xd8] sm:$0xff]
    %v7487 = vld [vmem:[%s6 + $0xe0] sm:$0xff]
    %v7488 = vld [vmem:[%s6 + $0xe8] sm:$0xff]
    %v7489 = vld [vmem:[%s6 + $0xf0] sm:$0xff]
    %v7490 = vld [vmem:[%s6 + $0xf8] sm:$0xff]
    %v7491 = vld [vmem:[%s6 + $0x100] sm:$0xff]
    %v7492 = vld [vmem:[%s6 + $0x108] sm:$0xff]
    %v7493 = vld [vmem:[%s6 + $0x110] sm:$0xff]
    %v7494 = vld [vmem:[%s6 + $0x118] sm:$0xff]
    %v7495 = vld [vmem:[%s6 + $0x120] sm:$0xff]
    %v7496 = vld [vmem:[%s6 + $0x128] sm:$0xff]
    %v7497 = vld [vmem:[%s6 + $0x130] sm:$0xff]
    %v7498 = vld [vmem:[%s6 + $0x138] sm:$0xff]
    %v7499 = vld [vmem:[%s6 + $0x140] sm:$0xff]
    %v7500 = vld [vmem:[%s6 + $0x148] sm:$0xff]
    %v7501 = vld [vmem:[%s6 + $0x150] sm:$0xff]
    %v7502 = vld [vmem:[%s6 + $0x158] sm:$0xff]
    %v7503 = vld [vmem:[%s6 + $0x160] sm:$0xff]
    %v7504 = vld [vmem:[%s6 + $0x168] sm:$0xff]
    %v7505 = vld [vmem:[%s6 + $0x170] sm:$0xff]
    %v7506 = vld [vmem:[%s6 + $0x178] sm:$0xff]
    %v7507 = vld [vmem:[%s6 + $0x180] sm:$0xff]
    %v7508 = vld [vmem:[%s6 + $0x188] sm:$0xff]
    %v7509 = vld [vmem:[%s6 + $0x190] sm:$0xff]
    %v7510 = vld [vmem:[%s6 + $0x198] sm:$0xff]
    %v7511 = vld [vmem:[%s6 + $0x1a0] sm:$0xff]
    %v7512 = vld [vmem:[%s6 + $0x1a8] sm:$0xff]
    %v7513 = vld [vmem:[%s6 + $0x1b0] sm:$0xff]
    %v7514 = vld [vmem:[%s6 + $0x1b8] sm:$0xff]
    %v7515 = vld [vmem:[%s6 + $0x1c0] sm:$0xff]
    %v7516 = vld [vmem:[%s6 + $0x1c8] sm:$0xff]
    %v7517 = vld [vmem:[%s6 + $0x1d0] sm:$0xff]
    %v7518 = vld [vmem:[%s6 + $0x1d8] sm:$0xff]
    %v7519 = vld [vmem:[%s6 + $0x1e0] sm:$0xff]
    %v7520 = vld [vmem:[%s6 + $0x1e8] sm:$0xff]
    %v7521 = vld [vmem:[%s6 + $0x1f0] sm:$0xff]
    %v7523 = vsel %vm1863, %v7454, 0
    %v7526 = vsel %vm1863, %v7458, 0
    %7528 = vmatprep.subr.mxu0 0.0
    %7529 = vmatpush1.msra.mxu0 %v7459
    %7530 = vmatprep.subr.mxu0 0.0
    %7531 = vmatpush1.msra.mxu0 %v7460
    %7532 = vmatprep.subr.mxu0 0.0
    %7533 = vmatpush1.msra.mxu0 %v7461
    %7534 = vmatprep.subr.mxu0 0.0
    %7535 = vmatpush1.msra.mxu0 %v7462
    %7536 = vmatprep.subr.mxu0 0.0
    %7537 = vmatpush1.msra.mxu0 %v7463
    %7538 = vmatprep.subr.mxu0 0.0
    %7539 = vmatpush1.msra.mxu0 %v7464
    %7540 = vmatprep.subr.mxu0 0.0
    %7541 = vmatpush1.msra.mxu0 %v7465
    %7542 = vmatprep.subr.mxu0 0.0
    %7543 = vmatpush1.msra.mxu0 %v7466
    %7544 = vmatprep.subr.mxu0 0.0
    %7545 = vmatpush1.msra.mxu0 %v7467
    %7546 = vmatprep.subr.mxu0 0.0
    %7547 = vmatpush1.msra.mxu0 %v7468
    %7548 = vmatprep.subr.mxu0 0.0
    %7549 = vmatpush1.msra.mxu0 %v7469
    %7550 = vmatprep.subr.mxu0 0.0
    %7551 = vmatpush1.msra.mxu0 %v7470
    %7552 = vmatprep.subr.mxu0 0.0
    %7553 = vmatpush1.msra.mxu0 %v7471
    %7554 = vmatprep.subr.mxu0 0.0
    %7555 = vmatpush1.msra.mxu0 %v7472
    %7556 = vmatprep.subr.mxu0 0.0
    %7557 = vmatpush1.msra.mxu0 %v7473
    %7558 = vmatprep.subr.mxu0 0.0
    %7559 = vmatpush1.msra.mxu0 %v7474
    %7560 = vmatprep.subr.mxu0 0.0
    %7561 = vmatpush1.msra.mxu0 %v7475
    %7562 = vmatprep.subr.mxu0 0.0
    %7563 = vmatpush1.msra.mxu0 %v7476
    %7564 = vmatprep.subr.mxu0 0.0
    %7565 = vmatpush1.msra.mxu0 %v7477
    %7566 = vmatprep.subr.mxu0 0.0
    %7567 = vmatpush1.msra.mxu0 %v7478
    %7568 = vmatprep.subr.mxu0 0.0
    %7569 = vmatpush1.msra.mxu0 %v7479
    %7570 = vmatprep.subr.mxu0 0.0
    %7571 = vmatpush1.msra.mxu0 %v7480
    %7572 = vmatprep.subr.mxu0 0.0
    %7573 = vmatpush1.msra.mxu0 %v7481
    %7574 = vmatprep.subr.mxu0 0.0
    %7575 = vmatpush1.msra.mxu0 %v7482
    %7576 = vmatprep.subr.mxu0 0.0
    %7577 = vmatpush1.msra.mxu0 %v7483
    %7578 = vmatprep.subr.mxu0 0.0
    %7579 = vmatpush1.msra.mxu0 %v7484
    %7580 = vmatprep.subr.mxu0 0.0
    %7581 = vmatpush1.msra.mxu0 %v7485
    %7582 = vmatprep.subr.mxu0 0.0
    %7583 = vmatpush1.msra.mxu0 %v7486
    %7584 = vmatprep.subr.mxu0 0.0
    %7585 = vmatpush1.msra.mxu0 %v7487
    %7586 = vmatprep.subr.mxu0 0.0
    %7587 = vmatpush1.msra.mxu0 %v7488
    %7588 = vmatprep.subr.mxu0 0.0
    %7589 = vmatpush1.msra.mxu0 %v7489
    %7590 = vmatprep.subr.mxu0 0.0
    %7591 = vmatpush1.msra.mxu0 %v7490
    %7592 = vmatprep.mubr.f32.mxu0 %v7452
    %7593 = vmatmul.mubr.f32.gmra.mrb[0].mxu0 %v7451
    %v7594 = vpop.f32.mrb[0].mxu0
    %v7595 = vadd.f32 0.0, %v7594
    %v7596 = vpop.f32.mrb[0].mxu0
    %7597 = vmatprep.mubr.f32.mxu0 %v7456
    %7598 = vmatmul.mubr.f32.gmra.mrb[0].mxu0 %v7455
    %v7599 = vpop.f32.mrb[0].mxu0
    %v7600 = vadd.f32 0.0, %v7599
    %v7601 = vpop.f32.mrb[0].mxu0
    %7602 = vdwg.mxu0
    %7603 = vmatprep.subr.mxu0 0.0
    %7604 = vmatpush1.msra.mxu0 %v7491
    %7605 = vmatprep.subr.mxu0 0.0
    %7606 = vmatpush1.msra.mxu0 %v7492
    %7607 = vmatprep.subr.mxu0 0.0
    %7608 = vmatpush1.msra.mxu0 %v7493
    %7609 = vmatprep.subr.mxu0 0.0
    %7610 = vmatpush1.msra.mxu0 %v7494
    %7611 = vmatprep.subr.mxu0 0.0
    %7612 = vmatpush1.msra.mxu0 %v7495
    %7613 = vmatprep.subr.mxu0 0.0
    %7614 = vmatpush1.msra.mxu0 %v7496
    %7615 = vmatprep.subr.mxu0 0.0
    %7616 = vmatpush1.msra.mxu0 %v7497
    %7617 = vmatprep.subr.mxu0 0.0
    %7618 = vmatpush1.msra.mxu0 %v7498
    %7619 = vmatprep.subr.mxu0 0.0
    %7620 = vmatpush1.msra.mxu0 %v7499
    %7621 = vmatprep.subr.mxu0 0.0
    %7622 = vmatpush1.msra.mxu0 %v7500
    %7623 = vmatprep.subr.mxu0 0.0
    %7624 = vmatpush1.msra.mxu0 %v7501
    %7625 = vmatprep.subr.mxu0 0.0
    %7626 = vmatpush1.msra.mxu0 %v7502
    %7627 = vmatprep.subr.mxu0 0.0
    %7628 = vmatpush1.msra.mxu0 %v7503
    %7629 = vmatprep.subr.mxu0 0.0
    %7630 = vmatpush1.msra.mxu0 %v7504
    %7631 = vmatprep.subr.mxu0 0.0
    %7632 = vmatpush1.msra.mxu0 %v7505
    %7633 = vmatprep.subr.mxu0 0.0
    %7634 = vmatpush1.msra.mxu0 %v7506
    %7635 = vmatprep.subr.mxu0 0.0
    %7636 = vmatpush1.msra.mxu0 %v7507
    %7637 = vmatprep.subr.mxu0 0.0
    %7638 = vmatpush1.msra.mxu0 %v7508
    %7639 = vmatprep.subr.mxu0 0.0
    %7640 = vmatpush1.msra.mxu0 %v7509
    %7641 = vmatprep.subr.mxu0 0.0
    %7642 = vmatpush1.msra.mxu0 %v7510
    %7643 = vmatprep.subr.mxu0 0.0
    %7644 = vmatpush1.msra.mxu0 %v7511
    %7645 = vmatprep.subr.mxu0 0.0
    %7646 = vmatpush1.msra.mxu0 %v7512
    %7647 = vmatprep.subr.mxu0 0.0
    %7648 = vmatpush1.msra.mxu0 %v7513
    %7649 = vmatprep.subr.mxu0 0.0
    %7650 = vmatpush1.msra.mxu0 %v7514
    %7651 = vmatprep.subr.mxu0 0.0
    %7652 = vmatpush1.msra.mxu0 %v7515
    %7653 = vmatprep.subr.mxu0 0.0
    %7654 = vmatpush1.msra.mxu0 %v7516
    %7655 = vmatprep.subr.mxu0 0.0
    %7656 = vmatpush1.msra.mxu0 %v7517
    %7657 = vmatprep.subr.mxu0 0.0
    %7658 = vmatpush1.msra.mxu0 %v7518
    %7659 = vmatprep.subr.mxu0 0.0
    %7660 = vmatpush1.msra.mxu0 %v7519
    %7661 = vmatprep.subr.mxu0 0.0
    %7662 = vmatpush1.msra.mxu0 %v7520
    %7663 = vmatprep.subr.mxu0 0.0
    %7664 = vmatpush1.msra.mxu0 %v7521
    %7665 = vmatprep.subr.mxu0 0.0
    %7666 = vmatpush1.msra.mxu0 0.0
    %7667 = vmatprep.mubr.f32.mxu0 %v7523
    %7668 = vmatmul.mubr.f32.gmra.mrb[0].mxu0 %v7453
    %v7669 = vpop.f32.mrb[0].mxu0
    %v7670 = vadd.f32 %v7595, %v7669
    %v7671 = vpop.f32.mrb[0].mxu0
    %7672 = vmatprep.mubr.f32.mxu0 %v7526
    %7673 = vmatmul.mubr.f32.gmra.mrb[0].mxu0 %v7457
    %v7674 = vpop.f32.mrb[0].mxu0
    %v7675 = vadd.f32 %v7600, %v7674
    %v7676 = vpop.f32.mrb[0].mxu0
    %7677 = vdwg.mxu0
    %7680 = vrot.lane.b32.xlu0 %v7670, 126
    %v7681 = vpop.permute.xlu0 %7680
    %7682 = vrot.lane.b32.xlu0 %v7675, 126
    %v7683 = vpop.permute.xlu0 %7682
    %7686 = vrot.lane.b32.xlu0 %v7670, 124
    %v7687 = vpop.permute.xlu0 %7686
    %7688 = vrot.lane.b32.xlu0 %v7675, 124
    %v7689 = vpop.permute.xlu0 %7688
    %7692 = vrot.lane.b32.xlu0 %v7670, 122
    %v7693 = vpop.permute.xlu0 %7692
    %7694 = vrot.lane.b32.xlu0 %v7675, 122
    %v7695 = vpop.permute.xlu0 %7694
    %7698 = vrot.lane.b32.xlu0 %v7670, 120
    %v7699 = vpop.permute.xlu0 %7698
    %7700 = vrot.lane.b32.xlu0 %v7675, 120
    %v7701 = vpop.permute.xlu0 %7700
    %7704 = vrot.lane.b32.xlu0 %v7670, 118
    %v7705 = vpop.permute.xlu0 %7704
    %7706 = vrot.lane.b32.xlu0 %v7675, 118
    %v7707 = vpop.permute.xlu0 %7706
    %7710 = vrot.lane.b32.xlu0 %v7670, 116
    %v7711 = vpop.permute.xlu0 %7710
    %7712 = vrot.lane.b32.xlu0 %v7675, 116
    %v7713 = vpop.permute.xlu0 %7712
    %7716 = vrot.lane.b32.xlu0 %v7670, 114
    %v7717 = vpop.permute.xlu0 %7716
    %7718 = vrot.lane.b32.xlu0 %v7675, 114
    %v7719 = vpop.permute.xlu0 %7718
    %7722 = vrot.lane.b32.xlu0 %v7670, 112
    %v7723 = vpop.permute.xlu0 %7722
    %7724 = vrot.lane.b32.xlu0 %v7675, 112
    %v7725 = vpop.permute.xlu0 %7724
    %7728 = vrot.lane.b32.xlu0 %v7670, 110
    %v7729 = vpop.permute.xlu0 %7728
    %7730 = vrot.lane.b32.xlu0 %v7675, 110
    %v7731 = vpop.permute.xlu0 %7730
    %7734 = vrot.lane.b32.xlu0 %v7670, 108
    %v7735 = vpop.permute.xlu0 %7734
    %7736 = vrot.lane.b32.xlu0 %v7675, 108
    %v7737 = vpop.permute.xlu0 %7736
    %7740 = vrot.lane.b32.xlu0 %v7670, 106
    %v7741 = vpop.permute.xlu0 %7740
    %7742 = vrot.lane.b32.xlu0 %v7675, 106
    %v7743 = vpop.permute.xlu0 %7742
    %7746 = vrot.lane.b32.xlu0 %v7670, 104
    %v7747 = vpop.permute.xlu0 %7746
    %7748 = vrot.lane.b32.xlu0 %v7675, 104
    %v7749 = vpop.permute.xlu0 %7748
    %7752 = vrot.lane.b32.xlu0 %v7670, 102
    %v7753 = vpop.permute.xlu0 %7752
    %7754 = vrot.lane.b32.xlu0 %v7675, 102
    %v7755 = vpop.permute.xlu0 %7754
    %7758 = vrot.lane.b32.xlu0 %v7670, 100
    %v7759 = vpop.permute.xlu0 %7758
    %7760 = vrot.lane.b32.xlu0 %v7675, 100
    %v7761 = vpop.permute.xlu0 %7760
    %7764 = vrot.lane.b32.xlu0 %v7670, 98
    %v7765 = vpop.permute.xlu0 %7764
    %7766 = vrot.lane.b32.xlu0 %v7675, 98
    %v7767 = vpop.permute.xlu0 %7766
    %7770 = vrot.lane.b32.xlu0 %v7670, 96
    %v7771 = vpop.permute.xlu0 %7770
    %7772 = vrot.lane.b32.xlu0 %v7675, 96
    %v7773 = vpop.permute.xlu0 %7772
    %7774 = vrot.lane.b32.xlu0 %v7681, 96
    %v7775 = vpop.permute.xlu0 %7774
    %7776 = vrot.lane.b32.xlu0 %v7683, 96
    %v7777 = vpop.permute.xlu0 %7776
    %7778 = vrot.lane.b32.xlu0 %v7687, 96
    %v7779 = vpop.permute.xlu0 %7778
    %7780 = vrot.lane.b32.xlu0 %v7689, 96
    %v7781 = vpop.permute.xlu0 %7780
    %7782 = vrot.lane.b32.xlu0 %v7693, 96
    %v7783 = vpop.permute.xlu0 %7782
    %7784 = vrot.lane.b32.xlu0 %v7695, 96
    %v7785 = vpop.permute.xlu0 %7784
    %7786 = vrot.lane.b32.xlu0 %v7699, 96
    %v7787 = vpop.permute.xlu0 %7786
    %7788 = vrot.lane.b32.xlu0 %v7701, 96
    %v7789 = vpop.permute.xlu0 %7788
    %7790 = vrot.lane.b32.xlu0 %v7705, 96
    %v7791 = vpop.permute.xlu0 %7790
    %7792 = vrot.lane.b32.xlu0 %v7707, 96
    %v7793 = vpop.permute.xlu0 %7792
    %7794 = vrot.lane.b32.xlu0 %v7711, 96
    %v7795 = vpop.permute.xlu0 %7794
    %7796 = vrot.lane.b32.xlu0 %v7713, 96
    %v7797 = vpop.permute.xlu0 %7796
    %7798 = vrot.lane.b32.xlu0 %v7717, 96
    %v7799 = vpop.permute.xlu0 %7798
    %7800 = vrot.lane.b32.xlu0 %v7719, 96
    %v7801 = vpop.permute.xlu0 %7800
    %v7818 = vld [vmem:[%s7] sm:$0xff]
    %v7819 = vld [vmem:[%s7 + $0x8] sm:$0xff]
    %v7820 = vld [vmem:[%s7 + $0x10] sm:$0xff]
    %v7821 = vld [vmem:[%s8] sm:$0xff]
    %7823 = vset.pattern.permute.xlu0 0
    %7824 = vperm.xlu0 %7823, %v7821
    %v7825 = vpop.permute.xlu0 %7824
    %7827 = vmatprep.subr.mxu0 0.0
    %7828 = vmatpush1.msra.mxu0 %v7670
    %7829 = vmatprep.subr.mxu0 0.0
    %7830 = vmatpush1.msra.mxu0 %v7675
    %7831 = vmatprep.subr.mxu0 0.0
    %7832 = vmatpush1.msra.mxu0 %v7681
    %7833 = vmatprep.subr.mxu0 0.0
    %7834 = vmatpush1.msra.mxu0 %v7683
    %7835 = vmatprep.subr.mxu0 0.0
    %7836 = vmatpush1.msra.mxu0 %v7687
    %7837 = vmatprep.subr.mxu0 0.0
    %7838 = vmatpush1.msra.mxu0 %v7689
    %7839 = vmatprep.subr.mxu0 0.0
    %7840 = vmatpush1.msra.mxu0 %v7693
    %7841 = vmatprep.subr.mxu0 0.0
    %7842 = vmatpush1.msra.mxu0 %v7695
    %7843 = vmatprep.subr.mxu0 0.0
    %7844 = vmatpush1.msra.mxu0 %v7699
    %7845 = vmatprep.subr.mxu0 0.0
    %7846 = vmatpush1.msra.mxu0 %v7701
    %7847 = vmatprep.subr.mxu0 0.0
    %7848 = vmatpush1.msra.mxu0 %v7705
    %7849 = vmatprep.subr.mxu0 0.0
    %7850 = vmatpush1.msra.mxu0 %v7707
    %7851 = vmatprep.subr.mxu0 0.0
    %7852 = vmatpush1.msra.mxu0 %v7711
    %7853 = vmatprep.subr.mxu0 0.0
    %7854 = vmatpush1.msra.mxu0 %v7713
    %7855 = vmatprep.subr.mxu0 0.0
    %7856 = vmatpush1.msra.mxu0 %v7717
    %7857 = vmatprep.subr.mxu0 0.0
    %7858 = vmatpush1.msra.mxu0 %v7719
    %7859 = vmatprep.subr.mxu0 0.0
    %7860 = vmatpush1.msra.mxu0 %v7723
    %7861 = vmatprep.subr.mxu0 0.0
    %7862 = vmatpush1.msra.mxu0 %v7725
    %7863 = vmatprep.subr.mxu0 0.0
    %7864 = vmatpush1.msra.mxu0 %v7729
    %7865 = vmatprep.subr.mxu0 0.0
    %7866 = vmatpush1.msra.mxu0 %v7731
    %7867 = vmatprep.subr.mxu0 0.0
    %7868 = vmatpush1.msra.mxu0 %v7735
    %7869 = vmatprep.subr.mxu0 0.0
    %7870 = vmatpush1.msra.mxu0 %v7737
    %7871 = vmatprep.subr.mxu0 0.0
    %7872 = vmatpush1.msra.mxu0 %v7741
    %7873 = vmatprep.subr.mxu0 0.0
    %7874 = vmatpush1.msra.mxu0 %v7743
    %7875 = vmatprep.subr.mxu0 0.0
    %7876 = vmatpush1.msra.mxu0 %v7747
    %7877 = vmatprep.subr.mxu0 0.0
    %7878 = vmatpush1.msra.mxu0 %v7749
    %7879 = vmatprep.subr.mxu0 0.0
    %7880 = vmatpush1.msra.mxu0 %v7753
    %7881 = vmatprep.subr.mxu0 0.0
    %7882 = vmatpush1.msra.mxu0 %v7755
    %7883 = vmatprep.subr.mxu0 0.0
    %7884 = vmatpush1.msra.mxu0 %v7759
    %7885 = vmatprep.subr.mxu0 0.0
    %7886 = vmatpush1.msra.mxu0 %v7761
    %7887 = vmatprep.subr.mxu0 0.0
    %7888 = vmatpush1.msra.mxu0 %v7765
    %7889 = vmatprep.subr.mxu0 0.0
    %7890 = vmatpush1.msra.mxu0 %v7767
    %7891 = vmatprep.mubr.f32.mxu0 %v7819
    %7892 = vmatmul.mubr.f32.gmra.mrb[0].mxu0 %v7818
    %v7893 = vpop.f32.mrb[0].mxu0
    %v7894 = vadd.f32 %v7825, %v7893
    %v7895 = vpop.f32.mrb[0].mxu0
    %7896 = vdwg.mxu0
    %7897 = vmatprep.subr.mxu0 0.0
    %7898 = vmatpush1.msra.mxu0 %v7771
    %7899 = vmatprep.subr.mxu0 0.0
    %7900 = vmatpush1.msra.mxu0 %v7773
    %7901 = vmatprep.subr.mxu0 0.0
    %7902 = vmatpush1.msra.mxu0 %v7775
    %7903 = vmatprep.subr.mxu0 0.0
    %7904 = vmatpush1.msra.mxu0 %v7777
    %7905 = vmatprep.subr.mxu0 0.0
    %7906 = vmatpush1.msra.mxu0 %v7779
    %7907 = vmatprep.subr.mxu0 0.0
    %7908 = vmatpush1.msra.mxu0 %v7781
    %7909 = vmatprep.subr.mxu0 0.0
    %7910 = vmatpush1.msra.mxu0 %v7783
    %7911 = vmatprep.subr.mxu0 0.0
    %7912 = vmatpush1.msra.mxu0 %v7785
    %7913 = vmatprep.subr.mxu0 0.0
    %7914 = vmatpush1.msra.mxu0 %v7787
    %7915 = vmatprep.subr.mxu0 0.0
    %7916 = vmatpush1.msra.mxu0 %v7789
    %7917 = vmatprep.subr.mxu0 0.0
    %7918 = vmatpush1.msra.mxu0 %v7791
    %7919 = vmatprep.subr.mxu0 0.0
    %7920 = vmatpush1.msra.mxu0 %v7793
    %7921 = vmatprep.subr.mxu0 0.0
    %7922 = vmatpush1.msra.mxu0 %v7795
    %7923 = vmatprep.subr.mxu0 0.0
    %7924 = vmatpush1.msra.mxu0 %v7797
    %7925 = vmatprep.subr.mxu0 0.0
    %7926 = vmatpush1.msra.mxu0 %v7799
    %7927 = vmatprep.subr.mxu0 0.0
    %7928 = vmatpush1.msra.mxu0 %v7801
    %7929 = vmatprep.subr.mxu0 0.0
    %7930 = vmatpush1.msra.mxu0 0.0
    %7931 = vmatprep.subr.mxu0 0.0
    %7932 = vmatpush1.msra.mxu0 0.0
    %7933 = vmatprep.subr.mxu0 0.0
    %7934 = vmatpush1.msra.mxu0 0.0
    %7935 = vmatprep.subr.mxu0 0.0
    %7936 = vmatpush1.msra.mxu0 0.0
    %7937 = vmatprep.subr.mxu0 0.0
    %7938 = vmatpush1.msra.mxu0 0.0
    %7939 = vmatprep.subr.mxu0 0.0
    %7940 = vmatpush1.msra.mxu0 0.0
    %7941 = vmatprep.subr.mxu0 0.0
    %7942 = vmatpush1.msra.mxu0 0.0
    %7943 = vmatprep.subr.mxu0 0.0
    %7944 = vmatpush1.msra.mxu0 0.0
    %7945 = vmatprep.subr.mxu0 0.0
    %7946 = vmatpush1.msra.mxu0 0.0
    %7947 = vmatprep.subr.mxu0 0.0
    %7948 = vmatpush1.msra.mxu0 0.0
    %7949 = vmatprep.subr.mxu0 0.0
    %7950 = vmatpush1.msra.mxu0 0.0
    %7951 = vmatprep.subr.mxu0 0.0
    %7952 = vmatpush1.msra.mxu0 0.0
    %7953 = vmatprep.subr.mxu0 0.0
    %7954 = vmatpush1.msra.mxu0 0.0
    %7955 = vmatprep.subr.mxu0 0.0
    %7956 = vmatpush1.msra.mxu0 0.0
    %7957 = vmatprep.subr.mxu0 0.0
    %7958 = vmatpush1.msra.mxu0 0.0
    %7959 = vmatprep.subr.mxu0 0.0
    %7960 = vmatpush1.msra.mxu0 0.0
    %7961 = vmatprep.mubr.f32.mxu0 0.0
    %7962 = vmatmul.mubr.f32.gmra.mrb[0].mxu0 %v7820
    %v7963 = vpop.f32.mrb[0].mxu0
    %v7964 = vadd.f32 %v7894, %v7963
    %v7965 = vpop.f32.mrb[0].mxu0
    %7966 = vdwg.mxu0
    %vm7967 = vcmask 15360
    %v7968 = vsel %vm7967, %v7964, -inf
    %v7969 = vrot.slane %v7968, 4
    %v7970 = vmax.f32 %v7968, %v7969
    %v7971 = vrot.slane %v7970, 2
    %v7972 = vmax.f32 %v7970, %v7971
    %v7973 = vrot.slane %v7972, 1
    %v7974 = vmax.f32 %v7972, %v7973
    %v7975 = vsub.f32 %v7964, %v7974
    %v7976 = vmul.f32 %v7975, 1.442695
    %v7977 = vpow.pop %v7976
    %v7978 = vsel %vm7967, %v7977, 0.0
    %v7979 = vrot.slane %v7978, 4
    %v7980 = vadd.f32 %v7978, %v7979
    %v7981 = vrot.slane %v7980, 2
    %v7982 = vadd.f32 %v7980, %v7981
    %v7983 = vrot.slane %v7982, 1
    %v7984 = vadd.f32 %v7982, %v7983
    %v7985 = vrcp.pop %v7984
    %v7986 = vmul.f32 %v7977, %v7985
    %7987 = vxpose.xlu0.b32.start [1/16] %v7986, 128
    %7988 = vxpose.xlu0.b32.cont [2/16] 0.0, 128
    %7989 = vxpose.xlu0.b32.cont [3/16] 0.0, 128
    %7990 = vxpose.xlu0.b32.cont [4/16] 0.0, 128
    %7991 = vxpose.xlu0.b32.cont [5/16] 0.0, 128
    %7992 = vxpose.xlu0.b32.cont [6/16] 0.0, 128
    %7993 = vxpose.xlu0.b32.cont [7/16] 0.0, 128
    %7994 = vxpose.xlu0.b32.cont [8/16] 0.0, 128
    %7995 = vxpose.xlu0.b32.cont [9/16] 0.0, 128
    %7996 = vxpose.xlu0.b32.cont [10/16] 0.0, 128
    %7997 = vxpose.xlu0.b32.cont [11/16] 0.0, 128
    %7998 = vxpose.xlu0.b32.cont [12/16] 0.0, 128
    %7999 = vxpose.xlu0.b32.cont [13/16] 0.0, 128
    %8000 = vxpose.xlu0.b32.cont [14/16] 0.0, 128
    %8001 = vxpose.xlu0.b32.cont [15/16] 0.0, 128
    %8002 = vxpose.xlu0.b32.end [16/16] 0.0, 128
    %v8003 = vpop.trf.xlu0
    %v8004 = vpop.trf.xlu0
    %v8005 = vpop.trf.xlu0
    %v8006 = vpop.trf.xlu0
    %v8007 = vpop.trf.xlu0
    %v8008 = vpop.trf.xlu0
    %v8009 = vpop.trf.xlu0
    %v8010 = vpop.trf.xlu0
    %v8011 = vpop.trf.xlu0
    %v8012 = vpop.trf.xlu0
    %v8013 = vpop.trf.xlu0
    %v8014 = vpop.trf.xlu0
    %v8015 = vpop.trf.xlu0
    %v8016 = vpop.trf.xlu0
    %v8017 = vpop.trf.xlu0
    %v8018 = vpop.trf.xlu0
    %vm8019 = vcmask 58368
    %8020 = vst.msk [vmem:[#allocation9] sm:$0x3] %vm8019, %v8003
    // Predicated region
    $region46: #{forward.1} parent=1 // pred_check
      _
    $region47: #{forward.1} parent=1 // pred_check_branch
      %8022 = sbr.rel (0) target = $region49
    $region48: #{forward.1} parent=1 // pred_region
      %s8024 = ssub.s32 32, 32
      %8025 = vsyncadd [#allocation6], %s8024
      %s8027 = sshll.u32 [#allocation9], 4
      %s8028 = int_to_ptr.vmem [resolvable:$true] %s8027
      %8030 = dma.vmem_to_hbm [thread:$0]  %s8028, 32, %s9, [#allocation6]
    $region49: #{forward.1} parent=1 // pred_fallthru
      _
    // Predicated region
    $region50: #{forward.1} parent=1 // pred_check
      _
    $region51: #{forward.1} parent=1 // pred_check_branch
      %8032 = sbr.rel (0) target = $region53
    $region52: #{forward.1} parent=1 // pred_region
      %8033 = dma.done [#allocation6], 32
    $region53: #{forward.1} parent=1 // pred_fallthru
      _
    %8034 = vsyncpa [#allocation5], 1
    %8035 = vsyncpa [#allocation8], 1
    %8036 = vsyncpa [#allocation6], 1

</llo_original>
